<compile_context>
chip_gen: v7x
topology: tpu7x:2x2x1
jax: 0.10.0
libtpu: 0.0.40
codegen_flags: <defaults>
</compile_context>

<pallas_src>
import functools

import jax
import jax.numpy as jnp
from jax import lax
from jax.experimental import pallas as pl
from jax.experimental.pallas import tpu as pltpu


# ----------------------------- fused kernel ---------------------------------

def _fused_kernel(x_ref, unf_ref, wpar_ref, w2k_ref, w3k_ref,
                  b1_ref, b2_ref, b3_ref, o_ref,
                  xpad_scr, mid_scr, im1_scr, im2_scr, im3_scr,
                  *, Hh, Wh):
    """Per-batch fused feat_net + regularization.

    x_ref   : (1, Hh, Wh, 32)      reg_feat, NHWC
    unf_ref : (1, 2, 2, 49, Nh)    unfold(flow), [col-parity, flow-chan, tap, pix]
    wpar_ref: (4, 128, 32)         transposed-conv weights per output parity
    w2k_ref : (224, 49)            (7,1) conv, im2col layout
    w3k_ref : (343, 49)            (1,7) conv, im2col layout
    o_ref   : (1, 2, 2, Nh)        [col-parity, flow-chan, pix]
    """
    f32, bf16 = jnp.float32, jnp.bfloat16
    H = 2 * Hh
    Nq = Hh * Wh          # pixels of one quarter-res parity grid
    Nh = H * Wh           # pixels of one column-parity half grid

    b1 = b1_ref[...]      # (1, 32) f32
    b2 = b2_ref[...]      # (1, 49)
    b3 = b3_ref[...]      # (1, 49)

    # reg_feat with a zero halo of 1, cast to bf16 (MXU operand).
    xpad_scr[...] = jnp.zeros(xpad_scr.shape, xpad_scr.dtype)
    xpad_scr[1:Hh + 1, 1:Wh + 1, :] = x_ref[0].astype(bf16)

    mid_scr[...] = jnp.zeros(mid_scr.shape, mid_scr.dtype)

    # ---- ConvTranspose2d(32,32,4,2,1)  +  Conv2d(32,49,(7,1),pad(3,0)) ------
    # Column parity px stays separate end-to-end; row parity py is interleaved
    # right here (leading-dim concat, no lane relayout).
    for px in range(2):
        rows = []
        for py in range(2):
            t = 0
            for dy in (py, py + 1):
                for dx in (px, px + 1):
                    piece = xpad_scr[dy:dy + Hh, dx:dx + Wh, :]     # (Hh,Wh,32) bf16
                    im1_scr[:, t * 32:(t + 1) * 32] = piece.reshape(Nq, 32)
                    t += 1
            acc = jnp.dot(im1_scr[...], wpar_ref[2 * py + px],
                          preferred_element_type=f32)               # (Nq, 32) f32
            rows.append((acc + b1).reshape(Hh, Wh, 32))
        # full-res rows for this column parity: row 2*i+py <- rows[py][i]
        up = jnp.concatenate([rows[0][:, None], rows[1][:, None]],
                             axis=1).reshape(H, Wh, 32)             # (H, Wh, 32) f32
        # vertical 7x1 conv, zero halo of 3 rows (leading-dim concat).
        zrow = jnp.zeros((3, Wh, 32), f32)
        up_p = jnp.concatenate([zrow, up, zrow], axis=0)            # (H+6, Wh, 32)
        for i in range(7):
            im2_scr[:, i * 32:(i + 1) * 32] = (
                up_p[i:i + H].reshape(Nh, 32).astype(bf16))
        mid = jnp.dot(im2_scr[...], w2k_ref[...],
                      preferred_element_type=f32) + b2              # (Nh, 49) f32
        mid_scr[px, :, 2:2 + Wh, :] = mid.reshape(H, Wh, 49).astype(bf16)

    # ---- Conv2d(49,49,(1,7),pad(0,3)) + tap softmax + unfold average --------
    for qx in range(2):                       # output column parity
        for tx in range(7):                   # horizontal taps
            s = (tx + qx + 1) % 2             # source column parity
            delta = (tx - 3 + qx) // 2        # half-resolution column shift
            piece = mid_scr[s, :, 2 + delta:2 + delta + Wh, :]      # (H,Wh,49) bf16
            im3_scr[:, tx * 49:(tx + 1) * 49] = piece.reshape(Nh, 49)
        dist = jnp.dot(im3_scr[...], w3k_ref[...],
                       preferred_element_type=f32) + b3             # (Nh, 49) f32

        # planar (49, Nh): pixel axis on lanes -> full-width VPU/EUP ops.
        d = dist.T                                                  # (49, Nh)
        d = -(d * d)
        d = jnp.exp(d - jnp.max(d, axis=0, keepdims=True))
        div = jnp.sum(d, axis=0, keepdims=True)                     # (1, Nh)
        ux = unf_ref[0, qx, 0]                                      # (49, Nh) f32
        uy = unf_ref[0, qx, 1]
        sx = jnp.sum(d * ux, axis=0, keepdims=True)
        sy = jnp.sum(d * uy, axis=0, keepdims=True)
        o_ref[0, qx, 0:1, :] = (sx / div).astype(o_ref.dtype)
        o_ref[0, qx, 1:2, :] = (sy / div).astype(o_ref.dtype)


# ----------------------------- wrapper ---------------------------------------

def _prep_weights(params):
    """Rearrange PyTorch-layout weights into the kernel's im2col layouts."""
    wt, b1 = params["deconv"]     # (in=32, out=32, 4, 4), (32,)
    w2, b2 = params["conv_v"]     # (49, 32, 7, 1), (49,)
    w3, b3 = params["conv_h"]     # (49, 49, 1, 7), (49,)

    wpar = []
    for py in range(2):
        for px in range(2):
            taps = []
            for dy in (py, py + 1):
                ky = py + 3 - 2 * dy
                for dx in (px, px + 1):
                    kx = px + 3 - 2 * dx
                    taps.append(wt[:, :, ky, kx])                   # (in, out)
            wpar.append(jnp.concatenate(taps, axis=0))              # (128, 32)
    wpar = jnp.stack(wpar, axis=0).astype(jnp.bfloat16)             # (4, 128, 32)

    w2k = jnp.transpose(w2[:, :, :, 0], (2, 1, 0)).reshape(224, 49)
    w3k = jnp.transpose(w3[:, :, 0, :], (2, 1, 0)).reshape(343, 49)
    return (wpar, w2k.astype(jnp.bfloat16), w3k.astype(jnp.bfloat16),
            b1.reshape(1, 32).astype(jnp.float32),
            b2.reshape(1, 49).astype(jnp.float32),
            b3.reshape(1, 49).astype(jnp.float32))


def pseudo_regularization_forward(params, reg_feat, flow):
    """reg_feat: (B,32,Hh,Wh), flow: (B,2,2Hh,2Wh) NCHW -> smoothed flow (B,2,H,W)."""
    B, C, Hh, Wh = reg_feat.shape
    assert C == 32
    H, W = 2 * Hh, 2 * Wh
    assert flow.shape == (B, 2, H, W)
    Nh = H * Wh

    wpar, w2k, w3k, b1, b2, b3 = _prep_weights(params)

    # Input layout conversion at the module boundary (smallest tensor, one pass).
    x_nhwc = jnp.transpose(reg_feat, (0, 2, 3, 1))                  # (B, Hh, Wh, 32)

    # nn.Unfold(7, padding=3)(flow), split by output-column parity and flattened
    # so the kernel's planar softmax/average stage consumes it lane-dense.
    fp = jnp.pad(flow, ((0, 0), (0, 0), (3, 3), (3, 3)))
    wins = jnp.stack([fp[:, :, ty:ty + H, tx:tx + W]
                      for ty in range(7) for tx in range(7)], axis=2)   # (B,2,49,H,W)
    wins = wins.reshape(B, 2, 49, H, Wh, 2)                             # W -> (j, px)
    unf = jnp.transpose(wins, (0, 5, 1, 2, 3, 4)).reshape(B, 2, 2, 49, Nh)

    flops = 2 * B * H * W * (4 * 32 * 32 + 7 * 32 * 49 + 7 * 49 * 49) \
        + 8 * B * 49 * H * W
    bytes_accessed = (x_nhwc.size + unf.size + B * 2 * 2 * Nh) * 4 \
        + (wpar.size + w2k.size + w3k.size) * 2

    kern = functools.partial(_fused_kernel, Hh=Hh, Wh=Wh)
    out = pl.pallas_call(
        kern,
        out_shape=jax.ShapeDtypeStruct((B, 2, 2, Nh), jnp.float32),
        grid=(B,),
        in_specs=[
            pl.BlockSpec((1, Hh, Wh, 32), lambda b: (b, 0, 0, 0)),
            pl.BlockSpec((1, 2, 2, 49, Nh), lambda b: (b, 0, 0, 0, 0)),
            pl.BlockSpec((4, 128, 32), lambda b: (0, 0, 0)),
            pl.BlockSpec((224, 49), lambda b: (0, 0)),
            pl.BlockSpec((343, 49), lambda b: (0, 0)),
            pl.BlockSpec((1, 32), lambda b: (0, 0)),
            pl.BlockSpec((1, 49), lambda b: (0, 0)),
            pl.BlockSpec((1, 49), lambda b: (0, 0)),
        ],
        out_specs=pl.BlockSpec((1, 2, 2, Nh), lambda b: (b, 0, 0, 0)),
        scratch_shapes=[
            pltpu.VMEM((Hh + 2, Wh + 2, 32), jnp.bfloat16),   # padded reg_feat
            pltpu.VMEM((2, H, Wh + 4, 49), jnp.bfloat16),     # padded mid, per col parity
            pltpu.VMEM((Hh * Wh, 128), jnp.bfloat16),         # im2col: transposed conv
            pltpu.VMEM((Nh, 224), jnp.bfloat16),              # im2col: (7,1) conv
            pltpu.VMEM((Nh, 343), jnp.bfloat16),              # im2col: (1,7) conv
        ],
        compiler_params=pltpu.CompilerParams(
            dimension_semantics=("parallel",)),
        cost_estimate=pl.CostEstimate(
            flops=flops, transcendentals=B * 49 * H * W,
            bytes_accessed=bytes_accessed),
    )(x_nhwc, unf, wpar, w2k, w3k, b1, b2, b3)

    # Undo the column-parity split on the tiny 2-channel output (free reshapes).
    out = out.reshape(B, 2, 2, H, Wh)              # (b, px, c, y, j)
    out = jnp.transpose(out, (0, 2, 3, 4, 1))      # (b, c, y, j, px)
    return out.reshape(B, 2, H, W)


# ----------------------------- reference & demo ------------------------------

def _reference_forward(params, reg_feat, flow):
    """Pure-JAX NCHW reference (same bf16 MXU-operand quantization as the kernel)."""
    wt, b1 = params["deconv"]
    w2, b2 = params["conv_v"]
    w3, b3 = params["conv_h"]
    bf = lambda a: a.astype(jnp.bfloat16)
    dn = ("NCHW", "OIHW", "NCHW")
    w_eq = jnp.transpose(wt, (1, 0, 2, 3))[:, :, ::-1, ::-1]
    up = lax.conv_general_dilated(bf(reg_feat), bf(w_eq), (1, 1), ((2, 2), (2, 2)),
                                  lhs_dilation=(2, 2), dimension_numbers=dn,
                                  preferred_element_type=jnp.float32)
    up = up + b1[None, :, None, None]
    mid = lax.conv_general_dilated(bf(up), bf(w2), (1, 1), ((3, 3), (0, 0)),
                                   dimension_numbers=dn,
                                   preferred_element_type=jnp.float32)
    mid = mid + b2[None, :, None, None]
    dist = lax.conv_general_dilated(bf(mid), bf(w3), (1, 1), ((0, 0), (3, 3)),
                                    dimension_numbers=dn,
                                    preferred_element_type=jnp.float32)
    dist = dist + b3[None, :, None, None]
    d = -(dist * dist)
    d = jnp.exp(d - jnp.max(d, axis=1, keepdims=True))
    div = jnp.sum(d, axis=1, keepdims=True)
    B, _, H, W = flow.shape
    fp = jnp.pad(flow, ((0, 0), (0, 0), (3, 3), (3, 3)))
    wins = jnp.stack([fp[:, :, ty:ty + H, tx:tx + W]
                      for ty in range(7) for tx in range(7)], axis=2)
    num = jnp.sum(wins * d[:, None], axis=2)
    return num / div


def init_params(key):
    ks = jax.random.split(key, 6)

    def conv_w(k, shape, fan_in):
        return jax.random.normal(k, shape, jnp.float32) * (fan_in ** -0.5)

    return {
        "deconv": (conv_w(ks[0], (32, 32, 4, 4), 32 * 16),
                   0.01 * jax.random.normal(ks[1], (32,), jnp.float32)),
        "conv_v": (conv_w(ks[2], (49, 32, 7, 1), 32 * 7),
                   0.01 * jax.random.normal(ks[3], (49,), jnp.float32)),
        "conv_h": (conv_w(ks[4], (49, 49, 1, 7), 49 * 7),
                   0.01 * jax.random.normal(ks[5], (49,), jnp.float32)),
    }


if __name__ == "__main__":
    key = jax.random.PRNGKey(0)
    k_feat, k_flow, k_par = jax.random.split(key, 3)
    B, Hh, Wh = 2, 8, 8
    H, W = 2 * Hh, 2 * Wh
    reg_feat = jax.random.normal(k_feat, (B, 32, Hh, Wh), jnp.float32)
    flow = 2.0 * jax.random.normal(k_flow, (B, 2, H, W), jnp.float32)
    params = init_params(k_par)

    fwd = jax.jit(pseudo_regularization_forward)
    out = fwd(params, reg_feat, flow)
    jax.block_until_ready(out)

    assert out.shape == (B, 2, H, W)
    assert bool(jnp.all(jnp.isfinite(out)))
    # smoothed flow is a convex combination of (zero-padded) flow values
    assert float(jnp.max(jnp.abs(out))) <= float(jnp.max(jnp.abs(flow))) + 1e-3

    ref = _reference_forward(params, reg_feat, flow)
    err = float(jnp.max(jnp.abs(out - ref)))
    assert err < 2e-2, f"mismatch vs reference: {err}"
    print("KERNEL_OK")
</pallas_src>

<mosaic_0001>
module attributes {stable_mosaic.version = 11 : i64} {
  func.func @_fused_kernel(%arg0: i32, %arg1: memref<1x8x8x32xf32, #tpu.memory_space<vmem>>, %arg2: memref<1x2x2x49x128xf32, #tpu.memory_space<vmem>>, %arg3: memref<4x128x32xbf16, #tpu.memory_space<vmem>>, %arg4: memref<224x49xbf16, #tpu.memory_space<vmem>>, %arg5: memref<343x49xbf16, #tpu.memory_space<vmem>>, %arg6: memref<1x32xf32, #tpu.memory_space<vmem>>, %arg7: memref<1x49xf32, #tpu.memory_space<vmem>>, %arg8: memref<1x49xf32, #tpu.memory_space<vmem>>, %arg9: memref<1x2x2x128xf32, #tpu.memory_space<vmem>>, %arg10: memref<10x10x32xbf16, #tpu.memory_space<vmem>>, %arg11: memref<2x16x12x49xbf16, #tpu.memory_space<vmem>>, %arg12: memref<64x128xbf16, #tpu.memory_space<vmem>>, %arg13: memref<128x224xbf16, #tpu.memory_space<vmem>>, %arg14: memref<128x343xbf16, #tpu.memory_space<vmem>>) attributes {dimension_semantics = [#tpu.dimension_semantics<parallel>], iteration_bounds = array<i64: 2>, scalar_prefetch = 0 : i64, scratch_operands = 5 : i64, tpu.core_type = #tpu.core_type<tc>, window_params = [{transform_indices = @transform_0, window_bounds = array<i64: 1, 8, 8, 32>}, {transform_indices = @transform_1, window_bounds = array<i64: 1, 2, 2, 49, 128>}, {pipeline_mode = #tpu.pipeline_mode<synchronous>, transform_indices = @transform_2, window_bounds = array<i64: 4, 128, 32>}, {pipeline_mode = #tpu.pipeline_mode<synchronous>, transform_indices = @transform_3, window_bounds = array<i64: 224, 49>}, {pipeline_mode = #tpu.pipeline_mode<synchronous>, transform_indices = @transform_4, window_bounds = array<i64: 343, 49>}, {pipeline_mode = #tpu.pipeline_mode<synchronous>, transform_indices = @transform_5, window_bounds = array<i64: 1, 32>}, {pipeline_mode = #tpu.pipeline_mode<synchronous>, transform_indices = @transform_6, window_bounds = array<i64: 1, 49>}, {pipeline_mode = #tpu.pipeline_mode<synchronous>, transform_indices = @transform_7, window_bounds = array<i64: 1, 49>}, {transform_indices = @transform_8, window_bounds = array<i64: 1, 2, 2, 128>}]} {
    %c0 = arith.constant 0 : index
    %c0_0 = arith.constant 0 : index
    %0 = vector.load %arg6[%c0, %c0_0] : memref<1x32xf32, #tpu.memory_space<vmem>>, vector<1x32xf32>
    %c0_1 = arith.constant 0 : index
    %c0_2 = arith.constant 0 : index
    %1 = vector.load %arg7[%c0_1, %c0_2] : memref<1x49xf32, #tpu.memory_space<vmem>>, vector<1x49xf32>
    %c0_3 = arith.constant 0 : index
    %c0_4 = arith.constant 0 : index
    %2 = vector.load %arg8[%c0_3, %c0_4] : memref<1x49xf32, #tpu.memory_space<vmem>>, vector<1x49xf32>
    %cst = arith.constant 0.000000e+00 : bf16
    %3 = vector.broadcast %cst : bf16 to vector<10x10x32xbf16>
    %c0_5 = arith.constant 0 : index
    %c0_6 = arith.constant 0 : index
    %c0_7 = arith.constant 0 : index
    %4 = vector.load %arg10[%c0_5, %c0_6, %c0_7] : memref<10x10x32xbf16, #tpu.memory_space<vmem>>, vector<10x10x32xbf16>
    tpu.vector_store %arg10[%c0_5, %c0_6, %c0_7], %3 {strides = array<i32>} : memref<10x10x32xbf16, #tpu.memory_space<vmem>>, vector<10x10x32xbf16>,
    %c0_8 = arith.constant 0 : index
    %c0_9 = arith.constant 0 : index
    %c0_10 = arith.constant 0 : index
    %c0_11 = arith.constant 0 : index
    %5 = vector.load %arg1[%c0_8, %c0_9, %c0_10, %c0_11] : memref<1x8x8x32xf32, #tpu.memory_space<vmem>>, vector<1x8x8x32xf32>
    %6 = vector.shape_cast %5 : vector<1x8x8x32xf32> to vector<8x8x32xf32>
    %7 = arith.truncf %6 : vector<8x8x32xf32> to vector<8x8x32xbf16>
    %c1 = arith.constant 1 : index
    %c1_12 = arith.constant 1 : index
    %c0_13 = arith.constant 0 : index
    %8 = vector.load %arg10[%c1, %c1_12, %c0_13] : memref<10x10x32xbf16, #tpu.memory_space<vmem>>, vector<8x8x32xbf16>
    tpu.vector_store %arg10[%c1, %c1_12, %c0_13], %7 {strides = array<i32>} : memref<10x10x32xbf16, #tpu.memory_space<vmem>>, vector<8x8x32xbf16>,
    %cst_14 = arith.constant 0.000000e+00 : bf16
    %9 = vector.broadcast %cst_14 : bf16 to vector<2x16x12x49xbf16>
    %c0_15 = arith.constant 0 : index
    %c0_16 = arith.constant 0 : index
    %c0_17 = arith.constant 0 : index
    %c0_18 = arith.constant 0 : index
    %10 = vector.load %arg11[%c0_15, %c0_16, %c0_17, %c0_18] : memref<2x16x12x49xbf16, #tpu.memory_space<vmem>>, vector<2x16x12x49xbf16>
    tpu.vector_store %arg11[%c0_15, %c0_16, %c0_17, %c0_18], %9 {strides = array<i32>} : memref<2x16x12x49xbf16, #tpu.memory_space<vmem>>, vector<2x16x12x49xbf16>,
    %c0_19 = arith.constant 0 : index
    %c0_20 = arith.constant 0 : index
    %c0_21 = arith.constant 0 : index
    %11 = vector.load %arg10[%c0_19, %c0_20, %c0_21] : memref<10x10x32xbf16, #tpu.memory_space<vmem>>, vector<8x8x32xbf16>
    %12 = vector.shape_cast %11 : vector<8x8x32xbf16> to vector<64x32xbf16>
    %c0_22 = arith.constant 0 : index
    %c0_23 = arith.constant 0 : index
    %13 = vector.load %arg12[%c0_22, %c0_23] : memref<64x128xbf16, #tpu.memory_space<vmem>>, vector<64x32xbf16>
    tpu.vector_store %arg12[%c0_22, %c0_23], %12 {strides = array<i32>} : memref<64x128xbf16, #tpu.memory_space<vmem>>, vector<64x32xbf16>,
    %c0_24 = arith.constant 0 : index
    %c1_25 = arith.constant 1 : index
    %c0_26 = arith.constant 0 : index
    %14 = vector.load %arg10[%c0_24, %c1_25, %c0_26] : memref<10x10x32xbf16, #tpu.memory_space<vmem>>, vector<8x8x32xbf16>
    %15 = vector.shape_cast %14 : vector<8x8x32xbf16> to vector<64x32xbf16>
    %c0_27 = arith.constant 0 : index
    %c32 = arith.constant 32 : index
    %16 = vector.load %arg12[%c0_27, %c32] : memref<64x128xbf16, #tpu.memory_space<vmem>>, vector<64x32xbf16>
    tpu.vector_store %arg12[%c0_27, %c32], %15 {strides = array<i32>} : memref<64x128xbf16, #tpu.memory_space<vmem>>, vector<64x32xbf16>,
    %c1_28 = arith.constant 1 : index
    %c0_29 = arith.constant 0 : index
    %c0_30 = arith.constant 0 : index
    %17 = vector.load %arg10[%c1_28, %c0_29, %c0_30] : memref<10x10x32xbf16, #tpu.memory_space<vmem>>, vector<8x8x32xbf16>
    %18 = vector.shape_cast %17 : vector<8x8x32xbf16> to vector<64x32xbf16>
    %c0_31 = arith.constant 0 : index
    %c64 = arith.constant 64 : index
    %19 = vector.load %arg12[%c0_31, %c64] : memref<64x128xbf16, #tpu.memory_space<vmem>>, vector<64x32xbf16>
    tpu.vector_store %arg12[%c0_31, %c64], %18 {strides = array<i32>} : memref<64x128xbf16, #tpu.memory_space<vmem>>, vector<64x32xbf16>,
    %c1_32 = arith.constant 1 : index
    %c1_33 = arith.constant 1 : index
    %c0_34 = arith.constant 0 : index
    %20 = vector.load %arg10[%c1_32, %c1_33, %c0_34] : memref<10x10x32xbf16, #tpu.memory_space<vmem>>, vector<8x8x32xbf16>
    %21 = vector.shape_cast %20 : vector<8x8x32xbf16> to vector<64x32xbf16>
    %c0_35 = arith.constant 0 : index
    %c96 = arith.constant 96 : index
    %22 = vector.load %arg12[%c0_35, %c96] : memref<64x128xbf16, #tpu.memory_space<vmem>>, vector<64x32xbf16>
    tpu.vector_store %arg12[%c0_35, %c96], %21 {strides = array<i32>} : memref<64x128xbf16, #tpu.memory_space<vmem>>, vector<64x32xbf16>,
    %c0_36 = arith.constant 0 : index
    %c0_37 = arith.constant 0 : index
    %23 = vector.load %arg12[%c0_36, %c0_37] : memref<64x128xbf16, #tpu.memory_space<vmem>>, vector<64x128xbf16>
    %c0_38 = arith.constant 0 : index
    %c0_39 = arith.constant 0 : index
    %c0_40 = arith.constant 0 : index
    %24 = vector.load %arg3[%c0_38, %c0_39, %c0_40] : memref<4x128x32xbf16, #tpu.memory_space<vmem>>, vector<1x128x32xbf16>
    %25 = vector.shape_cast %24 : vector<1x128x32xbf16> to vector<128x32xbf16>
    %cst_41 = arith.constant dense<0.000000e+00> : vector<64x32xf32>
    %26 = tpu.matmul %23, %25, %cst_41 {dimension_numbers = #tpu.dot_dimension_numbers<[1], [0], [0], [1], [0, 0, 1, 1], [], []>} : vector<64x128xbf16>, vector<128x32xbf16>, vector<64x32xf32> -> vector<64x32xf32>
    %27 = vector.broadcast %0 : vector<1x32xf32> to vector<64x32xf32>
    %28 = arith.addf %26, %27 : vector<64x32xf32>
    %29 = vector.shape_cast %28 : vector<64x32xf32> to vector<8x8x32xf32>
    %c1_42 = arith.constant 1 : index
    %c0_43 = arith.constant 0 : index
    %c0_44 = arith.constant 0 : index
    %30 = vector.load %arg10[%c1_42, %c0_43, %c0_44] : memref<10x10x32xbf16, #tpu.memory_space<vmem>>, vector<8x8x32xbf16>
    %31 = vector.shape_cast %30 : vector<8x8x32xbf16> to vector<64x32xbf16>
    %c0_45 = arith.constant 0 : index
    %c0_46 = arith.constant 0 : index
    %32 = vector.load %arg12[%c0_45, %c0_46] : memref<64x128xbf16, #tpu.memory_space<vmem>>, vector<64x32xbf16>
    tpu.vector_store %arg12[%c0_45, %c0_46], %31 {strides = array<i32>} : memref<64x128xbf16, #tpu.memory_space<vmem>>, vector<64x32xbf16>,
    %c1_47 = arith.constant 1 : index
    %c1_48 = arith.constant 1 : index
    %c0_49 = arith.constant 0 : index
    %33 = vector.load %arg10[%c1_47, %c1_48, %c0_49] : memref<10x10x32xbf16, #tpu.memory_space<vmem>>, vector<8x8x32xbf16>
    %34 = vector.shape_cast %33 : vector<8x8x32xbf16> to vector<64x32xbf16>
    %c0_50 = arith.constant 0 : index
    %c32_51 = arith.constant 32 : index
    %35 = vector.load %arg12[%c0_50, %c32_51] : memref<64x128xbf16, #tpu.memory_space<vmem>>, vector<64x32xbf16>
    tpu.vector_store %arg12[%c0_50, %c32_51], %34 {strides = array<i32>} : memref<64x128xbf16, #tpu.memory_space<vmem>>, vector<64x32xbf16>,
    %c2 = arith.constant 2 : index
    %c0_52 = arith.constant 0 : index
    %c0_53 = arith.constant 0 : index
    %36 = vector.load %arg10[%c2, %c0_52, %c0_53] : memref<10x10x32xbf16, #tpu.memory_space<vmem>>, vector<8x8x32xbf16>
    %37 = vector.shape_cast %36 : vector<8x8x32xbf16> to vector<64x32xbf16>
    %c0_54 = arith.constant 0 : index
    %c64_55 = arith.constant 64 : index
    %38 = vector.load %arg12[%c0_54, %c64_55] : memref<64x128xbf16, #tpu.memory_space<vmem>>, vector<64x32xbf16>
    tpu.vector_store %arg12[%c0_54, %c64_55], %37 {strides = array<i32>} : memref<64x128xbf16, #tpu.memory_space<vmem>>, vector<64x32xbf16>,
    %c2_56 = arith.constant 2 : index
    %c1_57 = arith.constant 1 : index
    %c0_58 = arith.constant 0 : index
    %39 = vector.load %arg10[%c2_56, %c1_57, %c0_58] : memref<10x10x32xbf16, #tpu.memory_space<vmem>>, vector<8x8x32xbf16>
    %40 = vector.shape_cast %39 : vector<8x8x32xbf16> to vector<64x32xbf16>
    %c0_59 = arith.constant 0 : index
    %c96_60 = arith.constant 96 : index
    %41 = vector.load %arg12[%c0_59, %c96_60] : memref<64x128xbf16, #tpu.memory_space<vmem>>, vector<64x32xbf16>
    tpu.vector_store %arg12[%c0_59, %c96_60], %40 {strides = array<i32>} : memref<64x128xbf16, #tpu.memory_space<vmem>>, vector<64x32xbf16>,
    %c0_61 = arith.constant 0 : index
    %c0_62 = arith.constant 0 : index
    %42 = vector.load %arg12[%c0_61, %c0_62] : memref<64x128xbf16, #tpu.memory_space<vmem>>, vector<64x128xbf16>
    %c2_63 = arith.constant 2 : index
    %c0_64 = arith.constant 0 : index
    %c0_65 = arith.constant 0 : index
    %43 = vector.load %arg3[%c2_63, %c0_64, %c0_65] : memref<4x128x32xbf16, #tpu.memory_space<vmem>>, vector<1x128x32xbf16>
    %44 = vector.shape_cast %43 : vector<1x128x32xbf16> to vector<128x32xbf16>
    %cst_66 = arith.constant dense<0.000000e+00> : vector<64x32xf32>
    %45 = tpu.matmul %42, %44, %cst_66 {dimension_numbers = #tpu.dot_dimension_numbers<[1], [0], [0], [1], [0, 0, 1, 1], [], []>} : vector<64x128xbf16>, vector<128x32xbf16>, vector<64x32xf32> -> vector<64x32xf32>
    %46 = vector.broadcast %0 : vector<1x32xf32> to vector<64x32xf32>
    %47 = arith.addf %45, %46 : vector<64x32xf32>
    %48 = vector.shape_cast %47 : vector<64x32xf32> to vector<8x8x32xf32>
    %49 = vector.shape_cast %29 : vector<8x8x32xf32> to vector<8x1x8x32xf32>
    %50 = vector.shape_cast %48 : vector<8x8x32xf32> to vector<8x1x8x32xf32>
    %51 = tpu.concatenate %49, %50 in 1 : vector<8x1x8x32xf32>, vector<8x1x8x32xf32> -> vector<8x2x8x32xf32>
    %52 = vector.shape_cast %51 : vector<8x2x8x32xf32> to vector<16x8x32xf32>
    %cst_67 = arith.constant 0.000000e+00 : f32
    %53 = vector.broadcast %cst_67 : f32 to vector<3x8x32xf32>
    %54 = tpu.concatenate %53, %52, %53 in 0 : vector<3x8x32xf32>, vector<16x8x32xf32>, vector<3x8x32xf32> -> vector<22x8x32xf32>
    %55 = vector.extract_strided_slice %54 {offsets = [0, 0, 0], sizes = [16, 8, 32], strides = [1, 1, 1]} : vector<22x8x32xf32> to vector<16x8x32xf32>
    %56 = vector.shape_cast %55 : vector<16x8x32xf32> to vector<128x32xf32>
    %57 = arith.truncf %56 : vector<128x32xf32> to vector<128x32xbf16>
    %c0_68 = arith.constant 0 : index
    %c0_69 = arith.constant 0 : index
    %58 = vector.load %arg13[%c0_68, %c0_69] : memref<128x224xbf16, #tpu.memory_space<vmem>>, vector<128x32xbf16>
    tpu.vector_store %arg13[%c0_68, %c0_69], %57 {strides = array<i32>} : memref<128x224xbf16, #tpu.memory_space<vmem>>, vector<128x32xbf16>,
    %59 = vector.extract_strided_slice %54 {offsets = [1, 0, 0], sizes = [16, 8, 32], strides = [1, 1, 1]} : vector<22x8x32xf32> to vector<16x8x32xf32>
    %60 = vector.shape_cast %59 : vector<16x8x32xf32> to vector<128x32xf32>
    %61 = arith.truncf %60 : vector<128x32xf32> to vector<128x32xbf16>
    %c0_70 = arith.constant 0 : index
    %c32_71 = arith.constant 32 : index
    %62 = vector.load %arg13[%c0_70, %c32_71] : memref<128x224xbf16, #tpu.memory_space<vmem>>, vector<128x32xbf16>
    tpu.vector_store %arg13[%c0_70, %c32_71], %61 {strides = array<i32>} : memref<128x224xbf16, #tpu.memory_space<vmem>>, vector<128x32xbf16>,
    %63 = vector.extract_strided_slice %54 {offsets = [2, 0, 0], sizes = [16, 8, 32], strides = [1, 1, 1]} : vector<22x8x32xf32> to vector<16x8x32xf32>
    %64 = vector.shape_cast %63 : vector<16x8x32xf32> to vector<128x32xf32>
    %65 = arith.truncf %64 : vector<128x32xf32> to vector<128x32xbf16>
    %c0_72 = arith.constant 0 : index
    %c64_73 = arith.constant 64 : index
    %66 = vector.load %arg13[%c0_72, %c64_73] : memref<128x224xbf16, #tpu.memory_space<vmem>>, vector<128x32xbf16>
    tpu.vector_store %arg13[%c0_72, %c64_73], %65 {strides = array<i32>} : memref<128x224xbf16, #tpu.memory_space<vmem>>, vector<128x32xbf16>,
    %67 = vector.extract_strided_slice %54 {offsets = [3, 0, 0], sizes = [16, 8, 32], strides = [1, 1, 1]} : vector<22x8x32xf32> to vector<16x8x32xf32>
    %68 = vector.shape_cast %67 : vector<16x8x32xf32> to vector<128x32xf32>
    %69 = arith.truncf %68 : vector<128x32xf32> to vector<128x32xbf16>
    %c0_74 = arith.constant 0 : index
    %c96_75 = arith.constant 96 : index
    %70 = vector.load %arg13[%c0_74, %c96_75] : memref<128x224xbf16, #tpu.memory_space<vmem>>, vector<128x32xbf16>
    tpu.vector_store %arg13[%c0_74, %c96_75], %69 {strides = array<i32>} : memref<128x224xbf16, #tpu.memory_space<vmem>>, vector<128x32xbf16>,
    %71 = vector.extract_strided_slice %54 {offsets = [4, 0, 0], sizes = [16, 8, 32], strides = [1, 1, 1]} : vector<22x8x32xf32> to vector<16x8x32xf32>
    %72 = vector.shape_cast %71 : vector<16x8x32xf32> to vector<128x32xf32>
    %73 = arith.truncf %72 : vector<128x32xf32> to vector<128x32xbf16>
    %c0_76 = arith.constant 0 : index
    %c128 = arith.constant 128 : index
    %74 = vector.load %arg13[%c0_76, %c128] : memref<128x224xbf16, #tpu.memory_space<vmem>>, vector<128x32xbf16>
    tpu.vector_store %arg13[%c0_76, %c128], %73 {strides = array<i32>} : memref<128x224xbf16, #tpu.memory_space<vmem>>, vector<128x32xbf16>,
    %75 = vector.extract_strided_slice %54 {offsets = [5, 0, 0], sizes = [16, 8, 32], strides = [1, 1, 1]} : vector<22x8x32xf32> to vector<16x8x32xf32>
    %76 = vector.shape_cast %75 : vector<16x8x32xf32> to vector<128x32xf32>
    %77 = arith.truncf %76 : vector<128x32xf32> to vector<128x32xbf16>
    %c0_77 = arith.constant 0 : index
    %c160 = arith.constant 160 : index
    %78 = vector.load %arg13[%c0_77, %c160] : memref<128x224xbf16, #tpu.memory_space<vmem>>, vector<128x32xbf16>
    tpu.vector_store %arg13[%c0_77, %c160], %77 {strides = array<i32>} : memref<128x224xbf16, #tpu.memory_space<vmem>>, vector<128x32xbf16>,
    %79 = vector.extract_strided_slice %54 {offsets = [6, 0, 0], sizes = [16, 8, 32], strides = [1, 1, 1]} : vector<22x8x32xf32> to vector<16x8x32xf32>
    %80 = vector.shape_cast %79 : vector<16x8x32xf32> to vector<128x32xf32>
    %81 = arith.truncf %80 : vector<128x32xf32> to vector<128x32xbf16>
    %c0_78 = arith.constant 0 : index
    %c192 = arith.constant 192 : index
    %82 = vector.load %arg13[%c0_78, %c192] : memref<128x224xbf16, #tpu.memory_space<vmem>>, vector<128x32xbf16>
    tpu.vector_store %arg13[%c0_78, %c192], %81 {strides = array<i32>} : memref<128x224xbf16, #tpu.memory_space<vmem>>, vector<128x32xbf16>,
    %c0_79 = arith.constant 0 : index
    %c0_80 = arith.constant 0 : index
    %83 = vector.load %arg13[%c0_79, %c0_80] : memref<128x224xbf16, #tpu.memory_space<vmem>>, vector<128x224xbf16>
    %c0_81 = arith.constant 0 : index
    %c0_82 = arith.constant 0 : index
    %84 = vector.load %arg4[%c0_81, %c0_82] : memref<224x49xbf16, #tpu.memory_space<vmem>>, vector<224x49xbf16>
    %cst_83 = arith.constant dense<0.000000e+00> : vector<128x49xf32>
    %85 = tpu.matmul %83, %84, %cst_83 {dimension_numbers = #tpu.dot_dimension_numbers<[1], [0], [0], [1], [0, 0, 1, 1], [], []>} : vector<128x224xbf16>, vector<224x49xbf16>, vector<128x49xf32> -> vector<128x49xf32>
    %86 = vector.broadcast %1 : vector<1x49xf32> to vector<128x49xf32>
    %87 = arith.addf %85, %86 : vector<128x49xf32>
    %88 = vector.shape_cast %87 : vector<128x49xf32> to vector<16x8x49xf32>
    %89 = arith.truncf %88 : vector<16x8x49xf32> to vector<16x8x49xbf16>
    %c0_84 = arith.constant 0 : index
    %c0_85 = arith.constant 0 : index
    %c2_86 = arith.constant 2 : index
    %c0_87 = arith.constant 0 : index
    %90 = vector.load %arg11[%c0_84, %c0_85, %c2_86, %c0_87] : memref<2x16x12x49xbf16, #tpu.memory_space<vmem>>, vector<1x16x8x49xbf16>
    %91 = vector.shape_cast %90 : vector<1x16x8x49xbf16> to vector<16x8x49xbf16>
    %92 = vector.shape_cast %89 : vector<16x8x49xbf16> to vector<1x16x8x49xbf16>
    tpu.vector_store %arg11[%c0_84, %c0_85, %c2_86, %c0_87], %92 {strides = array<i32>} : memref<2x16x12x49xbf16, #tpu.memory_space<vmem>>, vector<1x16x8x49xbf16>,
    %c0_88 = arith.constant 0 : index
    %c1_89 = arith.constant 1 : index
    %c0_90 = arith.constant 0 : index
    %93 = vector.load %arg10[%c0_88, %c1_89, %c0_90] : memref<10x10x32xbf16, #tpu.memory_space<vmem>>, vector<8x8x32xbf16>
    %94 = vector.shape_cast %93 : vector<8x8x32xbf16> to vector<64x32xbf16>
    %c0_91 = arith.constant 0 : index
    %c0_92 = arith.constant 0 : index
    %95 = vector.load %arg12[%c0_91, %c0_92] : memref<64x128xbf16, #tpu.memory_space<vmem>>, vector<64x32xbf16>
    tpu.vector_store %arg12[%c0_91, %c0_92], %94 {strides = array<i32>} : memref<64x128xbf16, #tpu.memory_space<vmem>>, vector<64x32xbf16>,
    %c0_93 = arith.constant 0 : index
    %c2_94 = arith.constant 2 : index
    %c0_95 = arith.constant 0 : index
    %96 = vector.load %arg10[%c0_93, %c2_94, %c0_95] : memref<10x10x32xbf16, #tpu.memory_space<vmem>>, vector<8x8x32xbf16>
    %97 = vector.shape_cast %96 : vector<8x8x32xbf16> to vector<64x32xbf16>
    %c0_96 = arith.constant 0 : index
    %c32_97 = arith.constant 32 : index
    %98 = vector.load %arg12[%c0_96, %c32_97] : memref<64x128xbf16, #tpu.memory_space<vmem>>, vector<64x32xbf16>
    tpu.vector_store %arg12[%c0_96, %c32_97], %97 {strides = array<i32>} : memref<64x128xbf16, #tpu.memory_space<vmem>>, vector<64x32xbf16>,
    %c1_98 = arith.constant 1 : index
    %c1_99 = arith.constant 1 : index
    %c0_100 = arith.constant 0 : index
    %99 = vector.load %arg10[%c1_98, %c1_99, %c0_100] : memref<10x10x32xbf16, #tpu.memory_space<vmem>>, vector<8x8x32xbf16>
    %100 = vector.shape_cast %99 : vector<8x8x32xbf16> to vector<64x32xbf16>
    %c0_101 = arith.constant 0 : index
    %c64_102 = arith.constant 64 : index
    %101 = vector.load %arg12[%c0_101, %c64_102] : memref<64x128xbf16, #tpu.memory_space<vmem>>, vector<64x32xbf16>
    tpu.vector_store %arg12[%c0_101, %c64_102], %100 {strides = array<i32>} : memref<64x128xbf16, #tpu.memory_space<vmem>>, vector<64x32xbf16>,
    %c1_103 = arith.constant 1 : index
    %c2_104 = arith.constant 2 : index
    %c0_105 = arith.constant 0 : index
    %102 = vector.load %arg10[%c1_103, %c2_104, %c0_105] : memref<10x10x32xbf16, #tpu.memory_space<vmem>>, vector<8x8x32xbf16>
    %103 = vector.shape_cast %102 : vector<8x8x32xbf16> to vector<64x32xbf16>
    %c0_106 = arith.constant 0 : index
    %c96_107 = arith.constant 96 : index
    %104 = vector.load %arg12[%c0_106, %c96_107] : memref<64x128xbf16, #tpu.memory_space<vmem>>, vector<64x32xbf16>
    tpu.vector_store %arg12[%c0_106, %c96_107], %103 {strides = array<i32>} : memref<64x128xbf16, #tpu.memory_space<vmem>>, vector<64x32xbf16>,
    %c0_108 = arith.constant 0 : index
    %c0_109 = arith.constant 0 : index
    %105 = vector.load %arg12[%c0_108, %c0_109] : memref<64x128xbf16, #tpu.memory_space<vmem>>, vector<64x128xbf16>
    %c1_110 = arith.constant 1 : index
    %c0_111 = arith.constant 0 : index
    %c0_112 = arith.constant 0 : index
    %106 = vector.load %arg3[%c1_110, %c0_111, %c0_112] : memref<4x128x32xbf16, #tpu.memory_space<vmem>>, vector<1x128x32xbf16>
    %107 = vector.shape_cast %106 : vector<1x128x32xbf16> to vector<128x32xbf16>
    %cst_113 = arith.constant dense<0.000000e+00> : vector<64x32xf32>
    %108 = tpu.matmul %105, %107, %cst_113 {dimension_numbers = #tpu.dot_dimension_numbers<[1], [0], [0], [1], [0, 0, 1, 1], [], []>} : vector<64x128xbf16>, vector<128x32xbf16>, vector<64x32xf32> -> vector<64x32xf32>
    %109 = vector.broadcast %0 : vector<1x32xf32> to vector<64x32xf32>
    %110 = arith.addf %108, %109 : vector<64x32xf32>
    %111 = vector.shape_cast %110 : vector<64x32xf32> to vector<8x8x32xf32>
    %c1_114 = arith.constant 1 : index
    %c1_115 = arith.constant 1 : index
    %c0_116 = arith.constant 0 : index
    %112 = vector.load %arg10[%c1_114, %c1_115, %c0_116] : memref<10x10x32xbf16, #tpu.memory_space<vmem>>, vector<8x8x32xbf16>
    %113 = vector.shape_cast %112 : vector<8x8x32xbf16> to vector<64x32xbf16>
    %c0_117 = arith.constant 0 : index
    %c0_118 = arith.constant 0 : index
    %114 = vector.load %arg12[%c0_117, %c0_118] : memref<64x128xbf16, #tpu.memory_space<vmem>>, vector<64x32xbf16>
    tpu.vector_store %arg12[%c0_117, %c0_118], %113 {strides = array<i32>} : memref<64x128xbf16, #tpu.memory_space<vmem>>, vector<64x32xbf16>,
    %c1_119 = arith.constant 1 : index
    %c2_120 = arith.constant 2 : index
    %c0_121 = arith.constant 0 : index
    %115 = vector.load %arg10[%c1_119, %c2_120, %c0_121] : memref<10x10x32xbf16, #tpu.memory_space<vmem>>, vector<8x8x32xbf16>
    %116 = vector.shape_cast %115 : vector<8x8x32xbf16> to vector<64x32xbf16>
    %c0_122 = arith.constant 0 : index
    %c32_123 = arith.constant 32 : index
    %117 = vector.load %arg12[%c0_122, %c32_123] : memref<64x128xbf16, #tpu.memory_space<vmem>>, vector<64x32xbf16>
    tpu.vector_store %arg12[%c0_122, %c32_123], %116 {strides = array<i32>} : memref<64x128xbf16, #tpu.memory_space<vmem>>, vector<64x32xbf16>,
    %c2_124 = arith.constant 2 : index
    %c1_125 = arith.constant 1 : index
    %c0_126 = arith.constant 0 : index
    %118 = vector.load %arg10[%c2_124, %c1_125, %c0_126] : memref<10x10x32xbf16, #tpu.memory_space<vmem>>, vector<8x8x32xbf16>
    %119 = vector.shape_cast %118 : vector<8x8x32xbf16> to vector<64x32xbf16>
    %c0_127 = arith.constant 0 : index
    %c64_128 = arith.constant 64 : index
    %120 = vector.load %arg12[%c0_127, %c64_128] : memref<64x128xbf16, #tpu.memory_space<vmem>>, vector<64x32xbf16>
    tpu.vector_store %arg12[%c0_127, %c64_128], %119 {strides = array<i32>} : memref<64x128xbf16, #tpu.memory_space<vmem>>, vector<64x32xbf16>,
    %c2_129 = arith.constant 2 : index
    %c2_130 = arith.constant 2 : index
    %c0_131 = arith.constant 0 : index
    %121 = vector.load %arg10[%c2_129, %c2_130, %c0_131] : memref<10x10x32xbf16, #tpu.memory_space<vmem>>, vector<8x8x32xbf16>
    %122 = vector.shape_cast %121 : vector<8x8x32xbf16> to vector<64x32xbf16>
    %c0_132 = arith.constant 0 : index
    %c96_133 = arith.constant 96 : index
    %123 = vector.load %arg12[%c0_132, %c96_133] : memref<64x128xbf16, #tpu.memory_space<vmem>>, vector<64x32xbf16>
    tpu.vector_store %arg12[%c0_132, %c96_133], %122 {strides = array<i32>} : memref<64x128xbf16, #tpu.memory_space<vmem>>, vector<64x32xbf16>,
    %c0_134 = arith.constant 0 : index
    %c0_135 = arith.constant 0 : index
    %124 = vector.load %arg12[%c0_134, %c0_135] : memref<64x128xbf16, #tpu.memory_space<vmem>>, vector<64x128xbf16>
    %c3 = arith.constant 3 : index
    %c0_136 = arith.constant 0 : index
    %c0_137 = arith.constant 0 : index
    %125 = vector.load %arg3[%c3, %c0_136, %c0_137] : memref<4x128x32xbf16, #tpu.memory_space<vmem>>, vector<1x128x32xbf16>
    %126 = vector.shape_cast %125 : vector<1x128x32xbf16> to vector<128x32xbf16>
    %cst_138 = arith.constant dense<0.000000e+00> : vector<64x32xf32>
    %127 = tpu.matmul %124, %126, %cst_138 {dimension_numbers = #tpu.dot_dimension_numbers<[1], [0], [0], [1], [0, 0, 1, 1], [], []>} : vector<64x128xbf16>, vector<128x32xbf16>, vector<64x32xf32> -> vector<64x32xf32>
    %128 = vector.broadcast %0 : vector<1x32xf32> to vector<64x32xf32>
    %129 = arith.addf %127, %128 : vector<64x32xf32>
    %130 = vector.shape_cast %129 : vector<64x32xf32> to vector<8x8x32xf32>
    %131 = vector.shape_cast %111 : vector<8x8x32xf32> to vector<8x1x8x32xf32>
    %132 = vector.shape_cast %130 : vector<8x8x32xf32> to vector<8x1x8x32xf32>
    %133 = tpu.concatenate %131, %132 in 1 : vector<8x1x8x32xf32>, vector<8x1x8x32xf32> -> vector<8x2x8x32xf32>
    %134 = vector.shape_cast %133 : vector<8x2x8x32xf32> to vector<16x8x32xf32>
    %cst_139 = arith.constant 0.000000e+00 : f32
    %135 = vector.broadcast %cst_139 : f32 to vector<3x8x32xf32>
    %136 = tpu.concatenate %135, %134, %135 in 0 : vector<3x8x32xf32>, vector<16x8x32xf32>, vector<3x8x32xf32> -> vector<22x8x32xf32>
    %137 = vector.extract_strided_slice %136 {offsets = [0, 0, 0], sizes = [16, 8, 32], strides = [1, 1, 1]} : vector<22x8x32xf32> to vector<16x8x32xf32>
    %138 = vector.shape_cast %137 : vector<16x8x32xf32> to vector<128x32xf32>
    %139 = arith.truncf %138 : vector<128x32xf32> to vector<128x32xbf16>
    %c0_140 = arith.constant 0 : index
    %c0_141 = arith.constant 0 : index
    %140 = vector.load %arg13[%c0_140, %c0_141] : memref<128x224xbf16, #tpu.memory_space<vmem>>, vector<128x32xbf16>
    tpu.vector_store %arg13[%c0_140, %c0_141], %139 {strides = array<i32>} : memref<128x224xbf16, #tpu.memory_space<vmem>>, vector<128x32xbf16>,
    %141 = vector.extract_strided_slice %136 {offsets = [1, 0, 0], sizes = [16, 8, 32], strides = [1, 1, 1]} : vector<22x8x32xf32> to vector<16x8x32xf32>
    %142 = vector.shape_cast %141 : vector<16x8x32xf32> to vector<128x32xf32>
    %143 = arith.truncf %142 : vector<128x32xf32> to vector<128x32xbf16>
    %c0_142 = arith.constant 0 : index
    %c32_143 = arith.constant 32 : index
    %144 = vector.load %arg13[%c0_142, %c32_143] : memref<128x224xbf16, #tpu.memory_space<vmem>>, vector<128x32xbf16>
    tpu.vector_store %arg13[%c0_142, %c32_143], %143 {strides = array<i32>} : memref<128x224xbf16, #tpu.memory_space<vmem>>, vector<128x32xbf16>,
    %145 = vector.extract_strided_slice %136 {offsets = [2, 0, 0], sizes = [16, 8, 32], strides = [1, 1, 1]} : vector<22x8x32xf32> to vector<16x8x32xf32>
    %146 = vector.shape_cast %145 : vector<16x8x32xf32> to vector<128x32xf32>
    %147 = arith.truncf %146 : vector<128x32xf32> to vector<128x32xbf16>
    %c0_144 = arith.constant 0 : index
    %c64_145 = arith.constant 64 : index
    %148 = vector.load %arg13[%c0_144, %c64_145] : memref<128x224xbf16, #tpu.memory_space<vmem>>, vector<128x32xbf16>
    tpu.vector_store %arg13[%c0_144, %c64_145], %147 {strides = array<i32>} : memref<128x224xbf16, #tpu.memory_space<vmem>>, vector<128x32xbf16>,
    %149 = vector.extract_strided_slice %136 {offsets = [3, 0, 0], sizes = [16, 8, 32], strides = [1, 1, 1]} : vector<22x8x32xf32> to vector<16x8x32xf32>
    %150 = vector.shape_cast %149 : vector<16x8x32xf32> to vector<128x32xf32>
    %151 = arith.truncf %150 : vector<128x32xf32> to vector<128x32xbf16>
    %c0_146 = arith.constant 0 : index
    %c96_147 = arith.constant 96 : index
    %152 = vector.load %arg13[%c0_146, %c96_147] : memref<128x224xbf16, #tpu.memory_space<vmem>>, vector<128x32xbf16>
    tpu.vector_store %arg13[%c0_146, %c96_147], %151 {strides = array<i32>} : memref<128x224xbf16, #tpu.memory_space<vmem>>, vector<128x32xbf16>,
    %153 = vector.extract_strided_slice %136 {offsets = [4, 0, 0], sizes = [16, 8, 32], strides = [1, 1, 1]} : vector<22x8x32xf32> to vector<16x8x32xf32>
    %154 = vector.shape_cast %153 : vector<16x8x32xf32> to vector<128x32xf32>
    %155 = arith.truncf %154 : vector<128x32xf32> to vector<128x32xbf16>
    %c0_148 = arith.constant 0 : index
    %c128_149 = arith.constant 128 : index
    %156 = vector.load %arg13[%c0_148, %c128_149] : memref<128x224xbf16, #tpu.memory_space<vmem>>, vector<128x32xbf16>
    tpu.vector_store %arg13[%c0_148, %c128_149], %155 {strides = array<i32>} : memref<128x224xbf16, #tpu.memory_space<vmem>>, vector<128x32xbf16>,
    %157 = vector.extract_strided_slice %136 {offsets = [5, 0, 0], sizes = [16, 8, 32], strides = [1, 1, 1]} : vector<22x8x32xf32> to vector<16x8x32xf32>
    %158 = vector.shape_cast %157 : vector<16x8x32xf32> to vector<128x32xf32>
    %159 = arith.truncf %158 : vector<128x32xf32> to vector<128x32xbf16>
    %c0_150 = arith.constant 0 : index
    %c160_151 = arith.constant 160 : index
    %160 = vector.load %arg13[%c0_150, %c160_151] : memref<128x224xbf16, #tpu.memory_space<vmem>>, vector<128x32xbf16>
    tpu.vector_store %arg13[%c0_150, %c160_151], %159 {strides = array<i32>} : memref<128x224xbf16, #tpu.memory_space<vmem>>, vector<128x32xbf16>,
    %161 = vector.extract_strided_slice %136 {offsets = [6, 0, 0], sizes = [16, 8, 32], strides = [1, 1, 1]} : vector<22x8x32xf32> to vector<16x8x32xf32>
    %162 = vector.shape_cast %161 : vector<16x8x32xf32> to vector<128x32xf32>
    %163 = arith.truncf %162 : vector<128x32xf32> to vector<128x32xbf16>
    %c0_152 = arith.constant 0 : index
    %c192_153 = arith.constant 192 : index
    %164 = vector.load %arg13[%c0_152, %c192_153] : memref<128x224xbf16, #tpu.memory_space<vmem>>, vector<128x32xbf16>
    tpu.vector_store %arg13[%c0_152, %c192_153], %163 {strides = array<i32>} : memref<128x224xbf16, #tpu.memory_space<vmem>>, vector<128x32xbf16>,
    %c0_154 = arith.constant 0 : index
    %c0_155 = arith.constant 0 : index
    %165 = vector.load %arg13[%c0_154, %c0_155] : memref<128x224xbf16, #tpu.memory_space<vmem>>, vector<128x224xbf16>
    %c0_156 = arith.constant 0 : index
    %c0_157 = arith.constant 0 : index
    %166 = vector.load %arg4[%c0_156, %c0_157] : memref<224x49xbf16, #tpu.memory_space<vmem>>, vector<224x49xbf16>
    %cst_158 = arith.constant dense<0.000000e+00> : vector<128x49xf32>
    %167 = tpu.matmul %165, %166, %cst_158 {dimension_numbers = #tpu.dot_dimension_numbers<[1], [0], [0], [1], [0, 0, 1, 1], [], []>} : vector<128x224xbf16>, vector<224x49xbf16>, vector<128x49xf32> -> vector<128x49xf32>
    %168 = vector.broadcast %1 : vector<1x49xf32> to vector<128x49xf32>
    %169 = arith.addf %167, %168 : vector<128x49xf32>
    %170 = vector.shape_cast %169 : vector<128x49xf32> to vector<16x8x49xf32>
    %171 = arith.truncf %170 : vector<16x8x49xf32> to vector<16x8x49xbf16>
    %c1_159 = arith.constant 1 : index
    %c0_160 = arith.constant 0 : index
    %c2_161 = arith.constant 2 : index
    %c0_162 = arith.constant 0 : index
    %172 = vector.load %arg11[%c1_159, %c0_160, %c2_161, %c0_162] : memref<2x16x12x49xbf16, #tpu.memory_space<vmem>>, vector<1x16x8x49xbf16>
    %173 = vector.shape_cast %172 : vector<1x16x8x49xbf16> to vector<16x8x49xbf16>
    %174 = vector.shape_cast %171 : vector<16x8x49xbf16> to vector<1x16x8x49xbf16>
    tpu.vector_store %arg11[%c1_159, %c0_160, %c2_161, %c0_162], %174 {strides = array<i32>} : memref<2x16x12x49xbf16, #tpu.memory_space<vmem>>, vector<1x16x8x49xbf16>,
    %c1_163 = arith.constant 1 : index
    %c0_164 = arith.constant 0 : index
    %c0_165 = arith.constant 0 : index
    %c0_166 = arith.constant 0 : index
    %175 = vector.load %arg11[%c1_163, %c0_164, %c0_165, %c0_166] : memref<2x16x12x49xbf16, #tpu.memory_space<vmem>>, vector<1x16x8x49xbf16>
    %176 = vector.shape_cast %175 : vector<1x16x8x49xbf16> to vector<16x8x49xbf16>
    %177 = vector.shape_cast %176 : vector<16x8x49xbf16> to vector<128x49xbf16>
    %c0_167 = arith.constant 0 : index
    %c0_168 = arith.constant 0 : index
    %178 = vector.load %arg14[%c0_167, %c0_168] : memref<128x343xbf16, #tpu.memory_space<vmem>>, vector<128x49xbf16>
    tpu.vector_store %arg14[%c0_167, %c0_168], %177 {strides = array<i32>} : memref<128x343xbf16, #tpu.memory_space<vmem>>, vector<128x49xbf16>,
    %c0_169 = arith.constant 0 : index
    %c0_170 = arith.constant 0 : index
    %c1_171 = arith.constant 1 : index
    %c0_172 = arith.constant 0 : index
    %179 = vector.load %arg11[%c0_169, %c0_170, %c1_171, %c0_172] : memref<2x16x12x49xbf16, #tpu.memory_space<vmem>>, vector<1x16x8x49xbf16>
    %180 = vector.shape_cast %179 : vector<1x16x8x49xbf16> to vector<16x8x49xbf16>
    %181 = vector.shape_cast %180 : vector<16x8x49xbf16> to vector<128x49xbf16>
    %c0_173 = arith.constant 0 : index
    %c49 = arith.constant 49 : index
    %182 = vector.load %arg14[%c0_173, %c49] : memref<128x343xbf16, #tpu.memory_space<vmem>>, vector<128x49xbf16>
    tpu.vector_store %arg14[%c0_173, %c49], %181 {strides = array<i32>} : memref<128x343xbf16, #tpu.memory_space<vmem>>, vector<128x49xbf16>,
    %c1_174 = arith.constant 1 : index
    %c0_175 = arith.constant 0 : index
    %c1_176 = arith.constant 1 : index
    %c0_177 = arith.constant 0 : index
    %183 = vector.load %arg11[%c1_174, %c0_175, %c1_176, %c0_177] : memref<2x16x12x49xbf16, #tpu.memory_space<vmem>>, vector<1x16x8x49xbf16>
    %184 = vector.shape_cast %183 : vector<1x16x8x49xbf16> to vector<16x8x49xbf16>
    %185 = vector.shape_cast %184 : vector<16x8x49xbf16> to vector<128x49xbf16>
    %c0_178 = arith.constant 0 : index
    %c98 = arith.constant 98 : index
    %186 = vector.load %arg14[%c0_178, %c98] : memref<128x343xbf16, #tpu.memory_space<vmem>>, vector<128x49xbf16>
    tpu.vector_store %arg14[%c0_178, %c98], %185 {strides = array<i32>} : memref<128x343xbf16, #tpu.memory_space<vmem>>, vector<128x49xbf16>,
    %c0_179 = arith.constant 0 : index
    %c0_180 = arith.constant 0 : index
    %c2_181 = arith.constant 2 : index
    %c0_182 = arith.constant 0 : index
    %187 = vector.load %arg11[%c0_179, %c0_180, %c2_181, %c0_182] : memref<2x16x12x49xbf16, #tpu.memory_space<vmem>>, vector<1x16x8x49xbf16>
    %188 = vector.shape_cast %187 : vector<1x16x8x49xbf16> to vector<16x8x49xbf16>
    %189 = vector.shape_cast %188 : vector<16x8x49xbf16> to vector<128x49xbf16>
    %c0_183 = arith.constant 0 : index
    %c147 = arith.constant 147 : index
    %190 = vector.load %arg14[%c0_183, %c147] : memref<128x343xbf16, #tpu.memory_space<vmem>>, vector<128x49xbf16>
    tpu.vector_store %arg14[%c0_183, %c147], %189 {strides = array<i32>} : memref<128x343xbf16, #tpu.memory_space<vmem>>, vector<128x49xbf16>,
    %c1_184 = arith.constant 1 : index
    %c0_185 = arith.constant 0 : index
    %c2_186 = arith.constant 2 : index
    %c0_187 = arith.constant 0 : index
    %191 = vector.load %arg11[%c1_184, %c0_185, %c2_186, %c0_187] : memref<2x16x12x49xbf16, #tpu.memory_space<vmem>>, vector<1x16x8x49xbf16>
    %192 = vector.shape_cast %191 : vector<1x16x8x49xbf16> to vector<16x8x49xbf16>
    %193 = vector.shape_cast %192 : vector<16x8x49xbf16> to vector<128x49xbf16>
    %c0_188 = arith.constant 0 : index
    %c196 = arith.constant 196 : index
    %194 = vector.load %arg14[%c0_188, %c196] : memref<128x343xbf16, #tpu.memory_space<vmem>>, vector<128x49xbf16>
    tpu.vector_store %arg14[%c0_188, %c196], %193 {strides = array<i32>} : memref<128x343xbf16, #tpu.memory_space<vmem>>, vector<128x49xbf16>,
    %c0_189 = arith.constant 0 : index
    %c0_190 = arith.constant 0 : index
    %c3_191 = arith.constant 3 : index
    %c0_192 = arith.constant 0 : index
    %195 = vector.load %arg11[%c0_189, %c0_190, %c3_191, %c0_192] : memref<2x16x12x49xbf16, #tpu.memory_space<vmem>>, vector<1x16x8x49xbf16>
    %196 = vector.shape_cast %195 : vector<1x16x8x49xbf16> to vector<16x8x49xbf16>
    %197 = vector.shape_cast %196 : vector<16x8x49xbf16> to vector<128x49xbf16>
    %c0_193 = arith.constant 0 : index
    %c245 = arith.constant 245 : index
    %198 = vector.load %arg14[%c0_193, %c245] : memref<128x343xbf16, #tpu.memory_space<vmem>>, vector<128x49xbf16>
    tpu.vector_store %arg14[%c0_193, %c245], %197 {strides = array<i32>} : memref<128x343xbf16, #tpu.memory_space<vmem>>, vector<128x49xbf16>,
    %c1_194 = arith.constant 1 : index
    %c0_195 = arith.constant 0 : index
    %c3_196 = arith.constant 3 : index
    %c0_197 = arith.constant 0 : index
    %199 = vector.load %arg11[%c1_194, %c0_195, %c3_196, %c0_197] : memref<2x16x12x49xbf16, #tpu.memory_space<vmem>>, vector<1x16x8x49xbf16>
    %200 = vector.shape_cast %199 : vector<1x16x8x49xbf16> to vector<16x8x49xbf16>
    %201 = vector.shape_cast %200 : vector<16x8x49xbf16> to vector<128x49xbf16>
    %c0_198 = arith.constant 0 : index
    %c294 = arith.constant 294 : index
    %202 = vector.load %arg14[%c0_198, %c294] : memref<128x343xbf16, #tpu.memory_space<vmem>>, vector<128x49xbf16>
    tpu.vector_store %arg14[%c0_198, %c294], %201 {strides = array<i32>} : memref<128x343xbf16, #tpu.memory_space<vmem>>, vector<128x49xbf16>,
    %c0_199 = arith.constant 0 : index
    %c0_200 = arith.constant 0 : index
    %203 = vector.load %arg14[%c0_199, %c0_200] : memref<128x343xbf16, #tpu.memory_space<vmem>>, vector<128x343xbf16>
    %c0_201 = arith.constant 0 : index
    %c0_202 = arith.constant 0 : index
    %204 = vector.load %arg5[%c0_201, %c0_202] : memref<343x49xbf16, #tpu.memory_space<vmem>>, vector<343x49xbf16>
    %cst_203 = arith.constant dense<0.000000e+00> : vector<128x49xf32>
    %205 = tpu.matmul %203, %204, %cst_203 {dimension_numbers = #tpu.dot_dimension_numbers<[1], [0], [0], [1], [0, 0, 1, 1], [], []>} : vector<128x343xbf16>, vector<343x49xbf16>, vector<128x49xf32> -> vector<128x49xf32>
    %206 = vector.broadcast %2 : vector<1x49xf32> to vector<128x49xf32>
    %207 = arith.addf %205, %206 : vector<128x49xf32>
    %208 = tpu.transpose %207, [1, 0] : vector<128x49xf32> -> vector<49x128xf32>
    %209 = arith.mulf %208, %208 : vector<49x128xf32>
    %cst_204 = arith.constant 0.000000e+00 : f32
    %210 = vector.broadcast %cst_204 : f32 to vector<49x128xf32>
    %211 = arith.subf %210, %209 : vector<49x128xf32>
    %cst_205 = arith.constant dense<0xFF800000> : vector<128xf32>
    %212 = vector.multi_reduction <maximumf>, %211, %cst_205 [0] : vector<49x128xf32> to vector<128xf32>
    %213 = vector.shape_cast %212 : vector<128xf32> to vector<1x128xf32>
    %214 = vector.broadcast %213 : vector<1x128xf32> to vector<49x128xf32>
    %215 = arith.subf %211, %214 : vector<49x128xf32>
    %216 = math.exp %215 : vector<49x128xf32>
    %cst_206 = arith.constant dense<0.000000e+00> : vector<128xf32>
    %217 = vector.multi_reduction <add>, %216, %cst_206 [0] : vector<49x128xf32> to vector<128xf32>
    %218 = vector.shape_cast %217 : vector<128xf32> to vector<1x128xf32>
    %c0_207 = arith.constant 0 : index
    %c0_208 = arith.constant 0 : index
    %c0_209 = arith.constant 0 : index
    %c0_210 = arith.constant 0 : index
    %c0_211 = arith.constant 0 : index
    %219 = vector.load %arg2[%c0_207, %c0_208, %c0_209, %c0_210, %c0_211] : memref<1x2x2x49x128xf32, #tpu.memory_space<vmem>>, vector<1x1x1x49x128xf32>
    %220 = vector.shape_cast %219 : vector<1x1x1x49x128xf32> to vector<49x128xf32>
    %c0_212 = arith.constant 0 : index
    %c0_213 = arith.constant 0 : index
    %c1_214 = arith.constant 1 : index
    %c0_215 = arith.constant 0 : index
    %c0_216 = arith.constant 0 : index
    %221 = vector.load %arg2[%c0_212, %c0_213, %c1_214, %c0_215, %c0_216] : memref<1x2x2x49x128xf32, #tpu.memory_space<vmem>>, vector<1x1x1x49x128xf32>
    %222 = vector.shape_cast %221 : vector<1x1x1x49x128xf32> to vector<49x128xf32>
    %223 = arith.mulf %216, %220 : vector<49x128xf32>
    %cst_217 = arith.constant dense<0.000000e+00> : vector<128xf32>
    %224 = vector.multi_reduction <add>, %223, %cst_217 [0] : vector<49x128xf32> to vector<128xf32>
    %225 = vector.shape_cast %224 : vector<128xf32> to vector<1x128xf32>
    %226 = arith.mulf %216, %222 : vector<49x128xf32>
    %cst_218 = arith.constant dense<0.000000e+00> : vector<128xf32>
    %227 = vector.multi_reduction <add>, %226, %cst_218 [0] : vector<49x128xf32> to vector<128xf32>
    %228 = vector.shape_cast %227 : vector<128xf32> to vector<1x128xf32>
    %229 = arith.divf %225, %218 : vector<1x128xf32>
    %c0_219 = arith.constant 0 : index
    %c0_220 = arith.constant 0 : index
    %c0_221 = arith.constant 0 : index
    %c0_222 = arith.constant 0 : index
    %230 = vector.load %arg9[%c0_219, %c0_220, %c0_221, %c0_222] : memref<1x2x2x128xf32, #tpu.memory_space<vmem>>, vector<1x1x1x128xf32>
    %231 = vector.shape_cast %230 : vector<1x1x1x128xf32> to vector<1x128xf32>
    %232 = vector.shape_cast %229 : vector<1x128xf32> to vector<1x1x1x128xf32>
    tpu.vector_store %arg9[%c0_219, %c0_220, %c0_221, %c0_222], %232 {strides = array<i32>} : memref<1x2x2x128xf32, #tpu.memory_space<vmem>>, vector<1x1x1x128xf32>,
    %233 = arith.divf %228, %218 : vector<1x128xf32>
    %c0_223 = arith.constant 0 : index
    %c0_224 = arith.constant 0 : index
    %c1_225 = arith.constant 1 : index
    %c0_226 = arith.constant 0 : index
    %234 = vector.load %arg9[%c0_223, %c0_224, %c1_225, %c0_226] : memref<1x2x2x128xf32, #tpu.memory_space<vmem>>, vector<1x1x1x128xf32>
    %235 = vector.shape_cast %234 : vector<1x1x1x128xf32> to vector<1x128xf32>
    %236 = vector.shape_cast %233 : vector<1x128xf32> to vector<1x1x1x128xf32>
    tpu.vector_store %arg9[%c0_223, %c0_224, %c1_225, %c0_226], %236 {strides = array<i32>} : memref<1x2x2x128xf32, #tpu.memory_space<vmem>>, vector<1x1x1x128xf32>,
    %c0_227 = arith.constant 0 : index
    %c0_228 = arith.constant 0 : index
    %c1_229 = arith.constant 1 : index
    %c0_230 = arith.constant 0 : index
    %237 = vector.load %arg11[%c0_227, %c0_228, %c1_229, %c0_230] : memref<2x16x12x49xbf16, #tpu.memory_space<vmem>>, vector<1x16x8x49xbf16>
    %238 = vector.shape_cast %237 : vector<1x16x8x49xbf16> to vector<16x8x49xbf16>
    %239 = vector.shape_cast %238 : vector<16x8x49xbf16> to vector<128x49xbf16>
    %c0_231 = arith.constant 0 : index
    %c0_232 = arith.constant 0 : index
    %240 = vector.load %arg14[%c0_231, %c0_232] : memref<128x343xbf16, #tpu.memory_space<vmem>>, vector<128x49xbf16>
    tpu.vector_store %arg14[%c0_231, %c0_232], %239 {strides = array<i32>} : memref<128x343xbf16, #tpu.memory_space<vmem>>, vector<128x49xbf16>,
    %c1_233 = arith.constant 1 : index
    %c0_234 = arith.constant 0 : index
    %c1_235 = arith.constant 1 : index
    %c0_236 = arith.constant 0 : index
    %241 = vector.load %arg11[%c1_233, %c0_234, %c1_235, %c0_236] : memref<2x16x12x49xbf16, #tpu.memory_space<vmem>>, vector<1x16x8x49xbf16>
    %242 = vector.shape_cast %241 : vector<1x16x8x49xbf16> to vector<16x8x49xbf16>
    %243 = vector.shape_cast %242 : vector<16x8x49xbf16> to vector<128x49xbf16>
    %c0_237 = arith.constant 0 : index
    %c49_238 = arith.constant 49 : index
    %244 = vector.load %arg14[%c0_237, %c49_238] : memref<128x343xbf16, #tpu.memory_space<vmem>>, vector<128x49xbf16>
    tpu.vector_store %arg14[%c0_237, %c49_238], %243 {strides = array<i32>} : memref<128x343xbf16, #tpu.memory_space<vmem>>, vector<128x49xbf16>,
    %c0_239 = arith.constant 0 : index
    %c0_240 = arith.constant 0 : index
    %c2_241 = arith.constant 2 : index
    %c0_242 = arith.constant 0 : index
    %245 = vector.load %arg11[%c0_239, %c0_240, %c2_241, %c0_242] : memref<2x16x12x49xbf16, #tpu.memory_space<vmem>>, vector<1x16x8x49xbf16>
    %246 = vector.shape_cast %245 : vector<1x16x8x49xbf16> to vector<16x8x49xbf16>
    %247 = vector.shape_cast %246 : vector<16x8x49xbf16> to vector<128x49xbf16>
    %c0_243 = arith.constant 0 : index
    %c98_244 = arith.constant 98 : index
    %248 = vector.load %arg14[%c0_243, %c98_244] : memref<128x343xbf16, #tpu.memory_space<vmem>>, vector<128x49xbf16>
    tpu.vector_store %arg14[%c0_243, %c98_244], %247 {strides = array<i32>} : memref<128x343xbf16, #tpu.memory_space<vmem>>, vector<128x49xbf16>,
    %c1_245 = arith.constant 1 : index
    %c0_246 = arith.constant 0 : index
    %c2_247 = arith.constant 2 : index
    %c0_248 = arith.constant 0 : index
    %249 = vector.load %arg11[%c1_245, %c0_246, %c2_247, %c0_248] : memref<2x16x12x49xbf16, #tpu.memory_space<vmem>>, vector<1x16x8x49xbf16>
    %250 = vector.shape_cast %249 : vector<1x16x8x49xbf16> to vector<16x8x49xbf16>
    %251 = vector.shape_cast %250 : vector<16x8x49xbf16> to vector<128x49xbf16>
    %c0_249 = arith.constant 0 : index
    %c147_250 = arith.constant 147 : index
    %252 = vector.load %arg14[%c0_249, %c147_250] : memref<128x343xbf16, #tpu.memory_space<vmem>>, vector<128x49xbf16>
    tpu.vector_store %arg14[%c0_249, %c147_250], %251 {strides = array<i32>} : memref<128x343xbf16, #tpu.memory_space<vmem>>, vector<128x49xbf16>,
    %c0_251 = arith.constant 0 : index
    %c0_252 = arith.constant 0 : index
    %c3_253 = arith.constant 3 : index
    %c0_254 = arith.constant 0 : index
    %253 = vector.load %arg11[%c0_251, %c0_252, %c3_253, %c0_254] : memref<2x16x12x49xbf16, #tpu.memory_space<vmem>>, vector<1x16x8x49xbf16>
    %254 = vector.shape_cast %253 : vector<1x16x8x49xbf16> to vector<16x8x49xbf16>
    %255 = vector.shape_cast %254 : vector<16x8x49xbf16> to vector<128x49xbf16>
    %c0_255 = arith.constant 0 : index
    %c196_256 = arith.constant 196 : index
    %256 = vector.load %arg14[%c0_255, %c196_256] : memref<128x343xbf16, #tpu.memory_space<vmem>>, vector<128x49xbf16>
    tpu.vector_store %arg14[%c0_255, %c196_256], %255 {strides = array<i32>} : memref<128x343xbf16, #tpu.memory_space<vmem>>, vector<128x49xbf16>,
    %c1_257 = arith.constant 1 : index
    %c0_258 = arith.constant 0 : index
    %c3_259 = arith.constant 3 : index
    %c0_260 = arith.constant 0 : index
    %257 = vector.load %arg11[%c1_257, %c0_258, %c3_259, %c0_260] : memref<2x16x12x49xbf16, #tpu.memory_space<vmem>>, vector<1x16x8x49xbf16>
    %258 = vector.shape_cast %257 : vector<1x16x8x49xbf16> to vector<16x8x49xbf16>
    %259 = vector.shape_cast %258 : vector<16x8x49xbf16> to vector<128x49xbf16>
    %c0_261 = arith.constant 0 : index
    %c245_262 = arith.constant 245 : index
    %260 = vector.load %arg14[%c0_261, %c245_262] : memref<128x343xbf16, #tpu.memory_space<vmem>>, vector<128x49xbf16>
    tpu.vector_store %arg14[%c0_261, %c245_262], %259 {strides = array<i32>} : memref<128x343xbf16, #tpu.memory_space<vmem>>, vector<128x49xbf16>,
    %c0_263 = arith.constant 0 : index
    %c0_264 = arith.constant 0 : index
    %c4 = arith.constant 4 : index
    %c0_265 = arith.constant 0 : index
    %261 = vector.load %arg11[%c0_263, %c0_264, %c4, %c0_265] : memref<2x16x12x49xbf16, #tpu.memory_space<vmem>>, vector<1x16x8x49xbf16>
    %262 = vector.shape_cast %261 : vector<1x16x8x49xbf16> to vector<16x8x49xbf16>
    %263 = vector.shape_cast %262 : vector<16x8x49xbf16> to vector<128x49xbf16>
    %c0_266 = arith.constant 0 : index
    %c294_267 = arith.constant 294 : index
    %264 = vector.load %arg14[%c0_266, %c294_267] : memref<128x343xbf16, #tpu.memory_space<vmem>>, vector<128x49xbf16>
    tpu.vector_store %arg14[%c0_266, %c294_267], %263 {strides = array<i32>} : memref<128x343xbf16, #tpu.memory_space<vmem>>, vector<128x49xbf16>,
    %c0_268 = arith.constant 0 : index
    %c0_269 = arith.constant 0 : index
    %265 = vector.load %arg14[%c0_268, %c0_269] : memref<128x343xbf16, #tpu.memory_space<vmem>>, vector<128x343xbf16>
    %c0_270 = arith.constant 0 : index
    %c0_271 = arith.constant 0 : index
    %266 = vector.load %arg5[%c0_270, %c0_271] : memref<343x49xbf16, #tpu.memory_space<vmem>>, vector<343x49xbf16>
    %cst_272 = arith.constant dense<0.000000e+00> : vector<128x49xf32>
    %267 = tpu.matmul %265, %266, %cst_272 {dimension_numbers = #tpu.dot_dimension_numbers<[1], [0], [0], [1], [0, 0, 1, 1], [], []>} : vector<128x343xbf16>, vector<343x49xbf16>, vector<128x49xf32> -> vector<128x49xf32>
    %268 = vector.broadcast %2 : vector<1x49xf32> to vector<128x49xf32>
    %269 = arith.addf %267, %268 : vector<128x49xf32>
    %270 = tpu.transpose %269, [1, 0] : vector<128x49xf32> -> vector<49x128xf32>
    %271 = arith.mulf %270, %270 : vector<49x128xf32>
    %cst_273 = arith.constant 0.000000e+00 : f32
    %272 = vector.broadcast %cst_273 : f32 to vector<49x128xf32>
    %273 = arith.subf %272, %271 : vector<49x128xf32>
    %cst_274 = arith.constant dense<0xFF800000> : vector<128xf32>
    %274 = vector.multi_reduction <maximumf>, %273, %cst_274 [0] : vector<49x128xf32> to vector<128xf32>
    %275 = vector.shape_cast %274 : vector<128xf32> to vector<1x128xf32>
    %276 = vector.broadcast %275 : vector<1x128xf32> to vector<49x128xf32>
    %277 = arith.subf %273, %276 : vector<49x128xf32>
    %278 = math.exp %277 : vector<49x128xf32>
    %cst_275 = arith.constant dense<0.000000e+00> : vector<128xf32>
    %279 = vector.multi_reduction <add>, %278, %cst_275 [0] : vector<49x128xf32> to vector<128xf32>
    %280 = vector.shape_cast %279 : vector<128xf32> to vector<1x128xf32>
    %c0_276 = arith.constant 0 : index
    %c1_277 = arith.constant 1 : index
    %c0_278 = arith.constant 0 : index
    %c0_279 = arith.constant 0 : index
    %c0_280 = arith.constant 0 : index
    %281 = vector.load %arg2[%c0_276, %c1_277, %c0_278, %c0_279, %c0_280] : memref<1x2x2x49x128xf32, #tpu.memory_space<vmem>>, vector<1x1x1x49x128xf32>
    %282 = vector.shape_cast %281 : vector<1x1x1x49x128xf32> to vector<49x128xf32>
    %c0_281 = arith.constant 0 : index
    %c1_282 = arith.constant 1 : index
    %c1_283 = arith.constant 1 : index
    %c0_284 = arith.constant 0 : index
    %c0_285 = arith.constant 0 : index
    %283 = vector.load %arg2[%c0_281, %c1_282, %c1_283, %c0_284, %c0_285] : memref<1x2x2x49x128xf32, #tpu.memory_space<vmem>>, vector<1x1x1x49x128xf32>
    %284 = vector.shape_cast %283 : vector<1x1x1x49x128xf32> to vector<49x128xf32>
    %285 = arith.mulf %278, %282 : vector<49x128xf32>
    %cst_286 = arith.constant dense<0.000000e+00> : vector<128xf32>
    %286 = vector.multi_reduction <add>, %285, %cst_286 [0] : vector<49x128xf32> to vector<128xf32>
    %287 = vector.shape_cast %286 : vector<128xf32> to vector<1x128xf32>
    %288 = arith.mulf %278, %284 : vector<49x128xf32>
    %cst_287 = arith.constant dense<0.000000e+00> : vector<128xf32>
    %289 = vector.multi_reduction <add>, %288, %cst_287 [0] : vector<49x128xf32> to vector<128xf32>
    %290 = vector.shape_cast %289 : vector<128xf32> to vector<1x128xf32>
    %291 = arith.divf %287, %280 : vector<1x128xf32>
    %c0_288 = arith.constant 0 : index
    %c1_289 = arith.constant 1 : index
    %c0_290 = arith.constant 0 : index
    %c0_291 = arith.constant 0 : index
    %292 = vector.load %arg9[%c0_288, %c1_289, %c0_290, %c0_291] : memref<1x2x2x128xf32, #tpu.memory_space<vmem>>, vector<1x1x1x128xf32>
    %293 = vector.shape_cast %292 : vector<1x1x1x128xf32> to vector<1x128xf32>
    %294 = vector.shape_cast %291 : vector<1x128xf32> to vector<1x1x1x128xf32>
    tpu.vector_store %arg9[%c0_288, %c1_289, %c0_290, %c0_291], %294 {strides = array<i32>} : memref<1x2x2x128xf32, #tpu.memory_space<vmem>>, vector<1x1x1x128xf32>,
    %295 = arith.divf %290, %280 : vector<1x128xf32>
    %c0_292 = arith.constant 0 : index
    %c1_293 = arith.constant 1 : index
    %c1_294 = arith.constant 1 : index
    %c0_295 = arith.constant 0 : index
    %296 = vector.load %arg9[%c0_292, %c1_293, %c1_294, %c0_295] : memref<1x2x2x128xf32, #tpu.memory_space<vmem>>, vector<1x1x1x128xf32>
    %297 = vector.shape_cast %296 : vector<1x1x1x128xf32> to vector<1x128xf32>
    %298 = vector.shape_cast %295 : vector<1x128xf32> to vector<1x1x1x128xf32>
    tpu.vector_store %arg9[%c0_292, %c1_293, %c1_294, %c0_295], %298 {strides = array<i32>} : memref<1x2x2x128xf32, #tpu.memory_space<vmem>>, vector<1x1x1x128xf32>,
    return
  }
  func.func @transform_0(%arg0: i32) -> (i32, i32, i32, i32) {
    %c0_i32 = arith.constant 0 : i32
    %c0_i32_0 = arith.constant 0 : i32
    %c0_i32_1 = arith.constant 0 : i32
    %c0_i32_2 = arith.constant 0 : i32
    return %arg0, %c0_i32, %c0_i32_0, %c0_i32_1 : i32, i32, i32, i32
  }
  func.func @transform_1(%arg0: i32) -> (i32, i32, i32, i32, i32) {
    %c0_i32 = arith.constant 0 : i32
    %c0_i32_0 = arith.constant 0 : i32
    %c0_i32_1 = arith.constant 0 : i32
    %c0_i32_2 = arith.constant 0 : i32
    %c0_i32_3 = arith.constant 0 : i32
    return %arg0, %c0_i32, %c0_i32_0, %c0_i32_1, %c0_i32_2 : i32, i32, i32, i32, i32
  }
  func.func @transform_2(%arg0: i32) -> (i32, i32, i32) {
    %c0_i32 = arith.constant 0 : i32
    %c0_i32_0 = arith.constant 0 : i32
    %c0_i32_1 = arith.constant 0 : i32
    %c0_i32_2 = arith.constant 0 : i32
    return %c0_i32, %c0_i32_0, %c0_i32_1 : i32, i32, i32
  }
  func.func @transform_3(%arg0: i32) -> (i32, i32) {
    %c0_i32 = arith.constant 0 : i32
    %c0_i32_0 = arith.constant 0 : i32
    %c0_i32_1 = arith.constant 0 : i32
    return %c0_i32, %c0_i32_0 : i32, i32
  }
  func.func @transform_4(%arg0: i32) -> (i32, i32) {
    %c0_i32 = arith.constant 0 : i32
    %c0_i32_0 = arith.constant 0 : i32
    %c0_i32_1 = arith.constant 0 : i32
    return %c0_i32, %c0_i32_0 : i32, i32
  }
  func.func @transform_5(%arg0: i32) -> (i32, i32) {
    %c0_i32 = arith.constant 0 : i32
    %c0_i32_0 = arith.constant 0 : i32
    %c0_i32_1 = arith.constant 0 : i32
    return %c0_i32, %c0_i32_0 : i32, i32
  }
  func.func @transform_6(%arg0: i32) -> (i32, i32) {
    %c0_i32 = arith.constant 0 : i32
    %c0_i32_0 = arith.constant 0 : i32
    %c0_i32_1 = arith.constant 0 : i32
    return %c0_i32, %c0_i32_0 : i32, i32
  }
  func.func @transform_7(%arg0: i32) -> (i32, i32) {
    %c0_i32 = arith.constant 0 : i32
    %c0_i32_0 = arith.constant 0 : i32
    %c0_i32_1 = arith.constant 0 : i32
    return %c0_i32, %c0_i32_0 : i32, i32
  }
  func.func @transform_8(%arg0: i32) -> (i32, i32, i32, i32) {
    %c0_i32 = arith.constant 0 : i32
    %c0_i32_0 = arith.constant 0 : i32
    %c0_i32_1 = arith.constant 0 : i32
    %c0_i32_2 = arith.constant 0 : i32
    return %arg0, %c0_i32, %c0_i32_0, %c0_i32_1 : i32, i32, i32, i32
  }
}

</mosaic_0001>

<llo_original>
// kernel: pseudo_regularization_forward.1
$region0: #{pseudo_regularization_forward.1}
  #allocation0 [shape = 'u32[]', space=smem, size = 0x4, offset = 0x4, fixed_abs, tag = 'smem constant byte address 0x4 - core index']
  #allocation1 [shape = 'u32[144,128]{1,0:T(1,128)}', space=vmem, size = 0x12000, scoped, tag = 'internal scratch']
  #allocation2 [shape = 'bf16[10,10,32]{2,1,0:T(8,128)(2,1)}', space=vmem, size = 0xa000, scoped, tag = 'scratch operand']
  #allocation3 [shape = 'bf16[2,16,12,49]{3,2,1,0:T(8,128)(2,1)}', space=vmem, size = 0x20000, scoped, tag = 'scratch operand']
  #allocation4 [shape = 'bf16[64,128]{1,0:T(16,128)(2,1)}', space=vmem, size = 0x4000, scoped, tag = 'scratch operand']
  #allocation5 [shape = 'bf16[128,224]{1,0:T(16,128)(2,1)}', space=vmem, size = 0x10000, scoped, tag = 'scratch operand']
  #allocation6 [shape = 'bf16[128,343]{1,0:T(16,128)(2,1)}', space=vmem, size = 0x18000, scoped, tag = 'scratch operand']
  %s0 = inlined_call_operand.vmem [shape: f32[2,8,8,32], index: 0, kind: input, shape index: {}]
  %s1 = inlined_call_operand.vmem [shape: f32[2,2,2,49,128], index: 1, kind: input, shape index: {}]
  %s2 = inlined_call_operand.vmem [shape: bf16[4,128,32], index: 2, kind: input, shape index: {}]
  %s3 = inlined_call_operand.vmem [shape: bf16[224,49], index: 3, kind: input, shape index: {}]
  %s4 = inlined_call_operand.vmem [shape: bf16[343,49], index: 4, kind: input, shape index: {}]
  %s5 = inlined_call_operand.vmem [shape: f32[1,32], index: 5, kind: input, shape index: {}]
  %s6 = inlined_call_operand.vmem [shape: f32[1,49], index: 6, kind: input, shape index: {}]
  %s7 = inlined_call_operand.vmem [shape: f32[1,49], index: 7, kind: input, shape index: {}]
  %s8 = inlined_call_operand.vmem [shape: f32[2,2,2,128], index: 8, kind: output, shape index: {}]
  %s9 = sld [smem:[#allocation0]]
  $region65: #{pseudo_regularization_forward.1} parent=0
    _
  %s11 = ssub.s32 1, %s9
  %s12 = scalar_select 0, %s11, %s9
  loop: start=0, step=1, limit=4
  $region2: #{pseudo_regularization_forward.1} parent=0 // loop_pre_header
    _
  $region3: #{pseudo_regularization_forward.1} parent=0 // loop_header
    %s14 = sphi 0, %s18
    %p15 = scmp.ge.s32.totalorder %s14, 4
    %s24 = sphi 0, %s26
    %s27 = sphi 0, %s24
    %s28 = sphi 0, %s27
    %s44 = sphi 0, %s28
    %s50 = sphi 0, %s52
    %s53 = sphi 0, %s50
    %s54 = sphi 0, %s53
    %s70 = sphi 0, %s54
    %s74 = sphi 0, %s74
    %s76 = sphi 0, %s74
    %s77 = sphi 0, %s76
    %s91 = sphi 0, %s77
    %s95 = sphi 0, %s95
    %s97 = sphi 0, %s95
    %s98 = sphi 0, %s97
    %s112 = sphi 0, %s98
    %s116 = sphi 0, %s116
    %s118 = sphi 0, %s116
    %s119 = sphi 0, %s118
    %s133 = sphi 0, %s119
    %s137 = sphi 0, %s137
    %s139 = sphi 0, %s137
    %s140 = sphi 0, %s139
    %s154 = sphi 0, %s140
    %s158 = sphi 0, %s158
    %s160 = sphi 0, %s158
    %s161 = sphi 0, %s160
    %s175 = sphi 0, %s161
    %s179 = sphi 0, %s179
    %s181 = sphi 0, %s179
    %s182 = sphi 0, %s181
    %s196 = sphi 0, %s182
    %s202 = sphi 0, %s204
    %s205 = sphi 0, %s202
    %s206 = sphi 0, %s205
    %s222 = sphi 0, %s206
  $region4: #{pseudo_regularization_forward.1} parent=0 // loop_header_branch
    %17 = sbr.rel (%p15) target = $region8
  $region5: #{pseudo_regularization_forward.1} parent=0 // loop_body
    %s19 = ssub.s32 %s14, 1
    %s20 = ssub.s32 %s14, 2
    %s21 = sadd.s32 %s14, 1
    %s22 = ssub.s32 %s14, %s21
    %p23 = scmp.eq.s32.totalorder %s22, 0
    %s25 = sadd.s32 %s24, 1
    %s26 = scalar_select %p23, %s24, %s25
    %p29 = pneg %p23
    %p30 = scmp.eq.s32.totalorder %s14, 1
    %p31 = por %p29, %p30
    %p32 = scmp.ne.s32.totalorder %s24, %s27
    %p33 = scmp.eq.s32.totalorder %s14, 0
    %p34 = por %p32, %p33
    %p35 = scmp.ne.s32.totalorder %s24, %s27
    %p36 = scmp.eq.s32.totalorder %s19, 1
    %p37 = por %p35, %p36
    %p38 = scmp.ne.s32.totalorder %s27, %s28
    %p39 = scmp.eq.s32.totalorder %s19, 0
    %p40 = por %p38, %p39
    %p41 = scmp.ne.s32.totalorder %s27, %s28
    %p42 = scmp.eq.s32.totalorder %s20, 1
    %p43 = por %p41, %p42
    %p45 = scmp.ne.s32.totalorder %s28, %s44
    %p46 = scmp.eq.s32.totalorder %s20, 0
    %p47 = por %p45, %p46
    %s48 = ssub.s32 %s14, %s21
    %p49 = scmp.eq.s32.totalorder %s48, 0
    %s51 = sadd.s32 %s50, 1
    %s52 = scalar_select %p49, %s50, %s51
    %p55 = pneg %p49
    %p56 = scmp.eq.s32.totalorder %s14, 1
    %p57 = por %p55, %p56
    %p58 = scmp.ne.s32.totalorder %s50, %s53
    %p59 = scmp.eq.s32.totalorder %s14, 0
    %p60 = por %p58, %p59
    %p61 = scmp.ne.s32.totalorder %s50, %s53
    %p62 = scmp.eq.s32.totalorder %s19, 1
    %p63 = por %p61, %p62
    %p64 = scmp.ne.s32.totalorder %s53, %s54
    %p65 = scmp.eq.s32.totalorder %s19, 0
    %p66 = por %p64, %p65
    %p67 = scmp.ne.s32.totalorder %s53, %s54
    %p68 = scmp.eq.s32.totalorder %s20, 1
    %p69 = por %p67, %p68
    %p71 = scmp.ne.s32.totalorder %s54, %s70
    %p72 = scmp.eq.s32.totalorder %s20, 0
    %p73 = por %p71, %p72
    %s75 = sadd.s32 %s74, 1
    %p78 = scmp.eq.s32.totalorder %s14, 1
    %p79 = scmp.ne.s32.totalorder %s74, %s76
    %p80 = scmp.eq.s32.totalorder %s14, 0
    %p81 = por %p79, %p80
    %p82 = scmp.ne.s32.totalorder %s74, %s76
    %p83 = scmp.eq.s32.totalorder %s19, 1
    %p84 = por %p82, %p83
    %p85 = scmp.ne.s32.totalorder %s76, %s77
    %p86 = scmp.eq.s32.totalorder %s19, 0
    %p87 = por %p85, %p86
    %p88 = scmp.ne.s32.totalorder %s76, %s77
    %p89 = scmp.eq.s32.totalorder %s20, 1
    %p90 = por %p88, %p89
    %p92 = scmp.ne.s32.totalorder %s77, %s91
    %p93 = scmp.eq.s32.totalorder %s20, 0
    %p94 = por %p92, %p93
    %s96 = sadd.s32 %s95, 1
    %p99 = scmp.eq.s32.totalorder %s14, 1
    %p100 = scmp.ne.s32.totalorder %s95, %s97
    %p101 = scmp.eq.s32.totalorder %s14, 0
    %p102 = por %p100, %p101
    %p103 = scmp.ne.s32.totalorder %s95, %s97
    %p104 = scmp.eq.s32.totalorder %s19, 1
    %p105 = por %p103, %p104
    %p106 = scmp.ne.s32.totalorder %s97, %s98
    %p107 = scmp.eq.s32.totalorder %s19, 0
    %p108 = por %p106, %p107
    %p109 = scmp.ne.s32.totalorder %s97, %s98
    %p110 = scmp.eq.s32.totalorder %s20, 1
    %p111 = por %p109, %p110
    %p113 = scmp.ne.s32.totalorder %s98, %s112
    %p114 = scmp.eq.s32.totalorder %s20, 0
    %p115 = por %p113, %p114
    %s117 = sadd.s32 %s116, 1
    %p120 = scmp.eq.s32.totalorder %s14, 1
    %p121 = scmp.ne.s32.totalorder %s116, %s118
    %p122 = scmp.eq.s32.totalorder %s14, 0
    %p123 = por %p121, %p122
    %p124 = scmp.ne.s32.totalorder %s116, %s118
    %p125 = scmp.eq.s32.totalorder %s19, 1
    %p126 = por %p124, %p125
    %p127 = scmp.ne.s32.totalorder %s118, %s119
    %p128 = scmp.eq.s32.totalorder %s19, 0
    %p129 = por %p127, %p128
    %p130 = scmp.ne.s32.totalorder %s118, %s119
    %p131 = scmp.eq.s32.totalorder %s20, 1
    %p132 = por %p130, %p131
    %p134 = scmp.ne.s32.totalorder %s119, %s133
    %p135 = scmp.eq.s32.totalorder %s20, 0
    %p136 = por %p134, %p135
    %s138 = sadd.s32 %s137, 1
    %p141 = scmp.eq.s32.totalorder %s14, 1
    %p142 = scmp.ne.s32.totalorder %s137, %s139
    %p143 = scmp.eq.s32.totalorder %s14, 0
    %p144 = por %p142, %p143
    %p145 = scmp.ne.s32.totalorder %s137, %s139
    %p146 = scmp.eq.s32.totalorder %s19, 1
    %p147 = por %p145, %p146
    %p148 = scmp.ne.s32.totalorder %s139, %s140
    %p149 = scmp.eq.s32.totalorder %s19, 0
    %p150 = por %p148, %p149
    %p151 = scmp.ne.s32.totalorder %s139, %s140
    %p152 = scmp.eq.s32.totalorder %s20, 1
    %p153 = por %p151, %p152
    %p155 = scmp.ne.s32.totalorder %s140, %s154
    %p156 = scmp.eq.s32.totalorder %s20, 0
    %p157 = por %p155, %p156
    %s159 = sadd.s32 %s158, 1
    %p162 = scmp.eq.s32.totalorder %s14, 1
    %p163 = scmp.ne.s32.totalorder %s158, %s160
    %p164 = scmp.eq.s32.totalorder %s14, 0
    %p165 = por %p163, %p164
    %p166 = scmp.ne.s32.totalorder %s158, %s160
    %p167 = scmp.eq.s32.totalorder %s19, 1
    %p168 = por %p166, %p167
    %p169 = scmp.ne.s32.totalorder %s160, %s161
    %p170 = scmp.eq.s32.totalorder %s19, 0
    %p171 = por %p169, %p170
    %p172 = scmp.ne.s32.totalorder %s160, %s161
    %p173 = scmp.eq.s32.totalorder %s20, 1
    %p174 = por %p172, %p173
    %p176 = scmp.ne.s32.totalorder %s161, %s175
    %p177 = scmp.eq.s32.totalorder %s20, 0
    %p178 = por %p176, %p177
    %s180 = sadd.s32 %s179, 1
    %p183 = scmp.eq.s32.totalorder %s14, 1
    %p184 = scmp.ne.s32.totalorder %s179, %s181
    %p185 = scmp.eq.s32.totalorder %s14, 0
    %p186 = por %p184, %p185
    %p187 = scmp.ne.s32.totalorder %s179, %s181
    %p188 = scmp.eq.s32.totalorder %s19, 1
    %p189 = por %p187, %p188
    %p190 = scmp.ne.s32.totalorder %s181, %s182
    %p191 = scmp.eq.s32.totalorder %s19, 0
    %p192 = por %p190, %p191
    %p193 = scmp.ne.s32.totalorder %s181, %s182
    %p194 = scmp.eq.s32.totalorder %s20, 1
    %p195 = por %p193, %p194
    %p197 = scmp.ne.s32.totalorder %s182, %s196
    %p198 = scmp.eq.s32.totalorder %s20, 0
    %p199 = por %p197, %p198
    %s200 = ssub.s32 %s14, %s21
    %p201 = scmp.eq.s32.totalorder %s200, 0
    %s203 = sadd.s32 %s202, 1
    %s204 = scalar_select %p201, %s202, %s203
    %p207 = pneg %p201
    %p208 = scmp.eq.s32.totalorder %s14, 1
    %p209 = por %p207, %p208
    %p210 = scmp.ne.s32.totalorder %s202, %s205
    %p211 = scmp.eq.s32.totalorder %s14, 0
    %p212 = por %p210, %p211
    %p213 = scmp.ne.s32.totalorder %s202, %s205
    %p214 = scmp.eq.s32.totalorder %s19, 1
    %p215 = por %p213, %p214
    %p216 = scmp.ne.s32.totalorder %s205, %s206
    %p217 = scmp.eq.s32.totalorder %s19, 0
    %p218 = por %p216, %p217
    %p219 = scmp.ne.s32.totalorder %s205, %s206
    %p220 = scmp.eq.s32.totalorder %s20, 1
    %p221 = por %p219, %p220
    %p223 = scmp.ne.s32.totalorder %s206, %s222
    %p224 = scmp.eq.s32.totalorder %s20, 0
    %p225 = por %p223, %p224
    %p226 = scmp.le.s32.totalorder 1, %s14
    %p227 = scmp.lt.s32.totalorder %s14, 3
    %p228 = pnand %p226, %p227
    %p229 = pneg %p228
    // Predicated region
    $region9: #{pseudo_regularization_forward.1} parent=5 // pred_check
      _
    $region10: #{pseudo_regularization_forward.1} parent=5 // pred_check_branch
      %231 = sbr.rel (%p228) target = $region12
    $region11: #{pseudo_regularization_forward.1} parent=5 // pred_region
      %s232 = ssub.s32 %s14, 1
      // Predicated region
      $region13: #{pseudo_regularization_forward.1} parent=11 // pred_check
        %p233 = pneg %p87
      $region14: #{pseudo_regularization_forward.1} parent=11 // pred_check_branch
        %235 = sbr.rel (%p233) target = $region16
      $region15: #{pseudo_regularization_forward.1} parent=11 // pred_region
        _
      $region16: #{pseudo_regularization_forward.1} parent=11 // pred_fallthru
        _
      // Predicated region
      $region17: #{pseudo_regularization_forward.1} parent=11 // pred_check
        %p236 = pneg %p108
      $region18: #{pseudo_regularization_forward.1} parent=11 // pred_check_branch
        %238 = sbr.rel (%p236) target = $region20
      $region19: #{pseudo_regularization_forward.1} parent=11 // pred_region
        _
      $region20: #{pseudo_regularization_forward.1} parent=11 // pred_fallthru
        _
      // Predicated region
      $region21: #{pseudo_regularization_forward.1} parent=11 // pred_check
        %p239 = pneg %p129
      $region22: #{pseudo_regularization_forward.1} parent=11 // pred_check_branch
        %241 = sbr.rel (%p239) target = $region24
      $region23: #{pseudo_regularization_forward.1} parent=11 // pred_region
        _
      $region24: #{pseudo_regularization_forward.1} parent=11 // pred_fallthru
        _
      // Predicated region
      $region25: #{pseudo_regularization_forward.1} parent=11 // pred_check
        %p242 = pneg %p150
      $region26: #{pseudo_regularization_forward.1} parent=11 // pred_check_branch
        %244 = sbr.rel (%p242) target = $region28
      $region27: #{pseudo_regularization_forward.1} parent=11 // pred_region
        _
      $region28: #{pseudo_regularization_forward.1} parent=11 // pred_fallthru
        _
      // Predicated region
      $region29: #{pseudo_regularization_forward.1} parent=11 // pred_check
        %p245 = pneg %p171
      $region30: #{pseudo_regularization_forward.1} parent=11 // pred_check_branch
        %247 = sbr.rel (%p245) target = $region32
      $region31: #{pseudo_regularization_forward.1} parent=11 // pred_region
        _
      $region32: #{pseudo_regularization_forward.1} parent=11 // pred_fallthru
        _
      // Predicated region
      $region33: #{pseudo_regularization_forward.1} parent=11 // pred_check
        %p248 = pneg %p192
      $region34: #{pseudo_regularization_forward.1} parent=11 // pred_check_branch
        %250 = sbr.rel (%p248) target = $region36
      $region35: #{pseudo_regularization_forward.1} parent=11 // pred_region
        _
      $region36: #{pseudo_regularization_forward.1} parent=11 // pred_fallthru
        _
    $region12: #{pseudo_regularization_forward.1} parent=5 // pred_fallthru
      _
    %p251 = scmp.lt.s32.totalorder %s14, 2
    // Predicated region
    $region37: #{pseudo_regularization_forward.1} parent=5 // pred_check
      %p252 = pneg %p251
    $region38: #{pseudo_regularization_forward.1} parent=5 // pred_check_branch
      %254 = sbr.rel (%p252) target = $region40
    $region39: #{pseudo_regularization_forward.1} parent=5 // pred_region
      // Predicated region
      $region41: #{pseudo_regularization_forward.1} parent=39 // pred_check
        %p255 = pneg %p34
      $region42: #{pseudo_regularization_forward.1} parent=39 // pred_check_branch
        %257 = sbr.rel (%p255) target = $region44
      $region43: #{pseudo_regularization_forward.1} parent=39 // pred_region
        %p258 = scmp.lt.s32.totalorder %s14, 1
        %s259 = scalar_select %p258, %s14, 1
        %s260 = smul.addr %s259, 8
        %s261 = smul.addr %s260, 8
        %s262 = scalar_lea.vmem %s0, %s261
      $region44: #{pseudo_regularization_forward.1} parent=39 // pred_fallthru
        _
      // Predicated region
      $region45: #{pseudo_regularization_forward.1} parent=39 // pred_check
        %p263 = pneg %p60
      $region46: #{pseudo_regularization_forward.1} parent=39 // pred_check_branch
        %265 = sbr.rel (%p263) target = $region48
      $region47: #{pseudo_regularization_forward.1} parent=39 // pred_region
        %p266 = scmp.lt.s32.totalorder %s14, 1
        %s267 = scalar_select %p266, %s14, 1
        %s268 = smul.addr %s267, 28
        %s269 = smul.addr %s268, 8
        %s270 = scalar_lea.vmem %s1, %s269
      $region48: #{pseudo_regularization_forward.1} parent=39 // pred_fallthru
        _
    $region40: #{pseudo_regularization_forward.1} parent=5 // pred_fallthru
      _
    %p271 = scmp.le.s32.totalorder 1, %s14
    %p272 = scmp.lt.s32.totalorder %s14, 3
    %p273 = pnand %p271, %p272
    %p274 = pneg %p273
    // Predicated region
    $region49: #{pseudo_regularization_forward.1} parent=5 // pred_check
      _
    $region50: #{pseudo_regularization_forward.1} parent=5 // pred_check_branch
      %276 = sbr.rel (%p273) target = $region52
    $region51: #{pseudo_regularization_forward.1} parent=5 // pred_region
      %s277 = ssub.s32 %s14, 1
      %p278 = scmp.lt.s32.totalorder %s19, 1
      %s279 = scalar_select %p278, %s19, 1
      %s280 = smul.addr %s279, 8
      %s281 = smul.addr %s280, 8
      %s282 = scalar_lea.vmem %s0, %s281
      %p283 = pneg %p40
      %p284 = pneg %p37
      %p285 = scmp.lt.s32.totalorder %s19, 1
      %s286 = scalar_select %p285, %s19, 1
      %s287 = smul.addr %s286, 28
      %s288 = smul.addr %s287, 8
      %s289 = scalar_lea.vmem %s1, %s288
      %p290 = pneg %p66
      %p291 = pneg %p63
      %p292 = pneg %p87
      %p293 = pneg %p84
      %p294 = pneg %p108
      %p295 = pneg %p105
      %p296 = pneg %p129
      %p297 = pneg %p126
      %p298 = pneg %p150
      %p299 = pneg %p147
      %p300 = pneg %p171
      %p301 = pneg %p168
      %p302 = pneg %p192
      %p303 = pneg %p189
      %p304 = pneg %p218
      %p305 = pneg %p215
      %p306 = scmp.lt.s32.totalorder %s19, 1
      %s307 = scalar_select %p306, %s19, 1
      %s308 = smul.addr %s307, 2
      %s309 = smul.addr %s308, 2
      %s310 = scalar_lea.vmem %s8, %s309
      %p311 = scmp.lt.s32.totalorder %s19, 1
      %s312 = scalar_select %p311, %s19, 1
      %s313 = smul.addr %s312, 8
      %s314 = smul.addr %s313, 8
      %s315 = scalar_lea.vmem %s0, %s314
      %p316 = scmp.lt.s32.totalorder %s19, 1
      %s317 = scalar_select %p316, %s19, 1
      %s318 = smul.addr %s317, 28
      %s319 = smul.addr %s318, 8
      %s320 = scalar_lea.vmem %s1, %s319
      %p321 = scmp.lt.s32.totalorder %s19, 1
      %s322 = scalar_select %p321, %s19, 1
      %s323 = smul.addr %s322, 2
      %s324 = smul.addr %s323, 2
      %s325 = scalar_lea.vmem %s8, %s324
      %v327 = vld [vmem:[%s5] sm:$0x1]
      %v328 = vld [vmem:[%s6] sm:$0x1]
      %v329 = vld [vmem:[%s7] sm:$0x1]
      %vm330 = vcmask 257024
      %331 = vst.msk [vmem:[#allocation2] sm:$0xf] %vm330, 0
      %vm332 = vcmask 253952
      %333 = vst.msk [vmem:[#allocation2 + $0x4] sm:$0x1] %vm332, 0
      %334 = vst.msk [vmem:[#allocation2 + $0x8] sm:$0xf] %vm330, 0
      %335 = vst.msk [vmem:[#allocation2 + $0xc] sm:$0x1] %vm332, 0
      %336 = vst.msk [vmem:[#allocation2 + $0x10] sm:$0xf] %vm330, 0
      %337 = vst.msk [vmem:[#allocation2 + $0x14] sm:$0x1] %vm332, 0
      %338 = vst.msk [vmem:[#allocation2 + $0x18] sm:$0xf] %vm330, 0
      %339 = vst.msk [vmem:[#allocation2 + $0x1c] sm:$0x1] %vm332, 0
      %340 = vst.msk [vmem:[#allocation2 + $0x20] sm:$0xf] %vm330, 0
      %341 = vst.msk [vmem:[#allocation2 + $0x24] sm:$0x1] %vm332, 0
      %342 = vst.msk [vmem:[#allocation2 + $0x28] sm:$0xf] %vm330, 0
      %343 = vst.msk [vmem:[#allocation2 + $0x2c] sm:$0x1] %vm332, 0
      %344 = vst.msk [vmem:[#allocation2 + $0x30] sm:$0xf] %vm330, 0
      %345 = vst.msk [vmem:[#allocation2 + $0x34] sm:$0x1] %vm332, 0
      %346 = vst.msk [vmem:[#allocation2 + $0x38] sm:$0xf] %vm330, 0
      %347 = vst.msk [vmem:[#allocation2 + $0x3c] sm:$0x1] %vm332, 0
      %348 = vst.msk [vmem:[#allocation2 + $0x40] sm:$0xf] %vm330, 0
      %349 = vst.msk [vmem:[#allocation2 + $0x44] sm:$0x1] %vm332, 0
      %350 = vst.msk [vmem:[#allocation2 + $0x48] sm:$0xf] %vm330, 0
      %351 = vst.msk [vmem:[#allocation2 + $0x4c] sm:$0x1] %vm332, 0
      %v352 = vld [vmem:[%s315] sm:$0xff]
      %v353 = vld [vmem:[%s315 + $0x8] sm:$0xff]
      %v354 = vld [vmem:[%s315 + $0x10] sm:$0xff]
      %v355 = vld [vmem:[%s315 + $0x18] sm:$0xff]
      %v356 = vld [vmem:[%s315 + $0x20] sm:$0xff]
      %v357 = vld [vmem:[%s315 + $0x28] sm:$0xff]
      %v358 = vld [vmem:[%s315 + $0x30] sm:$0xff]
      %v359 = vld [vmem:[%s315 + $0x38] sm:$0xff]
      %v360 = vpack.c.bf16 %v352, %v352
      %v361 = vpack.c.bf16 %v353, %v353
      %v362 = vpack.c.bf16 %v354, %v354
      %v363 = vpack.c.bf16 %v355, %v355
      %v364 = vpack.c.bf16 %v356, %v356
      %v365 = vpack.c.bf16 %v357, %v357
      %v366 = vpack.c.bf16 %v358, %v358
      %v367 = vpack.c.bf16 %v359, %v359
      %v376 = vunpack.c.l.b16 %v360
      %v377 = vunpack.c.l.b16 %v361
      %v378 = vunpack.c.l.b16 %v362
      %v379 = vunpack.c.l.b16 %v363
      %v380 = vunpack.c.l.b16 %v364
      %v381 = vunpack.c.l.b16 %v365
      %v382 = vunpack.c.l.b16 %v366
      %v383 = vunpack.c.l.b16 %v367
      %v384 = vpack.c.b16 %v376, %v376
      %v385 = vpack.c.b16 %v377, %v377
      %v386 = vpack.c.b16 %v378, %v378
      %v387 = vpack.c.b16 %v379, %v379
      %v388 = vpack.c.b16 %v380, %v380
      %v389 = vpack.c.b16 %v381, %v381
      %v390 = vpack.c.b16 %v382, %v382
      %v391 = vpack.c.b16 %v383, %v383
      %v393 = vshrl.u32 %v384, 16
      %v395 = vrot.slane %v393, 7
      %v396 = vshll.u32 %v384, 16
      %v398 = vor.u32 %v395, %v396
      %v399 = vrot.slane %v395, 4
      %v401 = vshrl.u32 %v385, 16
      %v403 = vrot.slane %v401, 7
      %v404 = vshll.u32 %v385, 16
      %v406 = vor.u32 %v403, %v404
      %v407 = vrot.slane %v403, 4
      %v409 = vshrl.u32 %v386, 16
      %v411 = vrot.slane %v409, 7
      %v412 = vshll.u32 %v386, 16
      %v414 = vor.u32 %v411, %v412
      %v415 = vrot.slane %v411, 4
      %v417 = vshrl.u32 %v387, 16
      %v419 = vrot.slane %v417, 7
      %v420 = vshll.u32 %v387, 16
      %v422 = vor.u32 %v419, %v420
      %v423 = vrot.slane %v419, 4
      %v425 = vshrl.u32 %v388, 16
      %v427 = vrot.slane %v425, 7
      %v428 = vshll.u32 %v388, 16
      %v430 = vor.u32 %v427, %v428
      %v431 = vrot.slane %v427, 4
      %v433 = vshrl.u32 %v389, 16
      %v435 = vrot.slane %v433, 7
      %v436 = vshll.u32 %v389, 16
      %v438 = vor.u32 %v435, %v436
      %v439 = vrot.slane %v435, 4
      %v441 = vshrl.u32 %v390, 16
      %v443 = vrot.slane %v441, 7
      %v444 = vshll.u32 %v390, 16
      %v446 = vor.u32 %v443, %v444
      %v447 = vrot.slane %v443, 4
      %v449 = vshrl.u32 %v391, 16
      %v451 = vrot.slane %v449, 7
      %v452 = vshll.u32 %v391, 16
      %v454 = vor.u32 %v451, %v452
      %v455 = vrot.slane %v451, 4
      %s472 = scalar_lea.vmem [#allocation2], 8
      %vm473 = vcmask 257024
      %vm474 = vsmask.f32 7938
      %vm475 = vmand %vm473, %vm474
      %v476 = vld [vmem:[%s472] sm:$0xf]
      %v477 = vsel %vm475, %v398, %v476
      %478 = vst [vmem:[%s472] sm:$0xf] %v477
      %vm479 = vcmask 253952
      %vm480 = vsmask.f32 256
      %vm481 = vmand %vm479, %vm480
      %v482 = vld [vmem:[%s472 + $0x4] sm:$0x1]
      %v483 = vsel %vm481, %v399, %v482
      %484 = vst [vmem:[%s472 + $0x4] sm:$0x1] %v483
      %v485 = vld [vmem:[%s472 + $0x8] sm:$0xf]
      %v486 = vsel %vm475, %v406, %v485
      %487 = vst [vmem:[%s472 + $0x8] sm:$0xf] %v486
      %v488 = vld [vmem:[%s472 + $0xc] sm:$0x1]
      %v489 = vsel %vm481, %v407, %v488
      %490 = vst [vmem:[%s472 + $0xc] sm:$0x1] %v489
      %v491 = vld [vmem:[%s472 + $0x10] sm:$0xf]
      %v492 = vsel %vm475, %v414, %v491
      %493 = vst [vmem:[%s472 + $0x10] sm:$0xf] %v492
      %v494 = vld [vmem:[%s472 + $0x14] sm:$0x1]
      %v495 = vsel %vm481, %v415, %v494
      %496 = vst [vmem:[%s472 + $0x14] sm:$0x1] %v495
      %v497 = vld [vmem:[%s472 + $0x18] sm:$0xf]
      %v498 = vsel %vm475, %v422, %v497
      %499 = vst [vmem:[%s472 + $0x18] sm:$0xf] %v498
      %v500 = vld [vmem:[%s472 + $0x1c] sm:$0x1]
      %v501 = vsel %vm481, %v423, %v500
      %502 = vst [vmem:[%s472 + $0x1c] sm:$0x1] %v501
      %v503 = vld [vmem:[%s472 + $0x20] sm:$0xf]
      %v504 = vsel %vm475, %v430, %v503
      %505 = vst [vmem:[%s472 + $0x20] sm:$0xf] %v504
      %v506 = vld [vmem:[%s472 + $0x24] sm:$0x1]
      %v507 = vsel %vm481, %v431, %v506
      %508 = vst [vmem:[%s472 + $0x24] sm:$0x1] %v507
      %v509 = vld [vmem:[%s472 + $0x28] sm:$0xf]
      %v510 = vsel %vm475, %v438, %v509
      %511 = vst [vmem:[%s472 + $0x28] sm:$0xf] %v510
      %v512 = vld [vmem:[%s472 + $0x2c] sm:$0x1]
      %v513 = vsel %vm481, %v439, %v512
      %514 = vst [vmem:[%s472 + $0x2c] sm:$0x1] %v513
      %v515 = vld [vmem:[%s472 + $0x30] sm:$0xf]
      %v516 = vsel %vm475, %v446, %v515
      %517 = vst [vmem:[%s472 + $0x30] sm:$0xf] %v516
      %v518 = vld [vmem:[%s472 + $0x34] sm:$0x1]
      %v519 = vsel %vm481, %v447, %v518
      %520 = vst [vmem:[%s472 + $0x34] sm:$0x1] %v519
      %v521 = vld [vmem:[%s472 + $0x38] sm:$0xf]
      %v522 = vsel %vm475, %v454, %v521
      %523 = vst [vmem:[%s472 + $0x38] sm:$0xf] %v522
      %v524 = vld [vmem:[%s472 + $0x3c] sm:$0x1]
      %v525 = vsel %vm481, %v455, %v524
      %526 = vst [vmem:[%s472 + $0x3c] sm:$0x1] %v525
      %vm527 = vcmask 396288
      %528 = vst.msk [vmem:[#allocation3] sm:$0xf] %vm527, 0
      %vm529 = vcmask 394240
      %530 = vst.msk [vmem:[#allocation3 + $0x4] sm:$0x3] %vm529, 0
      %531 = vst.msk [vmem:[#allocation3 + $0x8] sm:$0xf] %vm527, 0
      %532 = vst.msk [vmem:[#allocation3 + $0xc] sm:$0x3] %vm529, 0
      %533 = vst.msk [vmem:[#allocation3 + $0x10] sm:$0xf] %vm527, 0
      %534 = vst.msk [vmem:[#allocation3 + $0x14] sm:$0x3] %vm529, 0
      %535 = vst.msk [vmem:[#allocation3 + $0x18] sm:$0xf] %vm527, 0
      %536 = vst.msk [vmem:[#allocation3 + $0x1c] sm:$0x3] %vm529, 0
      %537 = vst.msk [vmem:[#allocation3 + $0x20] sm:$0xf] %vm527, 0
      %538 = vst.msk [vmem:[#allocation3 + $0x24] sm:$0x3] %vm529, 0
      %539 = vst.msk [vmem:[#allocation3 + $0x28] sm:$0xf] %vm527, 0
      %540 = vst.msk [vmem:[#allocation3 + $0x2c] sm:$0x3] %vm529, 0
      %541 = vst.msk [vmem:[#allocation3 + $0x30] sm:$0xf] %vm527, 0
      %542 = vst.msk [vmem:[#allocation3 + $0x34] sm:$0x3] %vm529, 0
      %543 = vst.msk [vmem:[#allocation3 + $0x38] sm:$0xf] %vm527, 0
      %544 = vst.msk [vmem:[#allocation3 + $0x3c] sm:$0x3] %vm529, 0
      %545 = vst.msk [vmem:[#allocation3 + $0x40] sm:$0xf] %vm527, 0
      %546 = vst.msk [vmem:[#allocation3 + $0x44] sm:$0x3] %vm529, 0
      %547 = vst.msk [vmem:[#allocation3 + $0x48] sm:$0xf] %vm527, 0
      %548 = vst.msk [vmem:[#allocation3 + $0x4c] sm:$0x3] %vm529, 0
      %549 = vst.msk [vmem:[#allocation3 + $0x50] sm:$0xf] %vm527, 0
      %550 = vst.msk [vmem:[#allocation3 + $0x54] sm:$0x3] %vm529, 0
      %551 = vst.msk [vmem:[#allocation3 + $0x58] sm:$0xf] %vm527, 0
      %552 = vst.msk [vmem:[#allocation3 + $0x5c] sm:$0x3] %vm529, 0
      %553 = vst.msk [vmem:[#allocation3 + $0x60] sm:$0xf] %vm527, 0
      %554 = vst.msk [vmem:[#allocation3 + $0x64] sm:$0x3] %vm529, 0
      %555 = vst.msk [vmem:[#allocation3 + $0x68] sm:$0xf] %vm527, 0
      %556 = vst.msk [vmem:[#allocation3 + $0x6c] sm:$0x3] %vm529, 0
      %557 = vst.msk [vmem:[#allocation3 + $0x70] sm:$0xf] %vm527, 0
      %558 = vst.msk [vmem:[#allocation3 + $0x74] sm:$0x3] %vm529, 0
      %559 = vst.msk [vmem:[#allocation3 + $0x78] sm:$0xf] %vm527, 0
      %560 = vst.msk [vmem:[#allocation3 + $0x7c] sm:$0x3] %vm529, 0
      %561 = vst.msk [vmem:[#allocation3 + $0x80] sm:$0xf] %vm527, 0
      %562 = vst.msk [vmem:[#allocation3 + $0x84] sm:$0x3] %vm529, 0
      %563 = vst.msk [vmem:[#allocation3 + $0x88] sm:$0xf] %vm527, 0
      %564 = vst.msk [vmem:[#allocation3 + $0x8c] sm:$0x3] %vm529, 0
      %565 = vst.msk [vmem:[#allocation3 + $0x90] sm:$0xf] %vm527, 0
      %566 = vst.msk [vmem:[#allocation3 + $0x94] sm:$0x3] %vm529, 0
      %567 = vst.msk [vmem:[#allocation3 + $0x98] sm:$0xf] %vm527, 0
      %568 = vst.msk [vmem:[#allocation3 + $0x9c] sm:$0x3] %vm529, 0
      %569 = vst.msk [vmem:[#allocation3 + $0xa0] sm:$0xf] %vm527, 0
      %570 = vst.msk [vmem:[#allocation3 + $0xa4] sm:$0x3] %vm529, 0
      %571 = vst.msk [vmem:[#allocation3 + $0xa8] sm:$0xf] %vm527, 0
      %572 = vst.msk [vmem:[#allocation3 + $0xac] sm:$0x3] %vm529, 0
      %573 = vst.msk [vmem:[#allocation3 + $0xb0] sm:$0xf] %vm527, 0
      %574 = vst.msk [vmem:[#allocation3 + $0xb4] sm:$0x3] %vm529, 0
      %575 = vst.msk [vmem:[#allocation3 + $0xb8] sm:$0xf] %vm527, 0
      %576 = vst.msk [vmem:[#allocation3 + $0xbc] sm:$0x3] %vm529, 0
      %577 = vst.msk [vmem:[#allocation3 + $0xc0] sm:$0xf] %vm527, 0
      %578 = vst.msk [vmem:[#allocation3 + $0xc4] sm:$0x3] %vm529, 0
      %579 = vst.msk [vmem:[#allocation3 + $0xc8] sm:$0xf] %vm527, 0
      %580 = vst.msk [vmem:[#allocation3 + $0xcc] sm:$0x3] %vm529, 0
      %581 = vst.msk [vmem:[#allocation3 + $0xd0] sm:$0xf] %vm527, 0
      %582 = vst.msk [vmem:[#allocation3 + $0xd4] sm:$0x3] %vm529, 0
      %583 = vst.msk [vmem:[#allocation3 + $0xd8] sm:$0xf] %vm527, 0
      %584 = vst.msk [vmem:[#allocation3 + $0xdc] sm:$0x3] %vm529, 0
      %585 = vst.msk [vmem:[#allocation3 + $0xe0] sm:$0xf] %vm527, 0
      %586 = vst.msk [vmem:[#allocation3 + $0xe4] sm:$0x3] %vm529, 0
      %587 = vst.msk [vmem:[#allocation3 + $0xe8] sm:$0xf] %vm527, 0
      %588 = vst.msk [vmem:[#allocation3 + $0xec] sm:$0x3] %vm529, 0
      %589 = vst.msk [vmem:[#allocation3 + $0xf0] sm:$0xf] %vm527, 0
      %590 = vst.msk [vmem:[#allocation3 + $0xf4] sm:$0x3] %vm529, 0
      %591 = vst.msk [vmem:[#allocation3 + $0xf8] sm:$0xf] %vm527, 0
      %592 = vst.msk [vmem:[#allocation3 + $0xfc] sm:$0x3] %vm529, 0
      %v593 = vld [vmem:[#allocation2] sm:$0xf]
      %v594 = vld [vmem:[#allocation2 + $0x8] sm:$0xf]
      %v595 = vld [vmem:[#allocation2 + $0x10] sm:$0xf]
      %v596 = vld [vmem:[#allocation2 + $0x18] sm:$0xf]
      %v597 = vld [vmem:[#allocation2 + $0x20] sm:$0xf]
      %v598 = vld [vmem:[#allocation2 + $0x28] sm:$0xf]
      %v599 = vld [vmem:[#allocation2 + $0x30] sm:$0xf]
      %v600 = vld [vmem:[#allocation2 + $0x38] sm:$0xf]
      %v609 = vunpack.c.l.b16 %v593
      %v610 = vunpack.c.l.b16 %v594
      %v611 = vunpack.c.l.b16 %v595
      %v612 = vunpack.c.l.b16 %v596
      %v613 = vunpack.c.l.b16 %v597
      %v614 = vunpack.c.l.b16 %v598
      %v615 = vunpack.c.l.b16 %v599
      %v616 = vunpack.c.l.b16 %v600
      %v617 = vpack.c.b16 %v610, %v609
      %v618 = vpack.c.b16 %v612, %v611
      %v619 = vpack.c.b16 %v614, %v613
      %v620 = vpack.c.b16 %v616, %v615
      %vm625 = vcmask 261120
      %626 = vst.msk [vmem:[#allocation4] sm:$0xff] %vm625, %v617
      %627 = vst.msk [vmem:[#allocation4 + $0x8] sm:$0xff] %vm625, %v618
      %628 = vst.msk [vmem:[#allocation4 + $0x10] sm:$0xff] %vm625, %v619
      %629 = vst.msk [vmem:[#allocation4 + $0x18] sm:$0xff] %vm625, %v620
      %v630 = vld [vmem:[#allocation2] sm:$0xf]
      %v631 = vld [vmem:[#allocation2 + $0x4] sm:$0x1]
      %v632 = vld [vmem:[#allocation2 + $0x8] sm:$0xf]
      %v633 = vld [vmem:[#allocation2 + $0xc] sm:$0x1]
      %v634 = vld [vmem:[#allocation2 + $0x10] sm:$0xf]
      %v635 = vld [vmem:[#allocation2 + $0x14] sm:$0x1]
      %v636 = vld [vmem:[#allocation2 + $0x18] sm:$0xf]
      %v637 = vld [vmem:[#allocation2 + $0x1c] sm:$0x1]
      %v638 = vld [vmem:[#allocation2 + $0x20] sm:$0xf]
      %v639 = vld [vmem:[#allocation2 + $0x24] sm:$0x1]
      %v640 = vld [vmem:[#allocation2 + $0x28] sm:$0xf]
      %v641 = vld [vmem:[#allocation2 + $0x2c] sm:$0x1]
      %v642 = vld [vmem:[#allocation2 + $0x30] sm:$0xf]
      %v643 = vld [vmem:[#allocation2 + $0x34] sm:$0x1]
      %v644 = vld [vmem:[#allocation2 + $0x38] sm:$0xf]
      %v645 = vld [vmem:[#allocation2 + $0x3c] sm:$0x1]
      %vm646 = vsmask.f32 3328
      %vm647 = vsmask.f32 7440
      %vm648 = vmor %vm646, %vm647
      %v650 = vshrl.u32 %v630, 16
      %v652 = vrot.slane %v650, 4
      %v653 = vshll.u32 %v630, 16
      %v655 = vrot.slane %v653, 5
      %v656 = vor.u32 %v652, %v655
      %v657 = vrot.slane %v656, 4
      %v659 = vshll.u32 %v631, 16
      %v661 = vrot.slane %v659, 5
      %v662 = vsel %vm648, %v657, %v661
      %v664 = vshrl.u32 %v632, 16
      %v666 = vrot.slane %v664, 4
      %v667 = vshll.u32 %v632, 16
      %v669 = vrot.slane %v667, 5
      %v670 = vor.u32 %v666, %v669
      %v671 = vrot.slane %v670, 4
      %v673 = vshll.u32 %v633, 16
      %v675 = vrot.slane %v673, 5
      %v676 = vsel %vm648, %v671, %v675
      %v678 = vshrl.u32 %v634, 16
      %v680 = vrot.slane %v678, 4
      %v681 = vshll.u32 %v634, 16
      %v683 = vrot.slane %v681, 5
      %v684 = vor.u32 %v680, %v683
      %v685 = vrot.slane %v684, 4
      %v687 = vshll.u32 %v635, 16
      %v689 = vrot.slane %v687, 5
      %v690 = vsel %vm648, %v685, %v689
      %v692 = vshrl.u32 %v636, 16
      %v694 = vrot.slane %v692, 4
      %v695 = vshll.u32 %v636, 16
      %v697 = vrot.slane %v695, 5
      %v698 = vor.u32 %v694, %v697
      %v699 = vrot.slane %v698, 4
      %v701 = vshll.u32 %v637, 16
      %v703 = vrot.slane %v701, 5
      %v704 = vsel %vm648, %v699, %v703
      %v706 = vshrl.u32 %v638, 16
      %v708 = vrot.slane %v706, 4
      %v709 = vshll.u32 %v638, 16
      %v711 = vrot.slane %v709, 5
      %v712 = vor.u32 %v708, %v711
      %v713 = vrot.slane %v712, 4
      %v715 = vshll.u32 %v639, 16
      %v717 = vrot.slane %v715, 5
      %v718 = vsel %vm648, %v713, %v717
      %v720 = vshrl.u32 %v640, 16
      %v722 = vrot.slane %v720, 4
      %v723 = vshll.u32 %v640, 16
      %v725 = vrot.slane %v723, 5
      %v726 = vor.u32 %v722, %v725
      %v727 = vrot.slane %v726, 4
      %v729 = vshll.u32 %v641, 16
      %v731 = vrot.slane %v729, 5
      %v732 = vsel %vm648, %v727, %v731
      %v734 = vshrl.u32 %v642, 16
      %v736 = vrot.slane %v734, 4
      %v737 = vshll.u32 %v642, 16
      %v739 = vrot.slane %v737, 5
      %v740 = vor.u32 %v736, %v739
      %v741 = vrot.slane %v740, 4
      %v743 = vshll.u32 %v643, 16
      %v745 = vrot.slane %v743, 5
      %v746 = vsel %vm648, %v741, %v745
      %v748 = vshrl.u32 %v644, 16
      %v750 = vrot.slane %v748, 4
      %v751 = vshll.u32 %v644, 16
      %v753 = vrot.slane %v751, 5
      %v754 = vor.u32 %v750, %v753
      %v755 = vrot.slane %v754, 4
      %v757 = vshll.u32 %v645, 16
      %v759 = vrot.slane %v757, 5
      %v760 = vsel %vm648, %v755, %v759
      %v761 = vunpack.c.l.b16 %v662
      %v762 = vunpack.c.l.b16 %v676
      %v763 = vunpack.c.l.b16 %v690
      %v764 = vunpack.c.l.b16 %v704
      %v765 = vunpack.c.l.b16 %v718
      %v766 = vunpack.c.l.b16 %v732
      %v767 = vunpack.c.l.b16 %v746
      %v768 = vunpack.c.l.b16 %v760
      %v769 = vpack.c.b16 %v762, %v761
      %v770 = vpack.c.b16 %v764, %v763
      %v771 = vpack.c.b16 %v766, %v765
      %v772 = vpack.c.b16 %v768, %v767
      %773 = vrot.lane.b32.xlu0 %v769, 32
      %v774 = vpop.permute.xlu0 %773
      %775 = vrot.lane.b32.xlu0 %v770, 32
      %v776 = vpop.permute.xlu0 %775
      %777 = vrot.lane.b32.xlu0 %v771, 32
      %v778 = vpop.permute.xlu0 %777
      %779 = vrot.lane.b32.xlu0 %v772, 32
      %v780 = vpop.permute.xlu0 %779
      %vm785 = vcmask 523520
      %786 = vst.msk [vmem:[#allocation4] sm:$0xff] %vm785, %v774
      %787 = vst.msk [vmem:[#allocation4 + $0x8] sm:$0xff] %vm785, %v776
      %788 = vst.msk [vmem:[#allocation4 + $0x10] sm:$0xff] %vm785, %v778
      %789 = vst.msk [vmem:[#allocation4 + $0x18] sm:$0xff] %vm785, %v780
      %v790 = vld [vmem:[%s472] sm:$0xf]
      %v791 = vld [vmem:[%s472 + $0x8] sm:$0xf]
      %v792 = vld [vmem:[%s472 + $0x10] sm:$0xf]
      %v793 = vld [vmem:[%s472 + $0x18] sm:$0xf]
      %v794 = vld [vmem:[%s472 + $0x20] sm:$0xf]
      %v795 = vld [vmem:[%s472 + $0x28] sm:$0xf]
      %v796 = vld [vmem:[%s472 + $0x30] sm:$0xf]
      %v797 = vld [vmem:[%s472 + $0x38] sm:$0xf]
      %v806 = vunpack.c.l.b16 %v790
      %v807 = vunpack.c.l.b16 %v791
      %v808 = vunpack.c.l.b16 %v792
      %v809 = vunpack.c.l.b16 %v793
      %v810 = vunpack.c.l.b16 %v794
      %v811 = vunpack.c.l.b16 %v795
      %v812 = vunpack.c.l.b16 %v796
      %v813 = vunpack.c.l.b16 %v797
      %v814 = vpack.c.b16 %v807, %v806
      %v815 = vpack.c.b16 %v809, %v808
      %v816 = vpack.c.b16 %v811, %v810
      %v817 = vpack.c.b16 %v813, %v812
      %818 = vrot.lane.b32.xlu0 %v814, 64
      %v819 = vpop.permute.xlu0 %818
      %820 = vrot.lane.b32.xlu0 %v815, 64
      %v821 = vpop.permute.xlu0 %820
      %822 = vrot.lane.b32.xlu0 %v816, 64
      %v823 = vpop.permute.xlu0 %822
      %824 = vrot.lane.b32.xlu0 %v817, 64
      %v825 = vpop.permute.xlu0 %824
      %vm830 = vcmask 785920
      %831 = vst.msk [vmem:[#allocation4] sm:$0xff] %vm830, %v819
      %832 = vst.msk [vmem:[#allocation4 + $0x8] sm:$0xff] %vm830, %v821
      %833 = vst.msk [vmem:[#allocation4 + $0x10] sm:$0xff] %vm830, %v823
      %834 = vst.msk [vmem:[#allocation4 + $0x18] sm:$0xff] %vm830, %v825
      %v835 = vld [vmem:[%s472] sm:$0xf]
      %v836 = vld [vmem:[%s472 + $0x4] sm:$0x1]
      %v837 = vld [vmem:[%s472 + $0x8] sm:$0xf]
      %v838 = vld [vmem:[%s472 + $0xc] sm:$0x1]
      %v839 = vld [vmem:[%s472 + $0x10] sm:$0xf]
      %v840 = vld [vmem:[%s472 + $0x14] sm:$0x1]
      %v841 = vld [vmem:[%s472 + $0x18] sm:$0xf]
      %v842 = vld [vmem:[%s472 + $0x1c] sm:$0x1]
      %v843 = vld [vmem:[%s472 + $0x20] sm:$0xf]
      %v844 = vld [vmem:[%s472 + $0x24] sm:$0x1]
      %v845 = vld [vmem:[%s472 + $0x28] sm:$0xf]
      %v846 = vld [vmem:[%s472 + $0x2c] sm:$0x1]
      %v847 = vld [vmem:[%s472 + $0x30] sm:$0xf]
      %v848 = vld [vmem:[%s472 + $0x34] sm:$0x1]
      %v849 = vld [vmem:[%s472 + $0x38] sm:$0xf]
      %v850 = vld [vmem:[%s472 + $0x3c] sm:$0x1]
      %v852 = vshrl.u32 %v835, 16
      %v854 = vrot.slane %v852, 4
      %v855 = vshll.u32 %v835, 16
      %v857 = vrot.slane %v855, 5
      %v858 = vor.u32 %v854, %v857
      %v859 = vrot.slane %v858, 4
      %v861 = vshll.u32 %v836, 16
      %v863 = vrot.slane %v861, 5
      %v864 = vsel %vm648, %v859, %v863
      %v866 = vshrl.u32 %v837, 16
      %v868 = vrot.slane %v866, 4
      %v869 = vshll.u32 %v837, 16
      %v871 = vrot.slane %v869, 5
      %v872 = vor.u32 %v868, %v871
      %v873 = vrot.slane %v872, 4
      %v875 = vshll.u32 %v838, 16
      %v877 = vrot.slane %v875, 5
      %v878 = vsel %vm648, %v873, %v877
      %v880 = vshrl.u32 %v839, 16
      %v882 = vrot.slane %v880, 4
      %v883 = vshll.u32 %v839, 16
      %v885 = vrot.slane %v883, 5
      %v886 = vor.u32 %v882, %v885
      %v887 = vrot.slane %v886, 4
      %v889 = vshll.u32 %v840, 16
      %v891 = vrot.slane %v889, 5
      %v892 = vsel %vm648, %v887, %v891
      %v894 = vshrl.u32 %v841, 16
      %v896 = vrot.slane %v894, 4
      %v897 = vshll.u32 %v841, 16
      %v899 = vrot.slane %v897, 5
      %v900 = vor.u32 %v896, %v899
      %v901 = vrot.slane %v900, 4
      %v903 = vshll.u32 %v842, 16
      %v905 = vrot.slane %v903, 5
      %v906 = vsel %vm648, %v901, %v905
      %v908 = vshrl.u32 %v843, 16
      %v910 = vrot.slane %v908, 4
      %v911 = vshll.u32 %v843, 16
      %v913 = vrot.slane %v911, 5
      %v914 = vor.u32 %v910, %v913
      %v915 = vrot.slane %v914, 4
      %v917 = vshll.u32 %v844, 16
      %v919 = vrot.slane %v917, 5
      %v920 = vsel %vm648, %v915, %v919
      %v922 = vshrl.u32 %v845, 16
      %v924 = vrot.slane %v922, 4
      %v925 = vshll.u32 %v845, 16
      %v927 = vrot.slane %v925, 5
      %v928 = vor.u32 %v924, %v927
      %v929 = vrot.slane %v928, 4
      %v931 = vshll.u32 %v846, 16
      %v933 = vrot.slane %v931, 5
      %v934 = vsel %vm648, %v929, %v933
      %v936 = vshrl.u32 %v847, 16
      %v938 = vrot.slane %v936, 4
      %v939 = vshll.u32 %v847, 16
      %v941 = vrot.slane %v939, 5
      %v942 = vor.u32 %v938, %v941
      %v943 = vrot.slane %v942, 4
      %v945 = vshll.u32 %v848, 16
      %v947 = vrot.slane %v945, 5
      %v948 = vsel %vm648, %v943, %v947
      %v950 = vshrl.u32 %v849, 16
      %v952 = vrot.slane %v950, 4
      %v953 = vshll.u32 %v849, 16
      %v955 = vrot.slane %v953, 5
      %v956 = vor.u32 %v952, %v955
      %v957 = vrot.slane %v956, 4
      %v959 = vshll.u32 %v850, 16
      %v961 = vrot.slane %v959, 5
      %v962 = vsel %vm648, %v957, %v961
      %v963 = vunpack.c.l.b16 %v864
      %v964 = vunpack.c.l.b16 %v878
      %v965 = vunpack.c.l.b16 %v892
      %v966 = vunpack.c.l.b16 %v906
      %v967 = vunpack.c.l.b16 %v920
      %v968 = vunpack.c.l.b16 %v934
      %v969 = vunpack.c.l.b16 %v948
      %v970 = vunpack.c.l.b16 %v962
      %v971 = vpack.c.b16 %v964, %v963
      %v972 = vpack.c.b16 %v966, %v965
      %v973 = vpack.c.b16 %v968, %v967
      %v974 = vpack.c.b16 %v970, %v969
      %975 = vrot.lane.b32.xlu0 %v971, 96
      %v976 = vpop.permute.xlu0 %975
      %977 = vrot.lane.b32.xlu0 %v972, 96
      %v978 = vpop.permute.xlu0 %977
      %979 = vrot.lane.b32.xlu0 %v973, 96
      %v980 = vpop.permute.xlu0 %979
      %981 = vrot.lane.b32.xlu0 %v974, 96
      %v982 = vpop.permute.xlu0 %981
      %vm987 = vcmask 1048320
      %988 = vst.msk [vmem:[#allocation4] sm:$0xff] %vm987, %v976
      %989 = vst.msk [vmem:[#allocation4 + $0x8] sm:$0xff] %vm987, %v978
      %990 = vst.msk [vmem:[#allocation4 + $0x10] sm:$0xff] %vm987, %v980
      %991 = vst.msk [vmem:[#allocation4 + $0x18] sm:$0xff] %vm987, %v982
      %v992 = vld [vmem:[#allocation4] sm:$0xff]
      %v993 = vld [vmem:[#allocation4 + $0x8] sm:$0xff]
      %v994 = vld [vmem:[#allocation4 + $0x10] sm:$0xff]
      %v995 = vld [vmem:[#allocation4 + $0x18] sm:$0xff]
      %v996 = vld [vmem:[%s2] sm:$0xf]
      %v997 = vld [vmem:[%s2 + $0x4] sm:$0xf]
      %v998 = vld [vmem:[%s2 + $0x8] sm:$0xf]
      %v999 = vld [vmem:[%s2 + $0xc] sm:$0xf]
      %v1000 = vld [vmem:[%s2 + $0x10] sm:$0xf]
      %v1001 = vld [vmem:[%s2 + $0x14] sm:$0xf]
      %v1002 = vld [vmem:[%s2 + $0x18] sm:$0xf]
      %v1003 = vld [vmem:[%s2 + $0x1c] sm:$0xf]
      %v1004 = vld [vmem:[%s2 + $0x20] sm:$0xf]
      %v1005 = vld [vmem:[%s2 + $0x24] sm:$0xf]
      %v1006 = vld [vmem:[%s2 + $0x28] sm:$0xf]
      %v1007 = vld [vmem:[%s2 + $0x2c] sm:$0xf]
      %v1008 = vld [vmem:[%s2 + $0x30] sm:$0xf]
      %v1009 = vld [vmem:[%s2 + $0x34] sm:$0xf]
      %v1010 = vld [vmem:[%s2 + $0x38] sm:$0xf]
      %v1011 = vld [vmem:[%s2 + $0x3c] sm:$0xf]
      %v1013 = vlaneseq
      %v1014 = vshrl.u32 %v1013, 7
      %v1015 = vsub.s32 0, %v1014
      %v1016 = vrot.slane %v327, %v1015
      %v1034 = vunpack.c.l.b16 %v996
      %v1035 = vunpack.c.l.b16 %v997
      %v1036 = vunpack.c.l.b16 %v998
      %v1037 = vunpack.c.l.b16 %v999
      %v1038 = vunpack.c.l.b16 %v1000
      %v1039 = vunpack.c.l.b16 %v1001
      %v1040 = vunpack.c.l.b16 %v1002
      %v1041 = vunpack.c.l.b16 %v1003
      %v1042 = vunpack.c.l.b16 %v1004
      %v1043 = vunpack.c.l.b16 %v1005
      %v1044 = vunpack.c.l.b16 %v1006
      %v1045 = vunpack.c.l.b16 %v1007
      %v1046 = vunpack.c.l.b16 %v1008
      %v1047 = vunpack.c.l.b16 %v1009
      %v1048 = vunpack.c.l.b16 %v1010
      %v1049 = vunpack.c.l.b16 %v1011
      %v1050 = vpack.c.b16 %v1035, %v1034
      %v1051 = vpack.c.b16 %v1037, %v1036
      %v1052 = vpack.c.b16 %v1039, %v1038
      %v1053 = vpack.c.b16 %v1041, %v1040
      %v1054 = vpack.c.b16 %v1043, %v1042
      %v1055 = vpack.c.b16 %v1045, %v1044
      %v1056 = vpack.c.b16 %v1047, %v1046
      %v1057 = vpack.c.b16 %v1049, %v1048
      %1066 = vmatprep.subr.bf16.mxu0 0
      %1067 = vmatpush1.bf16.msra.mxu0 %v1050
      %1068 = vmatprep.subr.bf16.mxu0 0
      %1069 = vmatpush1.bf16.msra.mxu0 %v1051
      %1070 = vmatprep.subr.bf16.mxu0 0
      %1071 = vmatpush1.bf16.msra.mxu0 %v1052
      %1072 = vmatprep.subr.bf16.mxu0 0
      %1073 = vmatpush1.bf16.msra.mxu0 %v1053
      %1074 = vmatprep.subr.bf16.mxu0 0
      %1075 = vmatpush1.bf16.msra.mxu0 %v1054
      %1076 = vmatprep.subr.bf16.mxu0 0
      %1077 = vmatpush1.bf16.msra.mxu0 %v1055
      %1078 = vmatprep.subr.bf16.mxu0 0
      %1079 = vmatpush1.bf16.msra.mxu0 %v1056
      %1080 = vmatprep.subr.bf16.mxu0 0
      %1081 = vmatpush1.bf16.msra.mxu0 %v1057
      %1082 = vmatprep.subr.bf16.mxu0 0
      %1083 = vmatpush1.bf16.msra.mxu0 0
      %1084 = vmatprep.subr.bf16.mxu0 0
      %1085 = vmatpush1.bf16.msra.mxu0 0
      %1086 = vmatprep.subr.bf16.mxu0 0
      %1087 = vmatpush1.bf16.msra.mxu0 0
      %1088 = vmatprep.subr.bf16.mxu0 0
      %1089 = vmatpush1.bf16.msra.mxu0 0
      %1090 = vmatprep.subr.bf16.mxu0 0
      %1091 = vmatpush1.bf16.msra.mxu0 0
      %1092 = vmatprep.subr.bf16.mxu0 0
      %1093 = vmatpush1.bf16.msra.mxu0 0
      %1094 = vmatprep.subr.bf16.mxu0 0
      %1095 = vmatpush1.bf16.msra.mxu0 0
      %1096 = vmatprep.subr.bf16.mxu0 0
      %1097 = vmatpush1.bf16.msra.mxu0 0
      %1098 = vmatprep.mubr.bf16.mxu0 0
      %1099 = vmatmul.mubr.bf16.gmra.mrb[0].mxu0 %v992
      %v1100 = vpop.f32.mrb[0].mxu0
      %v1101 = vadd.f32 %v1016, %v1100
      %v1102 = vpop.f32.mrb[0].mxu0
      %v1103 = vpop.f32.mrb[0].mxu0
      %v1104 = vadd.f32 %v1016, %v1103
      %v1105 = vpop.f32.mrb[0].mxu0
      %1106 = vmatprep.mubr.bf16.mxu0 0
      %1107 = vmatmul.mubr.bf16.gmra.mrb[0].mxu0 %v993
      %v1108 = vpop.f32.mrb[0].mxu0
      %v1109 = vadd.f32 %v1016, %v1108
      %v1110 = vpop.f32.mrb[0].mxu0
      %v1111 = vpop.f32.mrb[0].mxu0
      %v1112 = vadd.f32 %v1016, %v1111
      %v1113 = vpop.f32.mrb[0].mxu0
      %1114 = vmatprep.mubr.bf16.mxu0 0
      %1115 = vmatmul.mubr.bf16.gmra.mrb[0].mxu0 %v994
      %v1116 = vpop.f32.mrb[0].mxu0
      %v1117 = vadd.f32 %v1016, %v1116
      %v1118 = vpop.f32.mrb[0].mxu0
      %v1119 = vpop.f32.mrb[0].mxu0
      %v1120 = vadd.f32 %v1016, %v1119
      %v1121 = vpop.f32.mrb[0].mxu0
      %1122 = vmatprep.mubr.bf16.mxu0 0
      %1123 = vmatmul.mubr.bf16.gmra.mrb[0].mxu0 %v995
      %v1124 = vpop.f32.mrb[0].mxu0
      %v1125 = vadd.f32 %v1016, %v1124
      %v1126 = vpop.f32.mrb[0].mxu0
      %v1127 = vpop.f32.mrb[0].mxu0
      %v1128 = vadd.f32 %v1016, %v1127
      %v1129 = vpop.f32.mrb[0].mxu0
      %1130 = vdwg.mxu0
      %v1131 = vld [vmem:[%s472] sm:$0xf]
      %v1132 = vld [vmem:[%s472 + $0x8] sm:$0xf]
      %v1133 = vld [vmem:[%s472 + $0x10] sm:$0xf]
      %v1134 = vld [vmem:[%s472 + $0x18] sm:$0xf]
      %v1135 = vld [vmem:[%s472 + $0x20] sm:$0xf]
      %v1136 = vld [vmem:[%s472 + $0x28] sm:$0xf]
      %v1137 = vld [vmem:[%s472 + $0x30] sm:$0xf]
      %v1138 = vld [vmem:[%s472 + $0x38] sm:$0xf]
      %v1147 = vunpack.c.l.b16 %v1131
      %v1148 = vunpack.c.l.b16 %v1132
      %v1149 = vunpack.c.l.b16 %v1133
      %v1150 = vunpack.c.l.b16 %v1134
      %v1151 = vunpack.c.l.b16 %v1135
      %v1152 = vunpack.c.l.b16 %v1136
      %v1153 = vunpack.c.l.b16 %v1137
      %v1154 = vunpack.c.l.b16 %v1138
      %v1155 = vpack.c.b16 %v1148, %v1147
      %v1156 = vpack.c.b16 %v1150, %v1149
      %v1157 = vpack.c.b16 %v1152, %v1151
      %v1158 = vpack.c.b16 %v1154, %v1153
      %1163 = vst.msk [vmem:[#allocation4] sm:$0xff] %vm625, %v1155
      %1164 = vst.msk [vmem:[#allocation4 + $0x8] sm:$0xff] %vm625, %v1156
      %1165 = vst.msk [vmem:[#allocation4 + $0x10] sm:$0xff] %vm625, %v1157
      %1166 = vst.msk [vmem:[#allocation4 + $0x18] sm:$0xff] %vm625, %v1158
      %v1167 = vld [vmem:[%s472] sm:$0xf]
      %v1168 = vld [vmem:[%s472 + $0x4] sm:$0x1]
      %v1169 = vld [vmem:[%s472 + $0x8] sm:$0xf]
      %v1170 = vld [vmem:[%s472 + $0xc] sm:$0x1]
      %v1171 = vld [vmem:[%s472 + $0x10] sm:$0xf]
      %v1172 = vld [vmem:[%s472 + $0x14] sm:$0x1]
      %v1173 = vld [vmem:[%s472 + $0x18] sm:$0xf]
      %v1174 = vld [vmem:[%s472 + $0x1c] sm:$0x1]
      %v1175 = vld [vmem:[%s472 + $0x20] sm:$0xf]
      %v1176 = vld [vmem:[%s472 + $0x24] sm:$0x1]
      %v1177 = vld [vmem:[%s472 + $0x28] sm:$0xf]
      %v1178 = vld [vmem:[%s472 + $0x2c] sm:$0x1]
      %v1179 = vld [vmem:[%s472 + $0x30] sm:$0xf]
      %v1180 = vld [vmem:[%s472 + $0x34] sm:$0x1]
      %v1181 = vld [vmem:[%s472 + $0x38] sm:$0xf]
      %v1182 = vld [vmem:[%s472 + $0x3c] sm:$0x1]
      %v1184 = vshrl.u32 %v1167, 16
      %v1186 = vrot.slane %v1184, 4
      %v1187 = vshll.u32 %v1167, 16
      %v1189 = vrot.slane %v1187, 5
      %v1190 = vor.u32 %v1186, %v1189
      %v1191 = vrot.slane %v1190, 4
      %v1193 = vshll.u32 %v1168, 16
      %v1195 = vrot.slane %v1193, 5
      %v1196 = vsel %vm648, %v1191, %v1195
      %v1198 = vshrl.u32 %v1169, 16
      %v1200 = vrot.slane %v1198, 4
      %v1201 = vshll.u32 %v1169, 16
      %v1203 = vrot.slane %v1201, 5
      %v1204 = vor.u32 %v1200, %v1203
      %v1205 = vrot.slane %v1204, 4
      %v1207 = vshll.u32 %v1170, 16
      %v1209 = vrot.slane %v1207, 5
      %v1210 = vsel %vm648, %v1205, %v1209
      %v1212 = vshrl.u32 %v1171, 16
      %v1214 = vrot.slane %v1212, 4
      %v1215 = vshll.u32 %v1171, 16
      %v1217 = vrot.slane %v1215, 5
      %v1218 = vor.u32 %v1214, %v1217
      %v1219 = vrot.slane %v1218, 4
      %v1221 = vshll.u32 %v1172, 16
      %v1223 = vrot.slane %v1221, 5
      %v1224 = vsel %vm648, %v1219, %v1223
      %v1226 = vshrl.u32 %v1173, 16
      %v1228 = vrot.slane %v1226, 4
      %v1229 = vshll.u32 %v1173, 16
      %v1231 = vrot.slane %v1229, 5
      %v1232 = vor.u32 %v1228, %v1231
      %v1233 = vrot.slane %v1232, 4
      %v1235 = vshll.u32 %v1174, 16
      %v1237 = vrot.slane %v1235, 5
      %v1238 = vsel %vm648, %v1233, %v1237
      %v1240 = vshrl.u32 %v1175, 16
      %v1242 = vrot.slane %v1240, 4
      %v1243 = vshll.u32 %v1175, 16
      %v1245 = vrot.slane %v1243, 5
      %v1246 = vor.u32 %v1242, %v1245
      %v1247 = vrot.slane %v1246, 4
      %v1249 = vshll.u32 %v1176, 16
      %v1251 = vrot.slane %v1249, 5
      %v1252 = vsel %vm648, %v1247, %v1251
      %v1254 = vshrl.u32 %v1177, 16
      %v1256 = vrot.slane %v1254, 4
      %v1257 = vshll.u32 %v1177, 16
      %v1259 = vrot.slane %v1257, 5
      %v1260 = vor.u32 %v1256, %v1259
      %v1261 = vrot.slane %v1260, 4
      %v1263 = vshll.u32 %v1178, 16
      %v1265 = vrot.slane %v1263, 5
      %v1266 = vsel %vm648, %v1261, %v1265
      %v1268 = vshrl.u32 %v1179, 16
      %v1270 = vrot.slane %v1268, 4
      %v1271 = vshll.u32 %v1179, 16
      %v1273 = vrot.slane %v1271, 5
      %v1274 = vor.u32 %v1270, %v1273
      %v1275 = vrot.slane %v1274, 4
      %v1277 = vshll.u32 %v1180, 16
      %v1279 = vrot.slane %v1277, 5
      %v1280 = vsel %vm648, %v1275, %v1279
      %v1282 = vshrl.u32 %v1181, 16
      %v1284 = vrot.slane %v1282, 4
      %v1285 = vshll.u32 %v1181, 16
      %v1287 = vrot.slane %v1285, 5
      %v1288 = vor.u32 %v1284, %v1287
      %v1289 = vrot.slane %v1288, 4
      %v1291 = vshll.u32 %v1182, 16
      %v1293 = vrot.slane %v1291, 5
      %v1294 = vsel %vm648, %v1289, %v1293
      %v1295 = vunpack.c.l.b16 %v1196
      %v1296 = vunpack.c.l.b16 %v1210
      %v1297 = vunpack.c.l.b16 %v1224
      %v1298 = vunpack.c.l.b16 %v1238
      %v1299 = vunpack.c.l.b16 %v1252
      %v1300 = vunpack.c.l.b16 %v1266
      %v1301 = vunpack.c.l.b16 %v1280
      %v1302 = vunpack.c.l.b16 %v1294
      %v1303 = vpack.c.b16 %v1296, %v1295
      %v1304 = vpack.c.b16 %v1298, %v1297
      %v1305 = vpack.c.b16 %v1300, %v1299
      %v1306 = vpack.c.b16 %v1302, %v1301
      %1307 = vrot.lane.b32.xlu0 %v1303, 32
      %v1308 = vpop.permute.xlu0 %1307
      %1309 = vrot.lane.b32.xlu0 %v1304, 32
      %v1310 = vpop.permute.xlu0 %1309
      %1311 = vrot.lane.b32.xlu0 %v1305, 32
      %v1312 = vpop.permute.xlu0 %1311
      %1313 = vrot.lane.b32.xlu0 %v1306, 32
      %v1314 = vpop.permute.xlu0 %1313
      %1319 = vst.msk [vmem:[#allocation4] sm:$0xff] %vm785, %v1308
      %1320 = vst.msk [vmem:[#allocation4 + $0x8] sm:$0xff] %vm785, %v1310
      %1321 = vst.msk [vmem:[#allocation4 + $0x10] sm:$0xff] %vm785, %v1312
      %1322 = vst.msk [vmem:[#allocation4 + $0x18] sm:$0xff] %vm785, %v1314
      %s1323 = scalar_lea.vmem [#allocation2], 16
      %v1324 = vld [vmem:[%s1323] sm:$0xf]
      %v1325 = vld [vmem:[%s1323 + $0x8] sm:$0xf]
      %v1326 = vld [vmem:[%s1323 + $0x10] sm:$0xf]
      %v1327 = vld [vmem:[%s1323 + $0x18] sm:$0xf]
      %v1328 = vld [vmem:[%s1323 + $0x20] sm:$0xf]
      %v1329 = vld [vmem:[%s1323 + $0x28] sm:$0xf]
      %v1330 = vld [vmem:[%s1323 + $0x30] sm:$0xf]
      %v1331 = vld [vmem:[%s1323 + $0x38] sm:$0xf]
      %v1340 = vunpack.c.l.b16 %v1324
      %v1341 = vunpack.c.l.b16 %v1325
      %v1342 = vunpack.c.l.b16 %v1326
      %v1343 = vunpack.c.l.b16 %v1327
      %v1344 = vunpack.c.l.b16 %v1328
      %v1345 = vunpack.c.l.b16 %v1329
      %v1346 = vunpack.c.l.b16 %v1330
      %v1347 = vunpack.c.l.b16 %v1331
      %v1348 = vpack.c.b16 %v1341, %v1340
      %v1349 = vpack.c.b16 %v1343, %v1342
      %v1350 = vpack.c.b16 %v1345, %v1344
      %v1351 = vpack.c.b16 %v1347, %v1346
      %1352 = vrot.lane.b32.xlu0 %v1348, 64
      %v1353 = vpop.permute.xlu0 %1352
      %1354 = vrot.lane.b32.xlu0 %v1349, 64
      %v1355 = vpop.permute.xlu0 %1354
      %1356 = vrot.lane.b32.xlu0 %v1350, 64
      %v1357 = vpop.permute.xlu0 %1356
      %1358 = vrot.lane.b32.xlu0 %v1351, 64
      %v1359 = vpop.permute.xlu0 %1358
      %1364 = vst.msk [vmem:[#allocation4] sm:$0xff] %vm830, %v1353
      %1365 = vst.msk [vmem:[#allocation4 + $0x8] sm:$0xff] %vm830, %v1355
      %1366 = vst.msk [vmem:[#allocation4 + $0x10] sm:$0xff] %vm830, %v1357
      %1367 = vst.msk [vmem:[#allocation4 + $0x18] sm:$0xff] %vm830, %v1359
      %v1368 = vld [vmem:[%s1323] sm:$0xf]
      %v1369 = vld [vmem:[%s1323 + $0x4] sm:$0x1]
      %v1370 = vld [vmem:[%s1323 + $0x8] sm:$0xf]
      %v1371 = vld [vmem:[%s1323 + $0xc] sm:$0x1]
      %v1372 = vld [vmem:[%s1323 + $0x10] sm:$0xf]
      %v1373 = vld [vmem:[%s1323 + $0x14] sm:$0x1]
      %v1374 = vld [vmem:[%s1323 + $0x18] sm:$0xf]
      %v1375 = vld [vmem:[%s1323 + $0x1c] sm:$0x1]
      %v1376 = vld [vmem:[%s1323 + $0x20] sm:$0xf]
      %v1377 = vld [vmem:[%s1323 + $0x24] sm:$0x1]
      %v1378 = vld [vmem:[%s1323 + $0x28] sm:$0xf]
      %v1379 = vld [vmem:[%s1323 + $0x2c] sm:$0x1]
      %v1380 = vld [vmem:[%s1323 + $0x30] sm:$0xf]
      %v1381 = vld [vmem:[%s1323 + $0x34] sm:$0x1]
      %v1382 = vld [vmem:[%s1323 + $0x38] sm:$0xf]
      %v1383 = vld [vmem:[%s1323 + $0x3c] sm:$0x1]
      %v1385 = vshrl.u32 %v1368, 16
      %v1387 = vrot.slane %v1385, 4
      %v1388 = vshll.u32 %v1368, 16
      %v1390 = vrot.slane %v1388, 5
      %v1391 = vor.u32 %v1387, %v1390
      %v1392 = vrot.slane %v1391, 4
      %v1394 = vshll.u32 %v1369, 16
      %v1396 = vrot.slane %v1394, 5
      %v1397 = vsel %vm648, %v1392, %v1396
      %v1399 = vshrl.u32 %v1370, 16
      %v1401 = vrot.slane %v1399, 4
      %v1402 = vshll.u32 %v1370, 16
      %v1404 = vrot.slane %v1402, 5
      %v1405 = vor.u32 %v1401, %v1404
      %v1406 = vrot.slane %v1405, 4
      %v1408 = vshll.u32 %v1371, 16
      %v1410 = vrot.slane %v1408, 5
      %v1411 = vsel %vm648, %v1406, %v1410
      %v1413 = vshrl.u32 %v1372, 16
      %v1415 = vrot.slane %v1413, 4
      %v1416 = vshll.u32 %v1372, 16
      %v1418 = vrot.slane %v1416, 5
      %v1419 = vor.u32 %v1415, %v1418
      %v1420 = vrot.slane %v1419, 4
      %v1422 = vshll.u32 %v1373, 16
      %v1424 = vrot.slane %v1422, 5
      %v1425 = vsel %vm648, %v1420, %v1424
      %v1427 = vshrl.u32 %v1374, 16
      %v1429 = vrot.slane %v1427, 4
      %v1430 = vshll.u32 %v1374, 16
      %v1432 = vrot.slane %v1430, 5
      %v1433 = vor.u32 %v1429, %v1432
      %v1434 = vrot.slane %v1433, 4
      %v1436 = vshll.u32 %v1375, 16
      %v1438 = vrot.slane %v1436, 5
      %v1439 = vsel %vm648, %v1434, %v1438
      %v1441 = vshrl.u32 %v1376, 16
      %v1443 = vrot.slane %v1441, 4
      %v1444 = vshll.u32 %v1376, 16
      %v1446 = vrot.slane %v1444, 5
      %v1447 = vor.u32 %v1443, %v1446
      %v1448 = vrot.slane %v1447, 4
      %v1450 = vshll.u32 %v1377, 16
      %v1452 = vrot.slane %v1450, 5
      %v1453 = vsel %vm648, %v1448, %v1452
      %v1455 = vshrl.u32 %v1378, 16
      %v1457 = vrot.slane %v1455, 4
      %v1458 = vshll.u32 %v1378, 16
      %v1460 = vrot.slane %v1458, 5
      %v1461 = vor.u32 %v1457, %v1460
      %v1462 = vrot.slane %v1461, 4
      %v1464 = vshll.u32 %v1379, 16
      %v1466 = vrot.slane %v1464, 5
      %v1467 = vsel %vm648, %v1462, %v1466
      %v1469 = vshrl.u32 %v1380, 16
      %v1471 = vrot.slane %v1469, 4
      %v1472 = vshll.u32 %v1380, 16
      %v1474 = vrot.slane %v1472, 5
      %v1475 = vor.u32 %v1471, %v1474
      %v1476 = vrot.slane %v1475, 4
      %v1478 = vshll.u32 %v1381, 16
      %v1480 = vrot.slane %v1478, 5
      %v1481 = vsel %vm648, %v1476, %v1480
      %v1483 = vshrl.u32 %v1382, 16
      %v1485 = vrot.slane %v1483, 4
      %v1486 = vshll.u32 %v1382, 16
      %v1488 = vrot.slane %v1486, 5
      %v1489 = vor.u32 %v1485, %v1488
      %v1490 = vrot.slane %v1489, 4
      %v1492 = vshll.u32 %v1383, 16
      %v1494 = vrot.slane %v1492, 5
      %v1495 = vsel %vm648, %v1490, %v1494
      %v1496 = vunpack.c.l.b16 %v1397
      %v1497 = vunpack.c.l.b16 %v1411
      %v1498 = vunpack.c.l.b16 %v1425
      %v1499 = vunpack.c.l.b16 %v1439
      %v1500 = vunpack.c.l.b16 %v1453
      %v1501 = vunpack.c.l.b16 %v1467
      %v1502 = vunpack.c.l.b16 %v1481
      %v1503 = vunpack.c.l.b16 %v1495
      %v1504 = vpack.c.b16 %v1497, %v1496
      %v1505 = vpack.c.b16 %v1499, %v1498
      %v1506 = vpack.c.b16 %v1501, %v1500
      %v1507 = vpack.c.b16 %v1503, %v1502
      %1508 = vrot.lane.b32.xlu0 %v1504, 96
      %v1509 = vpop.permute.xlu0 %1508
      %1510 = vrot.lane.b32.xlu0 %v1505, 96
      %v1511 = vpop.permute.xlu0 %1510
      %1512 = vrot.lane.b32.xlu0 %v1506, 96
      %v1513 = vpop.permute.xlu0 %1512
      %1514 = vrot.lane.b32.xlu0 %v1507, 96
      %v1515 = vpop.permute.xlu0 %1514
      %1520 = vst.msk [vmem:[#allocation4] sm:$0xff] %vm987, %v1509
      %1521 = vst.msk [vmem:[#allocation4 + $0x8] sm:$0xff] %vm987, %v1511
      %1522 = vst.msk [vmem:[#allocation4 + $0x10] sm:$0xff] %vm987, %v1513
      %1523 = vst.msk [vmem:[#allocation4 + $0x18] sm:$0xff] %vm987, %v1515
      %v1524 = vld [vmem:[#allocation4] sm:$0xff]
      %v1525 = vld [vmem:[#allocation4 + $0x8] sm:$0xff]
      %v1526 = vld [vmem:[#allocation4 + $0x10] sm:$0xff]
      %v1527 = vld [vmem:[#allocation4 + $0x18] sm:$0xff]
      %s1528 = scalar_lea.vmem %s2, 128
      %v1529 = vld [vmem:[%s1528] sm:$0xf]
      %v1530 = vld [vmem:[%s1528 + $0x4] sm:$0xf]
      %v1531 = vld [vmem:[%s1528 + $0x8] sm:$0xf]
      %v1532 = vld [vmem:[%s1528 + $0xc] sm:$0xf]
      %v1533 = vld [vmem:[%s1528 + $0x10] sm:$0xf]
      %v1534 = vld [vmem:[%s1528 + $0x14] sm:$0xf]
      %v1535 = vld [vmem:[%s1528 + $0x18] sm:$0xf]
      %v1536 = vld [vmem:[%s1528 + $0x1c] sm:$0xf]
      %v1537 = vld [vmem:[%s1528 + $0x20] sm:$0xf]
      %v1538 = vld [vmem:[%s1528 + $0x24] sm:$0xf]
      %v1539 = vld [vmem:[%s1528 + $0x28] sm:$0xf]
      %v1540 = vld [vmem:[%s1528 + $0x2c] sm:$0xf]
      %v1541 = vld [vmem:[%s1528 + $0x30] sm:$0xf]
      %v1542 = vld [vmem:[%s1528 + $0x34] sm:$0xf]
      %v1543 = vld [vmem:[%s1528 + $0x38] sm:$0xf]
      %v1544 = vld [vmem:[%s1528 + $0x3c] sm:$0xf]
      %v1561 = vunpack.c.l.b16 %v1529
      %v1562 = vunpack.c.l.b16 %v1530
      %v1563 = vunpack.c.l.b16 %v1531
      %v1564 = vunpack.c.l.b16 %v1532
      %v1565 = vunpack.c.l.b16 %v1533
      %v1566 = vunpack.c.l.b16 %v1534
      %v1567 = vunpack.c.l.b16 %v1535
      %v1568 = vunpack.c.l.b16 %v1536
      %v1569 = vunpack.c.l.b16 %v1537
      %v1570 = vunpack.c.l.b16 %v1538
      %v1571 = vunpack.c.l.b16 %v1539
      %v1572 = vunpack.c.l.b16 %v1540
      %v1573 = vunpack.c.l.b16 %v1541
      %v1574 = vunpack.c.l.b16 %v1542
      %v1575 = vunpack.c.l.b16 %v1543
      %v1576 = vunpack.c.l.b16 %v1544
      %v1577 = vpack.c.b16 %v1562, %v1561
      %v1578 = vpack.c.b16 %v1564, %v1563
      %v1579 = vpack.c.b16 %v1566, %v1565
      %v1580 = vpack.c.b16 %v1568, %v1567
      %v1581 = vpack.c.b16 %v1570, %v1569
      %v1582 = vpack.c.b16 %v1572, %v1571
      %v1583 = vpack.c.b16 %v1574, %v1573
      %v1584 = vpack.c.b16 %v1576, %v1575
      %1593 = vmatprep.subr.bf16.mxu0 0
      %1594 = vmatpush1.bf16.msra.mxu0 %v1577
      %1595 = vmatprep.subr.bf16.mxu0 0
      %1596 = vmatpush1.bf16.msra.mxu0 %v1578
      %1597 = vmatprep.subr.bf16.mxu0 0
      %1598 = vmatpush1.bf16.msra.mxu0 %v1579
      %1599 = vmatprep.subr.bf16.mxu0 0
      %1600 = vmatpush1.bf16.msra.mxu0 %v1580
      %1601 = vmatprep.subr.bf16.mxu0 0
      %1602 = vmatpush1.bf16.msra.mxu0 %v1581
      %1603 = vmatprep.subr.bf16.mxu0 0
      %1604 = vmatpush1.bf16.msra.mxu0 %v1582
      %1605 = vmatprep.subr.bf16.mxu0 0
      %1606 = vmatpush1.bf16.msra.mxu0 %v1583
      %1607 = vmatprep.subr.bf16.mxu0 0
      %1608 = vmatpush1.bf16.msra.mxu0 %v1584
      %1609 = vmatprep.subr.bf16.mxu0 0
      %1610 = vmatpush1.bf16.msra.mxu0 0
      %1611 = vmatprep.subr.bf16.mxu0 0
      %1612 = vmatpush1.bf16.msra.mxu0 0
      %1613 = vmatprep.subr.bf16.mxu0 0
      %1614 = vmatpush1.bf16.msra.mxu0 0
      %1615 = vmatprep.subr.bf16.mxu0 0
      %1616 = vmatpush1.bf16.msra.mxu0 0
      %1617 = vmatprep.subr.bf16.mxu0 0
      %1618 = vmatpush1.bf16.msra.mxu0 0
      %1619 = vmatprep.subr.bf16.mxu0 0
      %1620 = vmatpush1.bf16.msra.mxu0 0
      %1621 = vmatprep.subr.bf16.mxu0 0
      %1622 = vmatpush1.bf16.msra.mxu0 0
      %1623 = vmatprep.subr.bf16.mxu0 0
      %1624 = vmatpush1.bf16.msra.mxu0 0
      %1625 = vmatprep.mubr.bf16.mxu0 0
      %1626 = vmatmul.mubr.bf16.gmra.mrb[0].mxu0 %v1524
      %v1627 = vpop.f32.mrb[0].mxu0
      %v1628 = vadd.f32 %v1016, %v1627
      %v1629 = vpop.f32.mrb[0].mxu0
      %v1630 = vpop.f32.mrb[0].mxu0
      %v1631 = vadd.f32 %v1016, %v1630
      %v1632 = vpop.f32.mrb[0].mxu0
      %1633 = vmatprep.mubr.bf16.mxu0 0
      %1634 = vmatmul.mubr.bf16.gmra.mrb[0].mxu0 %v1525
      %v1635 = vpop.f32.mrb[0].mxu0
      %v1636 = vadd.f32 %v1016, %v1635
      %v1637 = vpop.f32.mrb[0].mxu0
      %v1638 = vpop.f32.mrb[0].mxu0
      %v1639 = vadd.f32 %v1016, %v1638
      %v1640 = vpop.f32.mrb[0].mxu0
      %1641 = vmatprep.mubr.bf16.mxu0 0
      %1642 = vmatmul.mubr.bf16.gmra.mrb[0].mxu0 %v1526
      %v1643 = vpop.f32.mrb[0].mxu0
      %v1644 = vadd.f32 %v1016, %v1643
      %v1645 = vpop.f32.mrb[0].mxu0
      %v1646 = vpop.f32.mrb[0].mxu0
      %v1647 = vadd.f32 %v1016, %v1646
      %v1648 = vpop.f32.mrb[0].mxu0
      %1649 = vmatprep.mubr.bf16.mxu0 0
      %1650 = vmatmul.mubr.bf16.gmra.mrb[0].mxu0 %v1527
      %v1651 = vpop.f32.mrb[0].mxu0
      %v1652 = vadd.f32 %v1016, %v1651
      %v1653 = vpop.f32.mrb[0].mxu0
      %v1654 = vpop.f32.mrb[0].mxu0
      %v1655 = vadd.f32 %v1016, %v1654
      %v1656 = vpop.f32.mrb[0].mxu0
      %1657 = vdwg.mxu0
      %v1658 = vpack.c.bf16 0.0, 0.0
      %v1659 = vpack.c.bf16 %v1101, 0.0
      %v1660 = vpack.c.bf16 %v1104, %v1628
      %v1661 = vpack.c.bf16 %v1109, %v1631
      %v1662 = vpack.c.bf16 %v1112, %v1636
      %v1663 = vpack.c.bf16 %v1117, %v1639
      %v1664 = vpack.c.bf16 %v1120, %v1644
      %v1665 = vpack.c.bf16 %v1125, %v1647
      %1666 = vst.msk [vmem:[#allocation5] sm:$0xff] %vm625, %v1658
      %1667 = vst.msk [vmem:[#allocation5 + $0x10] sm:$0xff] %vm625, %v1659
      %1668 = vst.msk [vmem:[#allocation5 + $0x20] sm:$0xff] %vm625, %v1660
      %1669 = vst.msk [vmem:[#allocation5 + $0x30] sm:$0xff] %vm625, %v1661
      %1670 = vst.msk [vmem:[#allocation5 + $0x40] sm:$0xff] %vm625, %v1662
      %1671 = vst.msk [vmem:[#allocation5 + $0x50] sm:$0xff] %vm625, %v1663
      %1672 = vst.msk [vmem:[#allocation5 + $0x60] sm:$0xff] %vm625, %v1664
      %1673 = vst.msk [vmem:[#allocation5 + $0x70] sm:$0xff] %vm625, %v1665
      %v1674 = vpack.c.bf16 %v1628, %v1101
      %v1675 = vpack.c.bf16 %v1631, %v1104
      %v1676 = vpack.c.bf16 %v1636, %v1109
      %v1677 = vpack.c.bf16 %v1639, %v1112
      %v1678 = vpack.c.bf16 %v1644, %v1117
      %v1679 = vpack.c.bf16 %v1647, %v1120
      %v1680 = vpack.c.bf16 %v1652, %v1125
      %1689 = vrot.lane.b32.xlu0 %v1658, 32
      %v1690 = vpop.permute.xlu0 %1689
      %1691 = vrot.lane.b32.xlu0 %v1674, 32
      %v1692 = vpop.permute.xlu0 %1691
      %1693 = vrot.lane.b32.xlu0 %v1675, 32
      %v1694 = vpop.permute.xlu0 %1693
      %1695 = vrot.lane.b32.xlu0 %v1676, 32
      %v1696 = vpop.permute.xlu0 %1695
      %1697 = vrot.lane.b32.xlu0 %v1677, 32
      %v1698 = vpop.permute.xlu0 %1697
      %1699 = vrot.lane.b32.xlu0 %v1678, 32
      %v1700 = vpop.permute.xlu0 %1699
      %1701 = vrot.lane.b32.xlu0 %v1679, 32
      %v1702 = vpop.permute.xlu0 %1701
      %1703 = vrot.lane.b32.xlu0 %v1680, 32
      %v1704 = vpop.permute.xlu0 %1703
      %1713 = vst.msk [vmem:[#allocation5] sm:$0xff] %vm785, %v1690
      %1714 = vst.msk [vmem:[#allocation5 + $0x10] sm:$0xff] %vm785, %v1692
      %1715 = vst.msk [vmem:[#allocation5 + $0x20] sm:$0xff] %vm785, %v1694
      %1716 = vst.msk [vmem:[#allocation5 + $0x30] sm:$0xff] %vm785, %v1696
      %1717 = vst.msk [vmem:[#allocation5 + $0x40] sm:$0xff] %vm785, %v1698
      %1718 = vst.msk [vmem:[#allocation5 + $0x50] sm:$0xff] %vm785, %v1700
      %1719 = vst.msk [vmem:[#allocation5 + $0x60] sm:$0xff] %vm785, %v1702
      %1720 = vst.msk [vmem:[#allocation5 + $0x70] sm:$0xff] %vm785, %v1704
      %v1721 = vpack.c.bf16 %v1128, %v1652
      %1730 = vrot.lane.b32.xlu0 %v1659, 64
      %v1731 = vpop.permute.xlu0 %1730
      %1732 = vrot.lane.b32.xlu0 %v1660, 64
      %v1733 = vpop.permute.xlu0 %1732
      %1734 = vrot.lane.b32.xlu0 %v1661, 64
      %v1735 = vpop.permute.xlu0 %1734
      %1736 = vrot.lane.b32.xlu0 %v1662, 64
      %v1737 = vpop.permute.xlu0 %1736
      %1738 = vrot.lane.b32.xlu0 %v1663, 64
      %v1739 = vpop.permute.xlu0 %1738
      %1740 = vrot.lane.b32.xlu0 %v1664, 64
      %v1741 = vpop.permute.xlu0 %1740
      %1742 = vrot.lane.b32.xlu0 %v1665, 64
      %v1743 = vpop.permute.xlu0 %1742
      %1744 = vrot.lane.b32.xlu0 %v1721, 64
      %v1745 = vpop.permute.xlu0 %1744
      %1754 = vst.msk [vmem:[#allocation5] sm:$0xff] %vm830, %v1731
      %1755 = vst.msk [vmem:[#allocation5 + $0x10] sm:$0xff] %vm830, %v1733
      %1756 = vst.msk [vmem:[#allocation5 + $0x20] sm:$0xff] %vm830, %v1735
      %1757 = vst.msk [vmem:[#allocation5 + $0x30] sm:$0xff] %vm830, %v1737
      %1758 = vst.msk [vmem:[#allocation5 + $0x40] sm:$0xff] %vm830, %v1739
      %1759 = vst.msk [vmem:[#allocation5 + $0x50] sm:$0xff] %vm830, %v1741
      %1760 = vst.msk [vmem:[#allocation5 + $0x60] sm:$0xff] %vm830, %v1743
      %1761 = vst.msk [vmem:[#allocation5 + $0x70] sm:$0xff] %vm830, %v1745
      %v1762 = vpack.c.bf16 %v1655, %v1128
      %1764 = vrot.lane.b32.xlu0 %v1674, 96
      %v1765 = vpop.permute.xlu0 %1764
      %1766 = vrot.lane.b32.xlu0 %v1675, 96
      %v1767 = vpop.permute.xlu0 %1766
      %1768 = vrot.lane.b32.xlu0 %v1676, 96
      %v1769 = vpop.permute.xlu0 %1768
      %1770 = vrot.lane.b32.xlu0 %v1677, 96
      %v1771 = vpop.permute.xlu0 %1770
      %1772 = vrot.lane.b32.xlu0 %v1678, 96
      %v1773 = vpop.permute.xlu0 %1772
      %1774 = vrot.lane.b32.xlu0 %v1679, 96
      %v1775 = vpop.permute.xlu0 %1774
      %1776 = vrot.lane.b32.xlu0 %v1680, 96
      %v1777 = vpop.permute.xlu0 %1776
      %1778 = vrot.lane.b32.xlu0 %v1762, 96
      %v1779 = vpop.permute.xlu0 %1778
      %1788 = vst.msk [vmem:[#allocation5] sm:$0xff] %vm987, %v1765
      %1789 = vst.msk [vmem:[#allocation5 + $0x10] sm:$0xff] %vm987, %v1767
      %1790 = vst.msk [vmem:[#allocation5 + $0x20] sm:$0xff] %vm987, %v1769
      %1791 = vst.msk [vmem:[#allocation5 + $0x30] sm:$0xff] %vm987, %v1771
      %1792 = vst.msk [vmem:[#allocation5 + $0x40] sm:$0xff] %vm987, %v1773
      %1793 = vst.msk [vmem:[#allocation5 + $0x50] sm:$0xff] %vm987, %v1775
      %1794 = vst.msk [vmem:[#allocation5 + $0x60] sm:$0xff] %vm987, %v1777
      %1795 = vst.msk [vmem:[#allocation5 + $0x70] sm:$0xff] %vm987, %v1779
      %v1796 = vpack.c.bf16 0.0, %v1655
      %1797 = vst.msk [vmem:[#allocation5 + $0x8] sm:$0xff] %vm625, %v1660
      %1798 = vst.msk [vmem:[#allocation5 + $0x18] sm:$0xff] %vm625, %v1661
      %1799 = vst.msk [vmem:[#allocation5 + $0x28] sm:$0xff] %vm625, %v1662
      %1800 = vst.msk [vmem:[#allocation5 + $0x38] sm:$0xff] %vm625, %v1663
      %1801 = vst.msk [vmem:[#allocation5 + $0x48] sm:$0xff] %vm625, %v1664
      %1802 = vst.msk [vmem:[#allocation5 + $0x58] sm:$0xff] %vm625, %v1665
      %1803 = vst.msk [vmem:[#allocation5 + $0x68] sm:$0xff] %vm625, %v1721
      %1804 = vst.msk [vmem:[#allocation5 + $0x78] sm:$0xff] %vm625, %v1796
      %1805 = vrot.lane.b32.xlu0 %v1762, 32
      %v1806 = vpop.permute.xlu0 %1805
      %1808 = vst.msk [vmem:[#allocation5 + $0x8] sm:$0xff] %vm785, %v1694
      %1809 = vst.msk [vmem:[#allocation5 + $0x18] sm:$0xff] %vm785, %v1696
      %1810 = vst.msk [vmem:[#allocation5 + $0x28] sm:$0xff] %vm785, %v1698
      %1811 = vst.msk [vmem:[#allocation5 + $0x38] sm:$0xff] %vm785, %v1700
      %1812 = vst.msk [vmem:[#allocation5 + $0x48] sm:$0xff] %vm785, %v1702
      %1813 = vst.msk [vmem:[#allocation5 + $0x58] sm:$0xff] %vm785, %v1704
      %1814 = vst.msk [vmem:[#allocation5 + $0x68] sm:$0xff] %vm785, %v1806
      %1815 = vst.msk [vmem:[#allocation5 + $0x78] sm:$0xff] %vm785, %v1690
      %1817 = vrot.lane.b32.xlu0 %v1796, 64
      %v1818 = vpop.permute.xlu0 %1817
      %1819 = vrot.lane.b32.xlu0 %v1658, 64
      %v1820 = vpop.permute.xlu0 %1819
      %1823 = vst.msk [vmem:[#allocation5 + $0x8] sm:$0xff] %vm830, %v1735
      %1824 = vst.msk [vmem:[#allocation5 + $0x18] sm:$0xff] %vm830, %v1737
      %1825 = vst.msk [vmem:[#allocation5 + $0x28] sm:$0xff] %vm830, %v1739
      %1826 = vst.msk [vmem:[#allocation5 + $0x38] sm:$0xff] %vm830, %v1741
      %1827 = vst.msk [vmem:[#allocation5 + $0x48] sm:$0xff] %vm830, %v1743
      %1828 = vst.msk [vmem:[#allocation5 + $0x58] sm:$0xff] %vm830, %v1745
      %1829 = vst.msk [vmem:[#allocation5 + $0x68] sm:$0xff] %vm830, %v1818
      %1830 = vst.msk [vmem:[#allocation5 + $0x78] sm:$0xff] %vm830, %v1820
      %v1831 = vld [vmem:[#allocation5] sm:$0xff]
      %v1832 = vld [vmem:[#allocation5 + $0x8] sm:$0xff]
      %v1833 = vld [vmem:[#allocation5 + $0x10] sm:$0xff]
      %v1834 = vld [vmem:[#allocation5 + $0x18] sm:$0xff]
      %v1835 = vld [vmem:[#allocation5 + $0x20] sm:$0xff]
      %v1836 = vld [vmem:[#allocation5 + $0x28] sm:$0xff]
      %v1837 = vld [vmem:[#allocation5 + $0x30] sm:$0xff]
      %v1838 = vld [vmem:[#allocation5 + $0x38] sm:$0xff]
      %v1839 = vld [vmem:[#allocation5 + $0x40] sm:$0xff]
      %v1840 = vld [vmem:[#allocation5 + $0x48] sm:$0xff]
      %v1841 = vld [vmem:[#allocation5 + $0x50] sm:$0xff]
      %v1842 = vld [vmem:[#allocation5 + $0x58] sm:$0xff]
      %v1843 = vld [vmem:[#allocation5 + $0x60] sm:$0xff]
      %v1844 = vld [vmem:[#allocation5 + $0x68] sm:$0xff]
      %v1845 = vld [vmem:[#allocation5 + $0x70] sm:$0xff]
      %v1846 = vld [vmem:[#allocation5 + $0x78] sm:$0xff]
      %v1847 = vld [vmem:[%s3] sm:$0xf]
      %v1848 = vld [vmem:[%s3 + $0x4] sm:$0xf]
      %v1849 = vld [vmem:[%s3 + $0x8] sm:$0xf]
      %v1850 = vld [vmem:[%s3 + $0xc] sm:$0xf]
      %v1851 = vld [vmem:[%s3 + $0x10] sm:$0xf]
      %v1852 = vld [vmem:[%s3 + $0x14] sm:$0xf]
      %v1853 = vld [vmem:[%s3 + $0x18] sm:$0xf]
      %v1854 = vld [vmem:[%s3 + $0x1c] sm:$0xf]
      %v1855 = vld [vmem:[%s3 + $0x20] sm:$0xf]
      %v1856 = vld [vmem:[%s3 + $0x24] sm:$0xf]
      %v1857 = vld [vmem:[%s3 + $0x28] sm:$0xf]
      %v1858 = vld [vmem:[%s3 + $0x2c] sm:$0xf]
      %v1859 = vld [vmem:[%s3 + $0x30] sm:$0xf]
      %v1860 = vld [vmem:[%s3 + $0x34] sm:$0xf]
      %v1861 = vld [vmem:[%s3 + $0x38] sm:$0xf]
      %v1862 = vld [vmem:[%s3 + $0x3c] sm:$0xf]
      %v1863 = vld [vmem:[%s3 + $0x40] sm:$0xf]
      %v1864 = vld [vmem:[%s3 + $0x44] sm:$0xf]
      %v1865 = vld [vmem:[%s3 + $0x48] sm:$0xf]
      %v1866 = vld [vmem:[%s3 + $0x4c] sm:$0xf]
      %v1867 = vld [vmem:[%s3 + $0x50] sm:$0xf]
      %v1868 = vld [vmem:[%s3 + $0x54] sm:$0xf]
      %v1869 = vld [vmem:[%s3 + $0x58] sm:$0xf]
      %v1870 = vld [vmem:[%s3 + $0x5c] sm:$0xf]
      %v1871 = vld [vmem:[%s3 + $0x60] sm:$0xf]
      %v1872 = vld [vmem:[%s3 + $0x64] sm:$0xf]
      %v1873 = vld [vmem:[%s3 + $0x68] sm:$0xf]
      %v1874 = vld [vmem:[%s3 + $0x6c] sm:$0xf]
      %v1876 = vlaneseq
      %v1877 = vshrl.u32 %v1876, 7
      %v1878 = vsub.s32 0, %v1877
      %v1879 = vrot.slane %v328, %v1878
      %v1909 = vunpack.c.l.b16 %v1847
      %v1910 = vunpack.c.l.b16 %v1848
      %v1911 = vunpack.c.l.b16 %v1849
      %v1912 = vunpack.c.l.b16 %v1850
      %v1913 = vunpack.c.l.b16 %v1851
      %v1914 = vunpack.c.l.b16 %v1852
      %v1915 = vunpack.c.l.b16 %v1853
      %v1916 = vunpack.c.l.b16 %v1854
      %v1917 = vunpack.c.l.b16 %v1855
      %v1918 = vunpack.c.l.b16 %v1856
      %v1919 = vunpack.c.l.b16 %v1857
      %v1920 = vunpack.c.l.b16 %v1858
      %v1921 = vunpack.c.l.b16 %v1859
      %v1922 = vunpack.c.l.b16 %v1860
      %v1923 = vunpack.c.l.b16 %v1861
      %v1924 = vunpack.c.l.b16 %v1862
      %v1925 = vunpack.c.l.b16 %v1863
      %v1926 = vunpack.c.l.b16 %v1864
      %v1927 = vunpack.c.l.b16 %v1865
      %v1928 = vunpack.c.l.b16 %v1866
      %v1929 = vunpack.c.l.b16 %v1867
      %v1930 = vunpack.c.l.b16 %v1868
      %v1931 = vunpack.c.l.b16 %v1869
      %v1932 = vunpack.c.l.b16 %v1870
      %v1933 = vunpack.c.l.b16 %v1871
      %v1934 = vunpack.c.l.b16 %v1872
      %v1935 = vunpack.c.l.b16 %v1873
      %v1936 = vunpack.c.l.b16 %v1874
      %v1937 = vpack.c.b16 %v1910, %v1909
      %v1938 = vpack.c.b16 %v1912, %v1911
      %v1939 = vpack.c.b16 %v1914, %v1913
      %v1940 = vpack.c.b16 %v1916, %v1915
      %v1941 = vpack.c.b16 %v1918, %v1917
      %v1942 = vpack.c.b16 %v1920, %v1919
      %v1943 = vpack.c.b16 %v1922, %v1921
      %v1944 = vpack.c.b16 %v1924, %v1923
      %v1945 = vpack.c.b16 %v1926, %v1925
      %v1946 = vpack.c.b16 %v1928, %v1927
      %v1947 = vpack.c.b16 %v1930, %v1929
      %v1948 = vpack.c.b16 %v1932, %v1931
      %v1949 = vpack.c.b16 %v1934, %v1933
      %v1950 = vpack.c.b16 %v1936, %v1935
      %vm1965 = vcmask 785408
      %v1967 = vsel %vm1965, %v1832, 0
      %v1970 = vsel %vm1965, %v1834, 0
      %v1973 = vsel %vm1965, %v1836, 0
      %v1976 = vsel %vm1965, %v1838, 0
      %v1979 = vsel %vm1965, %v1840, 0
      %v1982 = vsel %vm1965, %v1842, 0
      %v1985 = vsel %vm1965, %v1844, 0
      %v1988 = vsel %vm1965, %v1846, 0
      %1990 = vmatprep.subr.bf16.mxu0 0
      %1991 = vmatpush1.bf16.msra.mxu0 %v1937
      %1992 = vmatprep.subr.bf16.mxu0 0
      %1993 = vmatpush1.bf16.msra.mxu0 %v1938
      %1994 = vmatprep.subr.bf16.mxu0 0
      %1995 = vmatpush1.bf16.msra.mxu0 %v1939
      %1996 = vmatprep.subr.bf16.mxu0 0
      %1997 = vmatpush1.bf16.msra.mxu0 %v1940
      %1998 = vmatprep.subr.bf16.mxu0 0
      %1999 = vmatpush1.bf16.msra.mxu0 %v1941
      %2000 = vmatprep.subr.bf16.mxu0 0
      %2001 = vmatpush1.bf16.msra.mxu0 %v1942
      %2002 = vmatprep.subr.bf16.mxu0 0
      %2003 = vmatpush1.bf16.msra.mxu0 %v1943
      %2004 = vmatprep.subr.bf16.mxu0 0
      %2005 = vmatpush1.bf16.msra.mxu0 %v1944
      %2006 = vmatprep.subr.bf16.mxu0 0
      %2007 = vmatpush1.bf16.msra.mxu0 %v1945
      %2008 = vmatprep.subr.bf16.mxu0 0
      %2009 = vmatpush1.bf16.msra.mxu0 %v1946
      %2010 = vmatprep.subr.bf16.mxu0 0
      %2011 = vmatpush1.bf16.msra.mxu0 %v1947
      %2012 = vmatprep.subr.bf16.mxu0 0
      %2013 = vmatpush1.bf16.msra.mxu0 %v1948
      %2014 = vmatprep.subr.bf16.mxu0 0
      %2015 = vmatpush1.bf16.msra.mxu0 %v1949
      %2016 = vmatprep.subr.bf16.mxu0 0
      %2017 = vmatpush1.bf16.msra.mxu0 %v1950
      %2018 = vmatprep.subr.bf16.mxu0 0
      %2019 = vmatpush1.bf16.msra.mxu0 0
      %2020 = vmatprep.subr.bf16.mxu0 0
      %2021 = vmatpush1.bf16.msra.mxu0 0
      %2022 = vmatprep.mubr.bf16.mxu0 %v1967
      %2023 = vmatmul.mubr.bf16.gmra.mrb[0].mxu0 %v1831
      %v2024 = vpop.f32.mrb[0].mxu0
      %v2025 = vadd.f32 %v1879, %v2024
      %v2026 = vpop.f32.mrb[0].mxu0
      %v2027 = vpop.f32.mrb[0].mxu0
      %v2028 = vadd.f32 %v1879, %v2027
      %v2029 = vpop.f32.mrb[0].mxu0
      %2030 = vmatprep.mubr.bf16.mxu0 %v1970
      %2031 = vmatmul.mubr.bf16.gmra.mrb[0].mxu0 %v1833
      %v2032 = vpop.f32.mrb[0].mxu0
      %v2033 = vadd.f32 %v1879, %v2032
      %v2034 = vpop.f32.mrb[0].mxu0
      %v2035 = vpop.f32.mrb[0].mxu0
      %v2036 = vadd.f32 %v1879, %v2035
      %v2037 = vpop.f32.mrb[0].mxu0
      %2038 = vmatprep.mubr.bf16.mxu0 %v1973
      %2039 = vmatmul.mubr.bf16.gmra.mrb[0].mxu0 %v1835
      %v2040 = vpop.f32.mrb[0].mxu0
      %v2041 = vadd.f32 %v1879, %v2040
      %v2042 = vpop.f32.mrb[0].mxu0
      %v2043 = vpop.f32.mrb[0].mxu0
      %v2044 = vadd.f32 %v1879, %v2043
      %v2045 = vpop.f32.mrb[0].mxu0
      %2046 = vmatprep.mubr.bf16.mxu0 %v1976
      %2047 = vmatmul.mubr.bf16.gmra.mrb[0].mxu0 %v1837
      %v2048 = vpop.f32.mrb[0].mxu0
      %v2049 = vadd.f32 %v1879, %v2048
      %v2050 = vpop.f32.mrb[0].mxu0
      %v2051 = vpop.f32.mrb[0].mxu0
      %v2052 = vadd.f32 %v1879, %v2051
      %v2053 = vpop.f32.mrb[0].mxu0
      %2054 = vmatprep.mubr.bf16.mxu0 %v1979
      %2055 = vmatmul.mubr.bf16.gmra.mrb[0].mxu0 %v1839
      %v2056 = vpop.f32.mrb[0].mxu0
      %v2057 = vadd.f32 %v1879, %v2056
      %v2058 = vpop.f32.mrb[0].mxu0
      %v2059 = vpop.f32.mrb[0].mxu0
      %v2060 = vadd.f32 %v1879, %v2059
      %v2061 = vpop.f32.mrb[0].mxu0
      %2062 = vmatprep.mubr.bf16.mxu0 %v1982
      %2063 = vmatmul.mubr.bf16.gmra.mrb[0].mxu0 %v1841
      %v2064 = vpop.f32.mrb[0].mxu0
      %v2065 = vadd.f32 %v1879, %v2064
      %v2066 = vpop.f32.mrb[0].mxu0
      %v2067 = vpop.f32.mrb[0].mxu0
      %v2068 = vadd.f32 %v1879, %v2067
      %v2069 = vpop.f32.mrb[0].mxu0
      %2070 = vmatprep.mubr.bf16.mxu0 %v1985
      %2071 = vmatmul.mubr.bf16.gmra.mrb[0].mxu0 %v1843
      %v2072 = vpop.f32.mrb[0].mxu0
      %v2073 = vadd.f32 %v1879, %v2072
      %v2074 = vpop.f32.mrb[0].mxu0
      %v2075 = vpop.f32.mrb[0].mxu0
      %v2076 = vadd.f32 %v1879, %v2075
      %v2077 = vpop.f32.mrb[0].mxu0
      %2078 = vmatprep.mubr.bf16.mxu0 %v1988
      %2079 = vmatmul.mubr.bf16.gmra.mrb[0].mxu0 %v1845
      %v2080 = vpop.f32.mrb[0].mxu0
      %v2081 = vadd.f32 %v1879, %v2080
      %v2082 = vpop.f32.mrb[0].mxu0
      %v2083 = vpop.f32.mrb[0].mxu0
      %v2084 = vadd.f32 %v1879, %v2083
      %v2085 = vpop.f32.mrb[0].mxu0
      %2086 = vdwg.mxu0
      %v2087 = vpack.c.bf16 %v2025, %v2025
      %v2088 = vpack.c.bf16 %v2028, %v2028
      %v2089 = vpack.c.bf16 %v2033, %v2033
      %v2090 = vpack.c.bf16 %v2036, %v2036
      %v2091 = vpack.c.bf16 %v2041, %v2041
      %v2092 = vpack.c.bf16 %v2044, %v2044
      %v2093 = vpack.c.bf16 %v2049, %v2049
      %v2094 = vpack.c.bf16 %v2052, %v2052
      %v2095 = vpack.c.bf16 %v2057, %v2057
      %v2096 = vpack.c.bf16 %v2060, %v2060
      %v2097 = vpack.c.bf16 %v2065, %v2065
      %v2098 = vpack.c.bf16 %v2068, %v2068
      %v2099 = vpack.c.bf16 %v2073, %v2073
      %v2100 = vpack.c.bf16 %v2076, %v2076
      %v2101 = vpack.c.bf16 %v2081, %v2081
      %v2102 = vpack.c.bf16 %v2084, %v2084
      %v2119 = vunpack.c.l.b16 %v2087
      %v2120 = vunpack.c.l.b16 %v2088
      %v2121 = vunpack.c.l.b16 %v2089
      %v2122 = vunpack.c.l.b16 %v2090
      %v2123 = vunpack.c.l.b16 %v2091
      %v2124 = vunpack.c.l.b16 %v2092
      %v2125 = vunpack.c.l.b16 %v2093
      %v2126 = vunpack.c.l.b16 %v2094
      %v2127 = vunpack.c.l.b16 %v2095
      %v2128 = vunpack.c.l.b16 %v2096
      %v2129 = vunpack.c.l.b16 %v2097
      %v2130 = vunpack.c.l.b16 %v2098
      %v2131 = vunpack.c.l.b16 %v2099
      %v2132 = vunpack.c.l.b16 %v2100
      %v2133 = vunpack.c.l.b16 %v2101
      %v2134 = vunpack.c.l.b16 %v2102
      %v2135 = vpack.c.b16 %v2119, %v2119
      %v2136 = vpack.c.b16 %v2120, %v2120
      %v2137 = vpack.c.b16 %v2121, %v2121
      %v2138 = vpack.c.b16 %v2122, %v2122
      %v2139 = vpack.c.b16 %v2123, %v2123
      %v2140 = vpack.c.b16 %v2124, %v2124
      %v2141 = vpack.c.b16 %v2125, %v2125
      %v2142 = vpack.c.b16 %v2126, %v2126
      %v2143 = vpack.c.b16 %v2127, %v2127
      %v2144 = vpack.c.b16 %v2128, %v2128
      %v2145 = vpack.c.b16 %v2129, %v2129
      %v2146 = vpack.c.b16 %v2130, %v2130
      %v2147 = vpack.c.b16 %v2131, %v2131
      %v2148 = vpack.c.b16 %v2132, %v2132
      %v2149 = vpack.c.b16 %v2133, %v2133
      %v2150 = vpack.c.b16 %v2134, %v2134
      %v2151 = vrot.slane %v2135, 7
      %v2152 = vrot.slane %v2151, 4
      %v2153 = vrot.slane %v2136, 7
      %v2154 = vrot.slane %v2153, 4
      %v2155 = vrot.slane %v2137, 7
      %v2156 = vrot.slane %v2155, 4
      %v2157 = vrot.slane %v2138, 7
      %v2158 = vrot.slane %v2157, 4
      %v2159 = vrot.slane %v2139, 7
      %v2160 = vrot.slane %v2159, 4
      %v2161 = vrot.slane %v2140, 7
      %v2162 = vrot.slane %v2161, 4
      %v2163 = vrot.slane %v2141, 7
      %v2164 = vrot.slane %v2163, 4
      %v2165 = vrot.slane %v2142, 7
      %v2166 = vrot.slane %v2165, 4
      %v2167 = vrot.slane %v2143, 7
      %v2168 = vrot.slane %v2167, 4
      %v2169 = vrot.slane %v2144, 7
      %v2170 = vrot.slane %v2169, 4
      %v2171 = vrot.slane %v2145, 7
      %v2172 = vrot.slane %v2171, 4
      %v2173 = vrot.slane %v2146, 7
      %v2174 = vrot.slane %v2173, 4
      %v2175 = vrot.slane %v2147, 7
      %v2176 = vrot.slane %v2175, 4
      %v2177 = vrot.slane %v2148, 7
      %v2178 = vrot.slane %v2177, 4
      %v2179 = vrot.slane %v2149, 7
      %v2180 = vrot.slane %v2179, 4
      %v2181 = vrot.slane %v2150, 7
      %v2182 = vrot.slane %v2181, 4
      %vm2215 = vcmask 396289
      %2216 = vst.msk [vmem:[#allocation3] sm:$0xe] %vm2215, %v2151
      %vm2217 = vcmask 393216
      %2218 = vst.msk [vmem:[#allocation3 + $0x4] sm:$0x1] %vm2217, %v2152
      %2219 = vst.msk [vmem:[#allocation3 + $0x8] sm:$0xe] %vm2215, %v2153
      %2220 = vst.msk [vmem:[#allocation3 + $0xc] sm:$0x1] %vm2217, %v2154
      %2221 = vst.msk [vmem:[#allocation3 + $0x10] sm:$0xe] %vm2215, %v2155
      %2222 = vst.msk [vmem:[#allocation3 + $0x14] sm:$0x1] %vm2217, %v2156
      %2223 = vst.msk [vmem:[#allocation3 + $0x18] sm:$0xe] %vm2215, %v2157
      %2224 = vst.msk [vmem:[#allocation3 + $0x1c] sm:$0x1] %vm2217, %v2158
      %2225 = vst.msk [vmem:[#allocation3 + $0x20] sm:$0xe] %vm2215, %v2159
      %2226 = vst.msk [vmem:[#allocation3 + $0x24] sm:$0x1] %vm2217, %v2160
      %2227 = vst.msk [vmem:[#allocation3 + $0x28] sm:$0xe] %vm2215, %v2161
      %2228 = vst.msk [vmem:[#allocation3 + $0x2c] sm:$0x1] %vm2217, %v2162
      %2229 = vst.msk [vmem:[#allocation3 + $0x30] sm:$0xe] %vm2215, %v2163
      %2230 = vst.msk [vmem:[#allocation3 + $0x34] sm:$0x1] %vm2217, %v2164
      %2231 = vst.msk [vmem:[#allocation3 + $0x38] sm:$0xe] %vm2215, %v2165
      %2232 = vst.msk [vmem:[#allocation3 + $0x3c] sm:$0x1] %vm2217, %v2166
      %2233 = vst.msk [vmem:[#allocation3 + $0x40] sm:$0xe] %vm2215, %v2167
      %2234 = vst.msk [vmem:[#allocation3 + $0x44] sm:$0x1] %vm2217, %v2168
      %2235 = vst.msk [vmem:[#allocation3 + $0x48] sm:$0xe] %vm2215, %v2169
      %2236 = vst.msk [vmem:[#allocation3 + $0x4c] sm:$0x1] %vm2217, %v2170
      %2237 = vst.msk [vmem:[#allocation3 + $0x50] sm:$0xe] %vm2215, %v2171
      %2238 = vst.msk [vmem:[#allocation3 + $0x54] sm:$0x1] %vm2217, %v2172
      %2239 = vst.msk [vmem:[#allocation3 + $0x58] sm:$0xe] %vm2215, %v2173
      %2240 = vst.msk [vmem:[#allocation3 + $0x5c] sm:$0x1] %vm2217, %v2174
      %2241 = vst.msk [vmem:[#allocation3 + $0x60] sm:$0xe] %vm2215, %v2175
      %2242 = vst.msk [vmem:[#allocation3 + $0x64] sm:$0x1] %vm2217, %v2176
      %2243 = vst.msk [vmem:[#allocation3 + $0x68] sm:$0xe] %vm2215, %v2177
      %2244 = vst.msk [vmem:[#allocation3 + $0x6c] sm:$0x1] %vm2217, %v2178
      %2245 = vst.msk [vmem:[#allocation3 + $0x70] sm:$0xe] %vm2215, %v2179
      %2246 = vst.msk [vmem:[#allocation3 + $0x74] sm:$0x1] %vm2217, %v2180
      %2247 = vst.msk [vmem:[#allocation3 + $0x78] sm:$0xe] %vm2215, %v2181
      %2248 = vst.msk [vmem:[#allocation3 + $0x7c] sm:$0x1] %vm2217, %v2182
      %v2249 = vld [vmem:[#allocation2] sm:$0xf]
      %v2250 = vld [vmem:[#allocation2 + $0x4] sm:$0x1]
      %v2251 = vld [vmem:[#allocation2 + $0x8] sm:$0xf]
      %v2252 = vld [vmem:[#allocation2 + $0xc] sm:$0x1]
      %v2253 = vld [vmem:[#allocation2 + $0x10] sm:$0xf]
      %v2254 = vld [vmem:[#allocation2 + $0x14] sm:$0x1]
      %v2255 = vld [vmem:[#allocation2 + $0x18] sm:$0xf]
      %v2256 = vld [vmem:[#allocation2 + $0x1c] sm:$0x1]
      %v2257 = vld [vmem:[#allocation2 + $0x20] sm:$0xf]
      %v2258 = vld [vmem:[#allocation2 + $0x24] sm:$0x1]
      %v2259 = vld [vmem:[#allocation2 + $0x28] sm:$0xf]
      %v2260 = vld [vmem:[#allocation2 + $0x2c] sm:$0x1]
      %v2261 = vld [vmem:[#allocation2 + $0x30] sm:$0xf]
      %v2262 = vld [vmem:[#allocation2 + $0x34] sm:$0x1]
      %v2263 = vld [vmem:[#allocation2 + $0x38] sm:$0xf]
      %v2264 = vld [vmem:[#allocation2 + $0x3c] sm:$0x1]
      %v2266 = vshrl.u32 %v2249, 16
      %v2268 = vrot.slane %v2266, 4
      %v2269 = vshll.u32 %v2249, 16
      %v2271 = vrot.slane %v2269, 5
      %v2272 = vor.u32 %v2268, %v2271
      %v2273 = vrot.slane %v2272, 4
      %v2275 = vshll.u32 %v2250, 16
      %v2277 = vrot.slane %v2275, 5
      %v2278 = vsel %vm648, %v2273, %v2277
      %v2280 = vshrl.u32 %v2251, 16
      %v2282 = vrot.slane %v2280, 4
      %v2283 = vshll.u32 %v2251, 16
      %v2285 = vrot.slane %v2283, 5
      %v2286 = vor.u32 %v2282, %v2285
      %v2287 = vrot.slane %v2286, 4
      %v2289 = vshll.u32 %v2252, 16
      %v2291 = vrot.slane %v2289, 5
      %v2292 = vsel %vm648, %v2287, %v2291
      %v2294 = vshrl.u32 %v2253, 16
      %v2296 = vrot.slane %v2294, 4
      %v2297 = vshll.u32 %v2253, 16
      %v2299 = vrot.slane %v2297, 5
      %v2300 = vor.u32 %v2296, %v2299
      %v2301 = vrot.slane %v2300, 4
      %v2303 = vshll.u32 %v2254, 16
      %v2305 = vrot.slane %v2303, 5
      %v2306 = vsel %vm648, %v2301, %v2305
      %v2308 = vshrl.u32 %v2255, 16
      %v2310 = vrot.slane %v2308, 4
      %v2311 = vshll.u32 %v2255, 16
      %v2313 = vrot.slane %v2311, 5
      %v2314 = vor.u32 %v2310, %v2313
      %v2315 = vrot.slane %v2314, 4
      %v2317 = vshll.u32 %v2256, 16
      %v2319 = vrot.slane %v2317, 5
      %v2320 = vsel %vm648, %v2315, %v2319
      %v2322 = vshrl.u32 %v2257, 16
      %v2324 = vrot.slane %v2322, 4
      %v2325 = vshll.u32 %v2257, 16
      %v2327 = vrot.slane %v2325, 5
      %v2328 = vor.u32 %v2324, %v2327
      %v2329 = vrot.slane %v2328, 4
      %v2331 = vshll.u32 %v2258, 16
      %v2333 = vrot.slane %v2331, 5
      %v2334 = vsel %vm648, %v2329, %v2333
      %v2336 = vshrl.u32 %v2259, 16
      %v2338 = vrot.slane %v2336, 4
      %v2339 = vshll.u32 %v2259, 16
      %v2341 = vrot.slane %v2339, 5
      %v2342 = vor.u32 %v2338, %v2341
      %v2343 = vrot.slane %v2342, 4
      %v2345 = vshll.u32 %v2260, 16
      %v2347 = vrot.slane %v2345, 5
      %v2348 = vsel %vm648, %v2343, %v2347
      %v2350 = vshrl.u32 %v2261, 16
      %v2352 = vrot.slane %v2350, 4
      %v2353 = vshll.u32 %v2261, 16
      %v2355 = vrot.slane %v2353, 5
      %v2356 = vor.u32 %v2352, %v2355
      %v2357 = vrot.slane %v2356, 4
      %v2359 = vshll.u32 %v2262, 16
      %v2361 = vrot.slane %v2359, 5
      %v2362 = vsel %vm648, %v2357, %v2361
      %v2364 = vshrl.u32 %v2263, 16
      %v2366 = vrot.slane %v2364, 4
      %v2367 = vshll.u32 %v2263, 16
      %v2369 = vrot.slane %v2367, 5
      %v2370 = vor.u32 %v2366, %v2369
      %v2371 = vrot.slane %v2370, 4
      %v2373 = vshll.u32 %v2264, 16
      %v2375 = vrot.slane %v2373, 5
      %v2376 = vsel %vm648, %v2371, %v2375
      %v2377 = vunpack.c.l.b16 %v2278
      %v2378 = vunpack.c.l.b16 %v2292
      %v2379 = vunpack.c.l.b16 %v2306
      %v2380 = vunpack.c.l.b16 %v2320
      %v2381 = vunpack.c.l.b16 %v2334
      %v2382 = vunpack.c.l.b16 %v2348
      %v2383 = vunpack.c.l.b16 %v2362
      %v2384 = vunpack.c.l.b16 %v2376
      %v2385 = vpack.c.b16 %v2378, %v2377
      %v2386 = vpack.c.b16 %v2380, %v2379
      %v2387 = vpack.c.b16 %v2382, %v2381
      %v2388 = vpack.c.b16 %v2384, %v2383
      %2393 = vst.msk [vmem:[#allocation4] sm:$0xff] %vm625, %v2385
      %2394 = vst.msk [vmem:[#allocation4 + $0x8] sm:$0xff] %vm625, %v2386
      %2395 = vst.msk [vmem:[#allocation4 + $0x10] sm:$0xff] %vm625, %v2387
      %2396 = vst.msk [vmem:[#allocation4 + $0x18] sm:$0xff] %vm625, %v2388
      %v2397 = vld [vmem:[#allocation2] sm:$0xe]
      %v2398 = vld [vmem:[#allocation2 + $0x4] sm:$0x1]
      %v2399 = vld [vmem:[#allocation2 + $0x8] sm:$0xe]
      %v2400 = vld [vmem:[#allocation2 + $0xc] sm:$0x1]
      %v2401 = vld [vmem:[#allocation2 + $0x10] sm:$0xe]
      %v2402 = vld [vmem:[#allocation2 + $0x14] sm:$0x1]
      %v2403 = vld [vmem:[#allocation2 + $0x18] sm:$0xe]
      %v2404 = vld [vmem:[#allocation2 + $0x1c] sm:$0x1]
      %v2405 = vld [vmem:[#allocation2 + $0x20] sm:$0xe]
      %v2406 = vld [vmem:[#allocation2 + $0x24] sm:$0x1]
      %v2407 = vld [vmem:[#allocation2 + $0x28] sm:$0xe]
      %v2408 = vld [vmem:[#allocation2 + $0x2c] sm:$0x1]
      %v2409 = vld [vmem:[#allocation2 + $0x30] sm:$0xe]
      %v2410 = vld [vmem:[#allocation2 + $0x34] sm:$0x1]
      %v2411 = vld [vmem:[#allocation2 + $0x38] sm:$0xe]
      %v2412 = vld [vmem:[#allocation2 + $0x3c] sm:$0x1]
      %vm2429 = vcmask 1042432
      %vm2430 = vcmask 1046532
      %vm2431 = vmor %vm2429, %vm2430
      %v2432 = vrot.slane %v2397, 5
      %v2433 = vrot.slane %v2432, 4
      %v2434 = vrot.slane %v2398, 5
      %v2435 = vsel %vm2431, %v2433, %v2434
      %v2436 = vrot.slane %v2399, 5
      %v2437 = vrot.slane %v2436, 4
      %v2438 = vrot.slane %v2400, 5
      %v2439 = vsel %vm2431, %v2437, %v2438
      %v2440 = vrot.slane %v2401, 5
      %v2441 = vrot.slane %v2440, 4
      %v2442 = vrot.slane %v2402, 5
      %v2443 = vsel %vm2431, %v2441, %v2442
      %v2444 = vrot.slane %v2403, 5
      %v2445 = vrot.slane %v2444, 4
      %v2446 = vrot.slane %v2404, 5
      %v2447 = vsel %vm2431, %v2445, %v2446
      %v2448 = vrot.slane %v2405, 5
      %v2449 = vrot.slane %v2448, 4
      %v2450 = vrot.slane %v2406, 5
      %v2451 = vsel %vm2431, %v2449, %v2450
      %v2452 = vrot.slane %v2407, 5
      %v2453 = vrot.slane %v2452, 4
      %v2454 = vrot.slane %v2408, 5
      %v2455 = vsel %vm2431, %v2453, %v2454
      %v2456 = vrot.slane %v2409, 5
      %v2457 = vrot.slane %v2456, 4
      %v2458 = vrot.slane %v2410, 5
      %v2459 = vsel %vm2431, %v2457, %v2458
      %v2460 = vrot.slane %v2411, 5
      %v2461 = vrot.slane %v2460, 4
      %v2462 = vrot.slane %v2412, 5
      %v2463 = vsel %vm2431, %v2461, %v2462
      %v2464 = vunpack.c.l.b16 %v2435
      %v2465 = vunpack.c.l.b16 %v2439
      %v2466 = vunpack.c.l.b16 %v2443
      %v2467 = vunpack.c.l.b16 %v2447
      %v2468 = vunpack.c.l.b16 %v2451
      %v2469 = vunpack.c.l.b16 %v2455
      %v2470 = vunpack.c.l.b16 %v2459
      %v2471 = vunpack.c.l.b16 %v2463
      %v2472 = vpack.c.b16 %v2465, %v2464
      %v2473 = vpack.c.b16 %v2467, %v2466
      %v2474 = vpack.c.b16 %v2469, %v2468
      %v2475 = vpack.c.b16 %v2471, %v2470
      %2476 = vrot.lane.b32.xlu0 %v2472, 32
      %v2477 = vpop.permute.xlu0 %2476
      %2478 = vrot.lane.b32.xlu0 %v2473, 32
      %v2479 = vpop.permute.xlu0 %2478
      %2480 = vrot.lane.b32.xlu0 %v2474, 32
      %v2481 = vpop.permute.xlu0 %2480
      %2482 = vrot.lane.b32.xlu0 %v2475, 32
      %v2483 = vpop.permute.xlu0 %2482
      %2488 = vst.msk [vmem:[#allocation4] sm:$0xff] %vm785, %v2477
      %2489 = vst.msk [vmem:[#allocation4 + $0x8] sm:$0xff] %vm785, %v2479
      %2490 = vst.msk [vmem:[#allocation4 + $0x10] sm:$0xff] %vm785, %v2481
      %2491 = vst.msk [vmem:[#allocation4 + $0x18] sm:$0xff] %vm785, %v2483
      %v2492 = vld [vmem:[%s472] sm:$0xf]
      %v2493 = vld [vmem:[%s472 + $0x4] sm:$0x1]
      %v2494 = vld [vmem:[%s472 + $0x8] sm:$0xf]
      %v2495 = vld [vmem:[%s472 + $0xc] sm:$0x1]
      %v2496 = vld [vmem:[%s472 + $0x10] sm:$0xf]
      %v2497 = vld [vmem:[%s472 + $0x14] sm:$0x1]
      %v2498 = vld [vmem:[%s472 + $0x18] sm:$0xf]
      %v2499 = vld [vmem:[%s472 + $0x1c] sm:$0x1]
      %v2500 = vld [vmem:[%s472 + $0x20] sm:$0xf]
      %v2501 = vld [vmem:[%s472 + $0x24] sm:$0x1]
      %v2502 = vld [vmem:[%s472 + $0x28] sm:$0xf]
      %v2503 = vld [vmem:[%s472 + $0x2c] sm:$0x1]
      %v2504 = vld [vmem:[%s472 + $0x30] sm:$0xf]
      %v2505 = vld [vmem:[%s472 + $0x34] sm:$0x1]
      %v2506 = vld [vmem:[%s472 + $0x38] sm:$0xf]
      %v2507 = vld [vmem:[%s472 + $0x3c] sm:$0x1]
      %v2509 = vshrl.u32 %v2492, 16
      %v2511 = vrot.slane %v2509, 4
      %v2512 = vshll.u32 %v2492, 16
      %v2514 = vrot.slane %v2512, 5
      %v2515 = vor.u32 %v2511, %v2514
      %v2516 = vrot.slane %v2515, 4
      %v2518 = vshll.u32 %v2493, 16
      %v2520 = vrot.slane %v2518, 5
      %v2521 = vsel %vm648, %v2516, %v2520
      %v2523 = vshrl.u32 %v2494, 16
      %v2525 = vrot.slane %v2523, 4
      %v2526 = vshll.u32 %v2494, 16
      %v2528 = vrot.slane %v2526, 5
      %v2529 = vor.u32 %v2525, %v2528
      %v2530 = vrot.slane %v2529, 4
      %v2532 = vshll.u32 %v2495, 16
      %v2534 = vrot.slane %v2532, 5
      %v2535 = vsel %vm648, %v2530, %v2534
      %v2537 = vshrl.u32 %v2496, 16
      %v2539 = vrot.slane %v2537, 4
      %v2540 = vshll.u32 %v2496, 16
      %v2542 = vrot.slane %v2540, 5
      %v2543 = vor.u32 %v2539, %v2542
      %v2544 = vrot.slane %v2543, 4
      %v2546 = vshll.u32 %v2497, 16
      %v2548 = vrot.slane %v2546, 5
      %v2549 = vsel %vm648, %v2544, %v2548
      %v2551 = vshrl.u32 %v2498, 16
      %v2553 = vrot.slane %v2551, 4
      %v2554 = vshll.u32 %v2498, 16
      %v2556 = vrot.slane %v2554, 5
      %v2557 = vor.u32 %v2553, %v2556
      %v2558 = vrot.slane %v2557, 4
      %v2560 = vshll.u32 %v2499, 16
      %v2562 = vrot.slane %v2560, 5
      %v2563 = vsel %vm648, %v2558, %v2562
      %v2565 = vshrl.u32 %v2500, 16
      %v2567 = vrot.slane %v2565, 4
      %v2568 = vshll.u32 %v2500, 16
      %v2570 = vrot.slane %v2568, 5
      %v2571 = vor.u32 %v2567, %v2570
      %v2572 = vrot.slane %v2571, 4
      %v2574 = vshll.u32 %v2501, 16
      %v2576 = vrot.slane %v2574, 5
      %v2577 = vsel %vm648, %v2572, %v2576
      %v2579 = vshrl.u32 %v2502, 16
      %v2581 = vrot.slane %v2579, 4
      %v2582 = vshll.u32 %v2502, 16
      %v2584 = vrot.slane %v2582, 5
      %v2585 = vor.u32 %v2581, %v2584
      %v2586 = vrot.slane %v2585, 4
      %v2588 = vshll.u32 %v2503, 16
      %v2590 = vrot.slane %v2588, 5
      %v2591 = vsel %vm648, %v2586, %v2590
      %v2593 = vshrl.u32 %v2504, 16
      %v2595 = vrot.slane %v2593, 4
      %v2596 = vshll.u32 %v2504, 16
      %v2598 = vrot.slane %v2596, 5
      %v2599 = vor.u32 %v2595, %v2598
      %v2600 = vrot.slane %v2599, 4
      %v2602 = vshll.u32 %v2505, 16
      %v2604 = vrot.slane %v2602, 5
      %v2605 = vsel %vm648, %v2600, %v2604
      %v2607 = vshrl.u32 %v2506, 16
      %v2609 = vrot.slane %v2607, 4
      %v2610 = vshll.u32 %v2506, 16
      %v2612 = vrot.slane %v2610, 5
      %v2613 = vor.u32 %v2609, %v2612
      %v2614 = vrot.slane %v2613, 4
      %v2616 = vshll.u32 %v2507, 16
      %v2618 = vrot.slane %v2616, 5
      %v2619 = vsel %vm648, %v2614, %v2618
      %v2620 = vunpack.c.l.b16 %v2521
      %v2621 = vunpack.c.l.b16 %v2535
      %v2622 = vunpack.c.l.b16 %v2549
      %v2623 = vunpack.c.l.b16 %v2563
      %v2624 = vunpack.c.l.b16 %v2577
      %v2625 = vunpack.c.l.b16 %v2591
      %v2626 = vunpack.c.l.b16 %v2605
      %v2627 = vunpack.c.l.b16 %v2619
      %v2628 = vpack.c.b16 %v2621, %v2620
      %v2629 = vpack.c.b16 %v2623, %v2622
      %v2630 = vpack.c.b16 %v2625, %v2624
      %v2631 = vpack.c.b16 %v2627, %v2626
      %2632 = vrot.lane.b32.xlu0 %v2628, 64
      %v2633 = vpop.permute.xlu0 %2632
      %2634 = vrot.lane.b32.xlu0 %v2629, 64
      %v2635 = vpop.permute.xlu0 %2634
      %2636 = vrot.lane.b32.xlu0 %v2630, 64
      %v2637 = vpop.permute.xlu0 %2636
      %2638 = vrot.lane.b32.xlu0 %v2631, 64
      %v2639 = vpop.permute.xlu0 %2638
      %2644 = vst.msk [vmem:[#allocation4] sm:$0xff] %vm830, %v2633
      %2645 = vst.msk [vmem:[#allocation4 + $0x8] sm:$0xff] %vm830, %v2635
      %2646 = vst.msk [vmem:[#allocation4 + $0x10] sm:$0xff] %vm830, %v2637
      %2647 = vst.msk [vmem:[#allocation4 + $0x18] sm:$0xff] %vm830, %v2639
      %v2648 = vld [vmem:[%s472] sm:$0xe]
      %v2649 = vld [vmem:[%s472 + $0x4] sm:$0x1]
      %v2650 = vld [vmem:[%s472 + $0x8] sm:$0xe]
      %v2651 = vld [vmem:[%s472 + $0xc] sm:$0x1]
      %v2652 = vld [vmem:[%s472 + $0x10] sm:$0xe]
      %v2653 = vld [vmem:[%s472 + $0x14] sm:$0x1]
      %v2654 = vld [vmem:[%s472 + $0x18] sm:$0xe]
      %v2655 = vld [vmem:[%s472 + $0x1c] sm:$0x1]
      %v2656 = vld [vmem:[%s472 + $0x20] sm:$0xe]
      %v2657 = vld [vmem:[%s472 + $0x24] sm:$0x1]
      %v2658 = vld [vmem:[%s472 + $0x28] sm:$0xe]
      %v2659 = vld [vmem:[%s472 + $0x2c] sm:$0x1]
      %v2660 = vld [vmem:[%s472 + $0x30] sm:$0xe]
      %v2661 = vld [vmem:[%s472 + $0x34] sm:$0x1]
      %v2662 = vld [vmem:[%s472 + $0x38] sm:$0xe]
      %v2663 = vld [vmem:[%s472 + $0x3c] sm:$0x1]
      %v2680 = vrot.slane %v2648, 5
      %v2681 = vrot.slane %v2680, 4
      %v2682 = vrot.slane %v2649, 5
      %v2683 = vsel %vm2431, %v2681, %v2682
      %v2684 = vrot.slane %v2650, 5
      %v2685 = vrot.slane %v2684, 4
      %v2686 = vrot.slane %v2651, 5
      %v2687 = vsel %vm2431, %v2685, %v2686
      %v2688 = vrot.slane %v2652, 5
      %v2689 = vrot.slane %v2688, 4
      %v2690 = vrot.slane %v2653, 5
      %v2691 = vsel %vm2431, %v2689, %v2690
      %v2692 = vrot.slane %v2654, 5
      %v2693 = vrot.slane %v2692, 4
      %v2694 = vrot.slane %v2655, 5
      %v2695 = vsel %vm2431, %v2693, %v2694
      %v2696 = vrot.slane %v2656, 5
      %v2697 = vrot.slane %v2696, 4
      %v2698 = vrot.slane %v2657, 5
      %v2699 = vsel %vm2431, %v2697, %v2698
      %v2700 = vrot.slane %v2658, 5
      %v2701 = vrot.slane %v2700, 4
      %v2702 = vrot.slane %v2659, 5
      %v2703 = vsel %vm2431, %v2701, %v2702
      %v2704 = vrot.slane %v2660, 5
      %v2705 = vrot.slane %v2704, 4
      %v2706 = vrot.slane %v2661, 5
      %v2707 = vsel %vm2431, %v2705, %v2706
      %v2708 = vrot.slane %v2662, 5
      %v2709 = vrot.slane %v2708, 4
      %v2710 = vrot.slane %v2663, 5
      %v2711 = vsel %vm2431, %v2709, %v2710
      %v2712 = vunpack.c.l.b16 %v2683
      %v2713 = vunpack.c.l.b16 %v2687
      %v2714 = vunpack.c.l.b16 %v2691
      %v2715 = vunpack.c.l.b16 %v2695
      %v2716 = vunpack.c.l.b16 %v2699
      %v2717 = vunpack.c.l.b16 %v2703
      %v2718 = vunpack.c.l.b16 %v2707
      %v2719 = vunpack.c.l.b16 %v2711
      %v2720 = vpack.c.b16 %v2713, %v2712
      %v2721 = vpack.c.b16 %v2715, %v2714
      %v2722 = vpack.c.b16 %v2717, %v2716
      %v2723 = vpack.c.b16 %v2719, %v2718
      %2724 = vrot.lane.b32.xlu0 %v2720, 96
      %v2725 = vpop.permute.xlu0 %2724
      %2726 = vrot.lane.b32.xlu0 %v2721, 96
      %v2727 = vpop.permute.xlu0 %2726
      %2728 = vrot.lane.b32.xlu0 %v2722, 96
      %v2729 = vpop.permute.xlu0 %2728
      %2730 = vrot.lane.b32.xlu0 %v2723, 96
      %v2731 = vpop.permute.xlu0 %2730
      %2736 = vst.msk [vmem:[#allocation4] sm:$0xff] %vm987, %v2725
      %2737 = vst.msk [vmem:[#allocation4 + $0x8] sm:$0xff] %vm987, %v2727
      %2738 = vst.msk [vmem:[#allocation4 + $0x10] sm:$0xff] %vm987, %v2729
      %2739 = vst.msk [vmem:[#allocation4 + $0x18] sm:$0xff] %vm987, %v2731
      %v2740 = vld [vmem:[#allocation4] sm:$0xff]
      %v2741 = vld [vmem:[#allocation4 + $0x8] sm:$0xff]
      %v2742 = vld [vmem:[#allocation4 + $0x10] sm:$0xff]
      %v2743 = vld [vmem:[#allocation4 + $0x18] sm:$0xff]
      %s2744 = scalar_lea.vmem %s2, 64
      %v2745 = vld [vmem:[%s2744] sm:$0xf]
      %v2746 = vld [vmem:[%s2744 + $0x4] sm:$0xf]
      %v2747 = vld [vmem:[%s2744 + $0x8] sm:$0xf]
      %v2748 = vld [vmem:[%s2744 + $0xc] sm:$0xf]
      %v2749 = vld [vmem:[%s2744 + $0x10] sm:$0xf]
      %v2750 = vld [vmem:[%s2744 + $0x14] sm:$0xf]
      %v2751 = vld [vmem:[%s2744 + $0x18] sm:$0xf]
      %v2752 = vld [vmem:[%s2744 + $0x1c] sm:$0xf]
      %v2753 = vld [vmem:[%s2744 + $0x20] sm:$0xf]
      %v2754 = vld [vmem:[%s2744 + $0x24] sm:$0xf]
      %v2755 = vld [vmem:[%s2744 + $0x28] sm:$0xf]
      %v2756 = vld [vmem:[%s2744 + $0x2c] sm:$0xf]
      %v2757 = vld [vmem:[%s2744 + $0x30] sm:$0xf]
      %v2758 = vld [vmem:[%s2744 + $0x34] sm:$0xf]
      %v2759 = vld [vmem:[%s2744 + $0x38] sm:$0xf]
      %v2760 = vld [vmem:[%s2744 + $0x3c] sm:$0xf]
      %v2777 = vunpack.c.l.b16 %v2745
      %v2778 = vunpack.c.l.b16 %v2746
      %v2779 = vunpack.c.l.b16 %v2747
      %v2780 = vunpack.c.l.b16 %v2748
      %v2781 = vunpack.c.l.b16 %v2749
      %v2782 = vunpack.c.l.b16 %v2750
      %v2783 = vunpack.c.l.b16 %v2751
      %v2784 = vunpack.c.l.b16 %v2752
      %v2785 = vunpack.c.l.b16 %v2753
      %v2786 = vunpack.c.l.b16 %v2754
      %v2787 = vunpack.c.l.b16 %v2755
      %v2788 = vunpack.c.l.b16 %v2756
      %v2789 = vunpack.c.l.b16 %v2757
      %v2790 = vunpack.c.l.b16 %v2758
      %v2791 = vunpack.c.l.b16 %v2759
      %v2792 = vunpack.c.l.b16 %v2760
      %v2793 = vpack.c.b16 %v2778, %v2777
      %v2794 = vpack.c.b16 %v2780, %v2779
      %v2795 = vpack.c.b16 %v2782, %v2781
      %v2796 = vpack.c.b16 %v2784, %v2783
      %v2797 = vpack.c.b16 %v2786, %v2785
      %v2798 = vpack.c.b16 %v2788, %v2787
      %v2799 = vpack.c.b16 %v2790, %v2789
      %v2800 = vpack.c.b16 %v2792, %v2791
      %2809 = vmatprep.subr.bf16.mxu0 0
      %2810 = vmatpush1.bf16.msra.mxu0 %v2793
      %2811 = vmatprep.subr.bf16.mxu0 0
      %2812 = vmatpush1.bf16.msra.mxu0 %v2794
      %2813 = vmatprep.subr.bf16.mxu0 0
      %2814 = vmatpush1.bf16.msra.mxu0 %v2795
      %2815 = vmatprep.subr.bf16.mxu0 0
      %2816 = vmatpush1.bf16.msra.mxu0 %v2796
      %2817 = vmatprep.subr.bf16.mxu0 0
      %2818 = vmatpush1.bf16.msra.mxu0 %v2797
      %2819 = vmatprep.subr.bf16.mxu0 0
      %2820 = vmatpush1.bf16.msra.mxu0 %v2798
      %2821 = vmatprep.subr.bf16.mxu0 0
      %2822 = vmatpush1.bf16.msra.mxu0 %v2799
      %2823 = vmatprep.subr.bf16.mxu0 0
      %2824 = vmatpush1.bf16.msra.mxu0 %v2800
      %2825 = vmatprep.subr.bf16.mxu0 0
      %2826 = vmatpush1.bf16.msra.mxu0 0
      %2827 = vmatprep.subr.bf16.mxu0 0
      %2828 = vmatpush1.bf16.msra.mxu0 0
      %2829 = vmatprep.subr.bf16.mxu0 0
      %2830 = vmatpush1.bf16.msra.mxu0 0
      %2831 = vmatprep.subr.bf16.mxu0 0
      %2832 = vmatpush1.bf16.msra.mxu0 0
      %2833 = vmatprep.subr.bf16.mxu0 0
      %2834 = vmatpush1.bf16.msra.mxu0 0
      %2835 = vmatprep.subr.bf16.mxu0 0
      %2836 = vmatpush1.bf16.msra.mxu0 0
      %2837 = vmatprep.subr.bf16.mxu0 0
      %2838 = vmatpush1.bf16.msra.mxu0 0
      %2839 = vmatprep.subr.bf16.mxu0 0
      %2840 = vmatpush1.bf16.msra.mxu0 0
      %2841 = vmatprep.mubr.bf16.mxu0 0
      %2842 = vmatmul.mubr.bf16.gmra.mrb[0].mxu0 %v2740
      %v2843 = vpop.f32.mrb[0].mxu0
      %v2844 = vadd.f32 %v1016, %v2843
      %v2845 = vpop.f32.mrb[0].mxu0
      %v2846 = vpop.f32.mrb[0].mxu0
      %v2847 = vadd.f32 %v1016, %v2846
      %v2848 = vpop.f32.mrb[0].mxu0
      %2849 = vmatprep.mubr.bf16.mxu0 0
      %2850 = vmatmul.mubr.bf16.gmra.mrb[0].mxu0 %v2741
      %v2851 = vpop.f32.mrb[0].mxu0
      %v2852 = vadd.f32 %v1016, %v2851
      %v2853 = vpop.f32.mrb[0].mxu0
      %v2854 = vpop.f32.mrb[0].mxu0
      %v2855 = vadd.f32 %v1016, %v2854
      %v2856 = vpop.f32.mrb[0].mxu0
      %2857 = vmatprep.mubr.bf16.mxu0 0
      %2858 = vmatmul.mubr.bf16.gmra.mrb[0].mxu0 %v2742
      %v2859 = vpop.f32.mrb[0].mxu0
      %v2860 = vadd.f32 %v1016, %v2859
      %v2861 = vpop.f32.mrb[0].mxu0
      %v2862 = vpop.f32.mrb[0].mxu0
      %v2863 = vadd.f32 %v1016, %v2862
      %v2864 = vpop.f32.mrb[0].mxu0
      %2865 = vmatprep.mubr.bf16.mxu0 0
      %2866 = vmatmul.mubr.bf16.gmra.mrb[0].mxu0 %v2743
      %v2867 = vpop.f32.mrb[0].mxu0
      %v2868 = vadd.f32 %v1016, %v2867
      %v2869 = vpop.f32.mrb[0].mxu0
      %v2870 = vpop.f32.mrb[0].mxu0
      %v2871 = vadd.f32 %v1016, %v2870
      %v2872 = vpop.f32.mrb[0].mxu0
      %2873 = vdwg.mxu0
      %v2874 = vld [vmem:[%s472] sm:$0xf]
      %v2875 = vld [vmem:[%s472 + $0x4] sm:$0x1]
      %v2876 = vld [vmem:[%s472 + $0x8] sm:$0xf]
      %v2877 = vld [vmem:[%s472 + $0xc] sm:$0x1]
      %v2878 = vld [vmem:[%s472 + $0x10] sm:$0xf]
      %v2879 = vld [vmem:[%s472 + $0x14] sm:$0x1]
      %v2880 = vld [vmem:[%s472 + $0x18] sm:$0xf]
      %v2881 = vld [vmem:[%s472 + $0x1c] sm:$0x1]
      %v2882 = vld [vmem:[%s472 + $0x20] sm:$0xf]
      %v2883 = vld [vmem:[%s472 + $0x24] sm:$0x1]
      %v2884 = vld [vmem:[%s472 + $0x28] sm:$0xf]
      %v2885 = vld [vmem:[%s472 + $0x2c] sm:$0x1]
      %v2886 = vld [vmem:[%s472 + $0x30] sm:$0xf]
      %v2887 = vld [vmem:[%s472 + $0x34] sm:$0x1]
      %v2888 = vld [vmem:[%s472 + $0x38] sm:$0xf]
      %v2889 = vld [vmem:[%s472 + $0x3c] sm:$0x1]
      %v2891 = vshrl.u32 %v2874, 16
      %v2893 = vrot.slane %v2891, 4
      %v2894 = vshll.u32 %v2874, 16
      %v2896 = vrot.slane %v2894, 5
      %v2897 = vor.u32 %v2893, %v2896
      %v2898 = vrot.slane %v2897, 4
      %v2900 = vshll.u32 %v2875, 16
      %v2902 = vrot.slane %v2900, 5
      %v2903 = vsel %vm648, %v2898, %v2902
      %v2905 = vshrl.u32 %v2876, 16
      %v2907 = vrot.slane %v2905, 4
      %v2908 = vshll.u32 %v2876, 16
      %v2910 = vrot.slane %v2908, 5
      %v2911 = vor.u32 %v2907, %v2910
      %v2912 = vrot.slane %v2911, 4
      %v2914 = vshll.u32 %v2877, 16
      %v2916 = vrot.slane %v2914, 5
      %v2917 = vsel %vm648, %v2912, %v2916
      %v2919 = vshrl.u32 %v2878, 16
      %v2921 = vrot.slane %v2919, 4
      %v2922 = vshll.u32 %v2878, 16
      %v2924 = vrot.slane %v2922, 5
      %v2925 = vor.u32 %v2921, %v2924
      %v2926 = vrot.slane %v2925, 4
      %v2928 = vshll.u32 %v2879, 16
      %v2930 = vrot.slane %v2928, 5
      %v2931 = vsel %vm648, %v2926, %v2930
      %v2933 = vshrl.u32 %v2880, 16
      %v2935 = vrot.slane %v2933, 4
      %v2936 = vshll.u32 %v2880, 16
      %v2938 = vrot.slane %v2936, 5
      %v2939 = vor.u32 %v2935, %v2938
      %v2940 = vrot.slane %v2939, 4
      %v2942 = vshll.u32 %v2881, 16
      %v2944 = vrot.slane %v2942, 5
      %v2945 = vsel %vm648, %v2940, %v2944
      %v2947 = vshrl.u32 %v2882, 16
      %v2949 = vrot.slane %v2947, 4
      %v2950 = vshll.u32 %v2882, 16
      %v2952 = vrot.slane %v2950, 5
      %v2953 = vor.u32 %v2949, %v2952
      %v2954 = vrot.slane %v2953, 4
      %v2956 = vshll.u32 %v2883, 16
      %v2958 = vrot.slane %v2956, 5
      %v2959 = vsel %vm648, %v2954, %v2958
      %v2961 = vshrl.u32 %v2884, 16
      %v2963 = vrot.slane %v2961, 4
      %v2964 = vshll.u32 %v2884, 16
      %v2966 = vrot.slane %v2964, 5
      %v2967 = vor.u32 %v2963, %v2966
      %v2968 = vrot.slane %v2967, 4
      %v2970 = vshll.u32 %v2885, 16
      %v2972 = vrot.slane %v2970, 5
      %v2973 = vsel %vm648, %v2968, %v2972
      %v2975 = vshrl.u32 %v2886, 16
      %v2977 = vrot.slane %v2975, 4
      %v2978 = vshll.u32 %v2886, 16
      %v2980 = vrot.slane %v2978, 5
      %v2981 = vor.u32 %v2977, %v2980
      %v2982 = vrot.slane %v2981, 4
      %v2984 = vshll.u32 %v2887, 16
      %v2986 = vrot.slane %v2984, 5
      %v2987 = vsel %vm648, %v2982, %v2986
      %v2989 = vshrl.u32 %v2888, 16
      %v2991 = vrot.slane %v2989, 4
      %v2992 = vshll.u32 %v2888, 16
      %v2994 = vrot.slane %v2992, 5
      %v2995 = vor.u32 %v2991, %v2994
      %v2996 = vrot.slane %v2995, 4
      %v2998 = vshll.u32 %v2889, 16
      %v3000 = vrot.slane %v2998, 5
      %v3001 = vsel %vm648, %v2996, %v3000
      %v3002 = vunpack.c.l.b16 %v2903
      %v3003 = vunpack.c.l.b16 %v2917
      %v3004 = vunpack.c.l.b16 %v2931
      %v3005 = vunpack.c.l.b16 %v2945
      %v3006 = vunpack.c.l.b16 %v2959
      %v3007 = vunpack.c.l.b16 %v2973
      %v3008 = vunpack.c.l.b16 %v2987
      %v3009 = vunpack.c.l.b16 %v3001
      %v3010 = vpack.c.b16 %v3003, %v3002
      %v3011 = vpack.c.b16 %v3005, %v3004
      %v3012 = vpack.c.b16 %v3007, %v3006
      %v3013 = vpack.c.b16 %v3009, %v3008
      %3018 = vst.msk [vmem:[#allocation4] sm:$0xff] %vm625, %v3010
      %3019 = vst.msk [vmem:[#allocation4 + $0x8] sm:$0xff] %vm625, %v3011
      %3020 = vst.msk [vmem:[#allocation4 + $0x10] sm:$0xff] %vm625, %v3012
      %3021 = vst.msk [vmem:[#allocation4 + $0x18] sm:$0xff] %vm625, %v3013
      %v3022 = vld [vmem:[%s472] sm:$0xe]
      %v3023 = vld [vmem:[%s472 + $0x4] sm:$0x1]
      %v3024 = vld [vmem:[%s472 + $0x8] sm:$0xe]
      %v3025 = vld [vmem:[%s472 + $0xc] sm:$0x1]
      %v3026 = vld [vmem:[%s472 + $0x10] sm:$0xe]
      %v3027 = vld [vmem:[%s472 + $0x14] sm:$0x1]
      %v3028 = vld [vmem:[%s472 + $0x18] sm:$0xe]
      %v3029 = vld [vmem:[%s472 + $0x1c] sm:$0x1]
      %v3030 = vld [vmem:[%s472 + $0x20] sm:$0xe]
      %v3031 = vld [vmem:[%s472 + $0x24] sm:$0x1]
      %v3032 = vld [vmem:[%s472 + $0x28] sm:$0xe]
      %v3033 = vld [vmem:[%s472 + $0x2c] sm:$0x1]
      %v3034 = vld [vmem:[%s472 + $0x30] sm:$0xe]
      %v3035 = vld [vmem:[%s472 + $0x34] sm:$0x1]
      %v3036 = vld [vmem:[%s472 + $0x38] sm:$0xe]
      %v3037 = vld [vmem:[%s472 + $0x3c] sm:$0x1]
      %v3054 = vrot.slane %v3022, 5
      %v3055 = vrot.slane %v3054, 4
      %v3056 = vrot.slane %v3023, 5
      %v3057 = vsel %vm2431, %v3055, %v3056
      %v3058 = vrot.slane %v3024, 5
      %v3059 = vrot.slane %v3058, 4
      %v3060 = vrot.slane %v3025, 5
      %v3061 = vsel %vm2431, %v3059, %v3060
      %v3062 = vrot.slane %v3026, 5
      %v3063 = vrot.slane %v3062, 4
      %v3064 = vrot.slane %v3027, 5
      %v3065 = vsel %vm2431, %v3063, %v3064
      %v3066 = vrot.slane %v3028, 5
      %v3067 = vrot.slane %v3066, 4
      %v3068 = vrot.slane %v3029, 5
      %v3069 = vsel %vm2431, %v3067, %v3068
      %v3070 = vrot.slane %v3030, 5
      %v3071 = vrot.slane %v3070, 4
      %v3072 = vrot.slane %v3031, 5
      %v3073 = vsel %vm2431, %v3071, %v3072
      %v3074 = vrot.slane %v3032, 5
      %v3075 = vrot.slane %v3074, 4
      %v3076 = vrot.slane %v3033, 5
      %v3077 = vsel %vm2431, %v3075, %v3076
      %v3078 = vrot.slane %v3034, 5
      %v3079 = vrot.slane %v3078, 4
      %v3080 = vrot.slane %v3035, 5
      %v3081 = vsel %vm2431, %v3079, %v3080
      %v3082 = vrot.slane %v3036, 5
      %v3083 = vrot.slane %v3082, 4
      %v3084 = vrot.slane %v3037, 5
      %v3085 = vsel %vm2431, %v3083, %v3084
      %v3086 = vunpack.c.l.b16 %v3057
      %v3087 = vunpack.c.l.b16 %v3061
      %v3088 = vunpack.c.l.b16 %v3065
      %v3089 = vunpack.c.l.b16 %v3069
      %v3090 = vunpack.c.l.b16 %v3073
      %v3091 = vunpack.c.l.b16 %v3077
      %v3092 = vunpack.c.l.b16 %v3081
      %v3093 = vunpack.c.l.b16 %v3085
      %v3094 = vpack.c.b16 %v3087, %v3086
      %v3095 = vpack.c.b16 %v3089, %v3088
      %v3096 = vpack.c.b16 %v3091, %v3090
      %v3097 = vpack.c.b16 %v3093, %v3092
      %3098 = vrot.lane.b32.xlu0 %v3094, 32
      %v3099 = vpop.permute.xlu0 %3098
      %3100 = vrot.lane.b32.xlu0 %v3095, 32
      %v3101 = vpop.permute.xlu0 %3100
      %3102 = vrot.lane.b32.xlu0 %v3096, 32
      %v3103 = vpop.permute.xlu0 %3102
      %3104 = vrot.lane.b32.xlu0 %v3097, 32
      %v3105 = vpop.permute.xlu0 %3104
      %3110 = vst.msk [vmem:[#allocation4] sm:$0xff] %vm785, %v3099
      %3111 = vst.msk [vmem:[#allocation4 + $0x8] sm:$0xff] %vm785, %v3101
      %3112 = vst.msk [vmem:[#allocation4 + $0x10] sm:$0xff] %vm785, %v3103
      %3113 = vst.msk [vmem:[#allocation4 + $0x18] sm:$0xff] %vm785, %v3105
      %v3114 = vld [vmem:[%s1323] sm:$0xf]
      %v3115 = vld [vmem:[%s1323 + $0x4] sm:$0x1]
      %v3116 = vld [vmem:[%s1323 + $0x8] sm:$0xf]
      %v3117 = vld [vmem:[%s1323 + $0xc] sm:$0x1]
      %v3118 = vld [vmem:[%s1323 + $0x10] sm:$0xf]
      %v3119 = vld [vmem:[%s1323 + $0x14] sm:$0x1]
      %v3120 = vld [vmem:[%s1323 + $0x18] sm:$0xf]
      %v3121 = vld [vmem:[%s1323 + $0x1c] sm:$0x1]
      %v3122 = vld [vmem:[%s1323 + $0x20] sm:$0xf]
      %v3123 = vld [vmem:[%s1323 + $0x24] sm:$0x1]
      %v3124 = vld [vmem:[%s1323 + $0x28] sm:$0xf]
      %v3125 = vld [vmem:[%s1323 + $0x2c] sm:$0x1]
      %v3126 = vld [vmem:[%s1323 + $0x30] sm:$0xf]
      %v3127 = vld [vmem:[%s1323 + $0x34] sm:$0x1]
      %v3128 = vld [vmem:[%s1323 + $0x38] sm:$0xf]
      %v3129 = vld [vmem:[%s1323 + $0x3c] sm:$0x1]
      %v3131 = vshrl.u32 %v3114, 16
      %v3133 = vrot.slane %v3131, 4
      %v3134 = vshll.u32 %v3114, 16
      %v3136 = vrot.slane %v3134, 5
      %v3137 = vor.u32 %v3133, %v3136
      %v3138 = vrot.slane %v3137, 4
      %v3140 = vshll.u32 %v3115, 16
      %v3142 = vrot.slane %v3140, 5
      %v3143 = vsel %vm648, %v3138, %v3142
      %v3145 = vshrl.u32 %v3116, 16
      %v3147 = vrot.slane %v3145, 4
      %v3148 = vshll.u32 %v3116, 16
      %v3150 = vrot.slane %v3148, 5
      %v3151 = vor.u32 %v3147, %v3150
      %v3152 = vrot.slane %v3151, 4
      %v3154 = vshll.u32 %v3117, 16
      %v3156 = vrot.slane %v3154, 5
      %v3157 = vsel %vm648, %v3152, %v3156
      %v3159 = vshrl.u32 %v3118, 16
      %v3161 = vrot.slane %v3159, 4
      %v3162 = vshll.u32 %v3118, 16
      %v3164 = vrot.slane %v3162, 5
      %v3165 = vor.u32 %v3161, %v3164
      %v3166 = vrot.slane %v3165, 4
      %v3168 = vshll.u32 %v3119, 16
      %v3170 = vrot.slane %v3168, 5
      %v3171 = vsel %vm648, %v3166, %v3170
      %v3173 = vshrl.u32 %v3120, 16
      %v3175 = vrot.slane %v3173, 4
      %v3176 = vshll.u32 %v3120, 16
      %v3178 = vrot.slane %v3176, 5
      %v3179 = vor.u32 %v3175, %v3178
      %v3180 = vrot.slane %v3179, 4
      %v3182 = vshll.u32 %v3121, 16
      %v3184 = vrot.slane %v3182, 5
      %v3185 = vsel %vm648, %v3180, %v3184
      %v3187 = vshrl.u32 %v3122, 16
      %v3189 = vrot.slane %v3187, 4
      %v3190 = vshll.u32 %v3122, 16
      %v3192 = vrot.slane %v3190, 5
      %v3193 = vor.u32 %v3189, %v3192
      %v3194 = vrot.slane %v3193, 4
      %v3196 = vshll.u32 %v3123, 16
      %v3198 = vrot.slane %v3196, 5
      %v3199 = vsel %vm648, %v3194, %v3198
      %v3201 = vshrl.u32 %v3124, 16
      %v3203 = vrot.slane %v3201, 4
      %v3204 = vshll.u32 %v3124, 16
      %v3206 = vrot.slane %v3204, 5
      %v3207 = vor.u32 %v3203, %v3206
      %v3208 = vrot.slane %v3207, 4
      %v3210 = vshll.u32 %v3125, 16
      %v3212 = vrot.slane %v3210, 5
      %v3213 = vsel %vm648, %v3208, %v3212
      %v3215 = vshrl.u32 %v3126, 16
      %v3217 = vrot.slane %v3215, 4
      %v3218 = vshll.u32 %v3126, 16
      %v3220 = vrot.slane %v3218, 5
      %v3221 = vor.u32 %v3217, %v3220
      %v3222 = vrot.slane %v3221, 4
      %v3224 = vshll.u32 %v3127, 16
      %v3226 = vrot.slane %v3224, 5
      %v3227 = vsel %vm648, %v3222, %v3226
      %v3229 = vshrl.u32 %v3128, 16
      %v3231 = vrot.slane %v3229, 4
      %v3232 = vshll.u32 %v3128, 16
      %v3234 = vrot.slane %v3232, 5
      %v3235 = vor.u32 %v3231, %v3234
      %v3236 = vrot.slane %v3235, 4
      %v3238 = vshll.u32 %v3129, 16
      %v3240 = vrot.slane %v3238, 5
      %v3241 = vsel %vm648, %v3236, %v3240
      %v3242 = vunpack.c.l.b16 %v3143
      %v3243 = vunpack.c.l.b16 %v3157
      %v3244 = vunpack.c.l.b16 %v3171
      %v3245 = vunpack.c.l.b16 %v3185
      %v3246 = vunpack.c.l.b16 %v3199
      %v3247 = vunpack.c.l.b16 %v3213
      %v3248 = vunpack.c.l.b16 %v3227
      %v3249 = vunpack.c.l.b16 %v3241
      %v3250 = vpack.c.b16 %v3243, %v3242
      %v3251 = vpack.c.b16 %v3245, %v3244
      %v3252 = vpack.c.b16 %v3247, %v3246
      %v3253 = vpack.c.b16 %v3249, %v3248
      %3254 = vrot.lane.b32.xlu0 %v3250, 64
      %v3255 = vpop.permute.xlu0 %3254
      %3256 = vrot.lane.b32.xlu0 %v3251, 64
      %v3257 = vpop.permute.xlu0 %3256
      %3258 = vrot.lane.b32.xlu0 %v3252, 64
      %v3259 = vpop.permute.xlu0 %3258
      %3260 = vrot.lane.b32.xlu0 %v3253, 64
      %v3261 = vpop.permute.xlu0 %3260
      %3266 = vst.msk [vmem:[#allocation4] sm:$0xff] %vm830, %v3255
      %3267 = vst.msk [vmem:[#allocation4 + $0x8] sm:$0xff] %vm830, %v3257
      %3268 = vst.msk [vmem:[#allocation4 + $0x10] sm:$0xff] %vm830, %v3259
      %3269 = vst.msk [vmem:[#allocation4 + $0x18] sm:$0xff] %vm830, %v3261
      %v3270 = vld [vmem:[%s1323] sm:$0xe]
      %v3271 = vld [vmem:[%s1323 + $0x4] sm:$0x1]
      %v3272 = vld [vmem:[%s1323 + $0x8] sm:$0xe]
      %v3273 = vld [vmem:[%s1323 + $0xc] sm:$0x1]
      %v3274 = vld [vmem:[%s1323 + $0x10] sm:$0xe]
      %v3275 = vld [vmem:[%s1323 + $0x14] sm:$0x1]
      %v3276 = vld [vmem:[%s1323 + $0x18] sm:$0xe]
      %v3277 = vld [vmem:[%s1323 + $0x1c] sm:$0x1]
      %v3278 = vld [vmem:[%s1323 + $0x20] sm:$0xe]
      %v3279 = vld [vmem:[%s1323 + $0x24] sm:$0x1]
      %v3280 = vld [vmem:[%s1323 + $0x28] sm:$0xe]
      %v3281 = vld [vmem:[%s1323 + $0x2c] sm:$0x1]
      %v3282 = vld [vmem:[%s1323 + $0x30] sm:$0xe]
      %v3283 = vld [vmem:[%s1323 + $0x34] sm:$0x1]
      %v3284 = vld [vmem:[%s1323 + $0x38] sm:$0xe]
      %v3285 = vld [vmem:[%s1323 + $0x3c] sm:$0x1]
      %v3302 = vrot.slane %v3270, 5
      %v3303 = vrot.slane %v3302, 4
      %v3304 = vrot.slane %v3271, 5
      %v3305 = vsel %vm2431, %v3303, %v3304
      %v3306 = vrot.slane %v3272, 5
      %v3307 = vrot.slane %v3306, 4
      %v3308 = vrot.slane %v3273, 5
      %v3309 = vsel %vm2431, %v3307, %v3308
      %v3310 = vrot.slane %v3274, 5
      %v3311 = vrot.slane %v3310, 4
      %v3312 = vrot.slane %v3275, 5
      %v3313 = vsel %vm2431, %v3311, %v3312
      %v3314 = vrot.slane %v3276, 5
      %v3315 = vrot.slane %v3314, 4
      %v3316 = vrot.slane %v3277, 5
      %v3317 = vsel %vm2431, %v3315, %v3316
      %v3318 = vrot.slane %v3278, 5
      %v3319 = vrot.slane %v3318, 4
      %v3320 = vrot.slane %v3279, 5
      %v3321 = vsel %vm2431, %v3319, %v3320
      %v3322 = vrot.slane %v3280, 5
      %v3323 = vrot.slane %v3322, 4
      %v3324 = vrot.slane %v3281, 5
      %v3325 = vsel %vm2431, %v3323, %v3324
      %v3326 = vrot.slane %v3282, 5
      %v3327 = vrot.slane %v3326, 4
      %v3328 = vrot.slane %v3283, 5
      %v3329 = vsel %vm2431, %v3327, %v3328
      %v3330 = vrot.slane %v3284, 5
      %v3331 = vrot.slane %v3330, 4
      %v3332 = vrot.slane %v3285, 5
      %v3333 = vsel %vm2431, %v3331, %v3332
      %v3334 = vunpack.c.l.b16 %v3305
      %v3335 = vunpack.c.l.b16 %v3309
      %v3336 = vunpack.c.l.b16 %v3313
      %v3337 = vunpack.c.l.b16 %v3317
      %v3338 = vunpack.c.l.b16 %v3321
      %v3339 = vunpack.c.l.b16 %v3325
      %v3340 = vunpack.c.l.b16 %v3329
      %v3341 = vunpack.c.l.b16 %v3333
      %v3342 = vpack.c.b16 %v3335, %v3334
      %v3343 = vpack.c.b16 %v3337, %v3336
      %v3344 = vpack.c.b16 %v3339, %v3338
      %v3345 = vpack.c.b16 %v3341, %v3340
      %3346 = vrot.lane.b32.xlu0 %v3342, 96
      %v3347 = vpop.permute.xlu0 %3346
      %3348 = vrot.lane.b32.xlu0 %v3343, 96
      %v3349 = vpop.permute.xlu0 %3348
      %3350 = vrot.lane.b32.xlu0 %v3344, 96
      %v3351 = vpop.permute.xlu0 %3350
      %3352 = vrot.lane.b32.xlu0 %v3345, 96
      %v3353 = vpop.permute.xlu0 %3352
      %3358 = vst.msk [vmem:[#allocation4] sm:$0xff] %vm987, %v3347
      %3359 = vst.msk [vmem:[#allocation4 + $0x8] sm:$0xff] %vm987, %v3349
      %3360 = vst.msk [vmem:[#allocation4 + $0x10] sm:$0xff] %vm987, %v3351
      %3361 = vst.msk [vmem:[#allocation4 + $0x18] sm:$0xff] %vm987, %v3353
      %v3362 = vld [vmem:[#allocation4] sm:$0xff]
      %v3363 = vld [vmem:[#allocation4 + $0x8] sm:$0xff]
      %v3364 = vld [vmem:[#allocation4 + $0x10] sm:$0xff]
      %v3365 = vld [vmem:[#allocation4 + $0x18] sm:$0xff]
      %s3366 = scalar_lea.vmem %s2, 192
      %v3367 = vld [vmem:[%s3366] sm:$0xf]
      %v3368 = vld [vmem:[%s3366 + $0x4] sm:$0xf]
      %v3369 = vld [vmem:[%s3366 + $0x8] sm:$0xf]
      %v3370 = vld [vmem:[%s3366 + $0xc] sm:$0xf]
      %v3371 = vld [vmem:[%s3366 + $0x10] sm:$0xf]
      %v3372 = vld [vmem:[%s3366 + $0x14] sm:$0xf]
      %v3373 = vld [vmem:[%s3366 + $0x18] sm:$0xf]
      %v3374 = vld [vmem:[%s3366 + $0x1c] sm:$0xf]
      %v3375 = vld [vmem:[%s3366 + $0x20] sm:$0xf]
      %v3376 = vld [vmem:[%s3366 + $0x24] sm:$0xf]
      %v3377 = vld [vmem:[%s3366 + $0x28] sm:$0xf]
      %v3378 = vld [vmem:[%s3366 + $0x2c] sm:$0xf]
      %v3379 = vld [vmem:[%s3366 + $0x30] sm:$0xf]
      %v3380 = vld [vmem:[%s3366 + $0x34] sm:$0xf]
      %v3381 = vld [vmem:[%s3366 + $0x38] sm:$0xf]
      %v3382 = vld [vmem:[%s3366 + $0x3c] sm:$0xf]
      %v3399 = vunpack.c.l.b16 %v3367
      %v3400 = vunpack.c.l.b16 %v3368
      %v3401 = vunpack.c.l.b16 %v3369
      %v3402 = vunpack.c.l.b16 %v3370
      %v3403 = vunpack.c.l.b16 %v3371
      %v3404 = vunpack.c.l.b16 %v3372
      %v3405 = vunpack.c.l.b16 %v3373
      %v3406 = vunpack.c.l.b16 %v3374
      %v3407 = vunpack.c.l.b16 %v3375
      %v3408 = vunpack.c.l.b16 %v3376
      %v3409 = vunpack.c.l.b16 %v3377
      %v3410 = vunpack.c.l.b16 %v3378
      %v3411 = vunpack.c.l.b16 %v3379
      %v3412 = vunpack.c.l.b16 %v3380
      %v3413 = vunpack.c.l.b16 %v3381
      %v3414 = vunpack.c.l.b16 %v3382
      %v3415 = vpack.c.b16 %v3400, %v3399
      %v3416 = vpack.c.b16 %v3402, %v3401
      %v3417 = vpack.c.b16 %v3404, %v3403
      %v3418 = vpack.c.b16 %v3406, %v3405
      %v3419 = vpack.c.b16 %v3408, %v3407
      %v3420 = vpack.c.b16 %v3410, %v3409
      %v3421 = vpack.c.b16 %v3412, %v3411
      %v3422 = vpack.c.b16 %v3414, %v3413
      %3431 = vmatprep.subr.bf16.mxu0 0
      %3432 = vmatpush1.bf16.msra.mxu0 %v3415
      %3433 = vmatprep.subr.bf16.mxu0 0
      %3434 = vmatpush1.bf16.msra.mxu0 %v3416
      %3435 = vmatprep.subr.bf16.mxu0 0
      %3436 = vmatpush1.bf16.msra.mxu0 %v3417
      %3437 = vmatprep.subr.bf16.mxu0 0
      %3438 = vmatpush1.bf16.msra.mxu0 %v3418
      %3439 = vmatprep.subr.bf16.mxu0 0
      %3440 = vmatpush1.bf16.msra.mxu0 %v3419
      %3441 = vmatprep.subr.bf16.mxu0 0
      %3442 = vmatpush1.bf16.msra.mxu0 %v3420
      %3443 = vmatprep.subr.bf16.mxu0 0
      %3444 = vmatpush1.bf16.msra.mxu0 %v3421
      %3445 = vmatprep.subr.bf16.mxu0 0
      %3446 = vmatpush1.bf16.msra.mxu0 %v3422
      %3447 = vmatprep.subr.bf16.mxu0 0
      %3448 = vmatpush1.bf16.msra.mxu0 0
      %3449 = vmatprep.subr.bf16.mxu0 0
      %3450 = vmatpush1.bf16.msra.mxu0 0
      %3451 = vmatprep.subr.bf16.mxu0 0
      %3452 = vmatpush1.bf16.msra.mxu0 0
      %3453 = vmatprep.subr.bf16.mxu0 0
      %3454 = vmatpush1.bf16.msra.mxu0 0
      %3455 = vmatprep.subr.bf16.mxu0 0
      %3456 = vmatpush1.bf16.msra.mxu0 0
      %3457 = vmatprep.subr.bf16.mxu0 0
      %3458 = vmatpush1.bf16.msra.mxu0 0
      %3459 = vmatprep.subr.bf16.mxu0 0
      %3460 = vmatpush1.bf16.msra.mxu0 0
      %3461 = vmatprep.subr.bf16.mxu0 0
      %3462 = vmatpush1.bf16.msra.mxu0 0
      %3463 = vmatprep.mubr.bf16.mxu0 0
      %3464 = vmatmul.mubr.bf16.gmra.mrb[0].mxu0 %v3362
      %v3465 = vpop.f32.mrb[0].mxu0
      %v3466 = vadd.f32 %v1016, %v3465
      %v3467 = vpop.f32.mrb[0].mxu0
      %v3468 = vpop.f32.mrb[0].mxu0
      %v3469 = vadd.f32 %v1016, %v3468
      %v3470 = vpop.f32.mrb[0].mxu0
      %3471 = vmatprep.mubr.bf16.mxu0 0
      %3472 = vmatmul.mubr.bf16.gmra.mrb[0].mxu0 %v3363
      %v3473 = vpop.f32.mrb[0].mxu0
      %v3474 = vadd.f32 %v1016, %v3473
      %v3475 = vpop.f32.mrb[0].mxu0
      %v3476 = vpop.f32.mrb[0].mxu0
      %v3477 = vadd.f32 %v1016, %v3476
      %v3478 = vpop.f32.mrb[0].mxu0
      %3479 = vmatprep.mubr.bf16.mxu0 0
      %3480 = vmatmul.mubr.bf16.gmra.mrb[0].mxu0 %v3364
      %v3481 = vpop.f32.mrb[0].mxu0
      %v3482 = vadd.f32 %v1016, %v3481
      %v3483 = vpop.f32.mrb[0].mxu0
      %v3484 = vpop.f32.mrb[0].mxu0
      %v3485 = vadd.f32 %v1016, %v3484
      %v3486 = vpop.f32.mrb[0].mxu0
      %3487 = vmatprep.mubr.bf16.mxu0 0
      %3488 = vmatmul.mubr.bf16.gmra.mrb[0].mxu0 %v3365
      %v3489 = vpop.f32.mrb[0].mxu0
      %v3490 = vadd.f32 %v1016, %v3489
      %v3491 = vpop.f32.mrb[0].mxu0
      %v3492 = vpop.f32.mrb[0].mxu0
      %v3493 = vadd.f32 %v1016, %v3492
      %v3494 = vpop.f32.mrb[0].mxu0
      %3495 = vdwg.mxu0
      %v3496 = vpack.c.bf16 %v2844, 0.0
      %v3497 = vpack.c.bf16 %v2847, %v3466
      %v3498 = vpack.c.bf16 %v2852, %v3469
      %v3499 = vpack.c.bf16 %v2855, %v3474
      %v3500 = vpack.c.bf16 %v2860, %v3477
      %v3501 = vpack.c.bf16 %v2863, %v3482
      %v3502 = vpack.c.bf16 %v2868, %v3485
      %3503 = vst.msk [vmem:[#allocation5] sm:$0xff] %vm625, %v1658
      %3504 = vst.msk [vmem:[#allocation5 + $0x10] sm:$0xff] %vm625, %v3496
      %3505 = vst.msk [vmem:[#allocation5 + $0x20] sm:$0xff] %vm625, %v3497
      %3506 = vst.msk [vmem:[#allocation5 + $0x30] sm:$0xff] %vm625, %v3498
      %3507 = vst.msk [vmem:[#allocation5 + $0x40] sm:$0xff] %vm625, %v3499
      %3508 = vst.msk [vmem:[#allocation5 + $0x50] sm:$0xff] %vm625, %v3500
      %3509 = vst.msk [vmem:[#allocation5 + $0x60] sm:$0xff] %vm625, %v3501
      %3510 = vst.msk [vmem:[#allocation5 + $0x70] sm:$0xff] %vm625, %v3502
      %v3511 = vpack.c.bf16 %v3466, %v2844
      %v3512 = vpack.c.bf16 %v3469, %v2847
      %v3513 = vpack.c.bf16 %v3474, %v2852
      %v3514 = vpack.c.bf16 %v3477, %v2855
      %v3515 = vpack.c.bf16 %v3482, %v2860
      %v3516 = vpack.c.bf16 %v3485, %v2863
      %v3517 = vpack.c.bf16 %v3490, %v2868
      %3525 = vrot.lane.b32.xlu0 %v3511, 32
      %v3526 = vpop.permute.xlu0 %3525
      %3527 = vrot.lane.b32.xlu0 %v3512, 32
      %v3528 = vpop.permute.xlu0 %3527
      %3529 = vrot.lane.b32.xlu0 %v3513, 32
      %v3530 = vpop.permute.xlu0 %3529
      %3531 = vrot.lane.b32.xlu0 %v3514, 32
      %v3532 = vpop.permute.xlu0 %3531
      %3533 = vrot.lane.b32.xlu0 %v3515, 32
      %v3534 = vpop.permute.xlu0 %3533
      %3535 = vrot.lane.b32.xlu0 %v3516, 32
      %v3536 = vpop.permute.xlu0 %3535
      %3537 = vrot.lane.b32.xlu0 %v3517, 32
      %v3538 = vpop.permute.xlu0 %3537
      %3546 = vst.msk [vmem:[#allocation5] sm:$0xff] %vm785, %v1690
      %3547 = vst.msk [vmem:[#allocation5 + $0x10] sm:$0xff] %vm785, %v3526
      %3548 = vst.msk [vmem:[#allocation5 + $0x20] sm:$0xff] %vm785, %v3528
      %3549 = vst.msk [vmem:[#allocation5 + $0x30] sm:$0xff] %vm785, %v3530
      %3550 = vst.msk [vmem:[#allocation5 + $0x40] sm:$0xff] %vm785, %v3532
      %3551 = vst.msk [vmem:[#allocation5 + $0x50] sm:$0xff] %vm785, %v3534
      %3552 = vst.msk [vmem:[#allocation5 + $0x60] sm:$0xff] %vm785, %v3536
      %3553 = vst.msk [vmem:[#allocation5 + $0x70] sm:$0xff] %vm785, %v3538
      %v3554 = vpack.c.bf16 %v2871, %v3490
      %3563 = vrot.lane.b32.xlu0 %v3496, 64
      %v3564 = vpop.permute.xlu0 %3563
      %3565 = vrot.lane.b32.xlu0 %v3497, 64
      %v3566 = vpop.permute.xlu0 %3565
      %3567 = vrot.lane.b32.xlu0 %v3498, 64
      %v3568 = vpop.permute.xlu0 %3567
      %3569 = vrot.lane.b32.xlu0 %v3499, 64
      %v3570 = vpop.permute.xlu0 %3569
      %3571 = vrot.lane.b32.xlu0 %v3500, 64
      %v3572 = vpop.permute.xlu0 %3571
      %3573 = vrot.lane.b32.xlu0 %v3501, 64
      %v3574 = vpop.permute.xlu0 %3573
      %3575 = vrot.lane.b32.xlu0 %v3502, 64
      %v3576 = vpop.permute.xlu0 %3575
      %3577 = vrot.lane.b32.xlu0 %v3554, 64
      %v3578 = vpop.permute.xlu0 %3577
      %3587 = vst.msk [vmem:[#allocation5] sm:$0xff] %vm830, %v3564
      %3588 = vst.msk [vmem:[#allocation5 + $0x10] sm:$0xff] %vm830, %v3566
      %3589 = vst.msk [vmem:[#allocation5 + $0x20] sm:$0xff] %vm830, %v3568
      %3590 = vst.msk [vmem:[#allocation5 + $0x30] sm:$0xff] %vm830, %v3570
      %3591 = vst.msk [vmem:[#allocation5 + $0x40] sm:$0xff] %vm830, %v3572
      %3592 = vst.msk [vmem:[#allocation5 + $0x50] sm:$0xff] %vm830, %v3574
      %3593 = vst.msk [vmem:[#allocation5 + $0x60] sm:$0xff] %vm830, %v3576
      %3594 = vst.msk [vmem:[#allocation5 + $0x70] sm:$0xff] %vm830, %v3578
      %v3595 = vpack.c.bf16 %v3493, %v2871
      %3597 = vrot.lane.b32.xlu0 %v3511, 96
      %v3598 = vpop.permute.xlu0 %3597
      %3599 = vrot.lane.b32.xlu0 %v3512, 96
      %v3600 = vpop.permute.xlu0 %3599
      %3601 = vrot.lane.b32.xlu0 %v3513, 96
      %v3602 = vpop.permute.xlu0 %3601
      %3603 = vrot.lane.b32.xlu0 %v3514, 96
      %v3604 = vpop.permute.xlu0 %3603
      %3605 = vrot.lane.b32.xlu0 %v3515, 96
      %v3606 = vpop.permute.xlu0 %3605
      %3607 = vrot.lane.b32.xlu0 %v3516, 96
      %v3608 = vpop.permute.xlu0 %3607
      %3609 = vrot.lane.b32.xlu0 %v3517, 96
      %v3610 = vpop.permute.xlu0 %3609
      %3611 = vrot.lane.b32.xlu0 %v3595, 96
      %v3612 = vpop.permute.xlu0 %3611
      %3621 = vst.msk [vmem:[#allocation5] sm:$0xff] %vm987, %v3598
      %3622 = vst.msk [vmem:[#allocation5 + $0x10] sm:$0xff] %vm987, %v3600
      %3623 = vst.msk [vmem:[#allocation5 + $0x20] sm:$0xff] %vm987, %v3602
      %3624 = vst.msk [vmem:[#allocation5 + $0x30] sm:$0xff] %vm987, %v3604
      %3625 = vst.msk [vmem:[#allocation5 + $0x40] sm:$0xff] %vm987, %v3606
      %3626 = vst.msk [vmem:[#allocation5 + $0x50] sm:$0xff] %vm987, %v3608
      %3627 = vst.msk [vmem:[#allocation5 + $0x60] sm:$0xff] %vm987, %v3610
      %3628 = vst.msk [vmem:[#allocation5 + $0x70] sm:$0xff] %vm987, %v3612
      %v3629 = vpack.c.bf16 0.0, %v3493
      %3630 = vst.msk [vmem:[#allocation5 + $0x8] sm:$0xff] %vm625, %v3497
      %3631 = vst.msk [vmem:[#allocation5 + $0x18] sm:$0xff] %vm625, %v3498
      %3632 = vst.msk [vmem:[#allocation5 + $0x28] sm:$0xff] %vm625, %v3499
      %3633 = vst.msk [vmem:[#allocation5 + $0x38] sm:$0xff] %vm625, %v3500
      %3634 = vst.msk [vmem:[#allocation5 + $0x48] sm:$0xff] %vm625, %v3501
      %3635 = vst.msk [vmem:[#allocation5 + $0x58] sm:$0xff] %vm625, %v3502
      %3636 = vst.msk [vmem:[#allocation5 + $0x68] sm:$0xff] %vm625, %v3554
      %3637 = vst.msk [vmem:[#allocation5 + $0x78] sm:$0xff] %vm625, %v3629
      %3638 = vrot.lane.b32.xlu0 %v3595, 32
      %v3639 = vpop.permute.xlu0 %3638
      %3641 = vst.msk [vmem:[#allocation5 + $0x8] sm:$0xff] %vm785, %v3528
      %3642 = vst.msk [vmem:[#allocation5 + $0x18] sm:$0xff] %vm785, %v3530
      %3643 = vst.msk [vmem:[#allocation5 + $0x28] sm:$0xff] %vm785, %v3532
      %3644 = vst.msk [vmem:[#allocation5 + $0x38] sm:$0xff] %vm785, %v3534
      %3645 = vst.msk [vmem:[#allocation5 + $0x48] sm:$0xff] %vm785, %v3536
      %3646 = vst.msk [vmem:[#allocation5 + $0x58] sm:$0xff] %vm785, %v3538
      %3647 = vst.msk [vmem:[#allocation5 + $0x68] sm:$0xff] %vm785, %v3639
      %3648 = vst.msk [vmem:[#allocation5 + $0x78] sm:$0xff] %vm785, %v1690
      %3650 = vrot.lane.b32.xlu0 %v3629, 64
      %v3651 = vpop.permute.xlu0 %3650
      %3653 = vst.msk [vmem:[#allocation5 + $0x8] sm:$0xff] %vm830, %v3568
      %3654 = vst.msk [vmem:[#allocation5 + $0x18] sm:$0xff] %vm830, %v3570
      %3655 = vst.msk [vmem:[#allocation5 + $0x28] sm:$0xff] %vm830, %v3572
      %3656 = vst.msk [vmem:[#allocation5 + $0x38] sm:$0xff] %vm830, %v3574
      %3657 = vst.msk [vmem:[#allocation5 + $0x48] sm:$0xff] %vm830, %v3576
      %3658 = vst.msk [vmem:[#allocation5 + $0x58] sm:$0xff] %vm830, %v3578
      %3659 = vst.msk [vmem:[#allocation5 + $0x68] sm:$0xff] %vm830, %v3651
      %3660 = vst.msk [vmem:[#allocation5 + $0x78] sm:$0xff] %vm830, %v1820
      %v3661 = vld [vmem:[#allocation5] sm:$0xff]
      %v3662 = vld [vmem:[#allocation5 + $0x8] sm:$0xff]
      %v3663 = vld [vmem:[#allocation5 + $0x10] sm:$0xff]
      %v3664 = vld [vmem:[#allocation5 + $0x18] sm:$0xff]
      %v3665 = vld [vmem:[#allocation5 + $0x20] sm:$0xff]
      %v3666 = vld [vmem:[#allocation5 + $0x28] sm:$0xff]
      %v3667 = vld [vmem:[#allocation5 + $0x30] sm:$0xff]
      %v3668 = vld [vmem:[#allocation5 + $0x38] sm:$0xff]
      %v3669 = vld [vmem:[#allocation5 + $0x40] sm:$0xff]
      %v3670 = vld [vmem:[#allocation5 + $0x48] sm:$0xff]
      %v3671 = vld [vmem:[#allocation5 + $0x50] sm:$0xff]
      %v3672 = vld [vmem:[#allocation5 + $0x58] sm:$0xff]
      %v3673 = vld [vmem:[#allocation5 + $0x60] sm:$0xff]
      %v3674 = vld [vmem:[#allocation5 + $0x68] sm:$0xff]
      %v3675 = vld [vmem:[#allocation5 + $0x70] sm:$0xff]
      %v3676 = vld [vmem:[#allocation5 + $0x78] sm:$0xff]
      %v3677 = vld [vmem:[%s3] sm:$0xf]
      %v3678 = vld [vmem:[%s3 + $0x4] sm:$0xf]
      %v3679 = vld [vmem:[%s3 + $0x8] sm:$0xf]
      %v3680 = vld [vmem:[%s3 + $0xc] sm:$0xf]
      %v3681 = vld [vmem:[%s3 + $0x10] sm:$0xf]
      %v3682 = vld [vmem:[%s3 + $0x14] sm:$0xf]
      %v3683 = vld [vmem:[%s3 + $0x18] sm:$0xf]
      %v3684 = vld [vmem:[%s3 + $0x1c] sm:$0xf]
      %v3685 = vld [vmem:[%s3 + $0x20] sm:$0xf]
      %v3686 = vld [vmem:[%s3 + $0x24] sm:$0xf]
      %v3687 = vld [vmem:[%s3 + $0x28] sm:$0xf]
      %v3688 = vld [vmem:[%s3 + $0x2c] sm:$0xf]
      %v3689 = vld [vmem:[%s3 + $0x30] sm:$0xf]
      %v3690 = vld [vmem:[%s3 + $0x34] sm:$0xf]
      %v3691 = vld [vmem:[%s3 + $0x38] sm:$0xf]
      %v3692 = vld [vmem:[%s3 + $0x3c] sm:$0xf]
      %v3693 = vld [vmem:[%s3 + $0x40] sm:$0xf]
      %v3694 = vld [vmem:[%s3 + $0x44] sm:$0xf]
      %v3695 = vld [vmem:[%s3 + $0x48] sm:$0xf]
      %v3696 = vld [vmem:[%s3 + $0x4c] sm:$0xf]
      %v3697 = vld [vmem:[%s3 + $0x50] sm:$0xf]
      %v3698 = vld [vmem:[%s3 + $0x54] sm:$0xf]
      %v3699 = vld [vmem:[%s3 + $0x58] sm:$0xf]
      %v3700 = vld [vmem:[%s3 + $0x5c] sm:$0xf]
      %v3701 = vld [vmem:[%s3 + $0x60] sm:$0xf]
      %v3702 = vld [vmem:[%s3 + $0x64] sm:$0xf]
      %v3703 = vld [vmem:[%s3 + $0x68] sm:$0xf]
      %v3704 = vld [vmem:[%s3 + $0x6c] sm:$0xf]
      %v3733 = vunpack.c.l.b16 %v3677
      %v3734 = vunpack.c.l.b16 %v3678
      %v3735 = vunpack.c.l.b16 %v3679
      %v3736 = vunpack.c.l.b16 %v3680
      %v3737 = vunpack.c.l.b16 %v3681
      %v3738 = vunpack.c.l.b16 %v3682
      %v3739 = vunpack.c.l.b16 %v3683
      %v3740 = vunpack.c.l.b16 %v3684
      %v3741 = vunpack.c.l.b16 %v3685
      %v3742 = vunpack.c.l.b16 %v3686
      %v3743 = vunpack.c.l.b16 %v3687
      %v3744 = vunpack.c.l.b16 %v3688
      %v3745 = vunpack.c.l.b16 %v3689
      %v3746 = vunpack.c.l.b16 %v3690
      %v3747 = vunpack.c.l.b16 %v3691
      %v3748 = vunpack.c.l.b16 %v3692
      %v3749 = vunpack.c.l.b16 %v3693
      %v3750 = vunpack.c.l.b16 %v3694
      %v3751 = vunpack.c.l.b16 %v3695
      %v3752 = vunpack.c.l.b16 %v3696
      %v3753 = vunpack.c.l.b16 %v3697
      %v3754 = vunpack.c.l.b16 %v3698
      %v3755 = vunpack.c.l.b16 %v3699
      %v3756 = vunpack.c.l.b16 %v3700
      %v3757 = vunpack.c.l.b16 %v3701
      %v3758 = vunpack.c.l.b16 %v3702
      %v3759 = vunpack.c.l.b16 %v3703
      %v3760 = vunpack.c.l.b16 %v3704
      %v3761 = vpack.c.b16 %v3734, %v3733
      %v3762 = vpack.c.b16 %v3736, %v3735
      %v3763 = vpack.c.b16 %v3738, %v3737
      %v3764 = vpack.c.b16 %v3740, %v3739
      %v3765 = vpack.c.b16 %v3742, %v3741
      %v3766 = vpack.c.b16 %v3744, %v3743
      %v3767 = vpack.c.b16 %v3746, %v3745
      %v3768 = vpack.c.b16 %v3748, %v3747
      %v3769 = vpack.c.b16 %v3750, %v3749
      %v3770 = vpack.c.b16 %v3752, %v3751
      %v3771 = vpack.c.b16 %v3754, %v3753
      %v3772 = vpack.c.b16 %v3756, %v3755
      %v3773 = vpack.c.b16 %v3758, %v3757
      %v3774 = vpack.c.b16 %v3760, %v3759
      %v3790 = vsel %vm1965, %v3662, 0
      %v3793 = vsel %vm1965, %v3664, 0
      %v3796 = vsel %vm1965, %v3666, 0
      %v3799 = vsel %vm1965, %v3668, 0
      %v3802 = vsel %vm1965, %v3670, 0
      %v3805 = vsel %vm1965, %v3672, 0
      %v3808 = vsel %vm1965, %v3674, 0
      %v3811 = vsel %vm1965, %v3676, 0
      %3813 = vmatprep.subr.bf16.mxu0 0
      %3814 = vmatpush1.bf16.msra.mxu0 %v3761
      %3815 = vmatprep.subr.bf16.mxu0 0
      %3816 = vmatpush1.bf16.msra.mxu0 %v3762
      %3817 = vmatprep.subr.bf16.mxu0 0
      %3818 = vmatpush1.bf16.msra.mxu0 %v3763
      %3819 = vmatprep.subr.bf16.mxu0 0
      %3820 = vmatpush1.bf16.msra.mxu0 %v3764
      %3821 = vmatprep.subr.bf16.mxu0 0
      %3822 = vmatpush1.bf16.msra.mxu0 %v3765
      %3823 = vmatprep.subr.bf16.mxu0 0
      %3824 = vmatpush1.bf16.msra.mxu0 %v3766
      %3825 = vmatprep.subr.bf16.mxu0 0
      %3826 = vmatpush1.bf16.msra.mxu0 %v3767
      %3827 = vmatprep.subr.bf16.mxu0 0
      %3828 = vmatpush1.bf16.msra.mxu0 %v3768
      %3829 = vmatprep.subr.bf16.mxu0 0
      %3830 = vmatpush1.bf16.msra.mxu0 %v3769
      %3831 = vmatprep.subr.bf16.mxu0 0
      %3832 = vmatpush1.bf16.msra.mxu0 %v3770
      %3833 = vmatprep.subr.bf16.mxu0 0
      %3834 = vmatpush1.bf16.msra.mxu0 %v3771
      %3835 = vmatprep.subr.bf16.mxu0 0
      %3836 = vmatpush1.bf16.msra.mxu0 %v3772
      %3837 = vmatprep.subr.bf16.mxu0 0
      %3838 = vmatpush1.bf16.msra.mxu0 %v3773
      %3839 = vmatprep.subr.bf16.mxu0 0
      %3840 = vmatpush1.bf16.msra.mxu0 %v3774
      %3841 = vmatprep.subr.bf16.mxu0 0
      %3842 = vmatpush1.bf16.msra.mxu0 0
      %3843 = vmatprep.subr.bf16.mxu0 0
      %3844 = vmatpush1.bf16.msra.mxu0 0
      %3845 = vmatprep.mubr.bf16.mxu0 %v3790
      %3846 = vmatmul.mubr.bf16.gmra.mrb[0].mxu0 %v3661
      %v3847 = vpop.f32.mrb[0].mxu0
      %v3848 = vadd.f32 %v1879, %v3847
      %v3849 = vpop.f32.mrb[0].mxu0
      %v3850 = vpop.f32.mrb[0].mxu0
      %v3851 = vadd.f32 %v1879, %v3850
      %v3852 = vpop.f32.mrb[0].mxu0
      %3853 = vmatprep.mubr.bf16.mxu0 %v3793
      %3854 = vmatmul.mubr.bf16.gmra.mrb[0].mxu0 %v3663
      %v3855 = vpop.f32.mrb[0].mxu0
      %v3856 = vadd.f32 %v1879, %v3855
      %v3857 = vpop.f32.mrb[0].mxu0
      %v3858 = vpop.f32.mrb[0].mxu0
      %v3859 = vadd.f32 %v1879, %v3858
      %v3860 = vpop.f32.mrb[0].mxu0
      %3861 = vmatprep.mubr.bf16.mxu0 %v3796
      %3862 = vmatmul.mubr.bf16.gmra.mrb[0].mxu0 %v3665
      %v3863 = vpop.f32.mrb[0].mxu0
      %v3864 = vadd.f32 %v1879, %v3863
      %v3865 = vpop.f32.mrb[0].mxu0
      %v3866 = vpop.f32.mrb[0].mxu0
      %v3867 = vadd.f32 %v1879, %v3866
      %v3868 = vpop.f32.mrb[0].mxu0
      %3869 = vmatprep.mubr.bf16.mxu0 %v3799
      %3870 = vmatmul.mubr.bf16.gmra.mrb[0].mxu0 %v3667
      %v3871 = vpop.f32.mrb[0].mxu0
      %v3872 = vadd.f32 %v1879, %v3871
      %v3873 = vpop.f32.mrb[0].mxu0
      %v3874 = vpop.f32.mrb[0].mxu0
      %v3875 = vadd.f32 %v1879, %v3874
      %v3876 = vpop.f32.mrb[0].mxu0
      %3877 = vmatprep.mubr.bf16.mxu0 %v3802
      %3878 = vmatmul.mubr.bf16.gmra.mrb[0].mxu0 %v3669
      %v3879 = vpop.f32.mrb[0].mxu0
      %v3880 = vadd.f32 %v1879, %v3879
      %v3881 = vpop.f32.mrb[0].mxu0
      %v3882 = vpop.f32.mrb[0].mxu0
      %v3883 = vadd.f32 %v1879, %v3882
      %v3884 = vpop.f32.mrb[0].mxu0
      %3885 = vmatprep.mubr.bf16.mxu0 %v3805
      %3886 = vmatmul.mubr.bf16.gmra.mrb[0].mxu0 %v3671
      %v3887 = vpop.f32.mrb[0].mxu0
      %v3888 = vadd.f32 %v1879, %v3887
      %v3889 = vpop.f32.mrb[0].mxu0
      %v3890 = vpop.f32.mrb[0].mxu0
      %v3891 = vadd.f32 %v1879, %v3890
      %v3892 = vpop.f32.mrb[0].mxu0
      %3893 = vmatprep.mubr.bf16.mxu0 %v3808
      %3894 = vmatmul.mubr.bf16.gmra.mrb[0].mxu0 %v3673
      %v3895 = vpop.f32.mrb[0].mxu0
      %v3896 = vadd.f32 %v1879, %v3895
      %v3897 = vpop.f32.mrb[0].mxu0
      %v3898 = vpop.f32.mrb[0].mxu0
      %v3899 = vadd.f32 %v1879, %v3898
      %v3900 = vpop.f32.mrb[0].mxu0
      %3901 = vmatprep.mubr.bf16.mxu0 %v3811
      %3902 = vmatmul.mubr.bf16.gmra.mrb[0].mxu0 %v3675
      %v3903 = vpop.f32.mrb[0].mxu0
      %v3904 = vadd.f32 %v1879, %v3903
      %v3905 = vpop.f32.mrb[0].mxu0
      %v3906 = vpop.f32.mrb[0].mxu0
      %v3907 = vadd.f32 %v1879, %v3906
      %v3908 = vpop.f32.mrb[0].mxu0
      %3909 = vdwg.mxu0
      %v3910 = vpack.c.bf16 %v3848, %v3848
      %v3911 = vpack.c.bf16 %v3851, %v3851
      %v3912 = vpack.c.bf16 %v3856, %v3856
      %v3913 = vpack.c.bf16 %v3859, %v3859
      %v3914 = vpack.c.bf16 %v3864, %v3864
      %v3915 = vpack.c.bf16 %v3867, %v3867
      %v3916 = vpack.c.bf16 %v3872, %v3872
      %v3917 = vpack.c.bf16 %v3875, %v3875
      %v3918 = vpack.c.bf16 %v3880, %v3880
      %v3919 = vpack.c.bf16 %v3883, %v3883
      %v3920 = vpack.c.bf16 %v3888, %v3888
      %v3921 = vpack.c.bf16 %v3891, %v3891
      %v3922 = vpack.c.bf16 %v3896, %v3896
      %v3923 = vpack.c.bf16 %v3899, %v3899
      %v3924 = vpack.c.bf16 %v3904, %v3904
      %v3925 = vpack.c.bf16 %v3907, %v3907
      %v3942 = vunpack.c.l.b16 %v3910
      %v3943 = vunpack.c.l.b16 %v3911
      %v3944 = vunpack.c.l.b16 %v3912
      %v3945 = vunpack.c.l.b16 %v3913
      %v3946 = vunpack.c.l.b16 %v3914
      %v3947 = vunpack.c.l.b16 %v3915
      %v3948 = vunpack.c.l.b16 %v3916
      %v3949 = vunpack.c.l.b16 %v3917
      %v3950 = vunpack.c.l.b16 %v3918
      %v3951 = vunpack.c.l.b16 %v3919
      %v3952 = vunpack.c.l.b16 %v3920
      %v3953 = vunpack.c.l.b16 %v3921
      %v3954 = vunpack.c.l.b16 %v3922
      %v3955 = vunpack.c.l.b16 %v3923
      %v3956 = vunpack.c.l.b16 %v3924
      %v3957 = vunpack.c.l.b16 %v3925
      %v3958 = vpack.c.b16 %v3942, %v3942
      %v3959 = vpack.c.b16 %v3943, %v3943
      %v3960 = vpack.c.b16 %v3944, %v3944
      %v3961 = vpack.c.b16 %v3945, %v3945
      %v3962 = vpack.c.b16 %v3946, %v3946
      %v3963 = vpack.c.b16 %v3947, %v3947
      %v3964 = vpack.c.b16 %v3948, %v3948
      %v3965 = vpack.c.b16 %v3949, %v3949
      %v3966 = vpack.c.b16 %v3950, %v3950
      %v3967 = vpack.c.b16 %v3951, %v3951
      %v3968 = vpack.c.b16 %v3952, %v3952
      %v3969 = vpack.c.b16 %v3953, %v3953
      %v3970 = vpack.c.b16 %v3954, %v3954
      %v3971 = vpack.c.b16 %v3955, %v3955
      %v3972 = vpack.c.b16 %v3956, %v3956
      %v3973 = vpack.c.b16 %v3957, %v3957
      %v3974 = vrot.slane %v3958, 7
      %v3975 = vrot.slane %v3974, 4
      %v3976 = vrot.slane %v3959, 7
      %v3977 = vrot.slane %v3976, 4
      %v3978 = vrot.slane %v3960, 7
      %v3979 = vrot.slane %v3978, 4
      %v3980 = vrot.slane %v3961, 7
      %v3981 = vrot.slane %v3980, 4
      %v3982 = vrot.slane %v3962, 7
      %v3983 = vrot.slane %v3982, 4
      %v3984 = vrot.slane %v3963, 7
      %v3985 = vrot.slane %v3984, 4
      %v3986 = vrot.slane %v3964, 7
      %v3987 = vrot.slane %v3986, 4
      %v3988 = vrot.slane %v3965, 7
      %v3989 = vrot.slane %v3988, 4
      %v3990 = vrot.slane %v3966, 7
      %v3991 = vrot.slane %v3990, 4
      %v3992 = vrot.slane %v3967, 7
      %v3993 = vrot.slane %v3992, 4
      %v3994 = vrot.slane %v3968, 7
      %v3995 = vrot.slane %v3994, 4
      %v3996 = vrot.slane %v3969, 7
      %v3997 = vrot.slane %v3996, 4
      %v3998 = vrot.slane %v3970, 7
      %v3999 = vrot.slane %v3998, 4
      %v4000 = vrot.slane %v3971, 7
      %v4001 = vrot.slane %v4000, 4
      %v4002 = vrot.slane %v3972, 7
      %v4003 = vrot.slane %v4002, 4
      %v4004 = vrot.slane %v3973, 7
      %v4005 = vrot.slane %v4004, 4
      %s4038 = scalar_lea.vmem [#allocation3], 128
      %4039 = vst.msk [vmem:[%s4038] sm:$0xe] %vm2215, %v3974
      %4040 = vst.msk [vmem:[%s4038 + $0x4] sm:$0x1] %vm2217, %v3975
      %4041 = vst.msk [vmem:[%s4038 + $0x8] sm:$0xe] %vm2215, %v3976
      %4042 = vst.msk [vmem:[%s4038 + $0xc] sm:$0x1] %vm2217, %v3977
      %4043 = vst.msk [vmem:[%s4038 + $0x10] sm:$0xe] %vm2215, %v3978
      %4044 = vst.msk [vmem:[%s4038 + $0x14] sm:$0x1] %vm2217, %v3979
      %4045 = vst.msk [vmem:[%s4038 + $0x18] sm:$0xe] %vm2215, %v3980
      %4046 = vst.msk [vmem:[%s4038 + $0x1c] sm:$0x1] %vm2217, %v3981
      %4047 = vst.msk [vmem:[%s4038 + $0x20] sm:$0xe] %vm2215, %v3982
      %4048 = vst.msk [vmem:[%s4038 + $0x24] sm:$0x1] %vm2217, %v3983
      %4049 = vst.msk [vmem:[%s4038 + $0x28] sm:$0xe] %vm2215, %v3984
      %4050 = vst.msk [vmem:[%s4038 + $0x2c] sm:$0x1] %vm2217, %v3985
      %4051 = vst.msk [vmem:[%s4038 + $0x30] sm:$0xe] %vm2215, %v3986
      %4052 = vst.msk [vmem:[%s4038 + $0x34] sm:$0x1] %vm2217, %v3987
      %4053 = vst.msk [vmem:[%s4038 + $0x38] sm:$0xe] %vm2215, %v3988
      %4054 = vst.msk [vmem:[%s4038 + $0x3c] sm:$0x1] %vm2217, %v3989
      %4055 = vst.msk [vmem:[%s4038 + $0x40] sm:$0xe] %vm2215, %v3990
      %4056 = vst.msk [vmem:[%s4038 + $0x44] sm:$0x1] %vm2217, %v3991
      %4057 = vst.msk [vmem:[%s4038 + $0x48] sm:$0xe] %vm2215, %v3992
      %4058 = vst.msk [vmem:[%s4038 + $0x4c] sm:$0x1] %vm2217, %v3993
      %4059 = vst.msk [vmem:[%s4038 + $0x50] sm:$0xe] %vm2215, %v3994
      %4060 = vst.msk [vmem:[%s4038 + $0x54] sm:$0x1] %vm2217, %v3995
      %4061 = vst.msk [vmem:[%s4038 + $0x58] sm:$0xe] %vm2215, %v3996
      %4062 = vst.msk [vmem:[%s4038 + $0x5c] sm:$0x1] %vm2217, %v3997
      %4063 = vst.msk [vmem:[%s4038 + $0x60] sm:$0xe] %vm2215, %v3998
      %4064 = vst.msk [vmem:[%s4038 + $0x64] sm:$0x1] %vm2217, %v3999
      %4065 = vst.msk [vmem:[%s4038 + $0x68] sm:$0xe] %vm2215, %v4000
      %4066 = vst.msk [vmem:[%s4038 + $0x6c] sm:$0x1] %vm2217, %v4001
      %4067 = vst.msk [vmem:[%s4038 + $0x70] sm:$0xe] %vm2215, %v4002
      %4068 = vst.msk [vmem:[%s4038 + $0x74] sm:$0x1] %vm2217, %v4003
      %4069 = vst.msk [vmem:[%s4038 + $0x78] sm:$0xe] %vm2215, %v4004
      %4070 = vst.msk [vmem:[%s4038 + $0x7c] sm:$0x1] %vm2217, %v4005
      %v4071 = vld [vmem:[%s4038] sm:$0xf]
      %v4072 = vld [vmem:[%s4038 + $0x8] sm:$0xf]
      %v4073 = vld [vmem:[%s4038 + $0x10] sm:$0xf]
      %v4074 = vld [vmem:[%s4038 + $0x18] sm:$0xf]
      %v4075 = vld [vmem:[%s4038 + $0x20] sm:$0xf]
      %v4076 = vld [vmem:[%s4038 + $0x28] sm:$0xf]
      %v4077 = vld [vmem:[%s4038 + $0x30] sm:$0xf]
      %v4078 = vld [vmem:[%s4038 + $0x38] sm:$0xf]
      %v4079 = vld [vmem:[%s4038 + $0x40] sm:$0xf]
      %v4080 = vld [vmem:[%s4038 + $0x48] sm:$0xf]
      %v4081 = vld [vmem:[%s4038 + $0x50] sm:$0xf]
      %v4082 = vld [vmem:[%s4038 + $0x58] sm:$0xf]
      %v4083 = vld [vmem:[%s4038 + $0x60] sm:$0xf]
      %v4084 = vld [vmem:[%s4038 + $0x68] sm:$0xf]
      %v4085 = vld [vmem:[%s4038 + $0x70] sm:$0xf]
      %v4086 = vld [vmem:[%s4038 + $0x78] sm:$0xf]
      %v4103 = vunpack.c.l.b16 %v4071
      %v4104 = vunpack.c.l.b16 %v4072
      %v4105 = vunpack.c.l.b16 %v4073
      %v4106 = vunpack.c.l.b16 %v4074
      %v4107 = vunpack.c.l.b16 %v4075
      %v4108 = vunpack.c.l.b16 %v4076
      %v4109 = vunpack.c.l.b16 %v4077
      %v4110 = vunpack.c.l.b16 %v4078
      %v4111 = vunpack.c.l.b16 %v4079
      %v4112 = vunpack.c.l.b16 %v4080
      %v4113 = vunpack.c.l.b16 %v4081
      %v4114 = vunpack.c.l.b16 %v4082
      %v4115 = vunpack.c.l.b16 %v4083
      %v4116 = vunpack.c.l.b16 %v4084
      %v4117 = vunpack.c.l.b16 %v4085
      %v4118 = vunpack.c.l.b16 %v4086
      %v4119 = vpack.c.b16 %v4104, %v4103
      %v4120 = vpack.c.b16 %v4106, %v4105
      %v4121 = vpack.c.b16 %v4108, %v4107
      %v4122 = vpack.c.b16 %v4110, %v4109
      %v4123 = vpack.c.b16 %v4112, %v4111
      %v4124 = vpack.c.b16 %v4114, %v4113
      %v4125 = vpack.c.b16 %v4116, %v4115
      %v4126 = vpack.c.b16 %v4118, %v4117
      %vm4135 = vcmask 400384
      %4136 = vst.msk [vmem:[#allocation6] sm:$0xff] %vm4135, %v4119
      %4137 = vst.msk [vmem:[#allocation6 + $0x18] sm:$0xff] %vm4135, %v4120
      %4138 = vst.msk [vmem:[#allocation6 + $0x30] sm:$0xff] %vm4135, %v4121
      %4139 = vst.msk [vmem:[#allocation6 + $0x48] sm:$0xff] %vm4135, %v4122
      %4140 = vst.msk [vmem:[#allocation6 + $0x60] sm:$0xff] %vm4135, %v4123
      %4141 = vst.msk [vmem:[#allocation6 + $0x78] sm:$0xff] %vm4135, %v4124
      %4142 = vst.msk [vmem:[#allocation6 + $0x90] sm:$0xff] %vm4135, %v4125
      %4143 = vst.msk [vmem:[#allocation6 + $0xa8] sm:$0xff] %vm4135, %v4126
      %v4144 = vld [vmem:[#allocation3] sm:$0xf]
      %v4145 = vld [vmem:[#allocation3 + $0x4] sm:$0x1]
      %v4146 = vld [vmem:[#allocation3 + $0x8] sm:$0xf]
      %v4147 = vld [vmem:[#allocation3 + $0xc] sm:$0x1]
      %v4148 = vld [vmem:[#allocation3 + $0x10] sm:$0xf]
      %v4149 = vld [vmem:[#allocation3 + $0x14] sm:$0x1]
      %v4150 = vld [vmem:[#allocation3 + $0x18] sm:$0xf]
      %v4151 = vld [vmem:[#allocation3 + $0x1c] sm:$0x1]
      %v4152 = vld [vmem:[#allocation3 + $0x20] sm:$0xf]
      %v4153 = vld [vmem:[#allocation3 + $0x24] sm:$0x1]
      %v4154 = vld [vmem:[#allocation3 + $0x28] sm:$0xf]
      %v4155 = vld [vmem:[#allocation3 + $0x2c] sm:$0x1]
      %v4156 = vld [vmem:[#allocation3 + $0x30] sm:$0xf]
      %v4157 = vld [vmem:[#allocation3 + $0x34] sm:$0x1]
      %v4158 = vld [vmem:[#allocation3 + $0x38] sm:$0xf]
      %v4159 = vld [vmem:[#allocation3 + $0x3c] sm:$0x1]
      %v4160 = vld [vmem:[#allocation3 + $0x40] sm:$0xf]
      %v4161 = vld [vmem:[#allocation3 + $0x44] sm:$0x1]
      %v4162 = vld [vmem:[#allocation3 + $0x48] sm:$0xf]
      %v4163 = vld [vmem:[#allocation3 + $0x4c] sm:$0x1]
      %v4164 = vld [vmem:[#allocation3 + $0x50] sm:$0xf]
      %v4165 = vld [vmem:[#allocation3 + $0x54] sm:$0x1]
      %v4166 = vld [vmem:[#allocation3 + $0x58] sm:$0xf]
      %v4167 = vld [vmem:[#allocation3 + $0x5c] sm:$0x1]
      %v4168 = vld [vmem:[#allocation3 + $0x60] sm:$0xf]
      %v4169 = vld [vmem:[#allocation3 + $0x64] sm:$0x1]
      %v4170 = vld [vmem:[#allocation3 + $0x68] sm:$0xf]
      %v4171 = vld [vmem:[#allocation3 + $0x6c] sm:$0x1]
      %v4172 = vld [vmem:[#allocation3 + $0x70] sm:$0xf]
      %v4173 = vld [vmem:[#allocation3 + $0x74] sm:$0x1]
      %v4174 = vld [vmem:[#allocation3 + $0x78] sm:$0xf]
      %v4175 = vld [vmem:[#allocation3 + $0x7c] sm:$0x1]
      %v4177 = vshrl.u32 %v4144, 16
      %v4179 = vrot.slane %v4177, 4
      %v4180 = vshll.u32 %v4144, 16
      %v4182 = vrot.slane %v4180, 5
      %v4183 = vor.u32 %v4179, %v4182
      %v4184 = vrot.slane %v4183, 4
      %v4186 = vshll.u32 %v4145, 16
      %v4188 = vrot.slane %v4186, 5
      %v4189 = vsel %vm648, %v4184, %v4188
      %v4191 = vshrl.u32 %v4146, 16
      %v4193 = vrot.slane %v4191, 4
      %v4194 = vshll.u32 %v4146, 16
      %v4196 = vrot.slane %v4194, 5
      %v4197 = vor.u32 %v4193, %v4196
      %v4198 = vrot.slane %v4197, 4
      %v4200 = vshll.u32 %v4147, 16
      %v4202 = vrot.slane %v4200, 5
      %v4203 = vsel %vm648, %v4198, %v4202
      %v4205 = vshrl.u32 %v4148, 16
      %v4207 = vrot.slane %v4205, 4
      %v4208 = vshll.u32 %v4148, 16
      %v4210 = vrot.slane %v4208, 5
      %v4211 = vor.u32 %v4207, %v4210
      %v4212 = vrot.slane %v4211, 4
      %v4214 = vshll.u32 %v4149, 16
      %v4216 = vrot.slane %v4214, 5
      %v4217 = vsel %vm648, %v4212, %v4216
      %v4219 = vshrl.u32 %v4150, 16
      %v4221 = vrot.slane %v4219, 4
      %v4222 = vshll.u32 %v4150, 16
      %v4224 = vrot.slane %v4222, 5
      %v4225 = vor.u32 %v4221, %v4224
      %v4226 = vrot.slane %v4225, 4
      %v4228 = vshll.u32 %v4151, 16
      %v4230 = vrot.slane %v4228, 5
      %v4231 = vsel %vm648, %v4226, %v4230
      %v4233 = vshrl.u32 %v4152, 16
      %v4235 = vrot.slane %v4233, 4
      %v4236 = vshll.u32 %v4152, 16
      %v4238 = vrot.slane %v4236, 5
      %v4239 = vor.u32 %v4235, %v4238
      %v4240 = vrot.slane %v4239, 4
      %v4242 = vshll.u32 %v4153, 16
      %v4244 = vrot.slane %v4242, 5
      %v4245 = vsel %vm648, %v4240, %v4244
      %v4247 = vshrl.u32 %v4154, 16
      %v4249 = vrot.slane %v4247, 4
      %v4250 = vshll.u32 %v4154, 16
      %v4252 = vrot.slane %v4250, 5
      %v4253 = vor.u32 %v4249, %v4252
      %v4254 = vrot.slane %v4253, 4
      %v4256 = vshll.u32 %v4155, 16
      %v4258 = vrot.slane %v4256, 5
      %v4259 = vsel %vm648, %v4254, %v4258
      %v4261 = vshrl.u32 %v4156, 16
      %v4263 = vrot.slane %v4261, 4
      %v4264 = vshll.u32 %v4156, 16
      %v4266 = vrot.slane %v4264, 5
      %v4267 = vor.u32 %v4263, %v4266
      %v4268 = vrot.slane %v4267, 4
      %v4270 = vshll.u32 %v4157, 16
      %v4272 = vrot.slane %v4270, 5
      %v4273 = vsel %vm648, %v4268, %v4272
      %v4275 = vshrl.u32 %v4158, 16
      %v4277 = vrot.slane %v4275, 4
      %v4278 = vshll.u32 %v4158, 16
      %v4280 = vrot.slane %v4278, 5
      %v4281 = vor.u32 %v4277, %v4280
      %v4282 = vrot.slane %v4281, 4
      %v4284 = vshll.u32 %v4159, 16
      %v4286 = vrot.slane %v4284, 5
      %v4287 = vsel %vm648, %v4282, %v4286
      %v4289 = vshrl.u32 %v4160, 16
      %v4291 = vrot.slane %v4289, 4
      %v4292 = vshll.u32 %v4160, 16
      %v4294 = vrot.slane %v4292, 5
      %v4295 = vor.u32 %v4291, %v4294
      %v4296 = vrot.slane %v4295, 4
      %v4298 = vshll.u32 %v4161, 16
      %v4300 = vrot.slane %v4298, 5
      %v4301 = vsel %vm648, %v4296, %v4300
      %v4303 = vshrl.u32 %v4162, 16
      %v4305 = vrot.slane %v4303, 4
      %v4306 = vshll.u32 %v4162, 16
      %v4308 = vrot.slane %v4306, 5
      %v4309 = vor.u32 %v4305, %v4308
      %v4310 = vrot.slane %v4309, 4
      %v4312 = vshll.u32 %v4163, 16
      %v4314 = vrot.slane %v4312, 5
      %v4315 = vsel %vm648, %v4310, %v4314
      %v4317 = vshrl.u32 %v4164, 16
      %v4319 = vrot.slane %v4317, 4
      %v4320 = vshll.u32 %v4164, 16
      %v4322 = vrot.slane %v4320, 5
      %v4323 = vor.u32 %v4319, %v4322
      %v4324 = vrot.slane %v4323, 4
      %v4326 = vshll.u32 %v4165, 16
      %v4328 = vrot.slane %v4326, 5
      %v4329 = vsel %vm648, %v4324, %v4328
      %v4331 = vshrl.u32 %v4166, 16
      %v4333 = vrot.slane %v4331, 4
      %v4334 = vshll.u32 %v4166, 16
      %v4336 = vrot.slane %v4334, 5
      %v4337 = vor.u32 %v4333, %v4336
      %v4338 = vrot.slane %v4337, 4
      %v4340 = vshll.u32 %v4167, 16
      %v4342 = vrot.slane %v4340, 5
      %v4343 = vsel %vm648, %v4338, %v4342
      %v4345 = vshrl.u32 %v4168, 16
      %v4347 = vrot.slane %v4345, 4
      %v4348 = vshll.u32 %v4168, 16
      %v4350 = vrot.slane %v4348, 5
      %v4351 = vor.u32 %v4347, %v4350
      %v4352 = vrot.slane %v4351, 4
      %v4354 = vshll.u32 %v4169, 16
      %v4356 = vrot.slane %v4354, 5
      %v4357 = vsel %vm648, %v4352, %v4356
      %v4359 = vshrl.u32 %v4170, 16
      %v4361 = vrot.slane %v4359, 4
      %v4362 = vshll.u32 %v4170, 16
      %v4364 = vrot.slane %v4362, 5
      %v4365 = vor.u32 %v4361, %v4364
      %v4366 = vrot.slane %v4365, 4
      %v4368 = vshll.u32 %v4171, 16
      %v4370 = vrot.slane %v4368, 5
      %v4371 = vsel %vm648, %v4366, %v4370
      %v4373 = vshrl.u32 %v4172, 16
      %v4375 = vrot.slane %v4373, 4
      %v4376 = vshll.u32 %v4172, 16
      %v4378 = vrot.slane %v4376, 5
      %v4379 = vor.u32 %v4375, %v4378
      %v4380 = vrot.slane %v4379, 4
      %v4382 = vshll.u32 %v4173, 16
      %v4384 = vrot.slane %v4382, 5
      %v4385 = vsel %vm648, %v4380, %v4384
      %v4387 = vshrl.u32 %v4174, 16
      %v4389 = vrot.slane %v4387, 4
      %v4390 = vshll.u32 %v4174, 16
      %v4392 = vrot.slane %v4390, 5
      %v4393 = vor.u32 %v4389, %v4392
      %v4394 = vrot.slane %v4393, 4
      %v4396 = vshll.u32 %v4175, 16
      %v4398 = vrot.slane %v4396, 5
      %v4399 = vsel %vm648, %v4394, %v4398
      %v4400 = vunpack.c.l.b16 %v4189
      %v4401 = vunpack.c.l.b16 %v4203
      %v4402 = vunpack.c.l.b16 %v4217
      %v4403 = vunpack.c.l.b16 %v4231
      %v4404 = vunpack.c.l.b16 %v4245
      %v4405 = vunpack.c.l.b16 %v4259
      %v4406 = vunpack.c.l.b16 %v4273
      %v4407 = vunpack.c.l.b16 %v4287
      %v4408 = vunpack.c.l.b16 %v4301
      %v4409 = vunpack.c.l.b16 %v4315
      %v4410 = vunpack.c.l.b16 %v4329
      %v4411 = vunpack.c.l.b16 %v4343
      %v4412 = vunpack.c.l.b16 %v4357
      %v4413 = vunpack.c.l.b16 %v4371
      %v4414 = vunpack.c.l.b16 %v4385
      %v4415 = vunpack.c.l.b16 %v4399
      %v4416 = vpack.c.b16 %v4401, %v4400
      %v4417 = vpack.c.b16 %v4403, %v4402
      %v4418 = vpack.c.b16 %v4405, %v4404
      %v4419 = vpack.c.b16 %v4407, %v4406
      %v4420 = vpack.c.b16 %v4409, %v4408
      %v4421 = vpack.c.b16 %v4411, %v4410
      %v4422 = vpack.c.b16 %v4413, %v4412
      %v4423 = vpack.c.b16 %v4415, %v4414
      %4424 = vrot.lane.b32.xlu0 %v4416, 49
      %v4425 = vpop.permute.xlu0 %4424
      %4426 = vrot.lane.b32.xlu0 %v4417, 49
      %v4427 = vpop.permute.xlu0 %4426
      %4428 = vrot.lane.b32.xlu0 %v4418, 49
      %v4429 = vpop.permute.xlu0 %4428
      %4430 = vrot.lane.b32.xlu0 %v4419, 49
      %v4431 = vpop.permute.xlu0 %4430
      %4432 = vrot.lane.b32.xlu0 %v4420, 49
      %v4433 = vpop.permute.xlu0 %4432
      %4434 = vrot.lane.b32.xlu0 %v4421, 49
      %v4435 = vpop.permute.xlu0 %4434
      %4436 = vrot.lane.b32.xlu0 %v4422, 49
      %v4437 = vpop.permute.xlu0 %4436
      %4438 = vrot.lane.b32.xlu0 %v4423, 49
      %v4439 = vpop.permute.xlu0 %4438
      %vm4448 = vcmask 802184
      %4449 = vst.msk [vmem:[#allocation6] sm:$0xff] %vm4448, %v4425
      %4450 = vst.msk [vmem:[#allocation6 + $0x18] sm:$0xff] %vm4448, %v4427
      %4451 = vst.msk [vmem:[#allocation6 + $0x30] sm:$0xff] %vm4448, %v4429
      %4452 = vst.msk [vmem:[#allocation6 + $0x48] sm:$0xff] %vm4448, %v4431
      %4453 = vst.msk [vmem:[#allocation6 + $0x60] sm:$0xff] %vm4448, %v4433
      %4454 = vst.msk [vmem:[#allocation6 + $0x78] sm:$0xff] %vm4448, %v4435
      %4455 = vst.msk [vmem:[#allocation6 + $0x90] sm:$0xff] %vm4448, %v4437
      %4456 = vst.msk [vmem:[#allocation6 + $0xa8] sm:$0xff] %vm4448, %v4439
      %v4457 = vld [vmem:[%s4038] sm:$0xf]
      %v4458 = vld [vmem:[%s4038 + $0x4] sm:$0x1]
      %v4459 = vld [vmem:[%s4038 + $0x8] sm:$0xf]
      %v4460 = vld [vmem:[%s4038 + $0xc] sm:$0x1]
      %v4461 = vld [vmem:[%s4038 + $0x10] sm:$0xf]
      %v4462 = vld [vmem:[%s4038 + $0x14] sm:$0x1]
      %v4463 = vld [vmem:[%s4038 + $0x18] sm:$0xf]
      %v4464 = vld [vmem:[%s4038 + $0x1c] sm:$0x1]
      %v4465 = vld [vmem:[%s4038 + $0x20] sm:$0xf]
      %v4466 = vld [vmem:[%s4038 + $0x24] sm:$0x1]
      %v4467 = vld [vmem:[%s4038 + $0x28] sm:$0xf]
      %v4468 = vld [vmem:[%s4038 + $0x2c] sm:$0x1]
      %v4469 = vld [vmem:[%s4038 + $0x30] sm:$0xf]
      %v4470 = vld [vmem:[%s4038 + $0x34] sm:$0x1]
      %v4471 = vld [vmem:[%s4038 + $0x38] sm:$0xf]
      %v4472 = vld [vmem:[%s4038 + $0x3c] sm:$0x1]
      %v4473 = vld [vmem:[%s4038 + $0x40] sm:$0xf]
      %v4474 = vld [vmem:[%s4038 + $0x44] sm:$0x1]
      %v4475 = vld [vmem:[%s4038 + $0x48] sm:$0xf]
      %v4476 = vld [vmem:[%s4038 + $0x4c] sm:$0x1]
      %v4477 = vld [vmem:[%s4038 + $0x50] sm:$0xf]
      %v4478 = vld [vmem:[%s4038 + $0x54] sm:$0x1]
      %v4479 = vld [vmem:[%s4038 + $0x58] sm:$0xf]
      %v4480 = vld [vmem:[%s4038 + $0x5c] sm:$0x1]
      %v4481 = vld [vmem:[%s4038 + $0x60] sm:$0xf]
      %v4482 = vld [vmem:[%s4038 + $0x64] sm:$0x1]
      %v4483 = vld [vmem:[%s4038 + $0x68] sm:$0xf]
      %v4484 = vld [vmem:[%s4038 + $0x6c] sm:$0x1]
      %v4485 = vld [vmem:[%s4038 + $0x70] sm:$0xf]
      %v4486 = vld [vmem:[%s4038 + $0x74] sm:$0x1]
      %v4487 = vld [vmem:[%s4038 + $0x78] sm:$0xf]
      %v4488 = vld [vmem:[%s4038 + $0x7c] sm:$0x1]
      %v4490 = vshrl.u32 %v4457, 16
      %v4492 = vrot.slane %v4490, 4
      %v4493 = vshll.u32 %v4457, 16
      %v4495 = vrot.slane %v4493, 5
      %v4496 = vor.u32 %v4492, %v4495
      %v4497 = vrot.slane %v4496, 4
      %v4499 = vshll.u32 %v4458, 16
      %v4501 = vrot.slane %v4499, 5
      %v4502 = vsel %vm648, %v4497, %v4501
      %v4504 = vshrl.u32 %v4459, 16
      %v4506 = vrot.slane %v4504, 4
      %v4507 = vshll.u32 %v4459, 16
      %v4509 = vrot.slane %v4507, 5
      %v4510 = vor.u32 %v4506, %v4509
      %v4511 = vrot.slane %v4510, 4
      %v4513 = vshll.u32 %v4460, 16
      %v4515 = vrot.slane %v4513, 5
      %v4516 = vsel %vm648, %v4511, %v4515
      %v4518 = vshrl.u32 %v4461, 16
      %v4520 = vrot.slane %v4518, 4
      %v4521 = vshll.u32 %v4461, 16
      %v4523 = vrot.slane %v4521, 5
      %v4524 = vor.u32 %v4520, %v4523
      %v4525 = vrot.slane %v4524, 4
      %v4527 = vshll.u32 %v4462, 16
      %v4529 = vrot.slane %v4527, 5
      %v4530 = vsel %vm648, %v4525, %v4529
      %v4532 = vshrl.u32 %v4463, 16
      %v4534 = vrot.slane %v4532, 4
      %v4535 = vshll.u32 %v4463, 16
      %v4537 = vrot.slane %v4535, 5
      %v4538 = vor.u32 %v4534, %v4537
      %v4539 = vrot.slane %v4538, 4
      %v4541 = vshll.u32 %v4464, 16
      %v4543 = vrot.slane %v4541, 5
      %v4544 = vsel %vm648, %v4539, %v4543
      %v4546 = vshrl.u32 %v4465, 16
      %v4548 = vrot.slane %v4546, 4
      %v4549 = vshll.u32 %v4465, 16
      %v4551 = vrot.slane %v4549, 5
      %v4552 = vor.u32 %v4548, %v4551
      %v4553 = vrot.slane %v4552, 4
      %v4555 = vshll.u32 %v4466, 16
      %v4557 = vrot.slane %v4555, 5
      %v4558 = vsel %vm648, %v4553, %v4557
      %v4560 = vshrl.u32 %v4467, 16
      %v4562 = vrot.slane %v4560, 4
      %v4563 = vshll.u32 %v4467, 16
      %v4565 = vrot.slane %v4563, 5
      %v4566 = vor.u32 %v4562, %v4565
      %v4567 = vrot.slane %v4566, 4
      %v4569 = vshll.u32 %v4468, 16
      %v4571 = vrot.slane %v4569, 5
      %v4572 = vsel %vm648, %v4567, %v4571
      %v4574 = vshrl.u32 %v4469, 16
      %v4576 = vrot.slane %v4574, 4
      %v4577 = vshll.u32 %v4469, 16
      %v4579 = vrot.slane %v4577, 5
      %v4580 = vor.u32 %v4576, %v4579
      %v4581 = vrot.slane %v4580, 4
      %v4583 = vshll.u32 %v4470, 16
      %v4585 = vrot.slane %v4583, 5
      %v4586 = vsel %vm648, %v4581, %v4585
      %v4588 = vshrl.u32 %v4471, 16
      %v4590 = vrot.slane %v4588, 4
      %v4591 = vshll.u32 %v4471, 16
      %v4593 = vrot.slane %v4591, 5
      %v4594 = vor.u32 %v4590, %v4593
      %v4595 = vrot.slane %v4594, 4
      %v4597 = vshll.u32 %v4472, 16
      %v4599 = vrot.slane %v4597, 5
      %v4600 = vsel %vm648, %v4595, %v4599
      %v4602 = vshrl.u32 %v4473, 16
      %v4604 = vrot.slane %v4602, 4
      %v4605 = vshll.u32 %v4473, 16
      %v4607 = vrot.slane %v4605, 5
      %v4608 = vor.u32 %v4604, %v4607
      %v4609 = vrot.slane %v4608, 4
      %v4611 = vshll.u32 %v4474, 16
      %v4613 = vrot.slane %v4611, 5
      %v4614 = vsel %vm648, %v4609, %v4613
      %v4616 = vshrl.u32 %v4475, 16
      %v4618 = vrot.slane %v4616, 4
      %v4619 = vshll.u32 %v4475, 16
      %v4621 = vrot.slane %v4619, 5
      %v4622 = vor.u32 %v4618, %v4621
      %v4623 = vrot.slane %v4622, 4
      %v4625 = vshll.u32 %v4476, 16
      %v4627 = vrot.slane %v4625, 5
      %v4628 = vsel %vm648, %v4623, %v4627
      %v4630 = vshrl.u32 %v4477, 16
      %v4632 = vrot.slane %v4630, 4
      %v4633 = vshll.u32 %v4477, 16
      %v4635 = vrot.slane %v4633, 5
      %v4636 = vor.u32 %v4632, %v4635
      %v4637 = vrot.slane %v4636, 4
      %v4639 = vshll.u32 %v4478, 16
      %v4641 = vrot.slane %v4639, 5
      %v4642 = vsel %vm648, %v4637, %v4641
      %v4644 = vshrl.u32 %v4479, 16
      %v4646 = vrot.slane %v4644, 4
      %v4647 = vshll.u32 %v4479, 16
      %v4649 = vrot.slane %v4647, 5
      %v4650 = vor.u32 %v4646, %v4649
      %v4651 = vrot.slane %v4650, 4
      %v4653 = vshll.u32 %v4480, 16
      %v4655 = vrot.slane %v4653, 5
      %v4656 = vsel %vm648, %v4651, %v4655
      %v4658 = vshrl.u32 %v4481, 16
      %v4660 = vrot.slane %v4658, 4
      %v4661 = vshll.u32 %v4481, 16
      %v4663 = vrot.slane %v4661, 5
      %v4664 = vor.u32 %v4660, %v4663
      %v4665 = vrot.slane %v4664, 4
      %v4667 = vshll.u32 %v4482, 16
      %v4669 = vrot.slane %v4667, 5
      %v4670 = vsel %vm648, %v4665, %v4669
      %v4672 = vshrl.u32 %v4483, 16
      %v4674 = vrot.slane %v4672, 4
      %v4675 = vshll.u32 %v4483, 16
      %v4677 = vrot.slane %v4675, 5
      %v4678 = vor.u32 %v4674, %v4677
      %v4679 = vrot.slane %v4678, 4
      %v4681 = vshll.u32 %v4484, 16
      %v4683 = vrot.slane %v4681, 5
      %v4684 = vsel %vm648, %v4679, %v4683
      %v4686 = vshrl.u32 %v4485, 16
      %v4688 = vrot.slane %v4686, 4
      %v4689 = vshll.u32 %v4485, 16
      %v4691 = vrot.slane %v4689, 5
      %v4692 = vor.u32 %v4688, %v4691
      %v4693 = vrot.slane %v4692, 4
      %v4695 = vshll.u32 %v4486, 16
      %v4697 = vrot.slane %v4695, 5
      %v4698 = vsel %vm648, %v4693, %v4697
      %v4700 = vshrl.u32 %v4487, 16
      %v4702 = vrot.slane %v4700, 4
      %v4703 = vshll.u32 %v4487, 16
      %v4705 = vrot.slane %v4703, 5
      %v4706 = vor.u32 %v4702, %v4705
      %v4707 = vrot.slane %v4706, 4
      %v4709 = vshll.u32 %v4488, 16
      %v4711 = vrot.slane %v4709, 5
      %v4712 = vsel %vm648, %v4707, %v4711
      %v4713 = vunpack.c.l.b16 %v4502
      %v4714 = vunpack.c.l.b16 %v4516
      %v4715 = vunpack.c.l.b16 %v4530
      %v4716 = vunpack.c.l.b16 %v4544
      %v4717 = vunpack.c.l.b16 %v4558
      %v4718 = vunpack.c.l.b16 %v4572
      %v4719 = vunpack.c.l.b16 %v4586
      %v4720 = vunpack.c.l.b16 %v4600
      %v4721 = vunpack.c.l.b16 %v4614
      %v4722 = vunpack.c.l.b16 %v4628
      %v4723 = vunpack.c.l.b16 %v4642
      %v4724 = vunpack.c.l.b16 %v4656
      %v4725 = vunpack.c.l.b16 %v4670
      %v4726 = vunpack.c.l.b16 %v4684
      %v4727 = vunpack.c.l.b16 %v4698
      %v4728 = vunpack.c.l.b16 %v4712
      %v4729 = vpack.c.b16 %v4714, %v4713
      %v4730 = vpack.c.b16 %v4716, %v4715
      %v4731 = vpack.c.b16 %v4718, %v4717
      %v4732 = vpack.c.b16 %v4720, %v4719
      %v4733 = vpack.c.b16 %v4722, %v4721
      %v4734 = vpack.c.b16 %v4724, %v4723
      %v4735 = vpack.c.b16 %v4726, %v4725
      %v4736 = vpack.c.b16 %v4728, %v4727
      %4737 = vrot.lane.b32.xlu0 %v4729, 98
      %v4738 = vpop.permute.xlu0 %4737
      %4739 = vrot.lane.b32.xlu0 %v4730, 98
      %v4740 = vpop.permute.xlu0 %4739
      %4741 = vrot.lane.b32.xlu0 %v4731, 98
      %v4742 = vpop.permute.xlu0 %4741
      %4743 = vrot.lane.b32.xlu0 %v4732, 98
      %v4744 = vpop.permute.xlu0 %4743
      %4745 = vrot.lane.b32.xlu0 %v4733, 98
      %v4746 = vpop.permute.xlu0 %4745
      %4747 = vrot.lane.b32.xlu0 %v4734, 98
      %v4748 = vpop.permute.xlu0 %4747
      %4749 = vrot.lane.b32.xlu0 %v4735, 98
      %v4750 = vpop.permute.xlu0 %4749
      %4751 = vrot.lane.b32.xlu0 %v4736, 98
      %v4752 = vpop.permute.xlu0 %4751
      %vm4761 = vcmask 1048336
      %4762 = vst.msk [vmem:[#allocation6] sm:$0xff] %vm4761, %v4738
      %vm4763 = vcmask 154624
      %4764 = vst.msk [vmem:[#allocation6 + $0x8] sm:$0xff] %vm4763, %v4738
      %4765 = vst.msk [vmem:[#allocation6 + $0x18] sm:$0xff] %vm4761, %v4740
      %4766 = vst.msk [vmem:[#allocation6 + $0x20] sm:$0xff] %vm4763, %v4740
      %4767 = vst.msk [vmem:[#allocation6 + $0x30] sm:$0xff] %vm4761, %v4742
      %4768 = vst.msk [vmem:[#allocation6 + $0x38] sm:$0xff] %vm4763, %v4742
      %4769 = vst.msk [vmem:[#allocation6 + $0x48] sm:$0xff] %vm4761, %v4744
      %4770 = vst.msk [vmem:[#allocation6 + $0x50] sm:$0xff] %vm4763, %v4744
      %4771 = vst.msk [vmem:[#allocation6 + $0x60] sm:$0xff] %vm4761, %v4746
      %4772 = vst.msk [vmem:[#allocation6 + $0x68] sm:$0xff] %vm4763, %v4746
      %4773 = vst.msk [vmem:[#allocation6 + $0x78] sm:$0xff] %vm4761, %v4748
      %4774 = vst.msk [vmem:[#allocation6 + $0x80] sm:$0xff] %vm4763, %v4748
      %4775 = vst.msk [vmem:[#allocation6 + $0x90] sm:$0xff] %vm4761, %v4750
      %4776 = vst.msk [vmem:[#allocation6 + $0x98] sm:$0xff] %vm4763, %v4750
      %4777 = vst.msk [vmem:[#allocation6 + $0xa8] sm:$0xff] %vm4761, %v4752
      %4778 = vst.msk [vmem:[#allocation6 + $0xb0] sm:$0xff] %vm4763, %v4752
      %v4779 = vld [vmem:[#allocation3] sm:$0xe]
      %v4780 = vld [vmem:[#allocation3 + $0x4] sm:$0x1]
      %v4781 = vld [vmem:[#allocation3 + $0x8] sm:$0xe]
      %v4782 = vld [vmem:[#allocation3 + $0xc] sm:$0x1]
      %v4783 = vld [vmem:[#allocation3 + $0x10] sm:$0xe]
      %v4784 = vld [vmem:[#allocation3 + $0x14] sm:$0x1]
      %v4785 = vld [vmem:[#allocation3 + $0x18] sm:$0xe]
      %v4786 = vld [vmem:[#allocation3 + $0x1c] sm:$0x1]
      %v4787 = vld [vmem:[#allocation3 + $0x20] sm:$0xe]
      %v4788 = vld [vmem:[#allocation3 + $0x24] sm:$0x1]
      %v4789 = vld [vmem:[#allocation3 + $0x28] sm:$0xe]
      %v4790 = vld [vmem:[#allocation3 + $0x2c] sm:$0x1]
      %v4791 = vld [vmem:[#allocation3 + $0x30] sm:$0xe]
      %v4792 = vld [vmem:[#allocation3 + $0x34] sm:$0x1]
      %v4793 = vld [vmem:[#allocation3 + $0x38] sm:$0xe]
      %v4794 = vld [vmem:[#allocation3 + $0x3c] sm:$0x1]
      %v4795 = vld [vmem:[#allocation3 + $0x40] sm:$0xe]
      %v4796 = vld [vmem:[#allocation3 + $0x44] sm:$0x1]
      %v4797 = vld [vmem:[#allocation3 + $0x48] sm:$0xe]
      %v4798 = vld [vmem:[#allocation3 + $0x4c] sm:$0x1]
      %v4799 = vld [vmem:[#allocation3 + $0x50] sm:$0xe]
      %v4800 = vld [vmem:[#allocation3 + $0x54] sm:$0x1]
      %v4801 = vld [vmem:[#allocation3 + $0x58] sm:$0xe]
      %v4802 = vld [vmem:[#allocation3 + $0x5c] sm:$0x1]
      %v4803 = vld [vmem:[#allocation3 + $0x60] sm:$0xe]
      %v4804 = vld [vmem:[#allocation3 + $0x64] sm:$0x1]
      %v4805 = vld [vmem:[#allocation3 + $0x68] sm:$0xe]
      %v4806 = vld [vmem:[#allocation3 + $0x6c] sm:$0x1]
      %v4807 = vld [vmem:[#allocation3 + $0x70] sm:$0xe]
      %v4808 = vld [vmem:[#allocation3 + $0x74] sm:$0x1]
      %v4809 = vld [vmem:[#allocation3 + $0x78] sm:$0xe]
      %v4810 = vld [vmem:[#allocation3 + $0x7c] sm:$0x1]
      %v4843 = vrot.slane %v4779, 5
      %v4844 = vrot.slane %v4843, 4
      %v4845 = vrot.slane %v4780, 5
      %v4846 = vsel %vm2431, %v4844, %v4845
      %v4847 = vrot.slane %v4781, 5
      %v4848 = vrot.slane %v4847, 4
      %v4849 = vrot.slane %v4782, 5
      %v4850 = vsel %vm2431, %v4848, %v4849
      %v4851 = vrot.slane %v4783, 5
      %v4852 = vrot.slane %v4851, 4
      %v4853 = vrot.slane %v4784, 5
      %v4854 = vsel %vm2431, %v4852, %v4853
      %v4855 = vrot.slane %v4785, 5
      %v4856 = vrot.slane %v4855, 4
      %v4857 = vrot.slane %v4786, 5
      %v4858 = vsel %vm2431, %v4856, %v4857
      %v4859 = vrot.slane %v4787, 5
      %v4860 = vrot.slane %v4859, 4
      %v4861 = vrot.slane %v4788, 5
      %v4862 = vsel %vm2431, %v4860, %v4861
      %v4863 = vrot.slane %v4789, 5
      %v4864 = vrot.slane %v4863, 4
      %v4865 = vrot.slane %v4790, 5
      %v4866 = vsel %vm2431, %v4864, %v4865
      %v4867 = vrot.slane %v4791, 5
      %v4868 = vrot.slane %v4867, 4
      %v4869 = vrot.slane %v4792, 5
      %v4870 = vsel %vm2431, %v4868, %v4869
      %v4871 = vrot.slane %v4793, 5
      %v4872 = vrot.slane %v4871, 4
      %v4873 = vrot.slane %v4794, 5
      %v4874 = vsel %vm2431, %v4872, %v4873
      %v4875 = vrot.slane %v4795, 5
      %v4876 = vrot.slane %v4875, 4
      %v4877 = vrot.slane %v4796, 5
      %v4878 = vsel %vm2431, %v4876, %v4877
      %v4879 = vrot.slane %v4797, 5
      %v4880 = vrot.slane %v4879, 4
      %v4881 = vrot.slane %v4798, 5
      %v4882 = vsel %vm2431, %v4880, %v4881
      %v4883 = vrot.slane %v4799, 5
      %v4884 = vrot.slane %v4883, 4
      %v4885 = vrot.slane %v4800, 5
      %v4886 = vsel %vm2431, %v4884, %v4885
      %v4887 = vrot.slane %v4801, 5
      %v4888 = vrot.slane %v4887, 4
      %v4889 = vrot.slane %v4802, 5
      %v4890 = vsel %vm2431, %v4888, %v4889
      %v4891 = vrot.slane %v4803, 5
      %v4892 = vrot.slane %v4891, 4
      %v4893 = vrot.slane %v4804, 5
      %v4894 = vsel %vm2431, %v4892, %v4893
      %v4895 = vrot.slane %v4805, 5
      %v4896 = vrot.slane %v4895, 4
      %v4897 = vrot.slane %v4806, 5
      %v4898 = vsel %vm2431, %v4896, %v4897
      %v4899 = vrot.slane %v4807, 5
      %v4900 = vrot.slane %v4899, 4
      %v4901 = vrot.slane %v4808, 5
      %v4902 = vsel %vm2431, %v4900, %v4901
      %v4903 = vrot.slane %v4809, 5
      %v4904 = vrot.slane %v4903, 4
      %v4905 = vrot.slane %v4810, 5
      %v4906 = vsel %vm2431, %v4904, %v4905
      %v4907 = vunpack.c.l.b16 %v4846
      %v4908 = vunpack.c.l.b16 %v4850
      %v4909 = vunpack.c.l.b16 %v4854
      %v4910 = vunpack.c.l.b16 %v4858
      %v4911 = vunpack.c.l.b16 %v4862
      %v4912 = vunpack.c.l.b16 %v4866
      %v4913 = vunpack.c.l.b16 %v4870
      %v4914 = vunpack.c.l.b16 %v4874
      %v4915 = vunpack.c.l.b16 %v4878
      %v4916 = vunpack.c.l.b16 %v4882
      %v4917 = vunpack.c.l.b16 %v4886
      %v4918 = vunpack.c.l.b16 %v4890
      %v4919 = vunpack.c.l.b16 %v4894
      %v4920 = vunpack.c.l.b16 %v4898
      %v4921 = vunpack.c.l.b16 %v4902
      %v4922 = vunpack.c.l.b16 %v4906
      %v4923 = vpack.c.b16 %v4908, %v4907
      %v4924 = vpack.c.b16 %v4910, %v4909
      %v4925 = vpack.c.b16 %v4912, %v4911
      %v4926 = vpack.c.b16 %v4914, %v4913
      %v4927 = vpack.c.b16 %v4916, %v4915
      %v4928 = vpack.c.b16 %v4918, %v4917
      %v4929 = vpack.c.b16 %v4920, %v4919
      %v4930 = vpack.c.b16 %v4922, %v4921
      %4931 = vrot.lane.b32.xlu0 %v4923, 19
      %v4932 = vpop.permute.xlu0 %4931
      %4933 = vrot.lane.b32.xlu0 %v4924, 19
      %v4934 = vpop.permute.xlu0 %4933
      %4935 = vrot.lane.b32.xlu0 %v4925, 19
      %v4936 = vpop.permute.xlu0 %4935
      %4937 = vrot.lane.b32.xlu0 %v4926, 19
      %v4938 = vpop.permute.xlu0 %4937
      %4939 = vrot.lane.b32.xlu0 %v4927, 19
      %v4940 = vpop.permute.xlu0 %4939
      %4941 = vrot.lane.b32.xlu0 %v4928, 19
      %v4942 = vpop.permute.xlu0 %4941
      %4943 = vrot.lane.b32.xlu0 %v4929, 19
      %v4944 = vpop.permute.xlu0 %4943
      %4945 = vrot.lane.b32.xlu0 %v4930, 19
      %v4946 = vpop.permute.xlu0 %4945
      %vm4955 = vcmask 556184
      %4956 = vst.msk [vmem:[#allocation6 + $0x8] sm:$0xff] %vm4955, %v4932
      %4957 = vst.msk [vmem:[#allocation6 + $0x20] sm:$0xff] %vm4955, %v4934
      %4958 = vst.msk [vmem:[#allocation6 + $0x38] sm:$0xff] %vm4955, %v4936
      %4959 = vst.msk [vmem:[#allocation6 + $0x50] sm:$0xff] %vm4955, %v4938
      %4960 = vst.msk [vmem:[#allocation6 + $0x68] sm:$0xff] %vm4955, %v4940
      %4961 = vst.msk [vmem:[#allocation6 + $0x80] sm:$0xff] %vm4955, %v4942
      %4962 = vst.msk [vmem:[#allocation6 + $0x98] sm:$0xff] %vm4955, %v4944
      %4963 = vst.msk [vmem:[#allocation6 + $0xb0] sm:$0xff] %vm4955, %v4946
      %v4964 = vld [vmem:[%s4038] sm:$0xe]
      %v4965 = vld [vmem:[%s4038 + $0x4] sm:$0x1]
      %v4966 = vld [vmem:[%s4038 + $0x8] sm:$0xe]
      %v4967 = vld [vmem:[%s4038 + $0xc] sm:$0x1]
      %v4968 = vld [vmem:[%s4038 + $0x10] sm:$0xe]
      %v4969 = vld [vmem:[%s4038 + $0x14] sm:$0x1]
      %v4970 = vld [vmem:[%s4038 + $0x18] sm:$0xe]
      %v4971 = vld [vmem:[%s4038 + $0x1c] sm:$0x1]
      %v4972 = vld [vmem:[%s4038 + $0x20] sm:$0xe]
      %v4973 = vld [vmem:[%s4038 + $0x24] sm:$0x1]
      %v4974 = vld [vmem:[%s4038 + $0x28] sm:$0xe]
      %v4975 = vld [vmem:[%s4038 + $0x2c] sm:$0x1]
      %v4976 = vld [vmem:[%s4038 + $0x30] sm:$0xe]
      %v4977 = vld [vmem:[%s4038 + $0x34] sm:$0x1]
      %v4978 = vld [vmem:[%s4038 + $0x38] sm:$0xe]
      %v4979 = vld [vmem:[%s4038 + $0x3c] sm:$0x1]
      %v4980 = vld [vmem:[%s4038 + $0x40] sm:$0xe]
      %v4981 = vld [vmem:[%s4038 + $0x44] sm:$0x1]
      %v4982 = vld [vmem:[%s4038 + $0x48] sm:$0xe]
      %v4983 = vld [vmem:[%s4038 + $0x4c] sm:$0x1]
      %v4984 = vld [vmem:[%s4038 + $0x50] sm:$0xe]
      %v4985 = vld [vmem:[%s4038 + $0x54] sm:$0x1]
      %v4986 = vld [vmem:[%s4038 + $0x58] sm:$0xe]
      %v4987 = vld [vmem:[%s4038 + $0x5c] sm:$0x1]
      %v4988 = vld [vmem:[%s4038 + $0x60] sm:$0xe]
      %v4989 = vld [vmem:[%s4038 + $0x64] sm:$0x1]
      %v4990 = vld [vmem:[%s4038 + $0x68] sm:$0xe]
      %v4991 = vld [vmem:[%s4038 + $0x6c] sm:$0x1]
      %v4992 = vld [vmem:[%s4038 + $0x70] sm:$0xe]
      %v4993 = vld [vmem:[%s4038 + $0x74] sm:$0x1]
      %v4994 = vld [vmem:[%s4038 + $0x78] sm:$0xe]
      %v4995 = vld [vmem:[%s4038 + $0x7c] sm:$0x1]
      %v5028 = vrot.slane %v4964, 5
      %v5029 = vrot.slane %v5028, 4
      %v5030 = vrot.slane %v4965, 5
      %v5031 = vsel %vm2431, %v5029, %v5030
      %v5032 = vrot.slane %v4966, 5
      %v5033 = vrot.slane %v5032, 4
      %v5034 = vrot.slane %v4967, 5
      %v5035 = vsel %vm2431, %v5033, %v5034
      %v5036 = vrot.slane %v4968, 5
      %v5037 = vrot.slane %v5036, 4
      %v5038 = vrot.slane %v4969, 5
      %v5039 = vsel %vm2431, %v5037, %v5038
      %v5040 = vrot.slane %v4970, 5
      %v5041 = vrot.slane %v5040, 4
      %v5042 = vrot.slane %v4971, 5
      %v5043 = vsel %vm2431, %v5041, %v5042
      %v5044 = vrot.slane %v4972, 5
      %v5045 = vrot.slane %v5044, 4
      %v5046 = vrot.slane %v4973, 5
      %v5047 = vsel %vm2431, %v5045, %v5046
      %v5048 = vrot.slane %v4974, 5
      %v5049 = vrot.slane %v5048, 4
      %v5050 = vrot.slane %v4975, 5
      %v5051 = vsel %vm2431, %v5049, %v5050
      %v5052 = vrot.slane %v4976, 5
      %v5053 = vrot.slane %v5052, 4
      %v5054 = vrot.slane %v4977, 5
      %v5055 = vsel %vm2431, %v5053, %v5054
      %v5056 = vrot.slane %v4978, 5
      %v5057 = vrot.slane %v5056, 4
      %v5058 = vrot.slane %v4979, 5
      %v5059 = vsel %vm2431, %v5057, %v5058
      %v5060 = vrot.slane %v4980, 5
      %v5061 = vrot.slane %v5060, 4
      %v5062 = vrot.slane %v4981, 5
      %v5063 = vsel %vm2431, %v5061, %v5062
      %v5064 = vrot.slane %v4982, 5
      %v5065 = vrot.slane %v5064, 4
      %v5066 = vrot.slane %v4983, 5
      %v5067 = vsel %vm2431, %v5065, %v5066
      %v5068 = vrot.slane %v4984, 5
      %v5069 = vrot.slane %v5068, 4
      %v5070 = vrot.slane %v4985, 5
      %v5071 = vsel %vm2431, %v5069, %v5070
      %v5072 = vrot.slane %v4986, 5
      %v5073 = vrot.slane %v5072, 4
      %v5074 = vrot.slane %v4987, 5
      %v5075 = vsel %vm2431, %v5073, %v5074
      %v5076 = vrot.slane %v4988, 5
      %v5077 = vrot.slane %v5076, 4
      %v5078 = vrot.slane %v4989, 5
      %v5079 = vsel %vm2431, %v5077, %v5078
      %v5080 = vrot.slane %v4990, 5
      %v5081 = vrot.slane %v5080, 4
      %v5082 = vrot.slane %v4991, 5
      %v5083 = vsel %vm2431, %v5081, %v5082
      %v5084 = vrot.slane %v4992, 5
      %v5085 = vrot.slane %v5084, 4
      %v5086 = vrot.slane %v4993, 5
      %v5087 = vsel %vm2431, %v5085, %v5086
      %v5088 = vrot.slane %v4994, 5
      %v5089 = vrot.slane %v5088, 4
      %v5090 = vrot.slane %v4995, 5
      %v5091 = vsel %vm2431, %v5089, %v5090
      %v5092 = vunpack.c.l.b16 %v5031
      %v5093 = vunpack.c.l.b16 %v5035
      %v5094 = vunpack.c.l.b16 %v5039
      %v5095 = vunpack.c.l.b16 %v5043
      %v5096 = vunpack.c.l.b16 %v5047
      %v5097 = vunpack.c.l.b16 %v5051
      %v5098 = vunpack.c.l.b16 %v5055
      %v5099 = vunpack.c.l.b16 %v5059
      %v5100 = vunpack.c.l.b16 %v5063
      %v5101 = vunpack.c.l.b16 %v5067
      %v5102 = vunpack.c.l.b16 %v5071
      %v5103 = vunpack.c.l.b16 %v5075
      %v5104 = vunpack.c.l.b16 %v5079
      %v5105 = vunpack.c.l.b16 %v5083
      %v5106 = vunpack.c.l.b16 %v5087
      %v5107 = vunpack.c.l.b16 %v5091
      %v5108 = vpack.c.b16 %v5093, %v5092
      %v5109 = vpack.c.b16 %v5095, %v5094
      %v5110 = vpack.c.b16 %v5097, %v5096
      %v5111 = vpack.c.b16 %v5099, %v5098
      %v5112 = vpack.c.b16 %v5101, %v5100
      %v5113 = vpack.c.b16 %v5103, %v5102
      %v5114 = vpack.c.b16 %v5105, %v5104
      %v5115 = vpack.c.b16 %v5107, %v5106
      %5116 = vrot.lane.b32.xlu0 %v5108, 68
      %v5117 = vpop.permute.xlu0 %5116
      %5118 = vrot.lane.b32.xlu0 %v5109, 68
      %v5119 = vpop.permute.xlu0 %5118
      %5120 = vrot.lane.b32.xlu0 %v5110, 68
      %v5121 = vpop.permute.xlu0 %5120
      %5122 = vrot.lane.b32.xlu0 %v5111, 68
      %v5123 = vpop.permute.xlu0 %5122
      %5124 = vrot.lane.b32.xlu0 %v5112, 68
      %v5125 = vpop.permute.xlu0 %5124
      %5126 = vrot.lane.b32.xlu0 %v5113, 68
      %v5127 = vpop.permute.xlu0 %5126
      %5128 = vrot.lane.b32.xlu0 %v5114, 68
      %v5129 = vpop.permute.xlu0 %5128
      %5130 = vrot.lane.b32.xlu0 %v5115, 68
      %v5131 = vpop.permute.xlu0 %5130
      %vm5140 = vcmask 957984
      %5141 = vst.msk [vmem:[#allocation6 + $0x8] sm:$0xff] %vm5140, %v5117
      %5142 = vst.msk [vmem:[#allocation6 + $0x20] sm:$0xff] %vm5140, %v5119
      %5143 = vst.msk [vmem:[#allocation6 + $0x38] sm:$0xff] %vm5140, %v5121
      %5144 = vst.msk [vmem:[#allocation6 + $0x50] sm:$0xff] %vm5140, %v5123
      %5145 = vst.msk [vmem:[#allocation6 + $0x68] sm:$0xff] %vm5140, %v5125
      %5146 = vst.msk [vmem:[#allocation6 + $0x80] sm:$0xff] %vm5140, %v5127
      %5147 = vst.msk [vmem:[#allocation6 + $0x98] sm:$0xff] %vm5140, %v5129
      %5148 = vst.msk [vmem:[#allocation6 + $0xb0] sm:$0xff] %vm5140, %v5131
      %v5149 = vld [vmem:[#allocation3] sm:$0xe]
      %v5150 = vld [vmem:[#allocation3 + $0x4] sm:$0x3]
      %v5151 = vld [vmem:[#allocation3 + $0x8] sm:$0xe]
      %v5152 = vld [vmem:[#allocation3 + $0xc] sm:$0x3]
      %v5153 = vld [vmem:[#allocation3 + $0x10] sm:$0xe]
      %v5154 = vld [vmem:[#allocation3 + $0x14] sm:$0x3]
      %v5155 = vld [vmem:[#allocation3 + $0x18] sm:$0xe]
      %v5156 = vld [vmem:[#allocation3 + $0x1c] sm:$0x3]
      %v5157 = vld [vmem:[#allocation3 + $0x20] sm:$0xe]
      %v5158 = vld [vmem:[#allocation3 + $0x24] sm:$0x3]
      %v5159 = vld [vmem:[#allocation3 + $0x28] sm:$0xe]
      %v5160 = vld [vmem:[#allocation3 + $0x2c] sm:$0x3]
      %v5161 = vld [vmem:[#allocation3 + $0x30] sm:$0xe]
      %v5162 = vld [vmem:[#allocation3 + $0x34] sm:$0x3]
      %v5163 = vld [vmem:[#allocation3 + $0x38] sm:$0xe]
      %v5164 = vld [vmem:[#allocation3 + $0x3c] sm:$0x3]
      %v5165 = vld [vmem:[#allocation3 + $0x40] sm:$0xe]
      %v5166 = vld [vmem:[#allocation3 + $0x44] sm:$0x3]
      %v5167 = vld [vmem:[#allocation3 + $0x48] sm:$0xe]
      %v5168 = vld [vmem:[#allocation3 + $0x4c] sm:$0x3]
      %v5169 = vld [vmem:[#allocation3 + $0x50] sm:$0xe]
      %v5170 = vld [vmem:[#allocation3 + $0x54] sm:$0x3]
      %v5171 = vld [vmem:[#allocation3 + $0x58] sm:$0xe]
      %v5172 = vld [vmem:[#allocation3 + $0x5c] sm:$0x3]
      %v5173 = vld [vmem:[#allocation3 + $0x60] sm:$0xe]
      %v5174 = vld [vmem:[#allocation3 + $0x64] sm:$0x3]
      %v5175 = vld [vmem:[#allocation3 + $0x68] sm:$0xe]
      %v5176 = vld [vmem:[#allocation3 + $0x6c] sm:$0x3]
      %v5177 = vld [vmem:[#allocation3 + $0x70] sm:$0xe]
      %v5178 = vld [vmem:[#allocation3 + $0x74] sm:$0x3]
      %v5179 = vld [vmem:[#allocation3 + $0x78] sm:$0xe]
      %v5180 = vld [vmem:[#allocation3 + $0x7c] sm:$0x3]
      %vm5181 = vsmask.f32 2304
      %vm5182 = vsmask.f32 6416
      %vm5183 = vmor %vm5181, %vm5182
      %v5185 = vshrl.u32 %v5149, 16
      %v5187 = vrot.slane %v5185, 5
      %v5188 = vshll.u32 %v5149, 16
      %v5190 = vrot.slane %v5188, 6
      %v5191 = vor.u32 %v5187, %v5190
      %v5192 = vrot.slane %v5191, 4
      %v5194 = vshrl.u32 %v5150, 16
      %v5196 = vrot.slane %v5194, 5
      %v5197 = vshll.u32 %v5150, 16
      %v5199 = vrot.slane %v5197, 6
      %v5200 = vor.u32 %v5196, %v5199
      %v5201 = vsel %vm5183, %v5192, %v5200
      %v5203 = vshrl.u32 %v5151, 16
      %v5205 = vrot.slane %v5203, 5
      %v5206 = vshll.u32 %v5151, 16
      %v5208 = vrot.slane %v5206, 6
      %v5209 = vor.u32 %v5205, %v5208
      %v5210 = vrot.slane %v5209, 4
      %v5212 = vshrl.u32 %v5152, 16
      %v5214 = vrot.slane %v5212, 5
      %v5215 = vshll.u32 %v5152, 16
      %v5217 = vrot.slane %v5215, 6
      %v5218 = vor.u32 %v5214, %v5217
      %v5219 = vsel %vm5183, %v5210, %v5218
      %v5221 = vshrl.u32 %v5153, 16
      %v5223 = vrot.slane %v5221, 5
      %v5224 = vshll.u32 %v5153, 16
      %v5226 = vrot.slane %v5224, 6
      %v5227 = vor.u32 %v5223, %v5226
      %v5228 = vrot.slane %v5227, 4
      %v5230 = vshrl.u32 %v5154, 16
      %v5232 = vrot.slane %v5230, 5
      %v5233 = vshll.u32 %v5154, 16
      %v5235 = vrot.slane %v5233, 6
      %v5236 = vor.u32 %v5232, %v5235
      %v5237 = vsel %vm5183, %v5228, %v5236
      %v5239 = vshrl.u32 %v5155, 16
      %v5241 = vrot.slane %v5239, 5
      %v5242 = vshll.u32 %v5155, 16
      %v5244 = vrot.slane %v5242, 6
      %v5245 = vor.u32 %v5241, %v5244
      %v5246 = vrot.slane %v5245, 4
      %v5248 = vshrl.u32 %v5156, 16
      %v5250 = vrot.slane %v5248, 5
      %v5251 = vshll.u32 %v5156, 16
      %v5253 = vrot.slane %v5251, 6
      %v5254 = vor.u32 %v5250, %v5253
      %v5255 = vsel %vm5183, %v5246, %v5254
      %v5257 = vshrl.u32 %v5157, 16
      %v5259 = vrot.slane %v5257, 5
      %v5260 = vshll.u32 %v5157, 16
      %v5262 = vrot.slane %v5260, 6
      %v5263 = vor.u32 %v5259, %v5262
      %v5264 = vrot.slane %v5263, 4
      %v5266 = vshrl.u32 %v5158, 16
      %v5268 = vrot.slane %v5266, 5
      %v5269 = vshll.u32 %v5158, 16
      %v5271 = vrot.slane %v5269, 6
      %v5272 = vor.u32 %v5268, %v5271
      %v5273 = vsel %vm5183, %v5264, %v5272
      %v5275 = vshrl.u32 %v5159, 16
      %v5277 = vrot.slane %v5275, 5
      %v5278 = vshll.u32 %v5159, 16
      %v5280 = vrot.slane %v5278, 6
      %v5281 = vor.u32 %v5277, %v5280
      %v5282 = vrot.slane %v5281, 4
      %v5284 = vshrl.u32 %v5160, 16
      %v5286 = vrot.slane %v5284, 5
      %v5287 = vshll.u32 %v5160, 16
      %v5289 = vrot.slane %v5287, 6
      %v5290 = vor.u32 %v5286, %v5289
      %v5291 = vsel %vm5183, %v5282, %v5290
      %v5293 = vshrl.u32 %v5161, 16
      %v5295 = vrot.slane %v5293, 5
      %v5296 = vshll.u32 %v5161, 16
      %v5298 = vrot.slane %v5296, 6
      %v5299 = vor.u32 %v5295, %v5298
      %v5300 = vrot.slane %v5299, 4
      %v5302 = vshrl.u32 %v5162, 16
      %v5304 = vrot.slane %v5302, 5
      %v5305 = vshll.u32 %v5162, 16
      %v5307 = vrot.slane %v5305, 6
      %v5308 = vor.u32 %v5304, %v5307
      %v5309 = vsel %vm5183, %v5300, %v5308
      %v5311 = vshrl.u32 %v5163, 16
      %v5313 = vrot.slane %v5311, 5
      %v5314 = vshll.u32 %v5163, 16
      %v5316 = vrot.slane %v5314, 6
      %v5317 = vor.u32 %v5313, %v5316
      %v5318 = vrot.slane %v5317, 4
      %v5320 = vshrl.u32 %v5164, 16
      %v5322 = vrot.slane %v5320, 5
      %v5323 = vshll.u32 %v5164, 16
      %v5325 = vrot.slane %v5323, 6
      %v5326 = vor.u32 %v5322, %v5325
      %v5327 = vsel %vm5183, %v5318, %v5326
      %v5329 = vshrl.u32 %v5165, 16
      %v5331 = vrot.slane %v5329, 5
      %v5332 = vshll.u32 %v5165, 16
      %v5334 = vrot.slane %v5332, 6
      %v5335 = vor.u32 %v5331, %v5334
      %v5336 = vrot.slane %v5335, 4
      %v5338 = vshrl.u32 %v5166, 16
      %v5340 = vrot.slane %v5338, 5
      %v5341 = vshll.u32 %v5166, 16
      %v5343 = vrot.slane %v5341, 6
      %v5344 = vor.u32 %v5340, %v5343
      %v5345 = vsel %vm5183, %v5336, %v5344
      %v5347 = vshrl.u32 %v5167, 16
      %v5349 = vrot.slane %v5347, 5
      %v5350 = vshll.u32 %v5167, 16
      %v5352 = vrot.slane %v5350, 6
      %v5353 = vor.u32 %v5349, %v5352
      %v5354 = vrot.slane %v5353, 4
      %v5356 = vshrl.u32 %v5168, 16
      %v5358 = vrot.slane %v5356, 5
      %v5359 = vshll.u32 %v5168, 16
      %v5361 = vrot.slane %v5359, 6
      %v5362 = vor.u32 %v5358, %v5361
      %v5363 = vsel %vm5183, %v5354, %v5362
      %v5365 = vshrl.u32 %v5169, 16
      %v5367 = vrot.slane %v5365, 5
      %v5368 = vshll.u32 %v5169, 16
      %v5370 = vrot.slane %v5368, 6
      %v5371 = vor.u32 %v5367, %v5370
      %v5372 = vrot.slane %v5371, 4
      %v5374 = vshrl.u32 %v5170, 16
      %v5376 = vrot.slane %v5374, 5
      %v5377 = vshll.u32 %v5170, 16
      %v5379 = vrot.slane %v5377, 6
      %v5380 = vor.u32 %v5376, %v5379
      %v5381 = vsel %vm5183, %v5372, %v5380
      %v5383 = vshrl.u32 %v5171, 16
      %v5385 = vrot.slane %v5383, 5
      %v5386 = vshll.u32 %v5171, 16
      %v5388 = vrot.slane %v5386, 6
      %v5389 = vor.u32 %v5385, %v5388
      %v5390 = vrot.slane %v5389, 4
      %v5392 = vshrl.u32 %v5172, 16
      %v5394 = vrot.slane %v5392, 5
      %v5395 = vshll.u32 %v5172, 16
      %v5397 = vrot.slane %v5395, 6
      %v5398 = vor.u32 %v5394, %v5397
      %v5399 = vsel %vm5183, %v5390, %v5398
      %v5401 = vshrl.u32 %v5173, 16
      %v5403 = vrot.slane %v5401, 5
      %v5404 = vshll.u32 %v5173, 16
      %v5406 = vrot.slane %v5404, 6
      %v5407 = vor.u32 %v5403, %v5406
      %v5408 = vrot.slane %v5407, 4
      %v5410 = vshrl.u32 %v5174, 16
      %v5412 = vrot.slane %v5410, 5
      %v5413 = vshll.u32 %v5174, 16
      %v5415 = vrot.slane %v5413, 6
      %v5416 = vor.u32 %v5412, %v5415
      %v5417 = vsel %vm5183, %v5408, %v5416
      %v5419 = vshrl.u32 %v5175, 16
      %v5421 = vrot.slane %v5419, 5
      %v5422 = vshll.u32 %v5175, 16
      %v5424 = vrot.slane %v5422, 6
      %v5425 = vor.u32 %v5421, %v5424
      %v5426 = vrot.slane %v5425, 4
      %v5428 = vshrl.u32 %v5176, 16
      %v5430 = vrot.slane %v5428, 5
      %v5431 = vshll.u32 %v5176, 16
      %v5433 = vrot.slane %v5431, 6
      %v5434 = vor.u32 %v5430, %v5433
      %v5435 = vsel %vm5183, %v5426, %v5434
      %v5437 = vshrl.u32 %v5177, 16
      %v5439 = vrot.slane %v5437, 5
      %v5440 = vshll.u32 %v5177, 16
      %v5442 = vrot.slane %v5440, 6
      %v5443 = vor.u32 %v5439, %v5442
      %v5444 = vrot.slane %v5443, 4
      %v5446 = vshrl.u32 %v5178, 16
      %v5448 = vrot.slane %v5446, 5
      %v5449 = vshll.u32 %v5178, 16
      %v5451 = vrot.slane %v5449, 6
      %v5452 = vor.u32 %v5448, %v5451
      %v5453 = vsel %vm5183, %v5444, %v5452
      %v5455 = vshrl.u32 %v5179, 16
      %v5457 = vrot.slane %v5455, 5
      %v5458 = vshll.u32 %v5179, 16
      %v5460 = vrot.slane %v5458, 6
      %v5461 = vor.u32 %v5457, %v5460
      %v5462 = vrot.slane %v5461, 4
      %v5464 = vshrl.u32 %v5180, 16
      %v5466 = vrot.slane %v5464, 5
      %v5467 = vshll.u32 %v5180, 16
      %v5469 = vrot.slane %v5467, 6
      %v5470 = vor.u32 %v5466, %v5469
      %v5471 = vsel %vm5183, %v5462, %v5470
      %v5472 = vunpack.c.l.b16 %v5201
      %v5473 = vunpack.c.l.b16 %v5219
      %v5474 = vunpack.c.l.b16 %v5237
      %v5475 = vunpack.c.l.b16 %v5255
      %v5476 = vunpack.c.l.b16 %v5273
      %v5477 = vunpack.c.l.b16 %v5291
      %v5478 = vunpack.c.l.b16 %v5309
      %v5479 = vunpack.c.l.b16 %v5327
      %v5480 = vunpack.c.l.b16 %v5345
      %v5481 = vunpack.c.l.b16 %v5363
      %v5482 = vunpack.c.l.b16 %v5381
      %v5483 = vunpack.c.l.b16 %v5399
      %v5484 = vunpack.c.l.b16 %v5417
      %v5485 = vunpack.c.l.b16 %v5435
      %v5486 = vunpack.c.l.b16 %v5453
      %v5487 = vunpack.c.l.b16 %v5471
      %v5488 = vpack.c.b16 %v5473, %v5472
      %v5489 = vpack.c.b16 %v5475, %v5474
      %v5490 = vpack.c.b16 %v5477, %v5476
      %v5491 = vpack.c.b16 %v5479, %v5478
      %v5492 = vpack.c.b16 %v5481, %v5480
      %v5493 = vpack.c.b16 %v5483, %v5482
      %v5494 = vpack.c.b16 %v5485, %v5484
      %v5495 = vpack.c.b16 %v5487, %v5486
      %5496 = vrot.lane.b32.xlu0 %v5488, 117
      %v5497 = vpop.permute.xlu0 %5496
      %5498 = vrot.lane.b32.xlu0 %v5489, 117
      %v5499 = vpop.permute.xlu0 %5498
      %5500 = vrot.lane.b32.xlu0 %v5490, 117
      %v5501 = vpop.permute.xlu0 %5500
      %5502 = vrot.lane.b32.xlu0 %v5491, 117
      %v5503 = vpop.permute.xlu0 %5502
      %5504 = vrot.lane.b32.xlu0 %v5492, 117
      %v5505 = vpop.permute.xlu0 %5504
      %5506 = vrot.lane.b32.xlu0 %v5493, 117
      %v5507 = vpop.permute.xlu0 %5506
      %5508 = vrot.lane.b32.xlu0 %v5494, 117
      %v5509 = vpop.permute.xlu0 %5508
      %5510 = vrot.lane.b32.xlu0 %v5495, 117
      %v5511 = vpop.permute.xlu0 %5510
      %vm5520 = vcmask 1048488
      %5521 = vst.msk [vmem:[#allocation6 + $0x8] sm:$0xff] %vm5520, %v5497
      %vm5522 = vcmask 310272
      %5523 = vst.msk [vmem:[#allocation6 + $0x10] sm:$0xff] %vm5522, %v5497
      %5524 = vst.msk [vmem:[#allocation6 + $0x20] sm:$0xff] %vm5520, %v5499
      %5525 = vst.msk [vmem:[#allocation6 + $0x28] sm:$0xff] %vm5522, %v5499
      %5526 = vst.msk [vmem:[#allocation6 + $0x38] sm:$0xff] %vm5520, %v5501
      %5527 = vst.msk [vmem:[#allocation6 + $0x40] sm:$0xff] %vm5522, %v5501
      %5528 = vst.msk [vmem:[#allocation6 + $0x50] sm:$0xff] %vm5520, %v5503
      %5529 = vst.msk [vmem:[#allocation6 + $0x58] sm:$0xff] %vm5522, %v5503
      %5530 = vst.msk [vmem:[#allocation6 + $0x68] sm:$0xff] %vm5520, %v5505
      %5531 = vst.msk [vmem:[#allocation6 + $0x70] sm:$0xff] %vm5522, %v5505
      %5532 = vst.msk [vmem:[#allocation6 + $0x80] sm:$0xff] %vm5520, %v5507
      %5533 = vst.msk [vmem:[#allocation6 + $0x88] sm:$0xff] %vm5522, %v5507
      %5534 = vst.msk [vmem:[#allocation6 + $0x98] sm:$0xff] %vm5520, %v5509
      %5535 = vst.msk [vmem:[#allocation6 + $0xa0] sm:$0xff] %vm5522, %v5509
      %5536 = vst.msk [vmem:[#allocation6 + $0xb0] sm:$0xff] %vm5520, %v5511
      %5537 = vst.msk [vmem:[#allocation6 + $0xb8] sm:$0xff] %vm5522, %v5511
      %v5538 = vld [vmem:[%s4038] sm:$0xe]
      %v5539 = vld [vmem:[%s4038 + $0x4] sm:$0x3]
      %v5540 = vld [vmem:[%s4038 + $0x8] sm:$0xe]
      %v5541 = vld [vmem:[%s4038 + $0xc] sm:$0x3]
      %v5542 = vld [vmem:[%s4038 + $0x10] sm:$0xe]
      %v5543 = vld [vmem:[%s4038 + $0x14] sm:$0x3]
      %v5544 = vld [vmem:[%s4038 + $0x18] sm:$0xe]
      %v5545 = vld [vmem:[%s4038 + $0x1c] sm:$0x3]
      %v5546 = vld [vmem:[%s4038 + $0x20] sm:$0xe]
      %v5547 = vld [vmem:[%s4038 + $0x24] sm:$0x3]
      %v5548 = vld [vmem:[%s4038 + $0x28] sm:$0xe]
      %v5549 = vld [vmem:[%s4038 + $0x2c] sm:$0x3]
      %v5550 = vld [vmem:[%s4038 + $0x30] sm:$0xe]
      %v5551 = vld [vmem:[%s4038 + $0x34] sm:$0x3]
      %v5552 = vld [vmem:[%s4038 + $0x38] sm:$0xe]
      %v5553 = vld [vmem:[%s4038 + $0x3c] sm:$0x3]
      %v5554 = vld [vmem:[%s4038 + $0x40] sm:$0xe]
      %v5555 = vld [vmem:[%s4038 + $0x44] sm:$0x3]
      %v5556 = vld [vmem:[%s4038 + $0x48] sm:$0xe]
      %v5557 = vld [vmem:[%s4038 + $0x4c] sm:$0x3]
      %v5558 = vld [vmem:[%s4038 + $0x50] sm:$0xe]
      %v5559 = vld [vmem:[%s4038 + $0x54] sm:$0x3]
      %v5560 = vld [vmem:[%s4038 + $0x58] sm:$0xe]
      %v5561 = vld [vmem:[%s4038 + $0x5c] sm:$0x3]
      %v5562 = vld [vmem:[%s4038 + $0x60] sm:$0xe]
      %v5563 = vld [vmem:[%s4038 + $0x64] sm:$0x3]
      %v5564 = vld [vmem:[%s4038 + $0x68] sm:$0xe]
      %v5565 = vld [vmem:[%s4038 + $0x6c] sm:$0x3]
      %v5566 = vld [vmem:[%s4038 + $0x70] sm:$0xe]
      %v5567 = vld [vmem:[%s4038 + $0x74] sm:$0x3]
      %v5568 = vld [vmem:[%s4038 + $0x78] sm:$0xe]
      %v5569 = vld [vmem:[%s4038 + $0x7c] sm:$0x3]
      %v5571 = vshrl.u32 %v5538, 16
      %v5573 = vrot.slane %v5571, 5
      %v5574 = vshll.u32 %v5538, 16
      %v5576 = vrot.slane %v5574, 6
      %v5577 = vor.u32 %v5573, %v5576
      %v5578 = vrot.slane %v5577, 4
      %v5580 = vshrl.u32 %v5539, 16
      %v5582 = vrot.slane %v5580, 5
      %v5583 = vshll.u32 %v5539, 16
      %v5585 = vrot.slane %v5583, 6
      %v5586 = vor.u32 %v5582, %v5585
      %v5587 = vsel %vm5183, %v5578, %v5586
      %v5589 = vshrl.u32 %v5540, 16
      %v5591 = vrot.slane %v5589, 5
      %v5592 = vshll.u32 %v5540, 16
      %v5594 = vrot.slane %v5592, 6
      %v5595 = vor.u32 %v5591, %v5594
      %v5596 = vrot.slane %v5595, 4
      %v5598 = vshrl.u32 %v5541, 16
      %v5600 = vrot.slane %v5598, 5
      %v5601 = vshll.u32 %v5541, 16
      %v5603 = vrot.slane %v5601, 6
      %v5604 = vor.u32 %v5600, %v5603
      %v5605 = vsel %vm5183, %v5596, %v5604
      %v5607 = vshrl.u32 %v5542, 16
      %v5609 = vrot.slane %v5607, 5
      %v5610 = vshll.u32 %v5542, 16
      %v5612 = vrot.slane %v5610, 6
      %v5613 = vor.u32 %v5609, %v5612
      %v5614 = vrot.slane %v5613, 4
      %v5616 = vshrl.u32 %v5543, 16
      %v5618 = vrot.slane %v5616, 5
      %v5619 = vshll.u32 %v5543, 16
      %v5621 = vrot.slane %v5619, 6
      %v5622 = vor.u32 %v5618, %v5621
      %v5623 = vsel %vm5183, %v5614, %v5622
      %v5625 = vshrl.u32 %v5544, 16
      %v5627 = vrot.slane %v5625, 5
      %v5628 = vshll.u32 %v5544, 16
      %v5630 = vrot.slane %v5628, 6
      %v5631 = vor.u32 %v5627, %v5630
      %v5632 = vrot.slane %v5631, 4
      %v5634 = vshrl.u32 %v5545, 16
      %v5636 = vrot.slane %v5634, 5
      %v5637 = vshll.u32 %v5545, 16
      %v5639 = vrot.slane %v5637, 6
      %v5640 = vor.u32 %v5636, %v5639
      %v5641 = vsel %vm5183, %v5632, %v5640
      %v5643 = vshrl.u32 %v5546, 16
      %v5645 = vrot.slane %v5643, 5
      %v5646 = vshll.u32 %v5546, 16
      %v5648 = vrot.slane %v5646, 6
      %v5649 = vor.u32 %v5645, %v5648
      %v5650 = vrot.slane %v5649, 4
      %v5652 = vshrl.u32 %v5547, 16
      %v5654 = vrot.slane %v5652, 5
      %v5655 = vshll.u32 %v5547, 16
      %v5657 = vrot.slane %v5655, 6
      %v5658 = vor.u32 %v5654, %v5657
      %v5659 = vsel %vm5183, %v5650, %v5658
      %v5661 = vshrl.u32 %v5548, 16
      %v5663 = vrot.slane %v5661, 5
      %v5664 = vshll.u32 %v5548, 16
      %v5666 = vrot.slane %v5664, 6
      %v5667 = vor.u32 %v5663, %v5666
      %v5668 = vrot.slane %v5667, 4
      %v5670 = vshrl.u32 %v5549, 16
      %v5672 = vrot.slane %v5670, 5
      %v5673 = vshll.u32 %v5549, 16
      %v5675 = vrot.slane %v5673, 6
      %v5676 = vor.u32 %v5672, %v5675
      %v5677 = vsel %vm5183, %v5668, %v5676
      %v5679 = vshrl.u32 %v5550, 16
      %v5681 = vrot.slane %v5679, 5
      %v5682 = vshll.u32 %v5550, 16
      %v5684 = vrot.slane %v5682, 6
      %v5685 = vor.u32 %v5681, %v5684
      %v5686 = vrot.slane %v5685, 4
      %v5688 = vshrl.u32 %v5551, 16
      %v5690 = vrot.slane %v5688, 5
      %v5691 = vshll.u32 %v5551, 16
      %v5693 = vrot.slane %v5691, 6
      %v5694 = vor.u32 %v5690, %v5693
      %v5695 = vsel %vm5183, %v5686, %v5694
      %v5697 = vshrl.u32 %v5552, 16
      %v5699 = vrot.slane %v5697, 5
      %v5700 = vshll.u32 %v5552, 16
      %v5702 = vrot.slane %v5700, 6
      %v5703 = vor.u32 %v5699, %v5702
      %v5704 = vrot.slane %v5703, 4
      %v5706 = vshrl.u32 %v5553, 16
      %v5708 = vrot.slane %v5706, 5
      %v5709 = vshll.u32 %v5553, 16
      %v5711 = vrot.slane %v5709, 6
      %v5712 = vor.u32 %v5708, %v5711
      %v5713 = vsel %vm5183, %v5704, %v5712
      %v5715 = vshrl.u32 %v5554, 16
      %v5717 = vrot.slane %v5715, 5
      %v5718 = vshll.u32 %v5554, 16
      %v5720 = vrot.slane %v5718, 6
      %v5721 = vor.u32 %v5717, %v5720
      %v5722 = vrot.slane %v5721, 4
      %v5724 = vshrl.u32 %v5555, 16
      %v5726 = vrot.slane %v5724, 5
      %v5727 = vshll.u32 %v5555, 16
      %v5729 = vrot.slane %v5727, 6
      %v5730 = vor.u32 %v5726, %v5729
      %v5731 = vsel %vm5183, %v5722, %v5730
      %v5733 = vshrl.u32 %v5556, 16
      %v5735 = vrot.slane %v5733, 5
      %v5736 = vshll.u32 %v5556, 16
      %v5738 = vrot.slane %v5736, 6
      %v5739 = vor.u32 %v5735, %v5738
      %v5740 = vrot.slane %v5739, 4
      %v5742 = vshrl.u32 %v5557, 16
      %v5744 = vrot.slane %v5742, 5
      %v5745 = vshll.u32 %v5557, 16
      %v5747 = vrot.slane %v5745, 6
      %v5748 = vor.u32 %v5744, %v5747
      %v5749 = vsel %vm5183, %v5740, %v5748
      %v5751 = vshrl.u32 %v5558, 16
      %v5753 = vrot.slane %v5751, 5
      %v5754 = vshll.u32 %v5558, 16
      %v5756 = vrot.slane %v5754, 6
      %v5757 = vor.u32 %v5753, %v5756
      %v5758 = vrot.slane %v5757, 4
      %v5760 = vshrl.u32 %v5559, 16
      %v5762 = vrot.slane %v5760, 5
      %v5763 = vshll.u32 %v5559, 16
      %v5765 = vrot.slane %v5763, 6
      %v5766 = vor.u32 %v5762, %v5765
      %v5767 = vsel %vm5183, %v5758, %v5766
      %v5769 = vshrl.u32 %v5560, 16
      %v5771 = vrot.slane %v5769, 5
      %v5772 = vshll.u32 %v5560, 16
      %v5774 = vrot.slane %v5772, 6
      %v5775 = vor.u32 %v5771, %v5774
      %v5776 = vrot.slane %v5775, 4
      %v5778 = vshrl.u32 %v5561, 16
      %v5780 = vrot.slane %v5778, 5
      %v5781 = vshll.u32 %v5561, 16
      %v5783 = vrot.slane %v5781, 6
      %v5784 = vor.u32 %v5780, %v5783
      %v5785 = vsel %vm5183, %v5776, %v5784
      %v5787 = vshrl.u32 %v5562, 16
      %v5789 = vrot.slane %v5787, 5
      %v5790 = vshll.u32 %v5562, 16
      %v5792 = vrot.slane %v5790, 6
      %v5793 = vor.u32 %v5789, %v5792
      %v5794 = vrot.slane %v5793, 4
      %v5796 = vshrl.u32 %v5563, 16
      %v5798 = vrot.slane %v5796, 5
      %v5799 = vshll.u32 %v5563, 16
      %v5801 = vrot.slane %v5799, 6
      %v5802 = vor.u32 %v5798, %v5801
      %v5803 = vsel %vm5183, %v5794, %v5802
      %v5805 = vshrl.u32 %v5564, 16
      %v5807 = vrot.slane %v5805, 5
      %v5808 = vshll.u32 %v5564, 16
      %v5810 = vrot.slane %v5808, 6
      %v5811 = vor.u32 %v5807, %v5810
      %v5812 = vrot.slane %v5811, 4
      %v5814 = vshrl.u32 %v5565, 16
      %v5816 = vrot.slane %v5814, 5
      %v5817 = vshll.u32 %v5565, 16
      %v5819 = vrot.slane %v5817, 6
      %v5820 = vor.u32 %v5816, %v5819
      %v5821 = vsel %vm5183, %v5812, %v5820
      %v5823 = vshrl.u32 %v5566, 16
      %v5825 = vrot.slane %v5823, 5
      %v5826 = vshll.u32 %v5566, 16
      %v5828 = vrot.slane %v5826, 6
      %v5829 = vor.u32 %v5825, %v5828
      %v5830 = vrot.slane %v5829, 4
      %v5832 = vshrl.u32 %v5567, 16
      %v5834 = vrot.slane %v5832, 5
      %v5835 = vshll.u32 %v5567, 16
      %v5837 = vrot.slane %v5835, 6
      %v5838 = vor.u32 %v5834, %v5837
      %v5839 = vsel %vm5183, %v5830, %v5838
      %v5841 = vshrl.u32 %v5568, 16
      %v5843 = vrot.slane %v5841, 5
      %v5844 = vshll.u32 %v5568, 16
      %v5846 = vrot.slane %v5844, 6
      %v5847 = vor.u32 %v5843, %v5846
      %v5848 = vrot.slane %v5847, 4
      %v5850 = vshrl.u32 %v5569, 16
      %v5852 = vrot.slane %v5850, 5
      %v5853 = vshll.u32 %v5569, 16
      %v5855 = vrot.slane %v5853, 6
      %v5856 = vor.u32 %v5852, %v5855
      %v5857 = vsel %vm5183, %v5848, %v5856
      %v5858 = vunpack.c.l.b16 %v5587
      %v5859 = vunpack.c.l.b16 %v5605
      %v5860 = vunpack.c.l.b16 %v5623
      %v5861 = vunpack.c.l.b16 %v5641
      %v5862 = vunpack.c.l.b16 %v5659
      %v5863 = vunpack.c.l.b16 %v5677
      %v5864 = vunpack.c.l.b16 %v5695
      %v5865 = vunpack.c.l.b16 %v5713
      %v5866 = vunpack.c.l.b16 %v5731
      %v5867 = vunpack.c.l.b16 %v5749
      %v5868 = vunpack.c.l.b16 %v5767
      %v5869 = vunpack.c.l.b16 %v5785
      %v5870 = vunpack.c.l.b16 %v5803
      %v5871 = vunpack.c.l.b16 %v5821
      %v5872 = vunpack.c.l.b16 %v5839
      %v5873 = vunpack.c.l.b16 %v5857
      %v5874 = vpack.c.b16 %v5859, %v5858
      %v5875 = vpack.c.b16 %v5861, %v5860
      %v5876 = vpack.c.b16 %v5863, %v5862
      %v5877 = vpack.c.b16 %v5865, %v5864
      %v5878 = vpack.c.b16 %v5867, %v5866
      %v5879 = vpack.c.b16 %v5869, %v5868
      %v5880 = vpack.c.b16 %v5871, %v5870
      %v5881 = vpack.c.b16 %v5873, %v5872
      %5882 = vrot.lane.b32.xlu0 %v5874, 38
      %v5883 = vpop.permute.xlu0 %5882
      %5884 = vrot.lane.b32.xlu0 %v5875, 38
      %v5885 = vpop.permute.xlu0 %5884
      %5886 = vrot.lane.b32.xlu0 %v5876, 38
      %v5887 = vpop.permute.xlu0 %5886
      %5888 = vrot.lane.b32.xlu0 %v5877, 38
      %v5889 = vpop.permute.xlu0 %5888
      %5890 = vrot.lane.b32.xlu0 %v5878, 38
      %v5891 = vpop.permute.xlu0 %5890
      %5892 = vrot.lane.b32.xlu0 %v5879, 38
      %v5893 = vpop.permute.xlu0 %5892
      %5894 = vrot.lane.b32.xlu0 %v5880, 38
      %v5895 = vpop.permute.xlu0 %5894
      %5896 = vrot.lane.b32.xlu0 %v5881, 38
      %v5897 = vpop.permute.xlu0 %5896
      %vm5906 = vcmask 711984
      %5907 = vst.msk [vmem:[#allocation6 + $0x10] sm:$0xff] %vm5906, %v5883
      %5908 = vst.msk [vmem:[#allocation6 + $0x28] sm:$0xff] %vm5906, %v5885
      %5909 = vst.msk [vmem:[#allocation6 + $0x40] sm:$0xff] %vm5906, %v5887
      %5910 = vst.msk [vmem:[#allocation6 + $0x58] sm:$0xff] %vm5906, %v5889
      %5911 = vst.msk [vmem:[#allocation6 + $0x70] sm:$0xff] %vm5906, %v5891
      %5912 = vst.msk [vmem:[#allocation6 + $0x88] sm:$0xff] %vm5906, %v5893
      %5913 = vst.msk [vmem:[#allocation6 + $0xa0] sm:$0xff] %vm5906, %v5895
      %5914 = vst.msk [vmem:[#allocation6 + $0xb8] sm:$0xff] %vm5906, %v5897
      %v5915 = vld [vmem:[#allocation6] sm:$0xff]
      %v5916 = vld [vmem:[#allocation6 + $0x8] sm:$0xff]
      %v5917 = vld [vmem:[#allocation6 + $0x10] sm:$0xff]
      %v5918 = vld [vmem:[#allocation6 + $0x18] sm:$0xff]
      %v5919 = vld [vmem:[#allocation6 + $0x20] sm:$0xff]
      %v5920 = vld [vmem:[#allocation6 + $0x28] sm:$0xff]
      %v5921 = vld [vmem:[#allocation6 + $0x30] sm:$0xff]
      %v5922 = vld [vmem:[#allocation6 + $0x38] sm:$0xff]
      %v5923 = vld [vmem:[#allocation6 + $0x40] sm:$0xff]
      %v5924 = vld [vmem:[#allocation6 + $0x48] sm:$0xff]
      %v5925 = vld [vmem:[#allocation6 + $0x50] sm:$0xff]
      %v5926 = vld [vmem:[#allocation6 + $0x58] sm:$0xff]
      %v5927 = vld [vmem:[#allocation6 + $0x60] sm:$0xff]
      %v5928 = vld [vmem:[#allocation6 + $0x68] sm:$0xff]
      %v5929 = vld [vmem:[#allocation6 + $0x70] sm:$0xff]
      %v5930 = vld [vmem:[#allocation6 + $0x78] sm:$0xff]
      %v5931 = vld [vmem:[#allocation6 + $0x80] sm:$0xff]
      %v5932 = vld [vmem:[#allocation6 + $0x88] sm:$0xff]
      %v5933 = vld [vmem:[#allocation6 + $0x90] sm:$0xff]
      %v5934 = vld [vmem:[#allocation6 + $0x98] sm:$0xff]
      %v5935 = vld [vmem:[#allocation6 + $0xa0] sm:$0xff]
      %v5936 = vld [vmem:[#allocation6 + $0xa8] sm:$0xff]
      %v5937 = vld [vmem:[#allocation6 + $0xb0] sm:$0xff]
      %v5938 = vld [vmem:[#allocation6 + $0xb8] sm:$0xff]
      %v5939 = vld [vmem:[%s4] sm:$0xf]
      %v5940 = vld [vmem:[%s4 + $0x4] sm:$0xf]
      %v5941 = vld [vmem:[%s4 + $0x8] sm:$0xf]
      %v5942 = vld [vmem:[%s4 + $0xc] sm:$0xf]
      %v5943 = vld [vmem:[%s4 + $0x10] sm:$0xf]
      %v5944 = vld [vmem:[%s4 + $0x14] sm:$0xf]
      %v5945 = vld [vmem:[%s4 + $0x18] sm:$0xf]
      %v5946 = vld [vmem:[%s4 + $0x1c] sm:$0xf]
      %v5947 = vld [vmem:[%s4 + $0x20] sm:$0xf]
      %v5948 = vld [vmem:[%s4 + $0x24] sm:$0xf]
      %v5949 = vld [vmem:[%s4 + $0x28] sm:$0xf]
      %v5950 = vld [vmem:[%s4 + $0x2c] sm:$0xf]
      %v5951 = vld [vmem:[%s4 + $0x30] sm:$0xf]
      %v5952 = vld [vmem:[%s4 + $0x34] sm:$0xf]
      %v5953 = vld [vmem:[%s4 + $0x38] sm:$0xf]
      %v5954 = vld [vmem:[%s4 + $0x3c] sm:$0xf]
      %v5955 = vld [vmem:[%s4 + $0x40] sm:$0xf]
      %v5956 = vld [vmem:[%s4 + $0x44] sm:$0xf]
      %v5957 = vld [vmem:[%s4 + $0x48] sm:$0xf]
      %v5958 = vld [vmem:[%s4 + $0x4c] sm:$0xf]
      %v5959 = vld [vmem:[%s4 + $0x50] sm:$0xf]
      %v5960 = vld [vmem:[%s4 + $0x54] sm:$0xf]
      %v5961 = vld [vmem:[%s4 + $0x58] sm:$0xf]
      %v5962 = vld [vmem:[%s4 + $0x5c] sm:$0xf]
      %v5963 = vld [vmem:[%s4 + $0x60] sm:$0xf]
      %v5964 = vld [vmem:[%s4 + $0x64] sm:$0xf]
      %v5965 = vld [vmem:[%s4 + $0x68] sm:$0xf]
      %v5966 = vld [vmem:[%s4 + $0x6c] sm:$0xf]
      %v5967 = vld [vmem:[%s4 + $0x70] sm:$0xf]
      %v5968 = vld [vmem:[%s4 + $0x74] sm:$0xf]
      %v5969 = vld [vmem:[%s4 + $0x78] sm:$0xf]
      %v5970 = vld [vmem:[%s4 + $0x7c] sm:$0xf]
      %v5971 = vld [vmem:[%s4 + $0x80] sm:$0xf]
      %v5972 = vld [vmem:[%s4 + $0x84] sm:$0xf]
      %v5973 = vld [vmem:[%s4 + $0x88] sm:$0xf]
      %v5974 = vld [vmem:[%s4 + $0x8c] sm:$0xf]
      %v5975 = vld [vmem:[%s4 + $0x90] sm:$0xf]
      %v5976 = vld [vmem:[%s4 + $0x94] sm:$0xf]
      %v5977 = vld [vmem:[%s4 + $0x98] sm:$0xf]
      %v5978 = vld [vmem:[%s4 + $0x9c] sm:$0xf]
      %v5979 = vld [vmem:[%s4 + $0xa0] sm:$0xf]
      %v5980 = vld [vmem:[%s4 + $0xa4] sm:$0xf]
      %v5981 = vld [vmem:[%s4 + $0xa8] sm:$0xf]
      %v5983 = vlaneseq
      %v5984 = vshrl.u32 %v5983, 7
      %v5985 = vsub.s32 0, %v5984
      %v5986 = vrot.slane %v329, %v5985
      %v6031 = vunpack.c.l.b16 %v5939
      %v6032 = vunpack.c.l.b16 %v5940
      %v6033 = vunpack.c.l.b16 %v5941
      %v6034 = vunpack.c.l.b16 %v5942
      %v6035 = vunpack.c.l.b16 %v5943
      %v6036 = vunpack.c.l.b16 %v5944
      %v6037 = vunpack.c.l.b16 %v5945
      %v6038 = vunpack.c.l.b16 %v5946
      %v6039 = vunpack.c.l.b16 %v5947
      %v6040 = vunpack.c.l.b16 %v5948
      %v6041 = vunpack.c.l.b16 %v5949
      %v6042 = vunpack.c.l.b16 %v5950
      %v6043 = vunpack.c.l.b16 %v5951
      %v6044 = vunpack.c.l.b16 %v5952
      %v6045 = vunpack.c.l.b16 %v5953
      %v6046 = vunpack.c.l.b16 %v5954
      %v6047 = vunpack.c.l.b16 %v5955
      %v6048 = vunpack.c.l.b16 %v5956
      %v6049 = vunpack.c.l.b16 %v5957
      %v6050 = vunpack.c.l.b16 %v5958
      %v6051 = vunpack.c.l.b16 %v5959
      %v6052 = vunpack.c.l.b16 %v5960
      %v6053 = vunpack.c.l.b16 %v5961
      %v6054 = vunpack.c.l.b16 %v5962
      %v6055 = vunpack.c.l.b16 %v5963
      %v6056 = vunpack.c.l.b16 %v5964
      %v6057 = vunpack.c.l.b16 %v5965
      %v6058 = vunpack.c.l.b16 %v5966
      %v6059 = vunpack.c.l.b16 %v5967
      %v6060 = vunpack.c.l.b16 %v5968
      %v6061 = vunpack.c.l.b16 %v5969
      %v6062 = vunpack.c.l.b16 %v5970
      %v6063 = vunpack.c.l.b16 %v5971
      %v6064 = vunpack.c.l.b16 %v5972
      %v6065 = vunpack.c.l.b16 %v5973
      %v6066 = vunpack.c.l.b16 %v5974
      %v6067 = vunpack.c.l.b16 %v5975
      %v6068 = vunpack.c.l.b16 %v5976
      %v6069 = vunpack.c.l.b16 %v5977
      %v6070 = vunpack.c.l.b16 %v5978
      %v6071 = vunpack.c.l.b16 %v5979
      %v6072 = vunpack.c.l.b16 %v5980
      %v6073 = vunpack.c.l.b16 %v5981
      %v6074 = vpack.c.b16 %v6032, %v6031
      %v6075 = vpack.c.b16 %v6034, %v6033
      %v6076 = vpack.c.b16 %v6036, %v6035
      %v6077 = vpack.c.b16 %v6038, %v6037
      %v6078 = vpack.c.b16 %v6040, %v6039
      %v6079 = vpack.c.b16 %v6042, %v6041
      %v6080 = vpack.c.b16 %v6044, %v6043
      %v6081 = vpack.c.b16 %v6046, %v6045
      %v6082 = vpack.c.b16 %v6048, %v6047
      %v6083 = vpack.c.b16 %v6050, %v6049
      %v6084 = vpack.c.b16 %v6052, %v6051
      %v6085 = vpack.c.b16 %v6054, %v6053
      %v6086 = vpack.c.b16 %v6056, %v6055
      %v6087 = vpack.c.b16 %v6058, %v6057
      %v6088 = vpack.c.b16 %v6060, %v6059
      %v6089 = vpack.c.b16 %v6062, %v6061
      %v6090 = vpack.c.b16 %v6064, %v6063
      %v6091 = vpack.c.b16 %v6066, %v6065
      %v6092 = vpack.c.b16 %v6068, %v6067
      %v6093 = vpack.c.b16 %v6070, %v6069
      %v6094 = vpack.c.b16 %v6072, %v6071
      %v6095 = vpack.c.b16 %v6073, %v6073
      %vm6117 = vcmask 711680
      %v6119 = vsel %vm6117, %v5917, 0
      %v6122 = vsel %vm6117, %v5920, 0
      %v6125 = vsel %vm6117, %v5923, 0
      %v6128 = vsel %vm6117, %v5926, 0
      %v6131 = vsel %vm6117, %v5929, 0
      %v6134 = vsel %vm6117, %v5932, 0
      %v6137 = vsel %vm6117, %v5935, 0
      %v6140 = vsel %vm6117, %v5938, 0
      %vm6142 = vcmask 1042432
      %vm6143 = vcmask 1043456
      %v6144 = vsel %vm6142, 4294967295, 65535
      %v6145 = vsel %vm6143, %v6144, 0
      %v6147 = vand.u32 %v6095, %v6145
      %6149 = vmatprep.subr.bf16.mxu0 0
      %6150 = vmatpush1.bf16.msra.mxu0 %v6074
      %6151 = vmatprep.subr.bf16.mxu0 0
      %6152 = vmatpush1.bf16.msra.mxu0 %v6075
      %6153 = vmatprep.subr.bf16.mxu0 0
      %6154 = vmatpush1.bf16.msra.mxu0 %v6076
      %6155 = vmatprep.subr.bf16.mxu0 0
      %6156 = vmatpush1.bf16.msra.mxu0 %v6077
      %6157 = vmatprep.subr.bf16.mxu0 0
      %6158 = vmatpush1.bf16.msra.mxu0 %v6078
      %6159 = vmatprep.subr.bf16.mxu0 0
      %6160 = vmatpush1.bf16.msra.mxu0 %v6079
      %6161 = vmatprep.subr.bf16.mxu0 0
      %6162 = vmatpush1.bf16.msra.mxu0 %v6080
      %6163 = vmatprep.subr.bf16.mxu0 0
      %6164 = vmatpush1.bf16.msra.mxu0 %v6081
      %6165 = vmatprep.subr.bf16.mxu0 0
      %6166 = vmatpush1.bf16.msra.mxu0 %v6082
      %6167 = vmatprep.subr.bf16.mxu0 0
      %6168 = vmatpush1.bf16.msra.mxu0 %v6083
      %6169 = vmatprep.subr.bf16.mxu0 0
      %6170 = vmatpush1.bf16.msra.mxu0 %v6084
      %6171 = vmatprep.subr.bf16.mxu0 0
      %6172 = vmatpush1.bf16.msra.mxu0 %v6085
      %6173 = vmatprep.subr.bf16.mxu0 0
      %6174 = vmatpush1.bf16.msra.mxu0 %v6086
      %6175 = vmatprep.subr.bf16.mxu0 0
      %6176 = vmatpush1.bf16.msra.mxu0 %v6087
      %6177 = vmatprep.subr.bf16.mxu0 0
      %6178 = vmatpush1.bf16.msra.mxu0 %v6088
      %6179 = vmatprep.subr.bf16.mxu0 0
      %6180 = vmatpush1.bf16.msra.mxu0 %v6089
      %6181 = vmatprep.mubr.bf16.mxu0 %v5916
      %6182 = vmatmul.mubr.bf16.gmra.mrb[0].mxu0 %v5915
      %v6183 = vpop.f32.mrb[0].mxu0
      %v6184 = vadd.f32 %v5986, %v6183
      %v6185 = vpop.f32.mrb[0].mxu0
      %v6186 = vpop.f32.mrb[0].mxu0
      %v6187 = vadd.f32 %v5986, %v6186
      %v6188 = vpop.f32.mrb[0].mxu0
      %6189 = vmatprep.mubr.bf16.mxu0 %v5919
      %6190 = vmatmul.mubr.bf16.gmra.mrb[0].mxu0 %v5918
      %v6191 = vpop.f32.mrb[0].mxu0
      %v6192 = vadd.f32 %v5986, %v6191
      %v6193 = vpop.f32.mrb[0].mxu0
      %v6194 = vpop.f32.mrb[0].mxu0
      %v6195 = vadd.f32 %v5986, %v6194
      %v6196 = vpop.f32.mrb[0].mxu0
      %6197 = vmatprep.mubr.bf16.mxu0 %v5922
      %6198 = vmatmul.mubr.bf16.gmra.mrb[0].mxu0 %v5921
      %v6199 = vpop.f32.mrb[0].mxu0
      %v6200 = vadd.f32 %v5986, %v6199
      %v6201 = vpop.f32.mrb[0].mxu0
      %v6202 = vpop.f32.mrb[0].mxu0
      %v6203 = vadd.f32 %v5986, %v6202
      %v6204 = vpop.f32.mrb[0].mxu0
      %6205 = vmatprep.mubr.bf16.mxu0 %v5925
      %6206 = vmatmul.mubr.bf16.gmra.mrb[0].mxu0 %v5924
      %v6207 = vpop.f32.mrb[0].mxu0
      %v6208 = vadd.f32 %v5986, %v6207
      %v6209 = vpop.f32.mrb[0].mxu0
      %v6210 = vpop.f32.mrb[0].mxu0
      %v6211 = vadd.f32 %v5986, %v6210
      %v6212 = vpop.f32.mrb[0].mxu0
      %6213 = vmatprep.mubr.bf16.mxu0 %v5928
      %6214 = vmatmul.mubr.bf16.gmra.mrb[0].mxu0 %v5927
      %v6215 = vpop.f32.mrb[0].mxu0
      %v6216 = vadd.f32 %v5986, %v6215
      %v6217 = vpop.f32.mrb[0].mxu0
      %v6218 = vpop.f32.mrb[0].mxu0
      %v6219 = vadd.f32 %v5986, %v6218
      %v6220 = vpop.f32.mrb[0].mxu0
      %6221 = vmatprep.mubr.bf16.mxu0 %v5931
      %6222 = vmatmul.mubr.bf16.gmra.mrb[0].mxu0 %v5930
      %v6223 = vpop.f32.mrb[0].mxu0
      %v6224 = vadd.f32 %v5986, %v6223
      %v6225 = vpop.f32.mrb[0].mxu0
      %v6226 = vpop.f32.mrb[0].mxu0
      %v6227 = vadd.f32 %v5986, %v6226
      %v6228 = vpop.f32.mrb[0].mxu0
      %6229 = vmatprep.mubr.bf16.mxu0 %v5934
      %6230 = vmatmul.mubr.bf16.gmra.mrb[0].mxu0 %v5933
      %v6231 = vpop.f32.mrb[0].mxu0
      %v6232 = vadd.f32 %v5986, %v6231
      %v6233 = vpop.f32.mrb[0].mxu0
      %v6234 = vpop.f32.mrb[0].mxu0
      %v6235 = vadd.f32 %v5986, %v6234
      %v6236 = vpop.f32.mrb[0].mxu0
      %6237 = vmatprep.mubr.bf16.mxu0 %v5937
      %6238 = vmatmul.mubr.bf16.gmra.mrb[0].mxu0 %v5936
      %v6239 = vpop.f32.mrb[0].mxu0
      %v6240 = vadd.f32 %v5986, %v6239
      %v6241 = vpop.f32.mrb[0].mxu0
      %v6242 = vpop.f32.mrb[0].mxu0
      %v6243 = vadd.f32 %v5986, %v6242
      %v6244 = vpop.f32.mrb[0].mxu0
      %6245 = vdwg.mxu0
      %6246 = vmatprep.subr.bf16.mxu0 0
      %6247 = vmatpush1.bf16.msra.mxu0 %v6090
      %6248 = vmatprep.subr.bf16.mxu0 0
      %6249 = vmatpush1.bf16.msra.mxu0 %v6091
      %6250 = vmatprep.subr.bf16.mxu0 0
      %6251 = vmatpush1.bf16.msra.mxu0 %v6092
      %6252 = vmatprep.subr.bf16.mxu0 0
      %6253 = vmatpush1.bf16.msra.mxu0 %v6093
      %6254 = vmatprep.subr.bf16.mxu0 0
      %6255 = vmatpush1.bf16.msra.mxu0 %v6094
      %6256 = vmatprep.subr.bf16.mxu0 0
      %6257 = vmatpush1.bf16.msra.mxu0 %v6147
      %6258 = vmatprep.subr.bf16.mxu0 0
      %6259 = vmatpush1.bf16.msra.mxu0 0
      %6260 = vmatprep.subr.bf16.mxu0 0
      %6261 = vmatpush1.bf16.msra.mxu0 0
      %6262 = vmatprep.subr.bf16.mxu0 0
      %6263 = vmatpush1.bf16.msra.mxu0 0
      %6264 = vmatprep.subr.bf16.mxu0 0
      %6265 = vmatpush1.bf16.msra.mxu0 0
      %6266 = vmatprep.subr.bf16.mxu0 0
      %6267 = vmatpush1.bf16.msra.mxu0 0
      %6268 = vmatprep.subr.bf16.mxu0 0
      %6269 = vmatpush1.bf16.msra.mxu0 0
      %6270 = vmatprep.subr.bf16.mxu0 0
      %6271 = vmatpush1.bf16.msra.mxu0 0
      %6272 = vmatprep.subr.bf16.mxu0 0
      %6273 = vmatpush1.bf16.msra.mxu0 0
      %6274 = vmatprep.subr.bf16.mxu0 0
      %6275 = vmatpush1.bf16.msra.mxu0 0
      %6276 = vmatprep.subr.bf16.mxu0 0
      %6277 = vmatpush1.bf16.msra.mxu0 0
      %6278 = vmatprep.mubr.bf16.mxu0 0
      %6279 = vmatmul.mubr.bf16.gmra.mrb[0].mxu0 %v6119
      %v6280 = vpop.f32.mrb[0].mxu0
      %v6281 = vadd.f32 %v6184, %v6280
      %v6282 = vpop.f32.mrb[0].mxu0
      %v6283 = vpop.f32.mrb[0].mxu0
      %v6284 = vadd.f32 %v6187, %v6283
      %v6285 = vpop.f32.mrb[0].mxu0
      %6286 = vmatprep.mubr.bf16.mxu0 0
      %6287 = vmatmul.mubr.bf16.gmra.mrb[0].mxu0 %v6122
      %v6288 = vpop.f32.mrb[0].mxu0
      %v6289 = vadd.f32 %v6192, %v6288
      %v6290 = vpop.f32.mrb[0].mxu0
      %v6291 = vpop.f32.mrb[0].mxu0
      %v6292 = vadd.f32 %v6195, %v6291
      %v6293 = vpop.f32.mrb[0].mxu0
      %6294 = vmatprep.mubr.bf16.mxu0 0
      %6295 = vmatmul.mubr.bf16.gmra.mrb[0].mxu0 %v6125
      %v6296 = vpop.f32.mrb[0].mxu0
      %v6297 = vadd.f32 %v6200, %v6296
      %v6298 = vpop.f32.mrb[0].mxu0
      %v6299 = vpop.f32.mrb[0].mxu0
      %v6300 = vadd.f32 %v6203, %v6299
      %v6301 = vpop.f32.mrb[0].mxu0
      %6302 = vmatprep.mubr.bf16.mxu0 0
      %6303 = vmatmul.mubr.bf16.gmra.mrb[0].mxu0 %v6128
      %v6304 = vpop.f32.mrb[0].mxu0
      %v6305 = vadd.f32 %v6208, %v6304
      %v6306 = vpop.f32.mrb[0].mxu0
      %v6307 = vpop.f32.mrb[0].mxu0
      %v6308 = vadd.f32 %v6211, %v6307
      %v6309 = vpop.f32.mrb[0].mxu0
      %6310 = vmatprep.mubr.bf16.mxu0 0
      %6311 = vmatmul.mubr.bf16.gmra.mrb[0].mxu0 %v6131
      %v6312 = vpop.f32.mrb[0].mxu0
      %v6313 = vadd.f32 %v6216, %v6312
      %v6314 = vpop.f32.mrb[0].mxu0
      %v6315 = vpop.f32.mrb[0].mxu0
      %v6316 = vadd.f32 %v6219, %v6315
      %v6317 = vpop.f32.mrb[0].mxu0
      %6318 = vmatprep.mubr.bf16.mxu0 0
      %6319 = vmatmul.mubr.bf16.gmra.mrb[0].mxu0 %v6134
      %v6320 = vpop.f32.mrb[0].mxu0
      %v6321 = vadd.f32 %v6224, %v6320
      %v6322 = vpop.f32.mrb[0].mxu0
      %v6323 = vpop.f32.mrb[0].mxu0
      %v6324 = vadd.f32 %v6227, %v6323
      %v6325 = vpop.f32.mrb[0].mxu0
      %6326 = vmatprep.mubr.bf16.mxu0 0
      %6327 = vmatmul.mubr.bf16.gmra.mrb[0].mxu0 %v6137
      %v6328 = vpop.f32.mrb[0].mxu0
      %v6329 = vadd.f32 %v6232, %v6328
      %v6330 = vpop.f32.mrb[0].mxu0
      %v6331 = vpop.f32.mrb[0].mxu0
      %v6332 = vadd.f32 %v6235, %v6331
      %v6333 = vpop.f32.mrb[0].mxu0
      %6334 = vmatprep.mubr.bf16.mxu0 0
      %6335 = vmatmul.mubr.bf16.gmra.mrb[0].mxu0 %v6140
      %v6336 = vpop.f32.mrb[0].mxu0
      %v6337 = vadd.f32 %v6240, %v6336
      %v6338 = vpop.f32.mrb[0].mxu0
      %v6339 = vpop.f32.mrb[0].mxu0
      %v6340 = vadd.f32 %v6243, %v6339
      %v6341 = vpop.f32.mrb[0].mxu0
      %6342 = vdwg.mxu0
      %6343 = vxpose.xlu0.b32.start [1/16] %v6281, 128
      %6344 = vxpose.xlu0.b32.cont [2/16] %v6284, 128
      %6345 = vxpose.xlu0.b32.cont [3/16] %v6289, 128
      %6346 = vxpose.xlu0.b32.cont [4/16] %v6292, 128
      %6347 = vxpose.xlu0.b32.cont [5/16] %v6297, 128
      %6348 = vxpose.xlu0.b32.cont [6/16] %v6300, 128
      %6349 = vxpose.xlu0.b32.cont [7/16] %v6305, 128
      %6350 = vxpose.xlu0.b32.cont [8/16] %v6308, 128
      %6351 = vxpose.xlu0.b32.cont [9/16] %v6313, 128
      %6352 = vxpose.xlu0.b32.cont [10/16] %v6316, 128
      %6353 = vxpose.xlu0.b32.cont [11/16] %v6321, 128
      %6354 = vxpose.xlu0.b32.cont [12/16] %v6324, 128
      %6355 = vxpose.xlu0.b32.cont [13/16] %v6329, 128
      %6356 = vxpose.xlu0.b32.cont [14/16] %v6332, 128
      %6357 = vxpose.xlu0.b32.cont [15/16] %v6337, 128
      %6358 = vxpose.xlu0.b32.end [16/16] %v6340, 128
      %v6359 = vpop.trf.xlu0
      %v6360 = vpop.trf.xlu0
      %v6361 = vpop.trf.xlu0
      %v6362 = vpop.trf.xlu0
      %v6363 = vpop.trf.xlu0
      %v6364 = vpop.trf.xlu0
      %v6365 = vpop.trf.xlu0
      %v6366 = vpop.trf.xlu0
      %v6367 = vpop.trf.xlu0
      %v6368 = vpop.trf.xlu0
      %v6369 = vpop.trf.xlu0
      %v6370 = vpop.trf.xlu0
      %v6371 = vpop.trf.xlu0
      %v6372 = vpop.trf.xlu0
      %v6373 = vpop.trf.xlu0
      %v6374 = vpop.trf.xlu0
      %v6375 = vmul.f32 %v6359, %v6359
      %v6376 = vmul.f32 %v6360, %v6360
      %v6377 = vmul.f32 %v6361, %v6361
      %v6378 = vmul.f32 %v6362, %v6362
      %v6379 = vmul.f32 %v6363, %v6363
      %v6380 = vmul.f32 %v6364, %v6364
      %v6381 = vmul.f32 %v6365, %v6365
      %v6382 = vsub.f32 0.0, %v6375
      %v6383 = vsub.f32 0.0, %v6376
      %v6384 = vsub.f32 0.0, %v6377
      %v6385 = vsub.f32 0.0, %v6378
      %v6386 = vsub.f32 0.0, %v6379
      %v6387 = vsub.f32 0.0, %v6380
      %v6388 = vsub.f32 0.0, %v6381
      %v6389 = vmax.f32 %v6382, %v6386
      %v6390 = vmax.f32 %v6383, %v6387
      %vm6391 = vcmask 1040384
      %v6392 = vsel %vm6391, %v6388, -inf
      %v6393 = vmax.f32 %v6384, %v6392
      %v6394 = vmax.f32 %v6389, %v6390
      %v6395 = vmax.f32 %v6393, %v6385
      %v6396 = vmax.f32 %v6394, %v6395
      %v6397 = vrot.slane %v6396, 4
      %v6398 = vmax.f32 %v6396, %v6397
      %v6399 = vrot.slane %v6398, 2
      %v6400 = vmax.f32 %v6398, %v6399
      %v6401 = vrot.slane %v6400, 1
      %v6402 = vmax.f32 %v6400, %v6401
      %v6403 = vsub.f32 %v6382, %v6402
      %v6404 = vsub.f32 %v6383, %v6402
      %v6405 = vsub.f32 %v6384, %v6402
      %v6406 = vsub.f32 %v6385, %v6402
      %v6407 = vsub.f32 %v6386, %v6402
      %v6408 = vsub.f32 %v6387, %v6402
      %v6409 = vsub.f32 %v6388, %v6402
      %v6410 = vmul.f32 %v6403, 1.442695
      %v6411 = vpow.pop %v6410
      %v6412 = vmul.f32 %v6404, 1.442695
      %v6413 = vpow.pop %v6412
      %v6414 = vmul.f32 %v6405, 1.442695
      %v6415 = vpow.pop %v6414
      %v6416 = vmul.f32 %v6406, 1.442695
      %v6417 = vpow.pop %v6416
      %v6418 = vmul.f32 %v6407, 1.442695
      %v6419 = vpow.pop %v6418
      %v6420 = vmul.f32 %v6408, 1.442695
      %v6421 = vpow.pop %v6420
      %v6422 = vmul.f32 %v6409, 1.442695
      %v6423 = vpow.pop %v6422
      %v6424 = vadd.f32 %v6411, %v6413
      %v6425 = vadd.f32 %v6424, %v6415
      %v6426 = vadd.f32 %v6425, %v6417
      %v6427 = vadd.f32 %v6426, %v6419
      %v6428 = vadd.f32 %v6427, %v6421
      %v6429 = vsel %vm6391, %v6423, 0.0
      %v6430 = vadd.f32 %v6428, %v6429
      %v6431 = vrot.slane %v6430, 4
      %v6432 = vadd.f32 %v6430, %v6431
      %v6433 = vrot.slane %v6432, 2
      %v6434 = vadd.f32 %v6432, %v6433
      %v6435 = vrot.slane %v6434, 1
      %v6436 = vadd.f32 %v6434, %v6435
      %v6437 = vld [vmem:[%s320] sm:$0xff]
      %v6438 = vld [vmem:[%s320 + $0x8] sm:$0xff]
      %v6439 = vld [vmem:[%s320 + $0x10] sm:$0xff]
      %v6440 = vld [vmem:[%s320 + $0x18] sm:$0xff]
      %v6441 = vld [vmem:[%s320 + $0x20] sm:$0xff]
      %v6442 = vld [vmem:[%s320 + $0x28] sm:$0xff]
      %v6443 = vld [vmem:[%s320 + $0x30] sm:$0x1]
      %s6444 = scalar_lea.vmem %s320, 56
      %v6445 = vld [vmem:[%s6444] sm:$0xff]
      %v6446 = vld [vmem:[%s6444 + $0x8] sm:$0xff]
      %v6447 = vld [vmem:[%s6444 + $0x10] sm:$0xff]
      %v6448 = vld [vmem:[%s6444 + $0x18] sm:$0xff]
      %v6449 = vld [vmem:[%s6444 + $0x20] sm:$0xff]
      %v6450 = vld [vmem:[%s6444 + $0x28] sm:$0xff]
      %v6451 = vld [vmem:[%s6444 + $0x30] sm:$0x1]
      %v6452 = vmul.f32 %v6411, %v6437
      %v6453 = vmul.f32 %v6413, %v6438
      %v6454 = vmul.f32 %v6415, %v6439
      %v6455 = vmul.f32 %v6417, %v6440
      %v6456 = vmul.f32 %v6419, %v6441
      %v6457 = vmul.f32 %v6421, %v6442
      %v6458 = vmul.f32 %v6423, %v6443
      %v6459 = vadd.f32 %v6452, %v6453
      %v6460 = vadd.f32 %v6459, %v6454
      %v6461 = vadd.f32 %v6460, %v6455
      %v6462 = vadd.f32 %v6461, %v6456
      %v6463 = vadd.f32 %v6462, %v6457
      %v6464 = vsel %vm6391, %v6458, 0.0
      %v6465 = vadd.f32 %v6463, %v6464
      %v6466 = vrot.slane %v6465, 4
      %v6467 = vadd.f32 %v6465, %v6466
      %v6468 = vrot.slane %v6467, 2
      %v6469 = vadd.f32 %v6467, %v6468
      %v6470 = vrot.slane %v6469, 1
      %v6471 = vadd.f32 %v6469, %v6470
      %v6472 = vmul.f32 %v6411, %v6445
      %v6473 = vmul.f32 %v6413, %v6446
      %v6474 = vmul.f32 %v6415, %v6447
      %v6475 = vmul.f32 %v6417, %v6448
      %v6476 = vmul.f32 %v6419, %v6449
      %v6477 = vmul.f32 %v6421, %v6450
      %v6478 = vmul.f32 %v6423, %v6451
      %v6479 = vadd.f32 %v6472, %v6473
      %v6480 = vadd.f32 %v6479, %v6474
      %v6481 = vadd.f32 %v6480, %v6475
      %v6482 = vadd.f32 %v6481, %v6476
      %v6483 = vadd.f32 %v6482, %v6477
      %v6484 = vsel %vm6391, %v6478, 0.0
      %v6485 = vadd.f32 %v6483, %v6484
      %v6486 = vrot.slane %v6485, 4
      %v6487 = vadd.f32 %v6485, %v6486
      %v6488 = vrot.slane %v6487, 2
      %v6489 = vadd.f32 %v6487, %v6488
      %v6490 = vrot.slane %v6489, 1
      %v6491 = vadd.f32 %v6489, %v6490
      %v6492 = vrcp.pop %v6436
      %v6493 = vmul.f32 %v6471, %v6492
      %6494 = vst [vmem:[%s325] sm:$0x1] %v6493
      %v6495 = vmul.f32 %v6491, %v6492
      %6496 = vst [vmem:[%s325 + $0x1] sm:$0x1] %v6495
      %v6497 = vld [vmem:[#allocation3] sm:$0xf]
      %v6498 = vld [vmem:[#allocation3 + $0x4] sm:$0x1]
      %v6499 = vld [vmem:[#allocation3 + $0x8] sm:$0xf]
      %v6500 = vld [vmem:[#allocation3 + $0xc] sm:$0x1]
      %v6501 = vld [vmem:[#allocation3 + $0x10] sm:$0xf]
      %v6502 = vld [vmem:[#allocation3 + $0x14] sm:$0x1]
      %v6503 = vld [vmem:[#allocation3 + $0x18] sm:$0xf]
      %v6504 = vld [vmem:[#allocation3 + $0x1c] sm:$0x1]
      %v6505 = vld [vmem:[#allocation3 + $0x20] sm:$0xf]
      %v6506 = vld [vmem:[#allocation3 + $0x24] sm:$0x1]
      %v6507 = vld [vmem:[#allocation3 + $0x28] sm:$0xf]
      %v6508 = vld [vmem:[#allocation3 + $0x2c] sm:$0x1]
      %v6509 = vld [vmem:[#allocation3 + $0x30] sm:$0xf]
      %v6510 = vld [vmem:[#allocation3 + $0x34] sm:$0x1]
      %v6511 = vld [vmem:[#allocation3 + $0x38] sm:$0xf]
      %v6512 = vld [vmem:[#allocation3 + $0x3c] sm:$0x1]
      %v6513 = vld [vmem:[#allocation3 + $0x40] sm:$0xf]
      %v6514 = vld [vmem:[#allocation3 + $0x44] sm:$0x1]
      %v6515 = vld [vmem:[#allocation3 + $0x48] sm:$0xf]
      %v6516 = vld [vmem:[#allocation3 + $0x4c] sm:$0x1]
      %v6517 = vld [vmem:[#allocation3 + $0x50] sm:$0xf]
      %v6518 = vld [vmem:[#allocation3 + $0x54] sm:$0x1]
      %v6519 = vld [vmem:[#allocation3 + $0x58] sm:$0xf]
      %v6520 = vld [vmem:[#allocation3 + $0x5c] sm:$0x1]
      %v6521 = vld [vmem:[#allocation3 + $0x60] sm:$0xf]
      %v6522 = vld [vmem:[#allocation3 + $0x64] sm:$0x1]
      %v6523 = vld [vmem:[#allocation3 + $0x68] sm:$0xf]
      %v6524 = vld [vmem:[#allocation3 + $0x6c] sm:$0x1]
      %v6525 = vld [vmem:[#allocation3 + $0x70] sm:$0xf]
      %v6526 = vld [vmem:[#allocation3 + $0x74] sm:$0x1]
      %v6527 = vld [vmem:[#allocation3 + $0x78] sm:$0xf]
      %v6528 = vld [vmem:[#allocation3 + $0x7c] sm:$0x1]
      %v6530 = vshrl.u32 %v6497, 16
      %v6532 = vrot.slane %v6530, 4
      %v6533 = vshll.u32 %v6497, 16
      %v6535 = vrot.slane %v6533, 5
      %v6536 = vor.u32 %v6532, %v6535
      %v6537 = vrot.slane %v6536, 4
      %v6539 = vshll.u32 %v6498, 16
      %v6541 = vrot.slane %v6539, 5
      %v6542 = vsel %vm648, %v6537, %v6541
      %v6544 = vshrl.u32 %v6499, 16
      %v6546 = vrot.slane %v6544, 4
      %v6547 = vshll.u32 %v6499, 16
      %v6549 = vrot.slane %v6547, 5
      %v6550 = vor.u32 %v6546, %v6549
      %v6551 = vrot.slane %v6550, 4
      %v6553 = vshll.u32 %v6500, 16
      %v6555 = vrot.slane %v6553, 5
      %v6556 = vsel %vm648, %v6551, %v6555
      %v6558 = vshrl.u32 %v6501, 16
      %v6560 = vrot.slane %v6558, 4
      %v6561 = vshll.u32 %v6501, 16
      %v6563 = vrot.slane %v6561, 5
      %v6564 = vor.u32 %v6560, %v6563
      %v6565 = vrot.slane %v6564, 4
      %v6567 = vshll.u32 %v6502, 16
      %v6569 = vrot.slane %v6567, 5
      %v6570 = vsel %vm648, %v6565, %v6569
      %v6572 = vshrl.u32 %v6503, 16
      %v6574 = vrot.slane %v6572, 4
      %v6575 = vshll.u32 %v6503, 16
      %v6577 = vrot.slane %v6575, 5
      %v6578 = vor.u32 %v6574, %v6577
      %v6579 = vrot.slane %v6578, 4
      %v6581 = vshll.u32 %v6504, 16
      %v6583 = vrot.slane %v6581, 5
      %v6584 = vsel %vm648, %v6579, %v6583
      %v6586 = vshrl.u32 %v6505, 16
      %v6588 = vrot.slane %v6586, 4
      %v6589 = vshll.u32 %v6505, 16
      %v6591 = vrot.slane %v6589, 5
      %v6592 = vor.u32 %v6588, %v6591
      %v6593 = vrot.slane %v6592, 4
      %v6595 = vshll.u32 %v6506, 16
      %v6597 = vrot.slane %v6595, 5
      %v6598 = vsel %vm648, %v6593, %v6597
      %v6600 = vshrl.u32 %v6507, 16
      %v6602 = vrot.slane %v6600, 4
      %v6603 = vshll.u32 %v6507, 16
      %v6605 = vrot.slane %v6603, 5
      %v6606 = vor.u32 %v6602, %v6605
      %v6607 = vrot.slane %v6606, 4
      %v6609 = vshll.u32 %v6508, 16
      %v6611 = vrot.slane %v6609, 5
      %v6612 = vsel %vm648, %v6607, %v6611
      %v6614 = vshrl.u32 %v6509, 16
      %v6616 = vrot.slane %v6614, 4
      %v6617 = vshll.u32 %v6509, 16
      %v6619 = vrot.slane %v6617, 5
      %v6620 = vor.u32 %v6616, %v6619
      %v6621 = vrot.slane %v6620, 4
      %v6623 = vshll.u32 %v6510, 16
      %v6625 = vrot.slane %v6623, 5
      %v6626 = vsel %vm648, %v6621, %v6625
      %v6628 = vshrl.u32 %v6511, 16
      %v6630 = vrot.slane %v6628, 4
      %v6631 = vshll.u32 %v6511, 16
      %v6633 = vrot.slane %v6631, 5
      %v6634 = vor.u32 %v6630, %v6633
      %v6635 = vrot.slane %v6634, 4
      %v6637 = vshll.u32 %v6512, 16
      %v6639 = vrot.slane %v6637, 5
      %v6640 = vsel %vm648, %v6635, %v6639
      %v6642 = vshrl.u32 %v6513, 16
      %v6644 = vrot.slane %v6642, 4
      %v6645 = vshll.u32 %v6513, 16
      %v6647 = vrot.slane %v6645, 5
      %v6648 = vor.u32 %v6644, %v6647
      %v6649 = vrot.slane %v6648, 4
      %v6651 = vshll.u32 %v6514, 16
      %v6653 = vrot.slane %v6651, 5
      %v6654 = vsel %vm648, %v6649, %v6653
      %v6656 = vshrl.u32 %v6515, 16
      %v6658 = vrot.slane %v6656, 4
      %v6659 = vshll.u32 %v6515, 16
      %v6661 = vrot.slane %v6659, 5
      %v6662 = vor.u32 %v6658, %v6661
      %v6663 = vrot.slane %v6662, 4
      %v6665 = vshll.u32 %v6516, 16
      %v6667 = vrot.slane %v6665, 5
      %v6668 = vsel %vm648, %v6663, %v6667
      %v6670 = vshrl.u32 %v6517, 16
      %v6672 = vrot.slane %v6670, 4
      %v6673 = vshll.u32 %v6517, 16
      %v6675 = vrot.slane %v6673, 5
      %v6676 = vor.u32 %v6672, %v6675
      %v6677 = vrot.slane %v6676, 4
      %v6679 = vshll.u32 %v6518, 16
      %v6681 = vrot.slane %v6679, 5
      %v6682 = vsel %vm648, %v6677, %v6681
      %v6684 = vshrl.u32 %v6519, 16
      %v6686 = vrot.slane %v6684, 4
      %v6687 = vshll.u32 %v6519, 16
      %v6689 = vrot.slane %v6687, 5
      %v6690 = vor.u32 %v6686, %v6689
      %v6691 = vrot.slane %v6690, 4
      %v6693 = vshll.u32 %v6520, 16
      %v6695 = vrot.slane %v6693, 5
      %v6696 = vsel %vm648, %v6691, %v6695
      %v6698 = vshrl.u32 %v6521, 16
      %v6700 = vrot.slane %v6698, 4
      %v6701 = vshll.u32 %v6521, 16
      %v6703 = vrot.slane %v6701, 5
      %v6704 = vor.u32 %v6700, %v6703
      %v6705 = vrot.slane %v6704, 4
      %v6707 = vshll.u32 %v6522, 16
      %v6709 = vrot.slane %v6707, 5
      %v6710 = vsel %vm648, %v6705, %v6709
      %v6712 = vshrl.u32 %v6523, 16
      %v6714 = vrot.slane %v6712, 4
      %v6715 = vshll.u32 %v6523, 16
      %v6717 = vrot.slane %v6715, 5
      %v6718 = vor.u32 %v6714, %v6717
      %v6719 = vrot.slane %v6718, 4
      %v6721 = vshll.u32 %v6524, 16
      %v6723 = vrot.slane %v6721, 5
      %v6724 = vsel %vm648, %v6719, %v6723
      %v6726 = vshrl.u32 %v6525, 16
      %v6728 = vrot.slane %v6726, 4
      %v6729 = vshll.u32 %v6525, 16
      %v6731 = vrot.slane %v6729, 5
      %v6732 = vor.u32 %v6728, %v6731
      %v6733 = vrot.slane %v6732, 4
      %v6735 = vshll.u32 %v6526, 16
      %v6737 = vrot.slane %v6735, 5
      %v6738 = vsel %vm648, %v6733, %v6737
      %v6740 = vshrl.u32 %v6527, 16
      %v6742 = vrot.slane %v6740, 4
      %v6743 = vshll.u32 %v6527, 16
      %v6745 = vrot.slane %v6743, 5
      %v6746 = vor.u32 %v6742, %v6745
      %v6747 = vrot.slane %v6746, 4
      %v6749 = vshll.u32 %v6528, 16
      %v6751 = vrot.slane %v6749, 5
      %v6752 = vsel %vm648, %v6747, %v6751
      %v6753 = vunpack.c.l.b16 %v6542
      %v6754 = vunpack.c.l.b16 %v6556
      %v6755 = vunpack.c.l.b16 %v6570
      %v6756 = vunpack.c.l.b16 %v6584
      %v6757 = vunpack.c.l.b16 %v6598
      %v6758 = vunpack.c.l.b16 %v6612
      %v6759 = vunpack.c.l.b16 %v6626
      %v6760 = vunpack.c.l.b16 %v6640
      %v6761 = vunpack.c.l.b16 %v6654
      %v6762 = vunpack.c.l.b16 %v6668
      %v6763 = vunpack.c.l.b16 %v6682
      %v6764 = vunpack.c.l.b16 %v6696
      %v6765 = vunpack.c.l.b16 %v6710
      %v6766 = vunpack.c.l.b16 %v6724
      %v6767 = vunpack.c.l.b16 %v6738
      %v6768 = vunpack.c.l.b16 %v6752
      %v6769 = vpack.c.b16 %v6754, %v6753
      %v6770 = vpack.c.b16 %v6756, %v6755
      %v6771 = vpack.c.b16 %v6758, %v6757
      %v6772 = vpack.c.b16 %v6760, %v6759
      %v6773 = vpack.c.b16 %v6762, %v6761
      %v6774 = vpack.c.b16 %v6764, %v6763
      %v6775 = vpack.c.b16 %v6766, %v6765
      %v6776 = vpack.c.b16 %v6768, %v6767
      %6785 = vst.msk [vmem:[#allocation6] sm:$0xff] %vm4135, %v6769
      %6786 = vst.msk [vmem:[#allocation6 + $0x18] sm:$0xff] %vm4135, %v6770
      %6787 = vst.msk [vmem:[#allocation6 + $0x30] sm:$0xff] %vm4135, %v6771
      %6788 = vst.msk [vmem:[#allocation6 + $0x48] sm:$0xff] %vm4135, %v6772
      %6789 = vst.msk [vmem:[#allocation6 + $0x60] sm:$0xff] %vm4135, %v6773
      %6790 = vst.msk [vmem:[#allocation6 + $0x78] sm:$0xff] %vm4135, %v6774
      %6791 = vst.msk [vmem:[#allocation6 + $0x90] sm:$0xff] %vm4135, %v6775
      %6792 = vst.msk [vmem:[#allocation6 + $0xa8] sm:$0xff] %vm4135, %v6776
      %v6793 = vld [vmem:[%s4038] sm:$0xf]
      %v6794 = vld [vmem:[%s4038 + $0x4] sm:$0x1]
      %v6795 = vld [vmem:[%s4038 + $0x8] sm:$0xf]
      %v6796 = vld [vmem:[%s4038 + $0xc] sm:$0x1]
      %v6797 = vld [vmem:[%s4038 + $0x10] sm:$0xf]
      %v6798 = vld [vmem:[%s4038 + $0x14] sm:$0x1]
      %v6799 = vld [vmem:[%s4038 + $0x18] sm:$0xf]
      %v6800 = vld [vmem:[%s4038 + $0x1c] sm:$0x1]
      %v6801 = vld [vmem:[%s4038 + $0x20] sm:$0xf]
      %v6802 = vld [vmem:[%s4038 + $0x24] sm:$0x1]
      %v6803 = vld [vmem:[%s4038 + $0x28] sm:$0xf]
      %v6804 = vld [vmem:[%s4038 + $0x2c] sm:$0x1]
      %v6805 = vld [vmem:[%s4038 + $0x30] sm:$0xf]
      %v6806 = vld [vmem:[%s4038 + $0x34] sm:$0x1]
      %v6807 = vld [vmem:[%s4038 + $0x38] sm:$0xf]
      %v6808 = vld [vmem:[%s4038 + $0x3c] sm:$0x1]
      %v6809 = vld [vmem:[%s4038 + $0x40] sm:$0xf]
      %v6810 = vld [vmem:[%s4038 + $0x44] sm:$0x1]
      %v6811 = vld [vmem:[%s4038 + $0x48] sm:$0xf]
      %v6812 = vld [vmem:[%s4038 + $0x4c] sm:$0x1]
      %v6813 = vld [vmem:[%s4038 + $0x50] sm:$0xf]
      %v6814 = vld [vmem:[%s4038 + $0x54] sm:$0x1]
      %v6815 = vld [vmem:[%s4038 + $0x58] sm:$0xf]
      %v6816 = vld [vmem:[%s4038 + $0x5c] sm:$0x1]
      %v6817 = vld [vmem:[%s4038 + $0x60] sm:$0xf]
      %v6818 = vld [vmem:[%s4038 + $0x64] sm:$0x1]
      %v6819 = vld [vmem:[%s4038 + $0x68] sm:$0xf]
      %v6820 = vld [vmem:[%s4038 + $0x6c] sm:$0x1]
      %v6821 = vld [vmem:[%s4038 + $0x70] sm:$0xf]
      %v6822 = vld [vmem:[%s4038 + $0x74] sm:$0x1]
      %v6823 = vld [vmem:[%s4038 + $0x78] sm:$0xf]
      %v6824 = vld [vmem:[%s4038 + $0x7c] sm:$0x1]
      %v6826 = vshrl.u32 %v6793, 16
      %v6828 = vrot.slane %v6826, 4
      %v6829 = vshll.u32 %v6793, 16
      %v6831 = vrot.slane %v6829, 5
      %v6832 = vor.u32 %v6828, %v6831
      %v6833 = vrot.slane %v6832, 4
      %v6835 = vshll.u32 %v6794, 16
      %v6837 = vrot.slane %v6835, 5
      %v6838 = vsel %vm648, %v6833, %v6837
      %v6840 = vshrl.u32 %v6795, 16
      %v6842 = vrot.slane %v6840, 4
      %v6843 = vshll.u32 %v6795, 16
      %v6845 = vrot.slane %v6843, 5
      %v6846 = vor.u32 %v6842, %v6845
      %v6847 = vrot.slane %v6846, 4
      %v6849 = vshll.u32 %v6796, 16
      %v6851 = vrot.slane %v6849, 5
      %v6852 = vsel %vm648, %v6847, %v6851
      %v6854 = vshrl.u32 %v6797, 16
      %v6856 = vrot.slane %v6854, 4
      %v6857 = vshll.u32 %v6797, 16
      %v6859 = vrot.slane %v6857, 5
      %v6860 = vor.u32 %v6856, %v6859
      %v6861 = vrot.slane %v6860, 4
      %v6863 = vshll.u32 %v6798, 16
      %v6865 = vrot.slane %v6863, 5
      %v6866 = vsel %vm648, %v6861, %v6865
      %v6868 = vshrl.u32 %v6799, 16
      %v6870 = vrot.slane %v6868, 4
      %v6871 = vshll.u32 %v6799, 16
      %v6873 = vrot.slane %v6871, 5
      %v6874 = vor.u32 %v6870, %v6873
      %v6875 = vrot.slane %v6874, 4
      %v6877 = vshll.u32 %v6800, 16
      %v6879 = vrot.slane %v6877, 5
      %v6880 = vsel %vm648, %v6875, %v6879
      %v6882 = vshrl.u32 %v6801, 16
      %v6884 = vrot.slane %v6882, 4
      %v6885 = vshll.u32 %v6801, 16
      %v6887 = vrot.slane %v6885, 5
      %v6888 = vor.u32 %v6884, %v6887
      %v6889 = vrot.slane %v6888, 4
      %v6891 = vshll.u32 %v6802, 16
      %v6893 = vrot.slane %v6891, 5
      %v6894 = vsel %vm648, %v6889, %v6893
      %v6896 = vshrl.u32 %v6803, 16
      %v6898 = vrot.slane %v6896, 4
      %v6899 = vshll.u32 %v6803, 16
      %v6901 = vrot.slane %v6899, 5
      %v6902 = vor.u32 %v6898, %v6901
      %v6903 = vrot.slane %v6902, 4
      %v6905 = vshll.u32 %v6804, 16
      %v6907 = vrot.slane %v6905, 5
      %v6908 = vsel %vm648, %v6903, %v6907
      %v6910 = vshrl.u32 %v6805, 16
      %v6912 = vrot.slane %v6910, 4
      %v6913 = vshll.u32 %v6805, 16
      %v6915 = vrot.slane %v6913, 5
      %v6916 = vor.u32 %v6912, %v6915
      %v6917 = vrot.slane %v6916, 4
      %v6919 = vshll.u32 %v6806, 16
      %v6921 = vrot.slane %v6919, 5
      %v6922 = vsel %vm648, %v6917, %v6921
      %v6924 = vshrl.u32 %v6807, 16
      %v6926 = vrot.slane %v6924, 4
      %v6927 = vshll.u32 %v6807, 16
      %v6929 = vrot.slane %v6927, 5
      %v6930 = vor.u32 %v6926, %v6929
      %v6931 = vrot.slane %v6930, 4
      %v6933 = vshll.u32 %v6808, 16
      %v6935 = vrot.slane %v6933, 5
      %v6936 = vsel %vm648, %v6931, %v6935
      %v6938 = vshrl.u32 %v6809, 16
      %v6940 = vrot.slane %v6938, 4
      %v6941 = vshll.u32 %v6809, 16
      %v6943 = vrot.slane %v6941, 5
      %v6944 = vor.u32 %v6940, %v6943
      %v6945 = vrot.slane %v6944, 4
      %v6947 = vshll.u32 %v6810, 16
      %v6949 = vrot.slane %v6947, 5
      %v6950 = vsel %vm648, %v6945, %v6949
      %v6952 = vshrl.u32 %v6811, 16
      %v6954 = vrot.slane %v6952, 4
      %v6955 = vshll.u32 %v6811, 16
      %v6957 = vrot.slane %v6955, 5
      %v6958 = vor.u32 %v6954, %v6957
      %v6959 = vrot.slane %v6958, 4
      %v6961 = vshll.u32 %v6812, 16
      %v6963 = vrot.slane %v6961, 5
      %v6964 = vsel %vm648, %v6959, %v6963
      %v6966 = vshrl.u32 %v6813, 16
      %v6968 = vrot.slane %v6966, 4
      %v6969 = vshll.u32 %v6813, 16
      %v6971 = vrot.slane %v6969, 5
      %v6972 = vor.u32 %v6968, %v6971
      %v6973 = vrot.slane %v6972, 4
      %v6975 = vshll.u32 %v6814, 16
      %v6977 = vrot.slane %v6975, 5
      %v6978 = vsel %vm648, %v6973, %v6977
      %v6980 = vshrl.u32 %v6815, 16
      %v6982 = vrot.slane %v6980, 4
      %v6983 = vshll.u32 %v6815, 16
      %v6985 = vrot.slane %v6983, 5
      %v6986 = vor.u32 %v6982, %v6985
      %v6987 = vrot.slane %v6986, 4
      %v6989 = vshll.u32 %v6816, 16
      %v6991 = vrot.slane %v6989, 5
      %v6992 = vsel %vm648, %v6987, %v6991
      %v6994 = vshrl.u32 %v6817, 16
      %v6996 = vrot.slane %v6994, 4
      %v6997 = vshll.u32 %v6817, 16
      %v6999 = vrot.slane %v6997, 5
      %v7000 = vor.u32 %v6996, %v6999
      %v7001 = vrot.slane %v7000, 4
      %v7003 = vshll.u32 %v6818, 16
      %v7005 = vrot.slane %v7003, 5
      %v7006 = vsel %vm648, %v7001, %v7005
      %v7008 = vshrl.u32 %v6819, 16
      %v7010 = vrot.slane %v7008, 4
      %v7011 = vshll.u32 %v6819, 16
      %v7013 = vrot.slane %v7011, 5
      %v7014 = vor.u32 %v7010, %v7013
      %v7015 = vrot.slane %v7014, 4
      %v7017 = vshll.u32 %v6820, 16
      %v7019 = vrot.slane %v7017, 5
      %v7020 = vsel %vm648, %v7015, %v7019
      %v7022 = vshrl.u32 %v6821, 16
      %v7024 = vrot.slane %v7022, 4
      %v7025 = vshll.u32 %v6821, 16
      %v7027 = vrot.slane %v7025, 5
      %v7028 = vor.u32 %v7024, %v7027
      %v7029 = vrot.slane %v7028, 4
      %v7031 = vshll.u32 %v6822, 16
      %v7033 = vrot.slane %v7031, 5
      %v7034 = vsel %vm648, %v7029, %v7033
      %v7036 = vshrl.u32 %v6823, 16
      %v7038 = vrot.slane %v7036, 4
      %v7039 = vshll.u32 %v6823, 16
      %v7041 = vrot.slane %v7039, 5
      %v7042 = vor.u32 %v7038, %v7041
      %v7043 = vrot.slane %v7042, 4
      %v7045 = vshll.u32 %v6824, 16
      %v7047 = vrot.slane %v7045, 5
      %v7048 = vsel %vm648, %v7043, %v7047
      %v7049 = vunpack.c.l.b16 %v6838
      %v7050 = vunpack.c.l.b16 %v6852
      %v7051 = vunpack.c.l.b16 %v6866
      %v7052 = vunpack.c.l.b16 %v6880
      %v7053 = vunpack.c.l.b16 %v6894
      %v7054 = vunpack.c.l.b16 %v6908
      %v7055 = vunpack.c.l.b16 %v6922
      %v7056 = vunpack.c.l.b16 %v6936
      %v7057 = vunpack.c.l.b16 %v6950
      %v7058 = vunpack.c.l.b16 %v6964
      %v7059 = vunpack.c.l.b16 %v6978
      %v7060 = vunpack.c.l.b16 %v6992
      %v7061 = vunpack.c.l.b16 %v7006
      %v7062 = vunpack.c.l.b16 %v7020
      %v7063 = vunpack.c.l.b16 %v7034
      %v7064 = vunpack.c.l.b16 %v7048
      %v7065 = vpack.c.b16 %v7050, %v7049
      %v7066 = vpack.c.b16 %v7052, %v7051
      %v7067 = vpack.c.b16 %v7054, %v7053
      %v7068 = vpack.c.b16 %v7056, %v7055
      %v7069 = vpack.c.b16 %v7058, %v7057
      %v7070 = vpack.c.b16 %v7060, %v7059
      %v7071 = vpack.c.b16 %v7062, %v7061
      %v7072 = vpack.c.b16 %v7064, %v7063
      %7073 = vrot.lane.b32.xlu0 %v7065, 49
      %v7074 = vpop.permute.xlu0 %7073
      %7075 = vrot.lane.b32.xlu0 %v7066, 49
      %v7076 = vpop.permute.xlu0 %7075
      %7077 = vrot.lane.b32.xlu0 %v7067, 49
      %v7078 = vpop.permute.xlu0 %7077
      %7079 = vrot.lane.b32.xlu0 %v7068, 49
      %v7080 = vpop.permute.xlu0 %7079
      %7081 = vrot.lane.b32.xlu0 %v7069, 49
      %v7082 = vpop.permute.xlu0 %7081
      %7083 = vrot.lane.b32.xlu0 %v7070, 49
      %v7084 = vpop.permute.xlu0 %7083
      %7085 = vrot.lane.b32.xlu0 %v7071, 49
      %v7086 = vpop.permute.xlu0 %7085
      %7087 = vrot.lane.b32.xlu0 %v7072, 49
      %v7088 = vpop.permute.xlu0 %7087
      %7097 = vst.msk [vmem:[#allocation6] sm:$0xff] %vm4448, %v7074
      %7098 = vst.msk [vmem:[#allocation6 + $0x18] sm:$0xff] %vm4448, %v7076
      %7099 = vst.msk [vmem:[#allocation6 + $0x30] sm:$0xff] %vm4448, %v7078
      %7100 = vst.msk [vmem:[#allocation6 + $0x48] sm:$0xff] %vm4448, %v7080
      %7101 = vst.msk [vmem:[#allocation6 + $0x60] sm:$0xff] %vm4448, %v7082
      %7102 = vst.msk [vmem:[#allocation6 + $0x78] sm:$0xff] %vm4448, %v7084
      %7103 = vst.msk [vmem:[#allocation6 + $0x90] sm:$0xff] %vm4448, %v7086
      %7104 = vst.msk [vmem:[#allocation6 + $0xa8] sm:$0xff] %vm4448, %v7088
      %v7105 = vld [vmem:[#allocation3] sm:$0xe]
      %v7106 = vld [vmem:[#allocation3 + $0x4] sm:$0x1]
      %v7107 = vld [vmem:[#allocation3 + $0x8] sm:$0xe]
      %v7108 = vld [vmem:[#allocation3 + $0xc] sm:$0x1]
      %v7109 = vld [vmem:[#allocation3 + $0x10] sm:$0xe]
      %v7110 = vld [vmem:[#allocation3 + $0x14] sm:$0x1]
      %v7111 = vld [vmem:[#allocation3 + $0x18] sm:$0xe]
      %v7112 = vld [vmem:[#allocation3 + $0x1c] sm:$0x1]
      %v7113 = vld [vmem:[#allocation3 + $0x20] sm:$0xe]
      %v7114 = vld [vmem:[#allocation3 + $0x24] sm:$0x1]
      %v7115 = vld [vmem:[#allocation3 + $0x28] sm:$0xe]
      %v7116 = vld [vmem:[#allocation3 + $0x2c] sm:$0x1]
      %v7117 = vld [vmem:[#allocation3 + $0x30] sm:$0xe]
      %v7118 = vld [vmem:[#allocation3 + $0x34] sm:$0x1]
      %v7119 = vld [vmem:[#allocation3 + $0x38] sm:$0xe]
      %v7120 = vld [vmem:[#allocation3 + $0x3c] sm:$0x1]
      %v7121 = vld [vmem:[#allocation3 + $0x40] sm:$0xe]
      %v7122 = vld [vmem:[#allocation3 + $0x44] sm:$0x1]
      %v7123 = vld [vmem:[#allocation3 + $0x48] sm:$0xe]
      %v7124 = vld [vmem:[#allocation3 + $0x4c] sm:$0x1]
      %v7125 = vld [vmem:[#allocation3 + $0x50] sm:$0xe]
      %v7126 = vld [vmem:[#allocation3 + $0x54] sm:$0x1]
      %v7127 = vld [vmem:[#allocation3 + $0x58] sm:$0xe]
      %v7128 = vld [vmem:[#allocation3 + $0x5c] sm:$0x1]
      %v7129 = vld [vmem:[#allocation3 + $0x60] sm:$0xe]
      %v7130 = vld [vmem:[#allocation3 + $0x64] sm:$0x1]
      %v7131 = vld [vmem:[#allocation3 + $0x68] sm:$0xe]
      %v7132 = vld [vmem:[#allocation3 + $0x6c] sm:$0x1]
      %v7133 = vld [vmem:[#allocation3 + $0x70] sm:$0xe]
      %v7134 = vld [vmem:[#allocation3 + $0x74] sm:$0x1]
      %v7135 = vld [vmem:[#allocation3 + $0x78] sm:$0xe]
      %v7136 = vld [vmem:[#allocation3 + $0x7c] sm:$0x1]
      %v7169 = vrot.slane %v7105, 5
      %v7170 = vrot.slane %v7169, 4
      %v7171 = vrot.slane %v7106, 5
      %v7172 = vsel %vm2431, %v7170, %v7171
      %v7173 = vrot.slane %v7107, 5
      %v7174 = vrot.slane %v7173, 4
      %v7175 = vrot.slane %v7108, 5
      %v7176 = vsel %vm2431, %v7174, %v7175
      %v7177 = vrot.slane %v7109, 5
      %v7178 = vrot.slane %v7177, 4
      %v7179 = vrot.slane %v7110, 5
      %v7180 = vsel %vm2431, %v7178, %v7179
      %v7181 = vrot.slane %v7111, 5
      %v7182 = vrot.slane %v7181, 4
      %v7183 = vrot.slane %v7112, 5
      %v7184 = vsel %vm2431, %v7182, %v7183
      %v7185 = vrot.slane %v7113, 5
      %v7186 = vrot.slane %v7185, 4
      %v7187 = vrot.slane %v7114, 5
      %v7188 = vsel %vm2431, %v7186, %v7187
      %v7189 = vrot.slane %v7115, 5
      %v7190 = vrot.slane %v7189, 4
      %v7191 = vrot.slane %v7116, 5
      %v7192 = vsel %vm2431, %v7190, %v7191
      %v7193 = vrot.slane %v7117, 5
      %v7194 = vrot.slane %v7193, 4
      %v7195 = vrot.slane %v7118, 5
      %v7196 = vsel %vm2431, %v7194, %v7195
      %v7197 = vrot.slane %v7119, 5
      %v7198 = vrot.slane %v7197, 4
      %v7199 = vrot.slane %v7120, 5
      %v7200 = vsel %vm2431, %v7198, %v7199
      %v7201 = vrot.slane %v7121, 5
      %v7202 = vrot.slane %v7201, 4
      %v7203 = vrot.slane %v7122, 5
      %v7204 = vsel %vm2431, %v7202, %v7203
      %v7205 = vrot.slane %v7123, 5
      %v7206 = vrot.slane %v7205, 4
      %v7207 = vrot.slane %v7124, 5
      %v7208 = vsel %vm2431, %v7206, %v7207
      %v7209 = vrot.slane %v7125, 5
      %v7210 = vrot.slane %v7209, 4
      %v7211 = vrot.slane %v7126, 5
      %v7212 = vsel %vm2431, %v7210, %v7211
      %v7213 = vrot.slane %v7127, 5
      %v7214 = vrot.slane %v7213, 4
      %v7215 = vrot.slane %v7128, 5
      %v7216 = vsel %vm2431, %v7214, %v7215
      %v7217 = vrot.slane %v7129, 5
      %v7218 = vrot.slane %v7217, 4
      %v7219 = vrot.slane %v7130, 5
      %v7220 = vsel %vm2431, %v7218, %v7219
      %v7221 = vrot.slane %v7131, 5
      %v7222 = vrot.slane %v7221, 4
      %v7223 = vrot.slane %v7132, 5
      %v7224 = vsel %vm2431, %v7222, %v7223
      %v7225 = vrot.slane %v7133, 5
      %v7226 = vrot.slane %v7225, 4
      %v7227 = vrot.slane %v7134, 5
      %v7228 = vsel %vm2431, %v7226, %v7227
      %v7229 = vrot.slane %v7135, 5
      %v7230 = vrot.slane %v7229, 4
      %v7231 = vrot.slane %v7136, 5
      %v7232 = vsel %vm2431, %v7230, %v7231
      %v7233 = vunpack.c.l.b16 %v7172
      %v7234 = vunpack.c.l.b16 %v7176
      %v7235 = vunpack.c.l.b16 %v7180
      %v7236 = vunpack.c.l.b16 %v7184
      %v7237 = vunpack.c.l.b16 %v7188
      %v7238 = vunpack.c.l.b16 %v7192
      %v7239 = vunpack.c.l.b16 %v7196
      %v7240 = vunpack.c.l.b16 %v7200
      %v7241 = vunpack.c.l.b16 %v7204
      %v7242 = vunpack.c.l.b16 %v7208
      %v7243 = vunpack.c.l.b16 %v7212
      %v7244 = vunpack.c.l.b16 %v7216
      %v7245 = vunpack.c.l.b16 %v7220
      %v7246 = vunpack.c.l.b16 %v7224
      %v7247 = vunpack.c.l.b16 %v7228
      %v7248 = vunpack.c.l.b16 %v7232
      %v7249 = vpack.c.b16 %v7234, %v7233
      %v7250 = vpack.c.b16 %v7236, %v7235
      %v7251 = vpack.c.b16 %v7238, %v7237
      %v7252 = vpack.c.b16 %v7240, %v7239
      %v7253 = vpack.c.b16 %v7242, %v7241
      %v7254 = vpack.c.b16 %v7244, %v7243
      %v7255 = vpack.c.b16 %v7246, %v7245
      %v7256 = vpack.c.b16 %v7248, %v7247
      %7257 = vrot.lane.b32.xlu0 %v7249, 98
      %v7258 = vpop.permute.xlu0 %7257
      %7259 = vrot.lane.b32.xlu0 %v7250, 98
      %v7260 = vpop.permute.xlu0 %7259
      %7261 = vrot.lane.b32.xlu0 %v7251, 98
      %v7262 = vpop.permute.xlu0 %7261
      %7263 = vrot.lane.b32.xlu0 %v7252, 98
      %v7264 = vpop.permute.xlu0 %7263
      %7265 = vrot.lane.b32.xlu0 %v7253, 98
      %v7266 = vpop.permute.xlu0 %7265
      %7267 = vrot.lane.b32.xlu0 %v7254, 98
      %v7268 = vpop.permute.xlu0 %7267
      %7269 = vrot.lane.b32.xlu0 %v7255, 98
      %v7270 = vpop.permute.xlu0 %7269
      %7271 = vrot.lane.b32.xlu0 %v7256, 98
      %v7272 = vpop.permute.xlu0 %7271
      %7281 = vst.msk [vmem:[#allocation6] sm:$0xff] %vm4761, %v7258
      %7282 = vst.msk [vmem:[#allocation6 + $0x8] sm:$0xff] %vm4763, %v7258
      %7283 = vst.msk [vmem:[#allocation6 + $0x18] sm:$0xff] %vm4761, %v7260
      %7284 = vst.msk [vmem:[#allocation6 + $0x20] sm:$0xff] %vm4763, %v7260
      %7285 = vst.msk [vmem:[#allocation6 + $0x30] sm:$0xff] %vm4761, %v7262
      %7286 = vst.msk [vmem:[#allocation6 + $0x38] sm:$0xff] %vm4763, %v7262
      %7287 = vst.msk [vmem:[#allocation6 + $0x48] sm:$0xff] %vm4761, %v7264
      %7288 = vst.msk [vmem:[#allocation6 + $0x50] sm:$0xff] %vm4763, %v7264
      %7289 = vst.msk [vmem:[#allocation6 + $0x60] sm:$0xff] %vm4761, %v7266
      %7290 = vst.msk [vmem:[#allocation6 + $0x68] sm:$0xff] %vm4763, %v7266
      %7291 = vst.msk [vmem:[#allocation6 + $0x78] sm:$0xff] %vm4761, %v7268
      %7292 = vst.msk [vmem:[#allocation6 + $0x80] sm:$0xff] %vm4763, %v7268
      %7293 = vst.msk [vmem:[#allocation6 + $0x90] sm:$0xff] %vm4761, %v7270
      %7294 = vst.msk [vmem:[#allocation6 + $0x98] sm:$0xff] %vm4763, %v7270
      %7295 = vst.msk [vmem:[#allocation6 + $0xa8] sm:$0xff] %vm4761, %v7272
      %7296 = vst.msk [vmem:[#allocation6 + $0xb0] sm:$0xff] %vm4763, %v7272
      %v7297 = vld [vmem:[%s4038] sm:$0xe]
      %v7298 = vld [vmem:[%s4038 + $0x4] sm:$0x1]
      %v7299 = vld [vmem:[%s4038 + $0x8] sm:$0xe]
      %v7300 = vld [vmem:[%s4038 + $0xc] sm:$0x1]
      %v7301 = vld [vmem:[%s4038 + $0x10] sm:$0xe]
      %v7302 = vld [vmem:[%s4038 + $0x14] sm:$0x1]
      %v7303 = vld [vmem:[%s4038 + $0x18] sm:$0xe]
      %v7304 = vld [vmem:[%s4038 + $0x1c] sm:$0x1]
      %v7305 = vld [vmem:[%s4038 + $0x20] sm:$0xe]
      %v7306 = vld [vmem:[%s4038 + $0x24] sm:$0x1]
      %v7307 = vld [vmem:[%s4038 + $0x28] sm:$0xe]
      %v7308 = vld [vmem:[%s4038 + $0x2c] sm:$0x1]
      %v7309 = vld [vmem:[%s4038 + $0x30] sm:$0xe]
      %v7310 = vld [vmem:[%s4038 + $0x34] sm:$0x1]
      %v7311 = vld [vmem:[%s4038 + $0x38] sm:$0xe]
      %v7312 = vld [vmem:[%s4038 + $0x3c] sm:$0x1]
      %v7313 = vld [vmem:[%s4038 + $0x40] sm:$0xe]
      %v7314 = vld [vmem:[%s4038 + $0x44] sm:$0x1]
      %v7315 = vld [vmem:[%s4038 + $0x48] sm:$0xe]
      %v7316 = vld [vmem:[%s4038 + $0x4c] sm:$0x1]
      %v7317 = vld [vmem:[%s4038 + $0x50] sm:$0xe]
      %v7318 = vld [vmem:[%s4038 + $0x54] sm:$0x1]
      %v7319 = vld [vmem:[%s4038 + $0x58] sm:$0xe]
      %v7320 = vld [vmem:[%s4038 + $0x5c] sm:$0x1]
      %v7321 = vld [vmem:[%s4038 + $0x60] sm:$0xe]
      %v7322 = vld [vmem:[%s4038 + $0x64] sm:$0x1]
      %v7323 = vld [vmem:[%s4038 + $0x68] sm:$0xe]
      %v7324 = vld [vmem:[%s4038 + $0x6c] sm:$0x1]
      %v7325 = vld [vmem:[%s4038 + $0x70] sm:$0xe]
      %v7326 = vld [vmem:[%s4038 + $0x74] sm:$0x1]
      %v7327 = vld [vmem:[%s4038 + $0x78] sm:$0xe]
      %v7328 = vld [vmem:[%s4038 + $0x7c] sm:$0x1]
      %v7361 = vrot.slane %v7297, 5
      %v7362 = vrot.slane %v7361, 4
      %v7363 = vrot.slane %v7298, 5
      %v7364 = vsel %vm2431, %v7362, %v7363
      %v7365 = vrot.slane %v7299, 5
      %v7366 = vrot.slane %v7365, 4
      %v7367 = vrot.slane %v7300, 5
      %v7368 = vsel %vm2431, %v7366, %v7367
      %v7369 = vrot.slane %v7301, 5
      %v7370 = vrot.slane %v7369, 4
      %v7371 = vrot.slane %v7302, 5
      %v7372 = vsel %vm2431, %v7370, %v7371
      %v7373 = vrot.slane %v7303, 5
      %v7374 = vrot.slane %v7373, 4
      %v7375 = vrot.slane %v7304, 5
      %v7376 = vsel %vm2431, %v7374, %v7375
      %v7377 = vrot.slane %v7305, 5
      %v7378 = vrot.slane %v7377, 4
      %v7379 = vrot.slane %v7306, 5
      %v7380 = vsel %vm2431, %v7378, %v7379
      %v7381 = vrot.slane %v7307, 5
      %v7382 = vrot.slane %v7381, 4
      %v7383 = vrot.slane %v7308, 5
      %v7384 = vsel %vm2431, %v7382, %v7383
      %v7385 = vrot.slane %v7309, 5
      %v7386 = vrot.slane %v7385, 4
      %v7387 = vrot.slane %v7310, 5
      %v7388 = vsel %vm2431, %v7386, %v7387
      %v7389 = vrot.slane %v7311, 5
      %v7390 = vrot.slane %v7389, 4
      %v7391 = vrot.slane %v7312, 5
      %v7392 = vsel %vm2431, %v7390, %v7391
      %v7393 = vrot.slane %v7313, 5
      %v7394 = vrot.slane %v7393, 4
      %v7395 = vrot.slane %v7314, 5
      %v7396 = vsel %vm2431, %v7394, %v7395
      %v7397 = vrot.slane %v7315, 5
      %v7398 = vrot.slane %v7397, 4
      %v7399 = vrot.slane %v7316, 5
      %v7400 = vsel %vm2431, %v7398, %v7399
      %v7401 = vrot.slane %v7317, 5
      %v7402 = vrot.slane %v7401, 4
      %v7403 = vrot.slane %v7318, 5
      %v7404 = vsel %vm2431, %v7402, %v7403
      %v7405 = vrot.slane %v7319, 5
      %v7406 = vrot.slane %v7405, 4
      %v7407 = vrot.slane %v7320, 5
      %v7408 = vsel %vm2431, %v7406, %v7407
      %v7409 = vrot.slane %v7321, 5
      %v7410 = vrot.slane %v7409, 4
      %v7411 = vrot.slane %v7322, 5
      %v7412 = vsel %vm2431, %v7410, %v7411
      %v7413 = vrot.slane %v7323, 5
      %v7414 = vrot.slane %v7413, 4
      %v7415 = vrot.slane %v7324, 5
      %v7416 = vsel %vm2431, %v7414, %v7415
      %v7417 = vrot.slane %v7325, 5
      %v7418 = vrot.slane %v7417, 4
      %v7419 = vrot.slane %v7326, 5
      %v7420 = vsel %vm2431, %v7418, %v7419
      %v7421 = vrot.slane %v7327, 5
      %v7422 = vrot.slane %v7421, 4
      %v7423 = vrot.slane %v7328, 5
      %v7424 = vsel %vm2431, %v7422, %v7423
      %v7425 = vunpack.c.l.b16 %v7364
      %v7426 = vunpack.c.l.b16 %v7368
      %v7427 = vunpack.c.l.b16 %v7372
      %v7428 = vunpack.c.l.b16 %v7376
      %v7429 = vunpack.c.l.b16 %v7380
      %v7430 = vunpack.c.l.b16 %v7384
      %v7431 = vunpack.c.l.b16 %v7388
      %v7432 = vunpack.c.l.b16 %v7392
      %v7433 = vunpack.c.l.b16 %v7396
      %v7434 = vunpack.c.l.b16 %v7400
      %v7435 = vunpack.c.l.b16 %v7404
      %v7436 = vunpack.c.l.b16 %v7408
      %v7437 = vunpack.c.l.b16 %v7412
      %v7438 = vunpack.c.l.b16 %v7416
      %v7439 = vunpack.c.l.b16 %v7420
      %v7440 = vunpack.c.l.b16 %v7424
      %v7441 = vpack.c.b16 %v7426, %v7425
      %v7442 = vpack.c.b16 %v7428, %v7427
      %v7443 = vpack.c.b16 %v7430, %v7429
      %v7444 = vpack.c.b16 %v7432, %v7431
      %v7445 = vpack.c.b16 %v7434, %v7433
      %v7446 = vpack.c.b16 %v7436, %v7435
      %v7447 = vpack.c.b16 %v7438, %v7437
      %v7448 = vpack.c.b16 %v7440, %v7439
      %7449 = vrot.lane.b32.xlu0 %v7441, 19
      %v7450 = vpop.permute.xlu0 %7449
      %7451 = vrot.lane.b32.xlu0 %v7442, 19
      %v7452 = vpop.permute.xlu0 %7451
      %7453 = vrot.lane.b32.xlu0 %v7443, 19
      %v7454 = vpop.permute.xlu0 %7453
      %7455 = vrot.lane.b32.xlu0 %v7444, 19
      %v7456 = vpop.permute.xlu0 %7455
      %7457 = vrot.lane.b32.xlu0 %v7445, 19
      %v7458 = vpop.permute.xlu0 %7457
      %7459 = vrot.lane.b32.xlu0 %v7446, 19
      %v7460 = vpop.permute.xlu0 %7459
      %7461 = vrot.lane.b32.xlu0 %v7447, 19
      %v7462 = vpop.permute.xlu0 %7461
      %7463 = vrot.lane.b32.xlu0 %v7448, 19
      %v7464 = vpop.permute.xlu0 %7463
      %7473 = vst.msk [vmem:[#allocation6 + $0x8] sm:$0xff] %vm4955, %v7450
      %7474 = vst.msk [vmem:[#allocation6 + $0x20] sm:$0xff] %vm4955, %v7452
      %7475 = vst.msk [vmem:[#allocation6 + $0x38] sm:$0xff] %vm4955, %v7454
      %7476 = vst.msk [vmem:[#allocation6 + $0x50] sm:$0xff] %vm4955, %v7456
      %7477 = vst.msk [vmem:[#allocation6 + $0x68] sm:$0xff] %vm4955, %v7458
      %7478 = vst.msk [vmem:[#allocation6 + $0x80] sm:$0xff] %vm4955, %v7460
      %7479 = vst.msk [vmem:[#allocation6 + $0x98] sm:$0xff] %vm4955, %v7462
      %7480 = vst.msk [vmem:[#allocation6 + $0xb0] sm:$0xff] %vm4955, %v7464
      %v7481 = vld [vmem:[#allocation3] sm:$0xe]
      %v7482 = vld [vmem:[#allocation3 + $0x4] sm:$0x3]
      %v7483 = vld [vmem:[#allocation3 + $0x8] sm:$0xe]
      %v7484 = vld [vmem:[#allocation3 + $0xc] sm:$0x3]
      %v7485 = vld [vmem:[#allocation3 + $0x10] sm:$0xe]
      %v7486 = vld [vmem:[#allocation3 + $0x14] sm:$0x3]
      %v7487 = vld [vmem:[#allocation3 + $0x18] sm:$0xe]
      %v7488 = vld [vmem:[#allocation3 + $0x1c] sm:$0x3]
      %v7489 = vld [vmem:[#allocation3 + $0x20] sm:$0xe]
      %v7490 = vld [vmem:[#allocation3 + $0x24] sm:$0x3]
      %v7491 = vld [vmem:[#allocation3 + $0x28] sm:$0xe]
      %v7492 = vld [vmem:[#allocation3 + $0x2c] sm:$0x3]
      %v7493 = vld [vmem:[#allocation3 + $0x30] sm:$0xe]
      %v7494 = vld [vmem:[#allocation3 + $0x34] sm:$0x3]
      %v7495 = vld [vmem:[#allocation3 + $0x38] sm:$0xe]
      %v7496 = vld [vmem:[#allocation3 + $0x3c] sm:$0x3]
      %v7497 = vld [vmem:[#allocation3 + $0x40] sm:$0xe]
      %v7498 = vld [vmem:[#allocation3 + $0x44] sm:$0x3]
      %v7499 = vld [vmem:[#allocation3 + $0x48] sm:$0xe]
      %v7500 = vld [vmem:[#allocation3 + $0x4c] sm:$0x3]
      %v7501 = vld [vmem:[#allocation3 + $0x50] sm:$0xe]
      %v7502 = vld [vmem:[#allocation3 + $0x54] sm:$0x3]
      %v7503 = vld [vmem:[#allocation3 + $0x58] sm:$0xe]
      %v7504 = vld [vmem:[#allocation3 + $0x5c] sm:$0x3]
      %v7505 = vld [vmem:[#allocation3 + $0x60] sm:$0xe]
      %v7506 = vld [vmem:[#allocation3 + $0x64] sm:$0x3]
      %v7507 = vld [vmem:[#allocation3 + $0x68] sm:$0xe]
      %v7508 = vld [vmem:[#allocation3 + $0x6c] sm:$0x3]
      %v7509 = vld [vmem:[#allocation3 + $0x70] sm:$0xe]
      %v7510 = vld [vmem:[#allocation3 + $0x74] sm:$0x3]
      %v7511 = vld [vmem:[#allocation3 + $0x78] sm:$0xe]
      %v7512 = vld [vmem:[#allocation3 + $0x7c] sm:$0x3]
      %v7514 = vshrl.u32 %v7481, 16
      %v7516 = vrot.slane %v7514, 5
      %v7517 = vshll.u32 %v7481, 16
      %v7519 = vrot.slane %v7517, 6
      %v7520 = vor.u32 %v7516, %v7519
      %v7521 = vrot.slane %v7520, 4
      %v7523 = vshrl.u32 %v7482, 16
      %v7525 = vrot.slane %v7523, 5
      %v7526 = vshll.u32 %v7482, 16
      %v7528 = vrot.slane %v7526, 6
      %v7529 = vor.u32 %v7525, %v7528
      %v7530 = vsel %vm5183, %v7521, %v7529
      %v7532 = vshrl.u32 %v7483, 16
      %v7534 = vrot.slane %v7532, 5
      %v7535 = vshll.u32 %v7483, 16
      %v7537 = vrot.slane %v7535, 6
      %v7538 = vor.u32 %v7534, %v7537
      %v7539 = vrot.slane %v7538, 4
      %v7541 = vshrl.u32 %v7484, 16
      %v7543 = vrot.slane %v7541, 5
      %v7544 = vshll.u32 %v7484, 16
      %v7546 = vrot.slane %v7544, 6
      %v7547 = vor.u32 %v7543, %v7546
      %v7548 = vsel %vm5183, %v7539, %v7547
      %v7550 = vshrl.u32 %v7485, 16
      %v7552 = vrot.slane %v7550, 5
      %v7553 = vshll.u32 %v7485, 16
      %v7555 = vrot.slane %v7553, 6
      %v7556 = vor.u32 %v7552, %v7555
      %v7557 = vrot.slane %v7556, 4
      %v7559 = vshrl.u32 %v7486, 16
      %v7561 = vrot.slane %v7559, 5
      %v7562 = vshll.u32 %v7486, 16
      %v7564 = vrot.slane %v7562, 6
      %v7565 = vor.u32 %v7561, %v7564
      %v7566 = vsel %vm5183, %v7557, %v7565
      %v7568 = vshrl.u32 %v7487, 16
      %v7570 = vrot.slane %v7568, 5
      %v7571 = vshll.u32 %v7487, 16
      %v7573 = vrot.slane %v7571, 6
      %v7574 = vor.u32 %v7570, %v7573
      %v7575 = vrot.slane %v7574, 4
      %v7577 = vshrl.u32 %v7488, 16
      %v7579 = vrot.slane %v7577, 5
      %v7580 = vshll.u32 %v7488, 16
      %v7582 = vrot.slane %v7580, 6
      %v7583 = vor.u32 %v7579, %v7582
      %v7584 = vsel %vm5183, %v7575, %v7583
      %v7586 = vshrl.u32 %v7489, 16
      %v7588 = vrot.slane %v7586, 5
      %v7589 = vshll.u32 %v7489, 16
      %v7591 = vrot.slane %v7589, 6
      %v7592 = vor.u32 %v7588, %v7591
      %v7593 = vrot.slane %v7592, 4
      %v7595 = vshrl.u32 %v7490, 16
      %v7597 = vrot.slane %v7595, 5
      %v7598 = vshll.u32 %v7490, 16
      %v7600 = vrot.slane %v7598, 6
      %v7601 = vor.u32 %v7597, %v7600
      %v7602 = vsel %vm5183, %v7593, %v7601
      %v7604 = vshrl.u32 %v7491, 16
      %v7606 = vrot.slane %v7604, 5
      %v7607 = vshll.u32 %v7491, 16
      %v7609 = vrot.slane %v7607, 6
      %v7610 = vor.u32 %v7606, %v7609
      %v7611 = vrot.slane %v7610, 4
      %v7613 = vshrl.u32 %v7492, 16
      %v7615 = vrot.slane %v7613, 5
      %v7616 = vshll.u32 %v7492, 16
      %v7618 = vrot.slane %v7616, 6
      %v7619 = vor.u32 %v7615, %v7618
      %v7620 = vsel %vm5183, %v7611, %v7619
      %v7622 = vshrl.u32 %v7493, 16
      %v7624 = vrot.slane %v7622, 5
      %v7625 = vshll.u32 %v7493, 16
      %v7627 = vrot.slane %v7625, 6
      %v7628 = vor.u32 %v7624, %v7627
      %v7629 = vrot.slane %v7628, 4
      %v7631 = vshrl.u32 %v7494, 16
      %v7633 = vrot.slane %v7631, 5
      %v7634 = vshll.u32 %v7494, 16
      %v7636 = vrot.slane %v7634, 6
      %v7637 = vor.u32 %v7633, %v7636
      %v7638 = vsel %vm5183, %v7629, %v7637
      %v7640 = vshrl.u32 %v7495, 16
      %v7642 = vrot.slane %v7640, 5
      %v7643 = vshll.u32 %v7495, 16
      %v7645 = vrot.slane %v7643, 6
      %v7646 = vor.u32 %v7642, %v7645
      %v7647 = vrot.slane %v7646, 4
      %v7649 = vshrl.u32 %v7496, 16
      %v7651 = vrot.slane %v7649, 5
      %v7652 = vshll.u32 %v7496, 16
      %v7654 = vrot.slane %v7652, 6
      %v7655 = vor.u32 %v7651, %v7654
      %v7656 = vsel %vm5183, %v7647, %v7655
      %v7658 = vshrl.u32 %v7497, 16
      %v7660 = vrot.slane %v7658, 5
      %v7661 = vshll.u32 %v7497, 16
      %v7663 = vrot.slane %v7661, 6
      %v7664 = vor.u32 %v7660, %v7663
      %v7665 = vrot.slane %v7664, 4
      %v7667 = vshrl.u32 %v7498, 16
      %v7669 = vrot.slane %v7667, 5
      %v7670 = vshll.u32 %v7498, 16
      %v7672 = vrot.slane %v7670, 6
      %v7673 = vor.u32 %v7669, %v7672
      %v7674 = vsel %vm5183, %v7665, %v7673
      %v7676 = vshrl.u32 %v7499, 16
      %v7678 = vrot.slane %v7676, 5
      %v7679 = vshll.u32 %v7499, 16
      %v7681 = vrot.slane %v7679, 6
      %v7682 = vor.u32 %v7678, %v7681
      %v7683 = vrot.slane %v7682, 4
      %v7685 = vshrl.u32 %v7500, 16
      %v7687 = vrot.slane %v7685, 5
      %v7688 = vshll.u32 %v7500, 16
      %v7690 = vrot.slane %v7688, 6
      %v7691 = vor.u32 %v7687, %v7690
      %v7692 = vsel %vm5183, %v7683, %v7691
      %v7694 = vshrl.u32 %v7501, 16
      %v7696 = vrot.slane %v7694, 5
      %v7697 = vshll.u32 %v7501, 16
      %v7699 = vrot.slane %v7697, 6
      %v7700 = vor.u32 %v7696, %v7699
      %v7701 = vrot.slane %v7700, 4
      %v7703 = vshrl.u32 %v7502, 16
      %v7705 = vrot.slane %v7703, 5
      %v7706 = vshll.u32 %v7502, 16
      %v7708 = vrot.slane %v7706, 6
      %v7709 = vor.u32 %v7705, %v7708
      %v7710 = vsel %vm5183, %v7701, %v7709
      %v7712 = vshrl.u32 %v7503, 16
      %v7714 = vrot.slane %v7712, 5
      %v7715 = vshll.u32 %v7503, 16
      %v7717 = vrot.slane %v7715, 6
      %v7718 = vor.u32 %v7714, %v7717
      %v7719 = vrot.slane %v7718, 4
      %v7721 = vshrl.u32 %v7504, 16
      %v7723 = vrot.slane %v7721, 5
      %v7724 = vshll.u32 %v7504, 16
      %v7726 = vrot.slane %v7724, 6
      %v7727 = vor.u32 %v7723, %v7726
      %v7728 = vsel %vm5183, %v7719, %v7727
      %v7730 = vshrl.u32 %v7505, 16
      %v7732 = vrot.slane %v7730, 5
      %v7733 = vshll.u32 %v7505, 16
      %v7735 = vrot.slane %v7733, 6
      %v7736 = vor.u32 %v7732, %v7735
      %v7737 = vrot.slane %v7736, 4
      %v7739 = vshrl.u32 %v7506, 16
      %v7741 = vrot.slane %v7739, 5
      %v7742 = vshll.u32 %v7506, 16
      %v7744 = vrot.slane %v7742, 6
      %v7745 = vor.u32 %v7741, %v7744
      %v7746 = vsel %vm5183, %v7737, %v7745
      %v7748 = vshrl.u32 %v7507, 16
      %v7750 = vrot.slane %v7748, 5
      %v7751 = vshll.u32 %v7507, 16
      %v7753 = vrot.slane %v7751, 6
      %v7754 = vor.u32 %v7750, %v7753
      %v7755 = vrot.slane %v7754, 4
      %v7757 = vshrl.u32 %v7508, 16
      %v7759 = vrot.slane %v7757, 5
      %v7760 = vshll.u32 %v7508, 16
      %v7762 = vrot.slane %v7760, 6
      %v7763 = vor.u32 %v7759, %v7762
      %v7764 = vsel %vm5183, %v7755, %v7763
      %v7766 = vshrl.u32 %v7509, 16
      %v7768 = vrot.slane %v7766, 5
      %v7769 = vshll.u32 %v7509, 16
      %v7771 = vrot.slane %v7769, 6
      %v7772 = vor.u32 %v7768, %v7771
      %v7773 = vrot.slane %v7772, 4
      %v7775 = vshrl.u32 %v7510, 16
      %v7777 = vrot.slane %v7775, 5
      %v7778 = vshll.u32 %v7510, 16
      %v7780 = vrot.slane %v7778, 6
      %v7781 = vor.u32 %v7777, %v7780
      %v7782 = vsel %vm5183, %v7773, %v7781
      %v7784 = vshrl.u32 %v7511, 16
      %v7786 = vrot.slane %v7784, 5
      %v7787 = vshll.u32 %v7511, 16
      %v7789 = vrot.slane %v7787, 6
      %v7790 = vor.u32 %v7786, %v7789
      %v7791 = vrot.slane %v7790, 4
      %v7793 = vshrl.u32 %v7512, 16
      %v7795 = vrot.slane %v7793, 5
      %v7796 = vshll.u32 %v7512, 16
      %v7798 = vrot.slane %v7796, 6
      %v7799 = vor.u32 %v7795, %v7798
      %v7800 = vsel %vm5183, %v7791, %v7799
      %v7801 = vunpack.c.l.b16 %v7530
      %v7802 = vunpack.c.l.b16 %v7548
      %v7803 = vunpack.c.l.b16 %v7566
      %v7804 = vunpack.c.l.b16 %v7584
      %v7805 = vunpack.c.l.b16 %v7602
      %v7806 = vunpack.c.l.b16 %v7620
      %v7807 = vunpack.c.l.b16 %v7638
      %v7808 = vunpack.c.l.b16 %v7656
      %v7809 = vunpack.c.l.b16 %v7674
      %v7810 = vunpack.c.l.b16 %v7692
      %v7811 = vunpack.c.l.b16 %v7710
      %v7812 = vunpack.c.l.b16 %v7728
      %v7813 = vunpack.c.l.b16 %v7746
      %v7814 = vunpack.c.l.b16 %v7764
      %v7815 = vunpack.c.l.b16 %v7782
      %v7816 = vunpack.c.l.b16 %v7800
      %v7817 = vpack.c.b16 %v7802, %v7801
      %v7818 = vpack.c.b16 %v7804, %v7803
      %v7819 = vpack.c.b16 %v7806, %v7805
      %v7820 = vpack.c.b16 %v7808, %v7807
      %v7821 = vpack.c.b16 %v7810, %v7809
      %v7822 = vpack.c.b16 %v7812, %v7811
      %v7823 = vpack.c.b16 %v7814, %v7813
      %v7824 = vpack.c.b16 %v7816, %v7815
      %7825 = vrot.lane.b32.xlu0 %v7817, 68
      %v7826 = vpop.permute.xlu0 %7825
      %7827 = vrot.lane.b32.xlu0 %v7818, 68
      %v7828 = vpop.permute.xlu0 %7827
      %7829 = vrot.lane.b32.xlu0 %v7819, 68
      %v7830 = vpop.permute.xlu0 %7829
      %7831 = vrot.lane.b32.xlu0 %v7820, 68
      %v7832 = vpop.permute.xlu0 %7831
      %7833 = vrot.lane.b32.xlu0 %v7821, 68
      %v7834 = vpop.permute.xlu0 %7833
      %7835 = vrot.lane.b32.xlu0 %v7822, 68
      %v7836 = vpop.permute.xlu0 %7835
      %7837 = vrot.lane.b32.xlu0 %v7823, 68
      %v7838 = vpop.permute.xlu0 %7837
      %7839 = vrot.lane.b32.xlu0 %v7824, 68
      %v7840 = vpop.permute.xlu0 %7839
      %7849 = vst.msk [vmem:[#allocation6 + $0x8] sm:$0xff] %vm5140, %v7826
      %7850 = vst.msk [vmem:[#allocation6 + $0x20] sm:$0xff] %vm5140, %v7828
      %7851 = vst.msk [vmem:[#allocation6 + $0x38] sm:$0xff] %vm5140, %v7830
      %7852 = vst.msk [vmem:[#allocation6 + $0x50] sm:$0xff] %vm5140, %v7832
      %7853 = vst.msk [vmem:[#allocation6 + $0x68] sm:$0xff] %vm5140, %v7834
      %7854 = vst.msk [vmem:[#allocation6 + $0x80] sm:$0xff] %vm5140, %v7836
      %7855 = vst.msk [vmem:[#allocation6 + $0x98] sm:$0xff] %vm5140, %v7838
      %7856 = vst.msk [vmem:[#allocation6 + $0xb0] sm:$0xff] %vm5140, %v7840
      %v7857 = vld [vmem:[%s4038] sm:$0xe]
      %v7858 = vld [vmem:[%s4038 + $0x4] sm:$0x3]
      %v7859 = vld [vmem:[%s4038 + $0x8] sm:$0xe]
      %v7860 = vld [vmem:[%s4038 + $0xc] sm:$0x3]
      %v7861 = vld [vmem:[%s4038 + $0x10] sm:$0xe]
      %v7862 = vld [vmem:[%s4038 + $0x14] sm:$0x3]
      %v7863 = vld [vmem:[%s4038 + $0x18] sm:$0xe]
      %v7864 = vld [vmem:[%s4038 + $0x1c] sm:$0x3]
      %v7865 = vld [vmem:[%s4038 + $0x20] sm:$0xe]
      %v7866 = vld [vmem:[%s4038 + $0x24] sm:$0x3]
      %v7867 = vld [vmem:[%s4038 + $0x28] sm:$0xe]
      %v7868 = vld [vmem:[%s4038 + $0x2c] sm:$0x3]
      %v7869 = vld [vmem:[%s4038 + $0x30] sm:$0xe]
      %v7870 = vld [vmem:[%s4038 + $0x34] sm:$0x3]
      %v7871 = vld [vmem:[%s4038 + $0x38] sm:$0xe]
      %v7872 = vld [vmem:[%s4038 + $0x3c] sm:$0x3]
      %v7873 = vld [vmem:[%s4038 + $0x40] sm:$0xe]
      %v7874 = vld [vmem:[%s4038 + $0x44] sm:$0x3]
      %v7875 = vld [vmem:[%s4038 + $0x48] sm:$0xe]
      %v7876 = vld [vmem:[%s4038 + $0x4c] sm:$0x3]
      %v7877 = vld [vmem:[%s4038 + $0x50] sm:$0xe]
      %v7878 = vld [vmem:[%s4038 + $0x54] sm:$0x3]
      %v7879 = vld [vmem:[%s4038 + $0x58] sm:$0xe]
      %v7880 = vld [vmem:[%s4038 + $0x5c] sm:$0x3]
      %v7881 = vld [vmem:[%s4038 + $0x60] sm:$0xe]
      %v7882 = vld [vmem:[%s4038 + $0x64] sm:$0x3]
      %v7883 = vld [vmem:[%s4038 + $0x68] sm:$0xe]
      %v7884 = vld [vmem:[%s4038 + $0x6c] sm:$0x3]
      %v7885 = vld [vmem:[%s4038 + $0x70] sm:$0xe]
      %v7886 = vld [vmem:[%s4038 + $0x74] sm:$0x3]
      %v7887 = vld [vmem:[%s4038 + $0x78] sm:$0xe]
      %v7888 = vld [vmem:[%s4038 + $0x7c] sm:$0x3]
      %v7890 = vshrl.u32 %v7857, 16
      %v7892 = vrot.slane %v7890, 5
      %v7893 = vshll.u32 %v7857, 16
      %v7895 = vrot.slane %v7893, 6
      %v7896 = vor.u32 %v7892, %v7895
      %v7897 = vrot.slane %v7896, 4
      %v7899 = vshrl.u32 %v7858, 16
      %v7901 = vrot.slane %v7899, 5
      %v7902 = vshll.u32 %v7858, 16
      %v7904 = vrot.slane %v7902, 6
      %v7905 = vor.u32 %v7901, %v7904
      %v7906 = vsel %vm5183, %v7897, %v7905
      %v7908 = vshrl.u32 %v7859, 16
      %v7910 = vrot.slane %v7908, 5
      %v7911 = vshll.u32 %v7859, 16
      %v7913 = vrot.slane %v7911, 6
      %v7914 = vor.u32 %v7910, %v7913
      %v7915 = vrot.slane %v7914, 4
      %v7917 = vshrl.u32 %v7860, 16
      %v7919 = vrot.slane %v7917, 5
      %v7920 = vshll.u32 %v7860, 16
      %v7922 = vrot.slane %v7920, 6
      %v7923 = vor.u32 %v7919, %v7922
      %v7924 = vsel %vm5183, %v7915, %v7923
      %v7926 = vshrl.u32 %v7861, 16
      %v7928 = vrot.slane %v7926, 5
      %v7929 = vshll.u32 %v7861, 16
      %v7931 = vrot.slane %v7929, 6
      %v7932 = vor.u32 %v7928, %v7931
      %v7933 = vrot.slane %v7932, 4
      %v7935 = vshrl.u32 %v7862, 16
      %v7937 = vrot.slane %v7935, 5
      %v7938 = vshll.u32 %v7862, 16
      %v7940 = vrot.slane %v7938, 6
      %v7941 = vor.u32 %v7937, %v7940
      %v7942 = vsel %vm5183, %v7933, %v7941
      %v7944 = vshrl.u32 %v7863, 16
      %v7946 = vrot.slane %v7944, 5
      %v7947 = vshll.u32 %v7863, 16
      %v7949 = vrot.slane %v7947, 6
      %v7950 = vor.u32 %v7946, %v7949
      %v7951 = vrot.slane %v7950, 4
      %v7953 = vshrl.u32 %v7864, 16
      %v7955 = vrot.slane %v7953, 5
      %v7956 = vshll.u32 %v7864, 16
      %v7958 = vrot.slane %v7956, 6
      %v7959 = vor.u32 %v7955, %v7958
      %v7960 = vsel %vm5183, %v7951, %v7959
      %v7962 = vshrl.u32 %v7865, 16
      %v7964 = vrot.slane %v7962, 5
      %v7965 = vshll.u32 %v7865, 16
      %v7967 = vrot.slane %v7965, 6
      %v7968 = vor.u32 %v7964, %v7967
      %v7969 = vrot.slane %v7968, 4
      %v7971 = vshrl.u32 %v7866, 16
      %v7973 = vrot.slane %v7971, 5
      %v7974 = vshll.u32 %v7866, 16
      %v7976 = vrot.slane %v7974, 6
      %v7977 = vor.u32 %v7973, %v7976
      %v7978 = vsel %vm5183, %v7969, %v7977
      %v7980 = vshrl.u32 %v7867, 16
      %v7982 = vrot.slane %v7980, 5
      %v7983 = vshll.u32 %v7867, 16
      %v7985 = vrot.slane %v7983, 6
      %v7986 = vor.u32 %v7982, %v7985
      %v7987 = vrot.slane %v7986, 4
      %v7989 = vshrl.u32 %v7868, 16
      %v7991 = vrot.slane %v7989, 5
      %v7992 = vshll.u32 %v7868, 16
      %v7994 = vrot.slane %v7992, 6
      %v7995 = vor.u32 %v7991, %v7994
      %v7996 = vsel %vm5183, %v7987, %v7995
      %v7998 = vshrl.u32 %v7869, 16
      %v8000 = vrot.slane %v7998, 5
      %v8001 = vshll.u32 %v7869, 16
      %v8003 = vrot.slane %v8001, 6
      %v8004 = vor.u32 %v8000, %v8003
      %v8005 = vrot.slane %v8004, 4
      %v8007 = vshrl.u32 %v7870, 16
      %v8009 = vrot.slane %v8007, 5
      %v8010 = vshll.u32 %v7870, 16
      %v8012 = vrot.slane %v8010, 6
      %v8013 = vor.u32 %v8009, %v8012
      %v8014 = vsel %vm5183, %v8005, %v8013
      %v8016 = vshrl.u32 %v7871, 16
      %v8018 = vrot.slane %v8016, 5
      %v8019 = vshll.u32 %v7871, 16
      %v8021 = vrot.slane %v8019, 6
      %v8022 = vor.u32 %v8018, %v8021
      %v8023 = vrot.slane %v8022, 4
      %v8025 = vshrl.u32 %v7872, 16
      %v8027 = vrot.slane %v8025, 5
      %v8028 = vshll.u32 %v7872, 16
      %v8030 = vrot.slane %v8028, 6
      %v8031 = vor.u32 %v8027, %v8030
      %v8032 = vsel %vm5183, %v8023, %v8031
      %v8034 = vshrl.u32 %v7873, 16
      %v8036 = vrot.slane %v8034, 5
      %v8037 = vshll.u32 %v7873, 16
      %v8039 = vrot.slane %v8037, 6
      %v8040 = vor.u32 %v8036, %v8039
      %v8041 = vrot.slane %v8040, 4
      %v8043 = vshrl.u32 %v7874, 16
      %v8045 = vrot.slane %v8043, 5
      %v8046 = vshll.u32 %v7874, 16
      %v8048 = vrot.slane %v8046, 6
      %v8049 = vor.u32 %v8045, %v8048
      %v8050 = vsel %vm5183, %v8041, %v8049
      %v8052 = vshrl.u32 %v7875, 16
      %v8054 = vrot.slane %v8052, 5
      %v8055 = vshll.u32 %v7875, 16
      %v8057 = vrot.slane %v8055, 6
      %v8058 = vor.u32 %v8054, %v8057
      %v8059 = vrot.slane %v8058, 4
      %v8061 = vshrl.u32 %v7876, 16
      %v8063 = vrot.slane %v8061, 5
      %v8064 = vshll.u32 %v7876, 16
      %v8066 = vrot.slane %v8064, 6
      %v8067 = vor.u32 %v8063, %v8066
      %v8068 = vsel %vm5183, %v8059, %v8067
      %v8070 = vshrl.u32 %v7877, 16
      %v8072 = vrot.slane %v8070, 5
      %v8073 = vshll.u32 %v7877, 16
      %v8075 = vrot.slane %v8073, 6
      %v8076 = vor.u32 %v8072, %v8075
      %v8077 = vrot.slane %v8076, 4
      %v8079 = vshrl.u32 %v7878, 16
      %v8081 = vrot.slane %v8079, 5
      %v8082 = vshll.u32 %v7878, 16
      %v8084 = vrot.slane %v8082, 6
      %v8085 = vor.u32 %v8081, %v8084
      %v8086 = vsel %vm5183, %v8077, %v8085
      %v8088 = vshrl.u32 %v7879, 16
      %v8090 = vrot.slane %v8088, 5
      %v8091 = vshll.u32 %v7879, 16
      %v8093 = vrot.slane %v8091, 6
      %v8094 = vor.u32 %v8090, %v8093
      %v8095 = vrot.slane %v8094, 4
      %v8097 = vshrl.u32 %v7880, 16
      %v8099 = vrot.slane %v8097, 5
      %v8100 = vshll.u32 %v7880, 16
      %v8102 = vrot.slane %v8100, 6
      %v8103 = vor.u32 %v8099, %v8102
      %v8104 = vsel %vm5183, %v8095, %v8103
      %v8106 = vshrl.u32 %v7881, 16
      %v8108 = vrot.slane %v8106, 5
      %v8109 = vshll.u32 %v7881, 16
      %v8111 = vrot.slane %v8109, 6
      %v8112 = vor.u32 %v8108, %v8111
      %v8113 = vrot.slane %v8112, 4
      %v8115 = vshrl.u32 %v7882, 16
      %v8117 = vrot.slane %v8115, 5
      %v8118 = vshll.u32 %v7882, 16
      %v8120 = vrot.slane %v8118, 6
      %v8121 = vor.u32 %v8117, %v8120
      %v8122 = vsel %vm5183, %v8113, %v8121
      %v8124 = vshrl.u32 %v7883, 16
      %v8126 = vrot.slane %v8124, 5
      %v8127 = vshll.u32 %v7883, 16
      %v8129 = vrot.slane %v8127, 6
      %v8130 = vor.u32 %v8126, %v8129
      %v8131 = vrot.slane %v8130, 4
      %v8133 = vshrl.u32 %v7884, 16
      %v8135 = vrot.slane %v8133, 5
      %v8136 = vshll.u32 %v7884, 16
      %v8138 = vrot.slane %v8136, 6
      %v8139 = vor.u32 %v8135, %v8138
      %v8140 = vsel %vm5183, %v8131, %v8139
      %v8142 = vshrl.u32 %v7885, 16
      %v8144 = vrot.slane %v8142, 5
      %v8145 = vshll.u32 %v7885, 16
      %v8147 = vrot.slane %v8145, 6
      %v8148 = vor.u32 %v8144, %v8147
      %v8149 = vrot.slane %v8148, 4
      %v8151 = vshrl.u32 %v7886, 16
      %v8153 = vrot.slane %v8151, 5
      %v8154 = vshll.u32 %v7886, 16
      %v8156 = vrot.slane %v8154, 6
      %v8157 = vor.u32 %v8153, %v8156
      %v8158 = vsel %vm5183, %v8149, %v8157
      %v8160 = vshrl.u32 %v7887, 16
      %v8162 = vrot.slane %v8160, 5
      %v8163 = vshll.u32 %v7887, 16
      %v8165 = vrot.slane %v8163, 6
      %v8166 = vor.u32 %v8162, %v8165
      %v8167 = vrot.slane %v8166, 4
      %v8169 = vshrl.u32 %v7888, 16
      %v8171 = vrot.slane %v8169, 5
      %v8172 = vshll.u32 %v7888, 16
      %v8174 = vrot.slane %v8172, 6
      %v8175 = vor.u32 %v8171, %v8174
      %v8176 = vsel %vm5183, %v8167, %v8175
      %v8177 = vunpack.c.l.b16 %v7906
      %v8178 = vunpack.c.l.b16 %v7924
      %v8179 = vunpack.c.l.b16 %v7942
      %v8180 = vunpack.c.l.b16 %v7960
      %v8181 = vunpack.c.l.b16 %v7978
      %v8182 = vunpack.c.l.b16 %v7996
      %v8183 = vunpack.c.l.b16 %v8014
      %v8184 = vunpack.c.l.b16 %v8032
      %v8185 = vunpack.c.l.b16 %v8050
      %v8186 = vunpack.c.l.b16 %v8068
      %v8187 = vunpack.c.l.b16 %v8086
      %v8188 = vunpack.c.l.b16 %v8104
      %v8189 = vunpack.c.l.b16 %v8122
      %v8190 = vunpack.c.l.b16 %v8140
      %v8191 = vunpack.c.l.b16 %v8158
      %v8192 = vunpack.c.l.b16 %v8176
      %v8193 = vpack.c.b16 %v8178, %v8177
      %v8194 = vpack.c.b16 %v8180, %v8179
      %v8195 = vpack.c.b16 %v8182, %v8181
      %v8196 = vpack.c.b16 %v8184, %v8183
      %v8197 = vpack.c.b16 %v8186, %v8185
      %v8198 = vpack.c.b16 %v8188, %v8187
      %v8199 = vpack.c.b16 %v8190, %v8189
      %v8200 = vpack.c.b16 %v8192, %v8191
      %8201 = vrot.lane.b32.xlu0 %v8193, 117
      %v8202 = vpop.permute.xlu0 %8201
      %8203 = vrot.lane.b32.xlu0 %v8194, 117
      %v8204 = vpop.permute.xlu0 %8203
      %8205 = vrot.lane.b32.xlu0 %v8195, 117
      %v8206 = vpop.permute.xlu0 %8205
      %8207 = vrot.lane.b32.xlu0 %v8196, 117
      %v8208 = vpop.permute.xlu0 %8207
      %8209 = vrot.lane.b32.xlu0 %v8197, 117
      %v8210 = vpop.permute.xlu0 %8209
      %8211 = vrot.lane.b32.xlu0 %v8198, 117
      %v8212 = vpop.permute.xlu0 %8211
      %8213 = vrot.lane.b32.xlu0 %v8199, 117
      %v8214 = vpop.permute.xlu0 %8213
      %8215 = vrot.lane.b32.xlu0 %v8200, 117
      %v8216 = vpop.permute.xlu0 %8215
      %8225 = vst.msk [vmem:[#allocation6 + $0x8] sm:$0xff] %vm5520, %v8202
      %8226 = vst.msk [vmem:[#allocation6 + $0x10] sm:$0xff] %vm5522, %v8202
      %8227 = vst.msk [vmem:[#allocation6 + $0x20] sm:$0xff] %vm5520, %v8204
      %8228 = vst.msk [vmem:[#allocation6 + $0x28] sm:$0xff] %vm5522, %v8204
      %8229 = vst.msk [vmem:[#allocation6 + $0x38] sm:$0xff] %vm5520, %v8206
      %8230 = vst.msk [vmem:[#allocation6 + $0x40] sm:$0xff] %vm5522, %v8206
      %8231 = vst.msk [vmem:[#allocation6 + $0x50] sm:$0xff] %vm5520, %v8208
      %8232 = vst.msk [vmem:[#allocation6 + $0x58] sm:$0xff] %vm5522, %v8208
      %8233 = vst.msk [vmem:[#allocation6 + $0x68] sm:$0xff] %vm5520, %v8210
      %8234 = vst.msk [vmem:[#allocation6 + $0x70] sm:$0xff] %vm5522, %v8210
      %8235 = vst.msk [vmem:[#allocation6 + $0x80] sm:$0xff] %vm5520, %v8212
      %8236 = vst.msk [vmem:[#allocation6 + $0x88] sm:$0xff] %vm5522, %v8212
      %8237 = vst.msk [vmem:[#allocation6 + $0x98] sm:$0xff] %vm5520, %v8214
      %8238 = vst.msk [vmem:[#allocation6 + $0xa0] sm:$0xff] %vm5522, %v8214
      %8239 = vst.msk [vmem:[#allocation6 + $0xb0] sm:$0xff] %vm5520, %v8216
      %8240 = vst.msk [vmem:[#allocation6 + $0xb8] sm:$0xff] %vm5522, %v8216
      %v8241 = vld [vmem:[#allocation3] sm:$0xc]
      %v8242 = vld [vmem:[#allocation3 + $0x4] sm:$0x3]
      %v8243 = vld [vmem:[#allocation3 + $0x8] sm:$0xc]
      %v8244 = vld [vmem:[#allocation3 + $0xc] sm:$0x3]
      %v8245 = vld [vmem:[#allocation3 + $0x10] sm:$0xc]
      %v8246 = vld [vmem:[#allocation3 + $0x14] sm:$0x3]
      %v8247 = vld [vmem:[#allocation3 + $0x18] sm:$0xc]
      %v8248 = vld [vmem:[#allocation3 + $0x1c] sm:$0x3]
      %v8249 = vld [vmem:[#allocation3 + $0x20] sm:$0xc]
      %v8250 = vld [vmem:[#allocation3 + $0x24] sm:$0x3]
      %v8251 = vld [vmem:[#allocation3 + $0x28] sm:$0xc]
      %v8252 = vld [vmem:[#allocation3 + $0x2c] sm:$0x3]
      %v8253 = vld [vmem:[#allocation3 + $0x30] sm:$0xc]
      %v8254 = vld [vmem:[#allocation3 + $0x34] sm:$0x3]
      %v8255 = vld [vmem:[#allocation3 + $0x38] sm:$0xc]
      %v8256 = vld [vmem:[#allocation3 + $0x3c] sm:$0x3]
      %v8257 = vld [vmem:[#allocation3 + $0x40] sm:$0xc]
      %v8258 = vld [vmem:[#allocation3 + $0x44] sm:$0x3]
      %v8259 = vld [vmem:[#allocation3 + $0x48] sm:$0xc]
      %v8260 = vld [vmem:[#allocation3 + $0x4c] sm:$0x3]
      %v8261 = vld [vmem:[#allocation3 + $0x50] sm:$0xc]
      %v8262 = vld [vmem:[#allocation3 + $0x54] sm:$0x3]
      %v8263 = vld [vmem:[#allocation3 + $0x58] sm:$0xc]
      %v8264 = vld [vmem:[#allocation3 + $0x5c] sm:$0x3]
      %v8265 = vld [vmem:[#allocation3 + $0x60] sm:$0xc]
      %v8266 = vld [vmem:[#allocation3 + $0x64] sm:$0x3]
      %v8267 = vld [vmem:[#allocation3 + $0x68] sm:$0xc]
      %v8268 = vld [vmem:[#allocation3 + $0x6c] sm:$0x3]
      %v8269 = vld [vmem:[#allocation3 + $0x70] sm:$0xc]
      %v8270 = vld [vmem:[#allocation3 + $0x74] sm:$0x3]
      %v8271 = vld [vmem:[#allocation3 + $0x78] sm:$0xc]
      %v8272 = vld [vmem:[#allocation3 + $0x7c] sm:$0x3]
      %vm8305 = vcmask 1041408
      %vm8306 = vcmask 1045508
      %vm8307 = vmor %vm8305, %vm8306
      %v8308 = vrot.slane %v8241, 6
      %v8309 = vrot.slane %v8308, 4
      %v8310 = vrot.slane %v8242, 6
      %v8311 = vsel %vm8307, %v8309, %v8310
      %v8312 = vrot.slane %v8243, 6
      %v8313 = vrot.slane %v8312, 4
      %v8314 = vrot.slane %v8244, 6
      %v8315 = vsel %vm8307, %v8313, %v8314
      %v8316 = vrot.slane %v8245, 6
      %v8317 = vrot.slane %v8316, 4
      %v8318 = vrot.slane %v8246, 6
      %v8319 = vsel %vm8307, %v8317, %v8318
      %v8320 = vrot.slane %v8247, 6
      %v8321 = vrot.slane %v8320, 4
      %v8322 = vrot.slane %v8248, 6
      %v8323 = vsel %vm8307, %v8321, %v8322
      %v8324 = vrot.slane %v8249, 6
      %v8325 = vrot.slane %v8324, 4
      %v8326 = vrot.slane %v8250, 6
      %v8327 = vsel %vm8307, %v8325, %v8326
      %v8328 = vrot.slane %v8251, 6
      %v8329 = vrot.slane %v8328, 4
      %v8330 = vrot.slane %v8252, 6
      %v8331 = vsel %vm8307, %v8329, %v8330
      %v8332 = vrot.slane %v8253, 6
      %v8333 = vrot.slane %v8332, 4
      %v8334 = vrot.slane %v8254, 6
      %v8335 = vsel %vm8307, %v8333, %v8334
      %v8336 = vrot.slane %v8255, 6
      %v8337 = vrot.slane %v8336, 4
      %v8338 = vrot.slane %v8256, 6
      %v8339 = vsel %vm8307, %v8337, %v8338
      %v8340 = vrot.slane %v8257, 6
      %v8341 = vrot.slane %v8340, 4
      %v8342 = vrot.slane %v8258, 6
      %v8343 = vsel %vm8307, %v8341, %v8342
      %v8344 = vrot.slane %v8259, 6
      %v8345 = vrot.slane %v8344, 4
      %v8346 = vrot.slane %v8260, 6
      %v8347 = vsel %vm8307, %v8345, %v8346
      %v8348 = vrot.slane %v8261, 6
      %v8349 = vrot.slane %v8348, 4
      %v8350 = vrot.slane %v8262, 6
      %v8351 = vsel %vm8307, %v8349, %v8350
      %v8352 = vrot.slane %v8263, 6
      %v8353 = vrot.slane %v8352, 4
      %v8354 = vrot.slane %v8264, 6
      %v8355 = vsel %vm8307, %v8353, %v8354
      %v8356 = vrot.slane %v8265, 6
      %v8357 = vrot.slane %v8356, 4
      %v8358 = vrot.slane %v8266, 6
      %v8359 = vsel %vm8307, %v8357, %v8358
      %v8360 = vrot.slane %v8267, 6
      %v8361 = vrot.slane %v8360, 4
      %v8362 = vrot.slane %v8268, 6
      %v8363 = vsel %vm8307, %v8361, %v8362
      %v8364 = vrot.slane %v8269, 6
      %v8365 = vrot.slane %v8364, 4
      %v8366 = vrot.slane %v8270, 6
      %v8367 = vsel %vm8307, %v8365, %v8366
      %v8368 = vrot.slane %v8271, 6
      %v8369 = vrot.slane %v8368, 4
      %v8370 = vrot.slane %v8272, 6
      %v8371 = vsel %vm8307, %v8369, %v8370
      %v8372 = vunpack.c.l.b16 %v8311
      %v8373 = vunpack.c.l.b16 %v8315
      %v8374 = vunpack.c.l.b16 %v8319
      %v8375 = vunpack.c.l.b16 %v8323
      %v8376 = vunpack.c.l.b16 %v8327
      %v8377 = vunpack.c.l.b16 %v8331
      %v8378 = vunpack.c.l.b16 %v8335
      %v8379 = vunpack.c.l.b16 %v8339
      %v8380 = vunpack.c.l.b16 %v8343
      %v8381 = vunpack.c.l.b16 %v8347
      %v8382 = vunpack.c.l.b16 %v8351
      %v8383 = vunpack.c.l.b16 %v8355
      %v8384 = vunpack.c.l.b16 %v8359
      %v8385 = vunpack.c.l.b16 %v8363
      %v8386 = vunpack.c.l.b16 %v8367
      %v8387 = vunpack.c.l.b16 %v8371
      %v8388 = vpack.c.b16 %v8373, %v8372
      %v8389 = vpack.c.b16 %v8375, %v8374
      %v8390 = vpack.c.b16 %v8377, %v8376
      %v8391 = vpack.c.b16 %v8379, %v8378
      %v8392 = vpack.c.b16 %v8381, %v8380
      %v8393 = vpack.c.b16 %v8383, %v8382
      %v8394 = vpack.c.b16 %v8385, %v8384
      %v8395 = vpack.c.b16 %v8387, %v8386
      %8396 = vrot.lane.b32.xlu0 %v8388, 38
      %v8397 = vpop.permute.xlu0 %8396
      %8398 = vrot.lane.b32.xlu0 %v8389, 38
      %v8399 = vpop.permute.xlu0 %8398
      %8400 = vrot.lane.b32.xlu0 %v8390, 38
      %v8401 = vpop.permute.xlu0 %8400
      %8402 = vrot.lane.b32.xlu0 %v8391, 38
      %v8403 = vpop.permute.xlu0 %8402
      %8404 = vrot.lane.b32.xlu0 %v8392, 38
      %v8405 = vpop.permute.xlu0 %8404
      %8406 = vrot.lane.b32.xlu0 %v8393, 38
      %v8407 = vpop.permute.xlu0 %8406
      %8408 = vrot.lane.b32.xlu0 %v8394, 38
      %v8409 = vpop.permute.xlu0 %8408
      %8410 = vrot.lane.b32.xlu0 %v8395, 38
      %v8411 = vpop.permute.xlu0 %8410
      %8420 = vst.msk [vmem:[#allocation6 + $0x10] sm:$0xff] %vm5906, %v8397
      %8421 = vst.msk [vmem:[#allocation6 + $0x28] sm:$0xff] %vm5906, %v8399
      %8422 = vst.msk [vmem:[#allocation6 + $0x40] sm:$0xff] %vm5906, %v8401
      %8423 = vst.msk [vmem:[#allocation6 + $0x58] sm:$0xff] %vm5906, %v8403
      %8424 = vst.msk [vmem:[#allocation6 + $0x70] sm:$0xff] %vm5906, %v8405
      %8425 = vst.msk [vmem:[#allocation6 + $0x88] sm:$0xff] %vm5906, %v8407
      %8426 = vst.msk [vmem:[#allocation6 + $0xa0] sm:$0xff] %vm5906, %v8409
      %8427 = vst.msk [vmem:[#allocation6 + $0xb8] sm:$0xff] %vm5906, %v8411
      %v8428 = vld [vmem:[#allocation6] sm:$0xff]
      %v8429 = vld [vmem:[#allocation6 + $0x8] sm:$0xff]
      %v8430 = vld [vmem:[#allocation6 + $0x10] sm:$0xff]
      %v8431 = vld [vmem:[#allocation6 + $0x18] sm:$0xff]
      %v8432 = vld [vmem:[#allocation6 + $0x20] sm:$0xff]
      %v8433 = vld [vmem:[#allocation6 + $0x28] sm:$0xff]
      %v8434 = vld [vmem:[#allocation6 + $0x30] sm:$0xff]
      %v8435 = vld [vmem:[#allocation6 + $0x38] sm:$0xff]
      %v8436 = vld [vmem:[#allocation6 + $0x40] sm:$0xff]
      %v8437 = vld [vmem:[#allocation6 + $0x48] sm:$0xff]
      %v8438 = vld [vmem:[#allocation6 + $0x50] sm:$0xff]
      %v8439 = vld [vmem:[#allocation6 + $0x58] sm:$0xff]
      %v8440 = vld [vmem:[#allocation6 + $0x60] sm:$0xff]
      %v8441 = vld [vmem:[#allocation6 + $0x68] sm:$0xff]
      %v8442 = vld [vmem:[#allocation6 + $0x70] sm:$0xff]
      %v8443 = vld [vmem:[#allocation6 + $0x78] sm:$0xff]
      %v8444 = vld [vmem:[#allocation6 + $0x80] sm:$0xff]
      %v8445 = vld [vmem:[#allocation6 + $0x88] sm:$0xff]
      %v8446 = vld [vmem:[#allocation6 + $0x90] sm:$0xff]
      %v8447 = vld [vmem:[#allocation6 + $0x98] sm:$0xff]
      %v8448 = vld [vmem:[#allocation6 + $0xa0] sm:$0xff]
      %v8449 = vld [vmem:[#allocation6 + $0xa8] sm:$0xff]
      %v8450 = vld [vmem:[#allocation6 + $0xb0] sm:$0xff]
      %v8451 = vld [vmem:[#allocation6 + $0xb8] sm:$0xff]
      %v8452 = vld [vmem:[%s4] sm:$0xf]
      %v8453 = vld [vmem:[%s4 + $0x4] sm:$0xf]
      %v8454 = vld [vmem:[%s4 + $0x8] sm:$0xf]
      %v8455 = vld [vmem:[%s4 + $0xc] sm:$0xf]
      %v8456 = vld [vmem:[%s4 + $0x10] sm:$0xf]
      %v8457 = vld [vmem:[%s4 + $0x14] sm:$0xf]
      %v8458 = vld [vmem:[%s4 + $0x18] sm:$0xf]
      %v8459 = vld [vmem:[%s4 + $0x1c] sm:$0xf]
      %v8460 = vld [vmem:[%s4 + $0x20] sm:$0xf]
      %v8461 = vld [vmem:[%s4 + $0x24] sm:$0xf]
      %v8462 = vld [vmem:[%s4 + $0x28] sm:$0xf]
      %v8463 = vld [vmem:[%s4 + $0x2c] sm:$0xf]
      %v8464 = vld [vmem:[%s4 + $0x30] sm:$0xf]
      %v8465 = vld [vmem:[%s4 + $0x34] sm:$0xf]
      %v8466 = vld [vmem:[%s4 + $0x38] sm:$0xf]
      %v8467 = vld [vmem:[%s4 + $0x3c] sm:$0xf]
      %v8468 = vld [vmem:[%s4 + $0x40] sm:$0xf]
      %v8469 = vld [vmem:[%s4 + $0x44] sm:$0xf]
      %v8470 = vld [vmem:[%s4 + $0x48] sm:$0xf]
      %v8471 = vld [vmem:[%s4 + $0x4c] sm:$0xf]
      %v8472 = vld [vmem:[%s4 + $0x50] sm:$0xf]
      %v8473 = vld [vmem:[%s4 + $0x54] sm:$0xf]
      %v8474 = vld [vmem:[%s4 + $0x58] sm:$0xf]
      %v8475 = vld [vmem:[%s4 + $0x5c] sm:$0xf]
      %v8476 = vld [vmem:[%s4 + $0x60] sm:$0xf]
      %v8477 = vld [vmem:[%s4 + $0x64] sm:$0xf]
      %v8478 = vld [vmem:[%s4 + $0x68] sm:$0xf]
      %v8479 = vld [vmem:[%s4 + $0x6c] sm:$0xf]
      %v8480 = vld [vmem:[%s4 + $0x70] sm:$0xf]
      %v8481 = vld [vmem:[%s4 + $0x74] sm:$0xf]
      %v8482 = vld [vmem:[%s4 + $0x78] sm:$0xf]
      %v8483 = vld [vmem:[%s4 + $0x7c] sm:$0xf]
      %v8484 = vld [vmem:[%s4 + $0x80] sm:$0xf]
      %v8485 = vld [vmem:[%s4 + $0x84] sm:$0xf]
      %v8486 = vld [vmem:[%s4 + $0x88] sm:$0xf]
      %v8487 = vld [vmem:[%s4 + $0x8c] sm:$0xf]
      %v8488 = vld [vmem:[%s4 + $0x90] sm:$0xf]
      %v8489 = vld [vmem:[%s4 + $0x94] sm:$0xf]
      %v8490 = vld [vmem:[%s4 + $0x98] sm:$0xf]
      %v8491 = vld [vmem:[%s4 + $0x9c] sm:$0xf]
      %v8492 = vld [vmem:[%s4 + $0xa0] sm:$0xf]
      %v8493 = vld [vmem:[%s4 + $0xa4] sm:$0xf]
      %v8494 = vld [vmem:[%s4 + $0xa8] sm:$0xf]
      %v8538 = vunpack.c.l.b16 %v8452
      %v8539 = vunpack.c.l.b16 %v8453
      %v8540 = vunpack.c.l.b16 %v8454
      %v8541 = vunpack.c.l.b16 %v8455
      %v8542 = vunpack.c.l.b16 %v8456
      %v8543 = vunpack.c.l.b16 %v8457
      %v8544 = vunpack.c.l.b16 %v8458
      %v8545 = vunpack.c.l.b16 %v8459
      %v8546 = vunpack.c.l.b16 %v8460
      %v8547 = vunpack.c.l.b16 %v8461
      %v8548 = vunpack.c.l.b16 %v8462
      %v8549 = vunpack.c.l.b16 %v8463
      %v8550 = vunpack.c.l.b16 %v8464
      %v8551 = vunpack.c.l.b16 %v8465
      %v8552 = vunpack.c.l.b16 %v8466
      %v8553 = vunpack.c.l.b16 %v8467
      %v8554 = vunpack.c.l.b16 %v8468
      %v8555 = vunpack.c.l.b16 %v8469
      %v8556 = vunpack.c.l.b16 %v8470
      %v8557 = vunpack.c.l.b16 %v8471
      %v8558 = vunpack.c.l.b16 %v8472
      %v8559 = vunpack.c.l.b16 %v8473
      %v8560 = vunpack.c.l.b16 %v8474
      %v8561 = vunpack.c.l.b16 %v8475
      %v8562 = vunpack.c.l.b16 %v8476
      %v8563 = vunpack.c.l.b16 %v8477
      %v8564 = vunpack.c.l.b16 %v8478
      %v8565 = vunpack.c.l.b16 %v8479
      %v8566 = vunpack.c.l.b16 %v8480
      %v8567 = vunpack.c.l.b16 %v8481
      %v8568 = vunpack.c.l.b16 %v8482
      %v8569 = vunpack.c.l.b16 %v8483
      %v8570 = vunpack.c.l.b16 %v8484
      %v8571 = vunpack.c.l.b16 %v8485
      %v8572 = vunpack.c.l.b16 %v8486
      %v8573 = vunpack.c.l.b16 %v8487
      %v8574 = vunpack.c.l.b16 %v8488
      %v8575 = vunpack.c.l.b16 %v8489
      %v8576 = vunpack.c.l.b16 %v8490
      %v8577 = vunpack.c.l.b16 %v8491
      %v8578 = vunpack.c.l.b16 %v8492
      %v8579 = vunpack.c.l.b16 %v8493
      %v8580 = vunpack.c.l.b16 %v8494
      %v8581 = vpack.c.b16 %v8539, %v8538
      %v8582 = vpack.c.b16 %v8541, %v8540
      %v8583 = vpack.c.b16 %v8543, %v8542
      %v8584 = vpack.c.b16 %v8545, %v8544
      %v8585 = vpack.c.b16 %v8547, %v8546
      %v8586 = vpack.c.b16 %v8549, %v8548
      %v8587 = vpack.c.b16 %v8551, %v8550
      %v8588 = vpack.c.b16 %v8553, %v8552
      %v8589 = vpack.c.b16 %v8555, %v8554
      %v8590 = vpack.c.b16 %v8557, %v8556
      %v8591 = vpack.c.b16 %v8559, %v8558
      %v8592 = vpack.c.b16 %v8561, %v8560
      %v8593 = vpack.c.b16 %v8563, %v8562
      %v8594 = vpack.c.b16 %v8565, %v8564
      %v8595 = vpack.c.b16 %v8567, %v8566
      %v8596 = vpack.c.b16 %v8569, %v8568
      %v8597 = vpack.c.b16 %v8571, %v8570
      %v8598 = vpack.c.b16 %v8573, %v8572
      %v8599 = vpack.c.b16 %v8575, %v8574
      %v8600 = vpack.c.b16 %v8577, %v8576
      %v8601 = vpack.c.b16 %v8579, %v8578
      %v8602 = vpack.c.b16 %v8580, %v8580
      %v8625 = vsel %vm6117, %v8430, 0
      %v8628 = vsel %vm6117, %v8433, 0
      %v8631 = vsel %vm6117, %v8436, 0
      %v8634 = vsel %vm6117, %v8439, 0
      %v8637 = vsel %vm6117, %v8442, 0
      %v8640 = vsel %vm6117, %v8445, 0
      %v8643 = vsel %vm6117, %v8448, 0
      %v8646 = vsel %vm6117, %v8451, 0
      %v8649 = vand.u32 %v8602, %v6145
      %8651 = vmatprep.subr.bf16.mxu0 0
      %8652 = vmatpush1.bf16.msra.mxu0 %v8581
      %8653 = vmatprep.subr.bf16.mxu0 0
      %8654 = vmatpush1.bf16.msra.mxu0 %v8582
      %8655 = vmatprep.subr.bf16.mxu0 0
      %8656 = vmatpush1.bf16.msra.mxu0 %v8583
      %8657 = vmatprep.subr.bf16.mxu0 0
      %8658 = vmatpush1.bf16.msra.mxu0 %v8584
      %8659 = vmatprep.subr.bf16.mxu0 0
      %8660 = vmatpush1.bf16.msra.mxu0 %v8585
      %8661 = vmatprep.subr.bf16.mxu0 0
      %8662 = vmatpush1.bf16.msra.mxu0 %v8586
      %8663 = vmatprep.subr.bf16.mxu0 0
      %8664 = vmatpush1.bf16.msra.mxu0 %v8587
      %8665 = vmatprep.subr.bf16.mxu0 0
      %8666 = vmatpush1.bf16.msra.mxu0 %v8588
      %8667 = vmatprep.subr.bf16.mxu0 0
      %8668 = vmatpush1.bf16.msra.mxu0 %v8589
      %8669 = vmatprep.subr.bf16.mxu0 0
      %8670 = vmatpush1.bf16.msra.mxu0 %v8590
      %8671 = vmatprep.subr.bf16.mxu0 0
      %8672 = vmatpush1.bf16.msra.mxu0 %v8591
      %8673 = vmatprep.subr.bf16.mxu0 0
      %8674 = vmatpush1.bf16.msra.mxu0 %v8592
      %8675 = vmatprep.subr.bf16.mxu0 0
      %8676 = vmatpush1.bf16.msra.mxu0 %v8593
      %8677 = vmatprep.subr.bf16.mxu0 0
      %8678 = vmatpush1.bf16.msra.mxu0 %v8594
      %8679 = vmatprep.subr.bf16.mxu0 0
      %8680 = vmatpush1.bf16.msra.mxu0 %v8595
      %8681 = vmatprep.subr.bf16.mxu0 0
      %8682 = vmatpush1.bf16.msra.mxu0 %v8596
      %8683 = vmatprep.mubr.bf16.mxu0 %v8429
      %8684 = vmatmul.mubr.bf16.gmra.mrb[0].mxu0 %v8428
      %v8685 = vpop.f32.mrb[0].mxu0
      %v8686 = vadd.f32 %v5986, %v8685
      %v8687 = vpop.f32.mrb[0].mxu0
      %v8688 = vpop.f32.mrb[0].mxu0
      %v8689 = vadd.f32 %v5986, %v8688
      %v8690 = vpop.f32.mrb[0].mxu0
      %8691 = vmatprep.mubr.bf16.mxu0 %v8432
      %8692 = vmatmul.mubr.bf16.gmra.mrb[0].mxu0 %v8431
      %v8693 = vpop.f32.mrb[0].mxu0
      %v8694 = vadd.f32 %v5986, %v8693
      %v8695 = vpop.f32.mrb[0].mxu0
      %v8696 = vpop.f32.mrb[0].mxu0
      %v8697 = vadd.f32 %v5986, %v8696
      %v8698 = vpop.f32.mrb[0].mxu0
      %8699 = vmatprep.mubr.bf16.mxu0 %v8435
      %8700 = vmatmul.mubr.bf16.gmra.mrb[0].mxu0 %v8434
      %v8701 = vpop.f32.mrb[0].mxu0
      %v8702 = vadd.f32 %v5986, %v8701
      %v8703 = vpop.f32.mrb[0].mxu0
      %v8704 = vpop.f32.mrb[0].mxu0
      %v8705 = vadd.f32 %v5986, %v8704
      %v8706 = vpop.f32.mrb[0].mxu0
      %8707 = vmatprep.mubr.bf16.mxu0 %v8438
      %8708 = vmatmul.mubr.bf16.gmra.mrb[0].mxu0 %v8437
      %v8709 = vpop.f32.mrb[0].mxu0
      %v8710 = vadd.f32 %v5986, %v8709
      %v8711 = vpop.f32.mrb[0].mxu0
      %v8712 = vpop.f32.mrb[0].mxu0
      %v8713 = vadd.f32 %v5986, %v8712
      %v8714 = vpop.f32.mrb[0].mxu0
      %8715 = vmatprep.mubr.bf16.mxu0 %v8441
      %8716 = vmatmul.mubr.bf16.gmra.mrb[0].mxu0 %v8440
      %v8717 = vpop.f32.mrb[0].mxu0
      %v8718 = vadd.f32 %v5986, %v8717
      %v8719 = vpop.f32.mrb[0].mxu0
      %v8720 = vpop.f32.mrb[0].mxu0
      %v8721 = vadd.f32 %v5986, %v8720
      %v8722 = vpop.f32.mrb[0].mxu0
      %8723 = vmatprep.mubr.bf16.mxu0 %v8444
      %8724 = vmatmul.mubr.bf16.gmra.mrb[0].mxu0 %v8443
      %v8725 = vpop.f32.mrb[0].mxu0
      %v8726 = vadd.f32 %v5986, %v8725
      %v8727 = vpop.f32.mrb[0].mxu0
      %v8728 = vpop.f32.mrb[0].mxu0
      %v8729 = vadd.f32 %v5986, %v8728
      %v8730 = vpop.f32.mrb[0].mxu0
      %8731 = vmatprep.mubr.bf16.mxu0 %v8447
      %8732 = vmatmul.mubr.bf16.gmra.mrb[0].mxu0 %v8446
      %v8733 = vpop.f32.mrb[0].mxu0
      %v8734 = vadd.f32 %v5986, %v8733
      %v8735 = vpop.f32.mrb[0].mxu0
      %v8736 = vpop.f32.mrb[0].mxu0
      %v8737 = vadd.f32 %v5986, %v8736
      %v8738 = vpop.f32.mrb[0].mxu0
      %8739 = vmatprep.mubr.bf16.mxu0 %v8450
      %8740 = vmatmul.mubr.bf16.gmra.mrb[0].mxu0 %v8449
      %v8741 = vpop.f32.mrb[0].mxu0
      %v8742 = vadd.f32 %v5986, %v8741
      %v8743 = vpop.f32.mrb[0].mxu0
      %v8744 = vpop.f32.mrb[0].mxu0
      %v8745 = vadd.f32 %v5986, %v8744
      %v8746 = vpop.f32.mrb[0].mxu0
      %8747 = vdwg.mxu0
      %8748 = vmatprep.subr.bf16.mxu0 0
      %8749 = vmatpush1.bf16.msra.mxu0 %v8597
      %8750 = vmatprep.subr.bf16.mxu0 0
      %8751 = vmatpush1.bf16.msra.mxu0 %v8598
      %8752 = vmatprep.subr.bf16.mxu0 0
      %8753 = vmatpush1.bf16.msra.mxu0 %v8599
      %8754 = vmatprep.subr.bf16.mxu0 0
      %8755 = vmatpush1.bf16.msra.mxu0 %v8600
      %8756 = vmatprep.subr.bf16.mxu0 0
      %8757 = vmatpush1.bf16.msra.mxu0 %v8601
      %8758 = vmatprep.subr.bf16.mxu0 0
      %8759 = vmatpush1.bf16.msra.mxu0 %v8649
      %8760 = vmatprep.subr.bf16.mxu0 0
      %8761 = vmatpush1.bf16.msra.mxu0 0
      %8762 = vmatprep.subr.bf16.mxu0 0
      %8763 = vmatpush1.bf16.msra.mxu0 0
      %8764 = vmatprep.subr.bf16.mxu0 0
      %8765 = vmatpush1.bf16.msra.mxu0 0
      %8766 = vmatprep.subr.bf16.mxu0 0
      %8767 = vmatpush1.bf16.msra.mxu0 0
      %8768 = vmatprep.subr.bf16.mxu0 0
      %8769 = vmatpush1.bf16.msra.mxu0 0
      %8770 = vmatprep.subr.bf16.mxu0 0
      %8771 = vmatpush1.bf16.msra.mxu0 0
      %8772 = vmatprep.subr.bf16.mxu0 0
      %8773 = vmatpush1.bf16.msra.mxu0 0
      %8774 = vmatprep.subr.bf16.mxu0 0
      %8775 = vmatpush1.bf16.msra.mxu0 0
      %8776 = vmatprep.subr.bf16.mxu0 0
      %8777 = vmatpush1.bf16.msra.mxu0 0
      %8778 = vmatprep.subr.bf16.mxu0 0
      %8779 = vmatpush1.bf16.msra.mxu0 0
      %8780 = vmatprep.mubr.bf16.mxu0 0
      %8781 = vmatmul.mubr.bf16.gmra.mrb[0].mxu0 %v8625
      %v8782 = vpop.f32.mrb[0].mxu0
      %v8783 = vadd.f32 %v8686, %v8782
      %v8784 = vpop.f32.mrb[0].mxu0
      %v8785 = vpop.f32.mrb[0].mxu0
      %v8786 = vadd.f32 %v8689, %v8785
      %v8787 = vpop.f32.mrb[0].mxu0
      %8788 = vmatprep.mubr.bf16.mxu0 0
      %8789 = vmatmul.mubr.bf16.gmra.mrb[0].mxu0 %v8628
      %v8790 = vpop.f32.mrb[0].mxu0
      %v8791 = vadd.f32 %v8694, %v8790
      %v8792 = vpop.f32.mrb[0].mxu0
      %v8793 = vpop.f32.mrb[0].mxu0
      %v8794 = vadd.f32 %v8697, %v8793
      %v8795 = vpop.f32.mrb[0].mxu0
      %8796 = vmatprep.mubr.bf16.mxu0 0
      %8797 = vmatmul.mubr.bf16.gmra.mrb[0].mxu0 %v8631
      %v8798 = vpop.f32.mrb[0].mxu0
      %v8799 = vadd.f32 %v8702, %v8798
      %v8800 = vpop.f32.mrb[0].mxu0
      %v8801 = vpop.f32.mrb[0].mxu0
      %v8802 = vadd.f32 %v8705, %v8801
      %v8803 = vpop.f32.mrb[0].mxu0
      %8804 = vmatprep.mubr.bf16.mxu0 0
      %8805 = vmatmul.mubr.bf16.gmra.mrb[0].mxu0 %v8634
      %v8806 = vpop.f32.mrb[0].mxu0
      %v8807 = vadd.f32 %v8710, %v8806
      %v8808 = vpop.f32.mrb[0].mxu0
      %v8809 = vpop.f32.mrb[0].mxu0
      %v8810 = vadd.f32 %v8713, %v8809
      %v8811 = vpop.f32.mrb[0].mxu0
      %8812 = vmatprep.mubr.bf16.mxu0 0
      %8813 = vmatmul.mubr.bf16.gmra.mrb[0].mxu0 %v8637
      %v8814 = vpop.f32.mrb[0].mxu0
      %v8815 = vadd.f32 %v8718, %v8814
      %v8816 = vpop.f32.mrb[0].mxu0
      %v8817 = vpop.f32.mrb[0].mxu0
      %v8818 = vadd.f32 %v8721, %v8817
      %v8819 = vpop.f32.mrb[0].mxu0
      %8820 = vmatprep.mubr.bf16.mxu0 0
      %8821 = vmatmul.mubr.bf16.gmra.mrb[0].mxu0 %v8640
      %v8822 = vpop.f32.mrb[0].mxu0
      %v8823 = vadd.f32 %v8726, %v8822
      %v8824 = vpop.f32.mrb[0].mxu0
      %v8825 = vpop.f32.mrb[0].mxu0
      %v8826 = vadd.f32 %v8729, %v8825
      %v8827 = vpop.f32.mrb[0].mxu0
      %8828 = vmatprep.mubr.bf16.mxu0 0
      %8829 = vmatmul.mubr.bf16.gmra.mrb[0].mxu0 %v8643
      %v8830 = vpop.f32.mrb[0].mxu0
      %v8831 = vadd.f32 %v8734, %v8830
      %v8832 = vpop.f32.mrb[0].mxu0
      %v8833 = vpop.f32.mrb[0].mxu0
      %v8834 = vadd.f32 %v8737, %v8833
      %v8835 = vpop.f32.mrb[0].mxu0
      %8836 = vmatprep.mubr.bf16.mxu0 0
      %8837 = vmatmul.mubr.bf16.gmra.mrb[0].mxu0 %v8646
      %v8838 = vpop.f32.mrb[0].mxu0
      %v8839 = vadd.f32 %v8742, %v8838
      %v8840 = vpop.f32.mrb[0].mxu0
      %v8841 = vpop.f32.mrb[0].mxu0
      %v8842 = vadd.f32 %v8745, %v8841
      %v8843 = vpop.f32.mrb[0].mxu0
      %8844 = vdwg.mxu0
      %8845 = vxpose.xlu0.b32.start [1/16] %v8783, 128
      %8846 = vxpose.xlu0.b32.cont [2/16] %v8786, 128
      %8847 = vxpose.xlu0.b32.cont [3/16] %v8791, 128
      %8848 = vxpose.xlu0.b32.cont [4/16] %v8794, 128
      %8849 = vxpose.xlu0.b32.cont [5/16] %v8799, 128
      %8850 = vxpose.xlu0.b32.cont [6/16] %v8802, 128
      %8851 = vxpose.xlu0.b32.cont [7/16] %v8807, 128
      %8852 = vxpose.xlu0.b32.cont [8/16] %v8810, 128
      %8853 = vxpose.xlu0.b32.cont [9/16] %v8815, 128
      %8854 = vxpose.xlu0.b32.cont [10/16] %v8818, 128
      %8855 = vxpose.xlu0.b32.cont [11/16] %v8823, 128
      %8856 = vxpose.xlu0.b32.cont [12/16] %v8826, 128
      %8857 = vxpose.xlu0.b32.cont [13/16] %v8831, 128
      %8858 = vxpose.xlu0.b32.cont [14/16] %v8834, 128
      %8859 = vxpose.xlu0.b32.cont [15/16] %v8839, 128
      %8860 = vxpose.xlu0.b32.end [16/16] %v8842, 128
      %v8861 = vpop.trf.xlu0
      %v8862 = vpop.trf.xlu0
      %v8863 = vpop.trf.xlu0
      %v8864 = vpop.trf.xlu0
      %v8865 = vpop.trf.xlu0
      %v8866 = vpop.trf.xlu0
      %v8867 = vpop.trf.xlu0
      %v8868 = vpop.trf.xlu0
      %v8869 = vpop.trf.xlu0
      %v8870 = vpop.trf.xlu0
      %v8871 = vpop.trf.xlu0
      %v8872 = vpop.trf.xlu0
      %v8873 = vpop.trf.xlu0
      %v8874 = vpop.trf.xlu0
      %v8875 = vpop.trf.xlu0
      %v8876 = vpop.trf.xlu0
      %v8877 = vmul.f32 %v8861, %v8861
      %v8878 = vmul.f32 %v8862, %v8862
      %v8879 = vmul.f32 %v8863, %v8863
      %v8880 = vmul.f32 %v8864, %v8864
      %v8881 = vmul.f32 %v8865, %v8865
      %v8882 = vmul.f32 %v8866, %v8866
      %v8883 = vmul.f32 %v8867, %v8867
      %v8884 = vsub.f32 0.0, %v8877
      %v8885 = vsub.f32 0.0, %v8878
      %v8886 = vsub.f32 0.0, %v8879
      %v8887 = vsub.f32 0.0, %v8880
      %v8888 = vsub.f32 0.0, %v8881
      %v8889 = vsub.f32 0.0, %v8882
      %v8890 = vsub.f32 0.0, %v8883
      %v8891 = vmax.f32 %v8884, %v8888
      %v8892 = vmax.f32 %v8885, %v8889
      %v8893 = vsel %vm6391, %v8890, -inf
      %v8894 = vmax.f32 %v8886, %v8893
      %v8895 = vmax.f32 %v8891, %v8892
      %v8896 = vmax.f32 %v8894, %v8887
      %v8897 = vmax.f32 %v8895, %v8896
      %v8898 = vrot.slane %v8897, 4
      %v8899 = vmax.f32 %v8897, %v8898
      %v8900 = vrot.slane %v8899, 2
      %v8901 = vmax.f32 %v8899, %v8900
      %v8902 = vrot.slane %v8901, 1
      %v8903 = vmax.f32 %v8901, %v8902
      %v8904 = vsub.f32 %v8884, %v8903
      %v8905 = vsub.f32 %v8885, %v8903
      %v8906 = vsub.f32 %v8886, %v8903
      %v8907 = vsub.f32 %v8887, %v8903
      %v8908 = vsub.f32 %v8888, %v8903
      %v8909 = vsub.f32 %v8889, %v8903
      %v8910 = vsub.f32 %v8890, %v8903
      %v8911 = vmul.f32 %v8904, 1.442695
      %v8912 = vpow.pop %v8911
      %v8913 = vmul.f32 %v8905, 1.442695
      %v8914 = vpow.pop %v8913
      %v8915 = vmul.f32 %v8906, 1.442695
      %v8916 = vpow.pop %v8915
      %v8917 = vmul.f32 %v8907, 1.442695
      %v8918 = vpow.pop %v8917
      %v8919 = vmul.f32 %v8908, 1.442695
      %v8920 = vpow.pop %v8919
      %v8921 = vmul.f32 %v8909, 1.442695
      %v8922 = vpow.pop %v8921
      %v8923 = vmul.f32 %v8910, 1.442695
      %v8924 = vpow.pop %v8923
      %v8925 = vadd.f32 %v8912, %v8914
      %v8926 = vadd.f32 %v8925, %v8916
      %v8927 = vadd.f32 %v8926, %v8918
      %v8928 = vadd.f32 %v8927, %v8920
      %v8929 = vadd.f32 %v8928, %v8922
      %v8930 = vsel %vm6391, %v8924, 0.0
      %v8931 = vadd.f32 %v8929, %v8930
      %v8932 = vrot.slane %v8931, 4
      %v8933 = vadd.f32 %v8931, %v8932
      %v8934 = vrot.slane %v8933, 2
      %v8935 = vadd.f32 %v8933, %v8934
      %v8936 = vrot.slane %v8935, 1
      %v8937 = vadd.f32 %v8935, %v8936
      %s8938 = scalar_lea.vmem %s320, 112
      %v8939 = vld [vmem:[%s8938] sm:$0xff]
      %v8940 = vld [vmem:[%s8938 + $0x8] sm:$0xff]
      %v8941 = vld [vmem:[%s8938 + $0x10] sm:$0xff]
      %v8942 = vld [vmem:[%s8938 + $0x18] sm:$0xff]
      %v8943 = vld [vmem:[%s8938 + $0x20] sm:$0xff]
      %v8944 = vld [vmem:[%s8938 + $0x28] sm:$0xff]
      %v8945 = vld [vmem:[%s8938 + $0x30] sm:$0x1]
      %s8946 = scalar_lea.vmem %s320, 168
      %v8947 = vld [vmem:[%s8946] sm:$0xff]
      %v8948 = vld [vmem:[%s8946 + $0x8] sm:$0xff]
      %v8949 = vld [vmem:[%s8946 + $0x10] sm:$0xff]
      %v8950 = vld [vmem:[%s8946 + $0x18] sm:$0xff]
      %v8951 = vld [vmem:[%s8946 + $0x20] sm:$0xff]
      %v8952 = vld [vmem:[%s8946 + $0x28] sm:$0xff]
      %v8953 = vld [vmem:[%s8946 + $0x30] sm:$0x1]
      %v8954 = vmul.f32 %v8912, %v8939
      %v8955 = vmul.f32 %v8914, %v8940
      %v8956 = vmul.f32 %v8916, %v8941
      %v8957 = vmul.f32 %v8918, %v8942
      %v8958 = vmul.f32 %v8920, %v8943
      %v8959 = vmul.f32 %v8922, %v8944
      %v8960 = vmul.f32 %v8924, %v8945
      %v8961 = vadd.f32 %v8954, %v8955
      %v8962 = vadd.f32 %v8961, %v8956
      %v8963 = vadd.f32 %v8962, %v8957
      %v8964 = vadd.f32 %v8963, %v8958
      %v8965 = vadd.f32 %v8964, %v8959
      %v8966 = vsel %vm6391, %v8960, 0.0
      %v8967 = vadd.f32 %v8965, %v8966
      %v8968 = vrot.slane %v8967, 4
      %v8969 = vadd.f32 %v8967, %v8968
      %v8970 = vrot.slane %v8969, 2
      %v8971 = vadd.f32 %v8969, %v8970
      %v8972 = vrot.slane %v8971, 1
      %v8973 = vadd.f32 %v8971, %v8972
      %v8974 = vmul.f32 %v8912, %v8947
      %v8975 = vmul.f32 %v8914, %v8948
      %v8976 = vmul.f32 %v8916, %v8949
      %v8977 = vmul.f32 %v8918, %v8950
      %v8978 = vmul.f32 %v8920, %v8951
      %v8979 = vmul.f32 %v8922, %v8952
      %v8980 = vmul.f32 %v8924, %v8953
      %v8981 = vadd.f32 %v8974, %v8975
      %v8982 = vadd.f32 %v8981, %v8976
      %v8983 = vadd.f32 %v8982, %v8977
      %v8984 = vadd.f32 %v8983, %v8978
      %v8985 = vadd.f32 %v8984, %v8979
      %v8986 = vsel %vm6391, %v8980, 0.0
      %v8987 = vadd.f32 %v8985, %v8986
      %v8988 = vrot.slane %v8987, 4
      %v8989 = vadd.f32 %v8987, %v8988
      %v8990 = vrot.slane %v8989, 2
      %v8991 = vadd.f32 %v8989, %v8990
      %v8992 = vrot.slane %v8991, 1
      %v8993 = vadd.f32 %v8991, %v8992
      %v8994 = vrcp.pop %v8937
      %v8995 = vmul.f32 %v8973, %v8994
      %s8996 = scalar_lea.vmem %s325, 2
      %8997 = vst [vmem:[%s8996] sm:$0x1] %v8995
      %v8998 = vmul.f32 %v8993, %v8994
      %8999 = vst [vmem:[%s8996 + $0x1] sm:$0x1] %v8998
      %p9000 = scmp.lt.s32.totalorder %s19, 1
      %s9001 = scalar_select %p9000, %s19, 1
      %s9002 = smul.addr %s9001, 2
      %s9003 = smul.addr %s9002, 2
      %s9004 = scalar_lea.vmem %s8, %s9003
      // Predicated region
      $region53: #{pseudo_regularization_forward.1} parent=51 // pred_check
        %p9005 = pneg %p215
      $region54: #{pseudo_regularization_forward.1} parent=51 // pred_check_branch
        %9007 = sbr.rel (%p9005) target = $region56
      $region55: #{pseudo_regularization_forward.1} parent=51 // pred_region
        _
      $region56: #{pseudo_regularization_forward.1} parent=51 // pred_fallthru
        _
    $region52: #{pseudo_regularization_forward.1} parent=5 // pred_fallthru
      _
    %p9008 = scmp.le.s32.totalorder 2, %s14
    // Predicated region
    $region57: #{pseudo_regularization_forward.1} parent=5 // pred_check
      %p9009 = pneg %p9008
    $region58: #{pseudo_regularization_forward.1} parent=5 // pred_check_branch
      %9011 = sbr.rel (%p9009) target = $region60
    $region59: #{pseudo_regularization_forward.1} parent=5 // pred_region
      %s9012 = ssub.s32 %s14, 2
      // Predicated region
      $region61: #{pseudo_regularization_forward.1} parent=59 // pred_check
        %p9013 = pneg %p221
      $region62: #{pseudo_regularization_forward.1} parent=59 // pred_check_branch
        %9015 = sbr.rel (%p9013) target = $region64
      $region63: #{pseudo_regularization_forward.1} parent=59 // pred_region
        %p9016 = scmp.lt.s32.totalorder %s20, 1
        %s9017 = scalar_select %p9016, %s20, 1
        %s9018 = smul.addr %s9017, 2
        %s9019 = smul.addr %s9018, 2
        %s9020 = scalar_lea.vmem %s8, %s9019
      $region64: #{pseudo_regularization_forward.1} parent=59 // pred_fallthru
        _
    $region60: #{pseudo_regularization_forward.1} parent=5 // pred_fallthru
      _
  $region6: #{pseudo_regularization_forward.1} parent=0 // loop_footer
    %s18 = sadd.s32 1, %s14
  $region7: #{pseudo_regularization_forward.1} parent=0 // loop_footer_branch
    %13 = sbr.rel target = $region3
  $region8: #{pseudo_regularization_forward.1} parent=0 // loop_exit
    _

</llo_original>
